<compile_context>
chip_gen: v7x
topology: tpu7x:2x2x1
jax: 0.10.0
libtpu: 0.0.40
codegen_flags: <defaults>
</compile_context>

<pallas_src>
import functools

import jax
import jax.numpy as jnp
from jax.experimental import pallas as pl
from jax.experimental.pallas import tpu as pltpu


def self_attention_kernel(x_ref, g_ref, bt_ref, wqkv_ref, bqkv_ref, wp_ref, bp_ref,
                          out_ref, *, block_b, seq_len, num_heads, head_dim,
                          attn_eps, ln_eps):
    n = seq_len
    hdt = num_heads * head_dim

    # ---- LayerNorm over the channel axis on the whole (Bb*N, Din) slab ----
    # (torch default: eps=1e-5, biased variance)
    x = x_ref[...].reshape(block_b * n, -1)                      # (Bb*N, Din) f32
    mu = jnp.mean(x, axis=-1, keepdims=True)
    xc = x - mu
    var = jnp.mean(xc * xc, axis=-1, keepdims=True)
    xn = xc * jax.lax.rsqrt(var + ln_eps) * g_ref[...] + bt_ref[...]

    # ---- single fused q|k|v projection for all heads (softmax scale pre-folded
    #      into W_q / b_q on the host) ----
    qkv = jnp.dot(xn, wqkv_ref[...],
                  preferred_element_type=jnp.float32) + bqkv_ref[...]   # (Bb*N, 3*H*Dh)

    wp = wp_ref[...]                                             # (H*Dh, Dout)
    bp = bp_ref[...]                                             # (1, Dout)

    for bi in range(block_b):                                    # static tiny unroll
        rows = slice(bi * n, (bi + 1) * n)
        acc = None
        for h in range(num_heads):                               # static tiny unroll
            cq = slice(h * head_dim, (h + 1) * head_dim)
            ck = slice(hdt + h * head_dim, hdt + (h + 1) * head_dim)
            cv = slice(2 * hdt + h * head_dim, 2 * hdt + (h + 1) * head_dim)
            qs = qkv[rows, cq]                                   # (N, Dh) already *scale
            ks = qkv[rows, ck]
            vs = qkv[rows, cv]
            # dots[j, i] = sum_d q_scaled[j, d] * k[i, d]  (contract last dims, no transpose)
            dots = jax.lax.dot_general(
                qs, ks, (((1,), (1,)), ((), ())),
                preferred_element_type=jnp.float32)              # (N, N)
            m = jnp.max(dots, axis=-1, keepdims=True)
            e = jnp.exp(dots - m)
            s = jnp.sum(e, axis=-1, keepdims=True)
            # deferred normalization: (e/s + eps) @ v == (e@v) * (1/s) + eps * colsum(v)
            ev = jnp.dot(e, vs, preferred_element_type=jnp.float32)     # (N, Dh)
            head = (ev * pl.reciprocal(s, approx=True)
                    + attn_eps * jnp.sum(vs, axis=0, keepdims=True))
            # fold head-concat into result_proj: accumulate per-head contribution
            contrib = jnp.dot(head, wp[h * head_dim:(h + 1) * head_dim, :],
                              preferred_element_type=jnp.float32)       # (N, Dout)
            acc = contrib if acc is None else acc + contrib
        out_ref[bi] = (acc + bp).astype(out_ref.dtype)


def _pick_block_b(b):
    """Largest divisor of b that is <= 8 while still leaving >= 2 grid steps
    (keeps both v7x TensorCores busy via the 'parallel' grid axis)."""
    if b <= 1:
        return 1
    best = 1
    for cand in range(1, min(b // 2, 8) + 1):
        if b % cand == 0:
            best = cand
    return best


def self_attention_forward(x, params, *, num_heads):
    *lead, n, in_dim = x.shape
    xb = x.reshape((-1, n, in_dim)).astype(jnp.float32)
    b = xb.shape[0]

    out_dim = params['w_proj'].shape[0]
    head_dim = params['w_q'][0].shape[0]
    hdt = num_heads * head_dim
    scale = float(head_dim) ** -0.5                    # module: output_dim ** -0.5

    gamma = params['gamma'].reshape(1, in_dim).astype(jnp.float32)
    beta = params['beta'].reshape(1, in_dim).astype(jnp.float32)

    # Host-side weight prep (cheap, once):
    #  * pre-transpose so the kernel never transposes on the XLU,
    #  * fuse all heads' q|k|v into one (Din, 3*H*Dh) weight,
    #  * fold the softmax scale into W_q / b_q (exact, zero in-kernel cost).
    wq = jnp.concatenate(params['w_q'], axis=0).T.astype(jnp.float32) * scale
    wk = jnp.concatenate(params['w_k'], axis=0).T.astype(jnp.float32)
    wv = jnp.concatenate(params['w_v'], axis=0).T.astype(jnp.float32)
    bq = jnp.concatenate(params['b_q'], axis=0).astype(jnp.float32) * scale
    bk = jnp.concatenate(params['b_k'], axis=0).astype(jnp.float32)
    bv = jnp.concatenate(params['b_v'], axis=0).astype(jnp.float32)
    wqkv = jnp.concatenate([wq, wk, wv], axis=1)                 # (Din, 3*H*Dh)
    bqkv = jnp.concatenate([bq, bk, bv], axis=0).reshape(1, 3 * hdt)
    wp = params['w_proj'].T.astype(jnp.float32)                  # (H*Dh, Dout)
    bp = params['b_proj'].reshape(1, out_dim).astype(jnp.float32)

    bb = _pick_block_b(b)

    kernel = functools.partial(
        self_attention_kernel, block_b=bb, seq_len=n, num_heads=num_heads,
        head_dim=head_dim, attn_eps=1e-9, ln_eps=1e-5)

    in_specs = [
        pl.BlockSpec((bb, n, in_dim), lambda i: (i, 0, 0)),      # x (Bb full-sequence tiles)
        pl.BlockSpec((1, in_dim), lambda i: (0, 0)),             # layernorm gamma
        pl.BlockSpec((1, in_dim), lambda i: (0, 0)),             # layernorm beta
        pl.BlockSpec((in_dim, 3 * hdt), lambda i: (0, 0)),       # fused W_qkv (pre-T, q pre-scaled)
        pl.BlockSpec((1, 3 * hdt), lambda i: (0, 0)),            # fused b_qkv
        pl.BlockSpec((hdt, out_dim), lambda i: (0, 0)),          # result_proj W (pre-T)
        pl.BlockSpec((1, out_dim), lambda i: (0, 0)),            # result_proj b
    ]

    out = pl.pallas_call(
        kernel,
        grid=(b // bb,),
        in_specs=in_specs,
        out_specs=pl.BlockSpec((bb, n, out_dim), lambda i: (i, 0, 0)),
        out_shape=jax.ShapeDtypeStruct((b, n, out_dim), jnp.float32),
        compiler_params=pltpu.CompilerParams(
            dimension_semantics=("parallel",)),
    )(xb, gamma, beta, wqkv, bqkv, wp, bp)

    return out.reshape(*lead, n, out_dim)


def self_attention_reference(x, params, *, num_heads):
    """Pure-JAX f32 reference mirroring the PyTorch module semantics."""
    HI = jax.lax.Precision.HIGHEST
    mu = jnp.mean(x, axis=-1, keepdims=True)
    xc = x - mu
    var = jnp.mean(xc * xc, axis=-1, keepdims=True)
    xn = xc * jax.lax.rsqrt(var + 1e-5) * params['gamma'] + params['beta']
    scale = float(params['w_q'][0].shape[0]) ** -0.5
    heads = []
    for h in range(num_heads):
        q = jnp.matmul(xn, params['w_q'][h].T, precision=HI) + params['b_q'][h]
        k = jnp.matmul(xn, params['w_k'][h].T, precision=HI) + params['b_k'][h]
        v = jnp.matmul(xn, params['w_v'][h].T, precision=HI) + params['b_v'][h]
        dots = jnp.einsum('...jd,...id->...ji', q, k, precision=HI) * scale
        attn = jax.nn.softmax(dots, axis=-1) + 1e-9
        heads.append(jnp.einsum('...ji,...id->...jd', attn, v, precision=HI))
    cat = jnp.concatenate(heads, axis=-1)
    return jnp.matmul(cat, params['w_proj'].T, precision=HI) + params['b_proj']


if __name__ == "__main__":
    B, N, IN_DIM, OUT_DIM, HEADS = 4, 256, 16, 16, 2

    kit = iter(jax.random.split(jax.random.PRNGKey(0), 32))

    def uniform(shape, bound):
        return jax.random.uniform(next(kit), shape, minval=-bound, maxval=bound,
                                  dtype=jnp.float32)

    bound_in = 1.0 / (IN_DIM ** 0.5)                 # nn.Linear default init bound
    bound_proj = 1.0 / ((OUT_DIM * HEADS) ** 0.5)

    params = {
        'gamma': (1.0 + 0.1 * jax.random.normal(next(kit), (IN_DIM,))).astype(jnp.float32),
        'beta': (0.05 * jax.random.normal(next(kit), (IN_DIM,))).astype(jnp.float32),
        'w_q': [uniform((OUT_DIM, IN_DIM), bound_in) for _ in range(HEADS)],
        'b_q': [uniform((OUT_DIM,), bound_in) for _ in range(HEADS)],
        'w_k': [uniform((OUT_DIM, IN_DIM), bound_in) for _ in range(HEADS)],
        'b_k': [uniform((OUT_DIM,), bound_in) for _ in range(HEADS)],
        'w_v': [uniform((OUT_DIM, IN_DIM), bound_in) for _ in range(HEADS)],
        'b_v': [uniform((OUT_DIM,), bound_in) for _ in range(HEADS)],
        'w_proj': uniform((OUT_DIM, OUT_DIM * HEADS), bound_proj),
        'b_proj': uniform((OUT_DIM,), bound_proj),
    }

    x = jax.random.normal(next(kit), (B, N, IN_DIM), dtype=jnp.float32)

    out = self_attention_forward(x, params, num_heads=HEADS)
    out = jax.block_until_ready(out)

    ref = jax.block_until_ready(self_attention_reference(x, params, num_heads=HEADS))

    assert out.shape == (B, N, OUT_DIM)
    # Tolerance relaxed (5e-2): kernel matmuls now use DEFAULT precision (single-pass
    # bf16 MXU, f32 accumulation) per the performance review, vs. an f32 HIGHEST reference.
    err = float(jnp.max(jnp.abs(out - ref)))
    assert err < 5e-2, f"max abs err {err}"
    print("KERNEL_OK")
</pallas_src>

<mosaic_0001>
module attributes {stable_mosaic.version = 11 : i64} {
  func.func @self_attention_kernel(%arg0: i32, %arg1: memref<2x256x16xf32, #tpu.memory_space<vmem>>, %arg2: memref<1x16xf32, #tpu.memory_space<vmem>>, %arg3: memref<1x16xf32, #tpu.memory_space<vmem>>, %arg4: memref<16x96xf32, #tpu.memory_space<vmem>>, %arg5: memref<1x96xf32, #tpu.memory_space<vmem>>, %arg6: memref<32x16xf32, #tpu.memory_space<vmem>>, %arg7: memref<1x16xf32, #tpu.memory_space<vmem>>, %arg8: memref<2x256x16xf32, #tpu.memory_space<vmem>>) attributes {dimension_semantics = [#tpu.dimension_semantics<parallel>], iteration_bounds = array<i64: 2>, scalar_prefetch = 0 : i64, scratch_operands = 0 : i64, tpu.core_type = #tpu.core_type<tc>, window_params = [{transform_indices = @transform_0, window_bounds = array<i64: 2, 256, 16>}, {pipeline_mode = #tpu.pipeline_mode<synchronous>, transform_indices = @transform_1, window_bounds = array<i64: 1, 16>}, {pipeline_mode = #tpu.pipeline_mode<synchronous>, transform_indices = @transform_2, window_bounds = array<i64: 1, 16>}, {pipeline_mode = #tpu.pipeline_mode<synchronous>, transform_indices = @transform_3, window_bounds = array<i64: 16, 96>}, {pipeline_mode = #tpu.pipeline_mode<synchronous>, transform_indices = @transform_4, window_bounds = array<i64: 1, 96>}, {pipeline_mode = #tpu.pipeline_mode<synchronous>, transform_indices = @transform_5, window_bounds = array<i64: 32, 16>}, {pipeline_mode = #tpu.pipeline_mode<synchronous>, transform_indices = @transform_6, window_bounds = array<i64: 1, 16>}, {transform_indices = @transform_7, window_bounds = array<i64: 2, 256, 16>}]} {
    %c0 = arith.constant 0 : index
    %c0_0 = arith.constant 0 : index
    %c0_1 = arith.constant 0 : index
    %0 = vector.load %arg1[%c0, %c0_0, %c0_1] : memref<2x256x16xf32, #tpu.memory_space<vmem>>, vector<2x256x16xf32>
    %1 = vector.shape_cast %0 : vector<2x256x16xf32> to vector<512x16xf32>
    %cst = arith.constant dense<0.000000e+00> : vector<512xf32>
    %2 = vector.multi_reduction <add>, %1, %cst [1] : vector<512x16xf32> to vector<512xf32>
    %3 = vector.shape_cast %2 : vector<512xf32> to vector<512x1xf32>
    %cst_2 = arith.constant 1.600000e+01 : f32
    %4 = vector.broadcast %cst_2 : f32 to vector<512x1xf32>
    %5 = arith.divf %3, %4 : vector<512x1xf32>
    %6 = vector.broadcast %5 : vector<512x1xf32> to vector<512x16xf32>
    %7 = arith.subf %1, %6 : vector<512x16xf32>
    %8 = arith.mulf %7, %7 : vector<512x16xf32>
    %cst_3 = arith.constant dense<0.000000e+00> : vector<512xf32>
    %9 = vector.multi_reduction <add>, %8, %cst_3 [1] : vector<512x16xf32> to vector<512xf32>
    %10 = vector.shape_cast %9 : vector<512xf32> to vector<512x1xf32>
    %cst_4 = arith.constant 1.600000e+01 : f32
    %11 = vector.broadcast %cst_4 : f32 to vector<512x1xf32>
    %12 = arith.divf %10, %11 : vector<512x1xf32>
    %cst_5 = arith.constant 9.99999974E-6 : f32
    %13 = vector.broadcast %cst_5 : f32 to vector<512x1xf32>
    %14 = arith.addf %12, %13 : vector<512x1xf32>
    %15 = math.rsqrt %14 : vector<512x1xf32>
    %16 = vector.broadcast %15 : vector<512x1xf32> to vector<512x16xf32>
    %17 = arith.mulf %7, %16 : vector<512x16xf32>
    %c0_6 = arith.constant 0 : index
    %c0_7 = arith.constant 0 : index
    %18 = vector.load %arg2[%c0_6, %c0_7] : memref<1x16xf32, #tpu.memory_space<vmem>>, vector<1x16xf32>
    %19 = vector.broadcast %18 : vector<1x16xf32> to vector<512x16xf32>
    %20 = arith.mulf %17, %19 : vector<512x16xf32>
    %c0_8 = arith.constant 0 : index
    %c0_9 = arith.constant 0 : index
    %21 = vector.load %arg3[%c0_8, %c0_9] : memref<1x16xf32, #tpu.memory_space<vmem>>, vector<1x16xf32>
    %22 = vector.broadcast %21 : vector<1x16xf32> to vector<512x16xf32>
    %23 = arith.addf %20, %22 : vector<512x16xf32>
    %c0_10 = arith.constant 0 : index
    %c0_11 = arith.constant 0 : index
    %24 = vector.load %arg4[%c0_10, %c0_11] : memref<16x96xf32, #tpu.memory_space<vmem>>, vector<16x96xf32>
    %cst_12 = arith.constant dense<0.000000e+00> : vector<512x96xf32>
    %25 = tpu.matmul %23, %24, %cst_12 {dimension_numbers = #tpu.dot_dimension_numbers<[1], [0], [0], [1], [0, 0, 1, 1], [], []>} : vector<512x16xf32>, vector<16x96xf32>, vector<512x96xf32> -> vector<512x96xf32>
    %c0_13 = arith.constant 0 : index
    %c0_14 = arith.constant 0 : index
    %26 = vector.load %arg5[%c0_13, %c0_14] : memref<1x96xf32, #tpu.memory_space<vmem>>, vector<1x96xf32>
    %27 = vector.broadcast %26 : vector<1x96xf32> to vector<512x96xf32>
    %28 = arith.addf %25, %27 : vector<512x96xf32>
    %c0_15 = arith.constant 0 : index
    %c0_16 = arith.constant 0 : index
    %29 = vector.load %arg6[%c0_15, %c0_16] : memref<32x16xf32, #tpu.memory_space<vmem>>, vector<32x16xf32>
    %c0_17 = arith.constant 0 : index
    %c0_18 = arith.constant 0 : index
    %30 = vector.load %arg7[%c0_17, %c0_18] : memref<1x16xf32, #tpu.memory_space<vmem>>, vector<1x16xf32>
    %31 = vector.extract_strided_slice %28 {offsets = [0, 0], sizes = [256, 16], strides = [1, 1]} : vector<512x96xf32> to vector<256x16xf32>
    %32 = vector.extract_strided_slice %28 {offsets = [0, 32], sizes = [256, 16], strides = [1, 1]} : vector<512x96xf32> to vector<256x16xf32>
    %33 = vector.extract_strided_slice %28 {offsets = [0, 64], sizes = [256, 16], strides = [1, 1]} : vector<512x96xf32> to vector<256x16xf32>
    %cst_19 = arith.constant dense<0.000000e+00> : vector<256x256xf32>
    %34 = tpu.matmul %31, %32, %cst_19 {dimension_numbers = #tpu.dot_dimension_numbers<[1], [1], [0], [0], [0, 0, 1, 0], [], []>} : vector<256x16xf32>, vector<256x16xf32>, vector<256x256xf32> -> vector<256x256xf32>
    %cst_20 = arith.constant dense<0xFF800000> : vector<256xf32>
    %35 = vector.multi_reduction <maximumf>, %34, %cst_20 [1] : vector<256x256xf32> to vector<256xf32>
    %36 = vector.shape_cast %35 : vector<256xf32> to vector<256x1xf32>
    %37 = vector.broadcast %36 : vector<256x1xf32> to vector<256x256xf32>
    %38 = arith.subf %34, %37 : vector<256x256xf32>
    %39 = math.exp %38 : vector<256x256xf32>
    %cst_21 = arith.constant dense<0.000000e+00> : vector<256xf32>
    %40 = vector.multi_reduction <add>, %39, %cst_21 [1] : vector<256x256xf32> to vector<256xf32>
    %41 = vector.shape_cast %40 : vector<256xf32> to vector<256x1xf32>
    %cst_22 = arith.constant dense<0.000000e+00> : vector<256x16xf32>
    %42 = tpu.matmul %39, %33, %cst_22 {dimension_numbers = #tpu.dot_dimension_numbers<[1], [0], [0], [1], [0, 0, 1, 1], [], []>} : vector<256x256xf32>, vector<256x16xf32>, vector<256x16xf32> -> vector<256x16xf32>
    %43 = tpu.reciprocal %41 {approx = true} : vector<256x1xf32> -> vector<256x1xf32>
    %44 = vector.broadcast %43 : vector<256x1xf32> to vector<256x16xf32>
    %45 = arith.mulf %42, %44 : vector<256x16xf32>
    %cst_23 = arith.constant dense<0.000000e+00> : vector<16xf32>
    %46 = vector.multi_reduction <add>, %33, %cst_23 [0] : vector<256x16xf32> to vector<16xf32>
    %47 = vector.shape_cast %46 : vector<16xf32> to vector<1x16xf32>
    %cst_24 = arith.constant 9.99999971E-10 : f32
    %48 = vector.broadcast %cst_24 : f32 to vector<1x16xf32>
    %49 = arith.mulf %48, %47 : vector<1x16xf32>
    %50 = vector.broadcast %49 : vector<1x16xf32> to vector<256x16xf32>
    %51 = arith.addf %45, %50 : vector<256x16xf32>
    %52 = vector.extract_strided_slice %29 {offsets = [0, 0], sizes = [16, 16], strides = [1, 1]} : vector<32x16xf32> to vector<16x16xf32>
    %cst_25 = arith.constant dense<0.000000e+00> : vector<256x16xf32>
    %53 = tpu.matmul %51, %52, %cst_25 {dimension_numbers = #tpu.dot_dimension_numbers<[1], [0], [0], [1], [0, 0, 1, 1], [], []>} : vector<256x16xf32>, vector<16x16xf32>, vector<256x16xf32> -> vector<256x16xf32>
    %54 = vector.extract_strided_slice %28 {offsets = [0, 16], sizes = [256, 16], strides = [1, 1]} : vector<512x96xf32> to vector<256x16xf32>
    %55 = vector.extract_strided_slice %28 {offsets = [0, 48], sizes = [256, 16], strides = [1, 1]} : vector<512x96xf32> to vector<256x16xf32>
    %56 = vector.extract_strided_slice %28 {offsets = [0, 80], sizes = [256, 16], strides = [1, 1]} : vector<512x96xf32> to vector<256x16xf32>
    %cst_26 = arith.constant dense<0.000000e+00> : vector<256x256xf32>
    %57 = tpu.matmul %54, %55, %cst_26 {dimension_numbers = #tpu.dot_dimension_numbers<[1], [1], [0], [0], [0, 0, 1, 0], [], []>} : vector<256x16xf32>, vector<256x16xf32>, vector<256x256xf32> -> vector<256x256xf32>
    %cst_27 = arith.constant dense<0xFF800000> : vector<256xf32>
    %58 = vector.multi_reduction <maximumf>, %57, %cst_27 [1] : vector<256x256xf32> to vector<256xf32>
    %59 = vector.shape_cast %58 : vector<256xf32> to vector<256x1xf32>
    %60 = vector.broadcast %59 : vector<256x1xf32> to vector<256x256xf32>
    %61 = arith.subf %57, %60 : vector<256x256xf32>
    %62 = math.exp %61 : vector<256x256xf32>
    %cst_28 = arith.constant dense<0.000000e+00> : vector<256xf32>
    %63 = vector.multi_reduction <add>, %62, %cst_28 [1] : vector<256x256xf32> to vector<256xf32>
    %64 = vector.shape_cast %63 : vector<256xf32> to vector<256x1xf32>
    %cst_29 = arith.constant dense<0.000000e+00> : vector<256x16xf32>
    %65 = tpu.matmul %62, %56, %cst_29 {dimension_numbers = #tpu.dot_dimension_numbers<[1], [0], [0], [1], [0, 0, 1, 1], [], []>} : vector<256x256xf32>, vector<256x16xf32>, vector<256x16xf32> -> vector<256x16xf32>
    %66 = tpu.reciprocal %64 {approx = true} : vector<256x1xf32> -> vector<256x1xf32>
    %67 = vector.broadcast %66 : vector<256x1xf32> to vector<256x16xf32>
    %68 = arith.mulf %65, %67 : vector<256x16xf32>
    %cst_30 = arith.constant dense<0.000000e+00> : vector<16xf32>
    %69 = vector.multi_reduction <add>, %56, %cst_30 [0] : vector<256x16xf32> to vector<16xf32>
    %70 = vector.shape_cast %69 : vector<16xf32> to vector<1x16xf32>
    %cst_31 = arith.constant 9.99999971E-10 : f32
    %71 = vector.broadcast %cst_31 : f32 to vector<1x16xf32>
    %72 = arith.mulf %71, %70 : vector<1x16xf32>
    %73 = vector.broadcast %72 : vector<1x16xf32> to vector<256x16xf32>
    %74 = arith.addf %68, %73 : vector<256x16xf32>
    %75 = vector.extract_strided_slice %29 {offsets = [16, 0], sizes = [16, 16], strides = [1, 1]} : vector<32x16xf32> to vector<16x16xf32>
    %cst_32 = arith.constant dense<0.000000e+00> : vector<256x16xf32>
    %76 = tpu.matmul %74, %75, %cst_32 {dimension_numbers = #tpu.dot_dimension_numbers<[1], [0], [0], [1], [0, 0, 1, 1], [], []>} : vector<256x16xf32>, vector<16x16xf32>, vector<256x16xf32> -> vector<256x16xf32>
    %77 = arith.addf %53, %76 : vector<256x16xf32>
    %78 = vector.broadcast %30 : vector<1x16xf32> to vector<256x16xf32>
    %79 = arith.addf %77, %78 : vector<256x16xf32>
    %c0_33 = arith.constant 0 : index
    %c0_34 = arith.constant 0 : index
    %c0_35 = arith.constant 0 : index
    %80 = vector.load %arg8[%c0_33, %c0_34, %c0_35] : memref<2x256x16xf32, #tpu.memory_space<vmem>>, vector<1x256x16xf32>
    %81 = vector.shape_cast %80 : vector<1x256x16xf32> to vector<256x16xf32>
    %82 = vector.shape_cast %79 : vector<256x16xf32> to vector<1x256x16xf32>
    tpu.vector_store %arg8[%c0_33, %c0_34, %c0_35], %82 {strides = array<i32>} : memref<2x256x16xf32, #tpu.memory_space<vmem>>, vector<1x256x16xf32>,
    %83 = vector.extract_strided_slice %28 {offsets = [256, 0], sizes = [256, 16], strides = [1, 1]} : vector<512x96xf32> to vector<256x16xf32>
    %84 = vector.extract_strided_slice %28 {offsets = [256, 32], sizes = [256, 16], strides = [1, 1]} : vector<512x96xf32> to vector<256x16xf32>
    %85 = vector.extract_strided_slice %28 {offsets = [256, 64], sizes = [256, 16], strides = [1, 1]} : vector<512x96xf32> to vector<256x16xf32>
    %cst_36 = arith.constant dense<0.000000e+00> : vector<256x256xf32>
    %86 = tpu.matmul %83, %84, %cst_36 {dimension_numbers = #tpu.dot_dimension_numbers<[1], [1], [0], [0], [0, 0, 1, 0], [], []>} : vector<256x16xf32>, vector<256x16xf32>, vector<256x256xf32> -> vector<256x256xf32>
    %cst_37 = arith.constant dense<0xFF800000> : vector<256xf32>
    %87 = vector.multi_reduction <maximumf>, %86, %cst_37 [1] : vector<256x256xf32> to vector<256xf32>
    %88 = vector.shape_cast %87 : vector<256xf32> to vector<256x1xf32>
    %89 = vector.broadcast %88 : vector<256x1xf32> to vector<256x256xf32>
    %90 = arith.subf %86, %89 : vector<256x256xf32>
    %91 = math.exp %90 : vector<256x256xf32>
    %cst_38 = arith.constant dense<0.000000e+00> : vector<256xf32>
    %92 = vector.multi_reduction <add>, %91, %cst_38 [1] : vector<256x256xf32> to vector<256xf32>
    %93 = vector.shape_cast %92 : vector<256xf32> to vector<256x1xf32>
    %cst_39 = arith.constant dense<0.000000e+00> : vector<256x16xf32>
    %94 = tpu.matmul %91, %85, %cst_39 {dimension_numbers = #tpu.dot_dimension_numbers<[1], [0], [0], [1], [0, 0, 1, 1], [], []>} : vector<256x256xf32>, vector<256x16xf32>, vector<256x16xf32> -> vector<256x16xf32>
    %95 = tpu.reciprocal %93 {approx = true} : vector<256x1xf32> -> vector<256x1xf32>
    %96 = vector.broadcast %95 : vector<256x1xf32> to vector<256x16xf32>
    %97 = arith.mulf %94, %96 : vector<256x16xf32>
    %cst_40 = arith.constant dense<0.000000e+00> : vector<16xf32>
    %98 = vector.multi_reduction <add>, %85, %cst_40 [0] : vector<256x16xf32> to vector<16xf32>
    %99 = vector.shape_cast %98 : vector<16xf32> to vector<1x16xf32>
    %cst_41 = arith.constant 9.99999971E-10 : f32
    %100 = vector.broadcast %cst_41 : f32 to vector<1x16xf32>
    %101 = arith.mulf %100, %99 : vector<1x16xf32>
    %102 = vector.broadcast %101 : vector<1x16xf32> to vector<256x16xf32>
    %103 = arith.addf %97, %102 : vector<256x16xf32>
    %104 = vector.extract_strided_slice %29 {offsets = [0, 0], sizes = [16, 16], strides = [1, 1]} : vector<32x16xf32> to vector<16x16xf32>
    %cst_42 = arith.constant dense<0.000000e+00> : vector<256x16xf32>
    %105 = tpu.matmul %103, %104, %cst_42 {dimension_numbers = #tpu.dot_dimension_numbers<[1], [0], [0], [1], [0, 0, 1, 1], [], []>} : vector<256x16xf32>, vector<16x16xf32>, vector<256x16xf32> -> vector<256x16xf32>
    %106 = vector.extract_strided_slice %28 {offsets = [256, 16], sizes = [256, 16], strides = [1, 1]} : vector<512x96xf32> to vector<256x16xf32>
    %107 = vector.extract_strided_slice %28 {offsets = [256, 48], sizes = [256, 16], strides = [1, 1]} : vector<512x96xf32> to vector<256x16xf32>
    %108 = vector.extract_strided_slice %28 {offsets = [256, 80], sizes = [256, 16], strides = [1, 1]} : vector<512x96xf32> to vector<256x16xf32>
    %cst_43 = arith.constant dense<0.000000e+00> : vector<256x256xf32>
    %109 = tpu.matmul %106, %107, %cst_43 {dimension_numbers = #tpu.dot_dimension_numbers<[1], [1], [0], [0], [0, 0, 1, 0], [], []>} : vector<256x16xf32>, vector<256x16xf32>, vector<256x256xf32> -> vector<256x256xf32>
    %cst_44 = arith.constant dense<0xFF800000> : vector<256xf32>
    %110 = vector.multi_reduction <maximumf>, %109, %cst_44 [1] : vector<256x256xf32> to vector<256xf32>
    %111 = vector.shape_cast %110 : vector<256xf32> to vector<256x1xf32>
    %112 = vector.broadcast %111 : vector<256x1xf32> to vector<256x256xf32>
    %113 = arith.subf %109, %112 : vector<256x256xf32>
    %114 = math.exp %113 : vector<256x256xf32>
    %cst_45 = arith.constant dense<0.000000e+00> : vector<256xf32>
    %115 = vector.multi_reduction <add>, %114, %cst_45 [1] : vector<256x256xf32> to vector<256xf32>
    %116 = vector.shape_cast %115 : vector<256xf32> to vector<256x1xf32>
    %cst_46 = arith.constant dense<0.000000e+00> : vector<256x16xf32>
    %117 = tpu.matmul %114, %108, %cst_46 {dimension_numbers = #tpu.dot_dimension_numbers<[1], [0], [0], [1], [0, 0, 1, 1], [], []>} : vector<256x256xf32>, vector<256x16xf32>, vector<256x16xf32> -> vector<256x16xf32>
    %118 = tpu.reciprocal %116 {approx = true} : vector<256x1xf32> -> vector<256x1xf32>
    %119 = vector.broadcast %118 : vector<256x1xf32> to vector<256x16xf32>
    %120 = arith.mulf %117, %119 : vector<256x16xf32>
    %cst_47 = arith.constant dense<0.000000e+00> : vector<16xf32>
    %121 = vector.multi_reduction <add>, %108, %cst_47 [0] : vector<256x16xf32> to vector<16xf32>
    %122 = vector.shape_cast %121 : vector<16xf32> to vector<1x16xf32>
    %cst_48 = arith.constant 9.99999971E-10 : f32
    %123 = vector.broadcast %cst_48 : f32 to vector<1x16xf32>
    %124 = arith.mulf %123, %122 : vector<1x16xf32>
    %125 = vector.broadcast %124 : vector<1x16xf32> to vector<256x16xf32>
    %126 = arith.addf %120, %125 : vector<256x16xf32>
    %127 = vector.extract_strided_slice %29 {offsets = [16, 0], sizes = [16, 16], strides = [1, 1]} : vector<32x16xf32> to vector<16x16xf32>
    %cst_49 = arith.constant dense<0.000000e+00> : vector<256x16xf32>
    %128 = tpu.matmul %126, %127, %cst_49 {dimension_numbers = #tpu.dot_dimension_numbers<[1], [0], [0], [1], [0, 0, 1, 1], [], []>} : vector<256x16xf32>, vector<16x16xf32>, vector<256x16xf32> -> vector<256x16xf32>
    %129 = arith.addf %105, %128 : vector<256x16xf32>
    %130 = vector.broadcast %30 : vector<1x16xf32> to vector<256x16xf32>
    %131 = arith.addf %129, %130 : vector<256x16xf32>
    %c1 = arith.constant 1 : index
    %c0_50 = arith.constant 0 : index
    %c0_51 = arith.constant 0 : index
    %132 = vector.load %arg8[%c1, %c0_50, %c0_51] : memref<2x256x16xf32, #tpu.memory_space<vmem>>, vector<1x256x16xf32>
    %133 = vector.shape_cast %132 : vector<1x256x16xf32> to vector<256x16xf32>
    %134 = vector.shape_cast %131 : vector<256x16xf32> to vector<1x256x16xf32>
    tpu.vector_store %arg8[%c1, %c0_50, %c0_51], %134 {strides = array<i32>} : memref<2x256x16xf32, #tpu.memory_space<vmem>>, vector<1x256x16xf32>,
    return
  }
  func.func @transform_0(%arg0: i32) -> (i32, i32, i32) {
    %c0_i32 = arith.constant 0 : i32
    %c0_i32_0 = arith.constant 0 : i32
    %c0_i32_1 = arith.constant 0 : i32
    return %arg0, %c0_i32, %c0_i32_0 : i32, i32, i32
  }
  func.func @transform_1(%arg0: i32) -> (i32, i32) {
    %c0_i32 = arith.constant 0 : i32
    %c0_i32_0 = arith.constant 0 : i32
    %c0_i32_1 = arith.constant 0 : i32
    return %c0_i32, %c0_i32_0 : i32, i32
  }
  func.func @transform_2(%arg0: i32) -> (i32, i32) {
    %c0_i32 = arith.constant 0 : i32
    %c0_i32_0 = arith.constant 0 : i32
    %c0_i32_1 = arith.constant 0 : i32
    return %c0_i32, %c0_i32_0 : i32, i32
  }
  func.func @transform_3(%arg0: i32) -> (i32, i32) {
    %c0_i32 = arith.constant 0 : i32
    %c0_i32_0 = arith.constant 0 : i32
    %c0_i32_1 = arith.constant 0 : i32
    return %c0_i32, %c0_i32_0 : i32, i32
  }
  func.func @transform_4(%arg0: i32) -> (i32, i32) {
    %c0_i32 = arith.constant 0 : i32
    %c0_i32_0 = arith.constant 0 : i32
    %c0_i32_1 = arith.constant 0 : i32
    return %c0_i32, %c0_i32_0 : i32, i32
  }
  func.func @transform_5(%arg0: i32) -> (i32, i32) {
    %c0_i32 = arith.constant 0 : i32
    %c0_i32_0 = arith.constant 0 : i32
    %c0_i32_1 = arith.constant 0 : i32
    return %c0_i32, %c0_i32_0 : i32, i32
  }
  func.func @transform_6(%arg0: i32) -> (i32, i32) {
    %c0_i32 = arith.constant 0 : i32
    %c0_i32_0 = arith.constant 0 : i32
    %c0_i32_1 = arith.constant 0 : i32
    return %c0_i32, %c0_i32_0 : i32, i32
  }
  func.func @transform_7(%arg0: i32) -> (i32, i32, i32) {
    %c0_i32 = arith.constant 0 : i32
    %c0_i32_0 = arith.constant 0 : i32
    %c0_i32_1 = arith.constant 0 : i32
    return %arg0, %c0_i32, %c0_i32_0 : i32, i32, i32
  }
}

</mosaic_0001>

<llo_original>
// kernel: tpu_custom_call.1
$region0: #{tpu_custom_call.1}
  #allocation0 [shape = 'u32[]', space=smem, size = 0x4, offset = 0x4, fixed_abs, tag = 'smem constant byte address 0x4 - core index']
  #allocation1 [shape = 'u32[144,128]{1,0:T(1,128)}', space=vmem, size = 0x12000, scoped, tag = 'internal scratch']
  %s0 = inlined_call_operand.vmem [shape: f32[4,256,16], index: 0, kind: input, shape index: {}]
  %s1 = inlined_call_operand.vmem [shape: f32[1,16], index: 1, kind: input, shape index: {}]
  %s2 = inlined_call_operand.vmem [shape: f32[1,16], index: 2, kind: input, shape index: {}]
  %s3 = inlined_call_operand.vmem [shape: f32[16,96], index: 3, kind: input, shape index: {}]
  %s4 = inlined_call_operand.vmem [shape: f32[1,96], index: 4, kind: input, shape index: {}]
  %s5 = inlined_call_operand.vmem [shape: f32[32,16], index: 5, kind: input, shape index: {}]
  %s6 = inlined_call_operand.vmem [shape: f32[1,16], index: 6, kind: input, shape index: {}]
  %s7 = inlined_call_operand.vmem [shape: f32[4,256,16], index: 7, kind: output, shape index: {}]
  %s8 = sld [smem:[#allocation0]]
  $region61: #{tpu_custom_call.1} parent=0
    _
  %s10 = ssub.s32 1, %s8
  %s11 = scalar_select 0, %s10, %s8
  loop: start=0, step=1, limit=4
  $region2: #{tpu_custom_call.1} parent=0 // loop_pre_header
    _
  $region3: #{tpu_custom_call.1} parent=0 // loop_header
    %s13 = sphi 0, %s17
    %p14 = scmp.ge.s32.totalorder %s13, 4
    %s23 = sphi 0, %s25
    %s26 = sphi 0, %s23
    %s27 = sphi 0, %s26
    %s43 = sphi 0, %s27
    %s47 = sphi 0, %s47
    %s49 = sphi 0, %s47
    %s50 = sphi 0, %s49
    %s64 = sphi 0, %s50
    %s68 = sphi 0, %s68
    %s70 = sphi 0, %s68
    %s71 = sphi 0, %s70
    %s85 = sphi 0, %s71
    %s89 = sphi 0, %s89
    %s91 = sphi 0, %s89
    %s92 = sphi 0, %s91
    %s106 = sphi 0, %s92
    %s110 = sphi 0, %s110
    %s112 = sphi 0, %s110
    %s113 = sphi 0, %s112
    %s127 = sphi 0, %s113
    %s131 = sphi 0, %s131
    %s133 = sphi 0, %s131
    %s134 = sphi 0, %s133
    %s148 = sphi 0, %s134
    %s152 = sphi 0, %s152
    %s154 = sphi 0, %s152
    %s155 = sphi 0, %s154
    %s169 = sphi 0, %s155
    %s175 = sphi 0, %s177
    %s178 = sphi 0, %s175
    %s179 = sphi 0, %s178
    %s195 = sphi 0, %s179
  $region4: #{tpu_custom_call.1} parent=0 // loop_header_branch
    %16 = sbr.rel (%p14) target = $region8
  $region5: #{tpu_custom_call.1} parent=0 // loop_body
    %s18 = ssub.s32 %s13, 1
    %s19 = ssub.s32 %s13, 2
    %s20 = sadd.s32 %s13, 1
    %s21 = ssub.s32 %s13, %s20
    %p22 = scmp.eq.s32.totalorder %s21, 0
    %s24 = sadd.s32 %s23, 1
    %s25 = scalar_select %p22, %s23, %s24
    %p28 = pneg %p22
    %p29 = scmp.eq.s32.totalorder %s13, 1
    %p30 = por %p28, %p29
    %p31 = scmp.ne.s32.totalorder %s23, %s26
    %p32 = scmp.eq.s32.totalorder %s13, 0
    %p33 = por %p31, %p32
    %p34 = scmp.ne.s32.totalorder %s23, %s26
    %p35 = scmp.eq.s32.totalorder %s18, 1
    %p36 = por %p34, %p35
    %p37 = scmp.ne.s32.totalorder %s26, %s27
    %p38 = scmp.eq.s32.totalorder %s18, 0
    %p39 = por %p37, %p38
    %p40 = scmp.ne.s32.totalorder %s26, %s27
    %p41 = scmp.eq.s32.totalorder %s19, 1
    %p42 = por %p40, %p41
    %p44 = scmp.ne.s32.totalorder %s27, %s43
    %p45 = scmp.eq.s32.totalorder %s19, 0
    %p46 = por %p44, %p45
    %s48 = sadd.s32 %s47, 1
    %p51 = scmp.eq.s32.totalorder %s13, 1
    %p52 = scmp.ne.s32.totalorder %s47, %s49
    %p53 = scmp.eq.s32.totalorder %s13, 0
    %p54 = por %p52, %p53
    %p55 = scmp.ne.s32.totalorder %s47, %s49
    %p56 = scmp.eq.s32.totalorder %s18, 1
    %p57 = por %p55, %p56
    %p58 = scmp.ne.s32.totalorder %s49, %s50
    %p59 = scmp.eq.s32.totalorder %s18, 0
    %p60 = por %p58, %p59
    %p61 = scmp.ne.s32.totalorder %s49, %s50
    %p62 = scmp.eq.s32.totalorder %s19, 1
    %p63 = por %p61, %p62
    %p65 = scmp.ne.s32.totalorder %s50, %s64
    %p66 = scmp.eq.s32.totalorder %s19, 0
    %p67 = por %p65, %p66
    %s69 = sadd.s32 %s68, 1
    %p72 = scmp.eq.s32.totalorder %s13, 1
    %p73 = scmp.ne.s32.totalorder %s68, %s70
    %p74 = scmp.eq.s32.totalorder %s13, 0
    %p75 = por %p73, %p74
    %p76 = scmp.ne.s32.totalorder %s68, %s70
    %p77 = scmp.eq.s32.totalorder %s18, 1
    %p78 = por %p76, %p77
    %p79 = scmp.ne.s32.totalorder %s70, %s71
    %p80 = scmp.eq.s32.totalorder %s18, 0
    %p81 = por %p79, %p80
    %p82 = scmp.ne.s32.totalorder %s70, %s71
    %p83 = scmp.eq.s32.totalorder %s19, 1
    %p84 = por %p82, %p83
    %p86 = scmp.ne.s32.totalorder %s71, %s85
    %p87 = scmp.eq.s32.totalorder %s19, 0
    %p88 = por %p86, %p87
    %s90 = sadd.s32 %s89, 1
    %p93 = scmp.eq.s32.totalorder %s13, 1
    %p94 = scmp.ne.s32.totalorder %s89, %s91
    %p95 = scmp.eq.s32.totalorder %s13, 0
    %p96 = por %p94, %p95
    %p97 = scmp.ne.s32.totalorder %s89, %s91
    %p98 = scmp.eq.s32.totalorder %s18, 1
    %p99 = por %p97, %p98
    %p100 = scmp.ne.s32.totalorder %s91, %s92
    %p101 = scmp.eq.s32.totalorder %s18, 0
    %p102 = por %p100, %p101
    %p103 = scmp.ne.s32.totalorder %s91, %s92
    %p104 = scmp.eq.s32.totalorder %s19, 1
    %p105 = por %p103, %p104
    %p107 = scmp.ne.s32.totalorder %s92, %s106
    %p108 = scmp.eq.s32.totalorder %s19, 0
    %p109 = por %p107, %p108
    %s111 = sadd.s32 %s110, 1
    %p114 = scmp.eq.s32.totalorder %s13, 1
    %p115 = scmp.ne.s32.totalorder %s110, %s112
    %p116 = scmp.eq.s32.totalorder %s13, 0
    %p117 = por %p115, %p116
    %p118 = scmp.ne.s32.totalorder %s110, %s112
    %p119 = scmp.eq.s32.totalorder %s18, 1
    %p120 = por %p118, %p119
    %p121 = scmp.ne.s32.totalorder %s112, %s113
    %p122 = scmp.eq.s32.totalorder %s18, 0
    %p123 = por %p121, %p122
    %p124 = scmp.ne.s32.totalorder %s112, %s113
    %p125 = scmp.eq.s32.totalorder %s19, 1
    %p126 = por %p124, %p125
    %p128 = scmp.ne.s32.totalorder %s113, %s127
    %p129 = scmp.eq.s32.totalorder %s19, 0
    %p130 = por %p128, %p129
    %s132 = sadd.s32 %s131, 1
    %p135 = scmp.eq.s32.totalorder %s13, 1
    %p136 = scmp.ne.s32.totalorder %s131, %s133
    %p137 = scmp.eq.s32.totalorder %s13, 0
    %p138 = por %p136, %p137
    %p139 = scmp.ne.s32.totalorder %s131, %s133
    %p140 = scmp.eq.s32.totalorder %s18, 1
    %p141 = por %p139, %p140
    %p142 = scmp.ne.s32.totalorder %s133, %s134
    %p143 = scmp.eq.s32.totalorder %s18, 0
    %p144 = por %p142, %p143
    %p145 = scmp.ne.s32.totalorder %s133, %s134
    %p146 = scmp.eq.s32.totalorder %s19, 1
    %p147 = por %p145, %p146
    %p149 = scmp.ne.s32.totalorder %s134, %s148
    %p150 = scmp.eq.s32.totalorder %s19, 0
    %p151 = por %p149, %p150
    %s153 = sadd.s32 %s152, 1
    %p156 = scmp.eq.s32.totalorder %s13, 1
    %p157 = scmp.ne.s32.totalorder %s152, %s154
    %p158 = scmp.eq.s32.totalorder %s13, 0
    %p159 = por %p157, %p158
    %p160 = scmp.ne.s32.totalorder %s152, %s154
    %p161 = scmp.eq.s32.totalorder %s18, 1
    %p162 = por %p160, %p161
    %p163 = scmp.ne.s32.totalorder %s154, %s155
    %p164 = scmp.eq.s32.totalorder %s18, 0
    %p165 = por %p163, %p164
    %p166 = scmp.ne.s32.totalorder %s154, %s155
    %p167 = scmp.eq.s32.totalorder %s19, 1
    %p168 = por %p166, %p167
    %p170 = scmp.ne.s32.totalorder %s155, %s169
    %p171 = scmp.eq.s32.totalorder %s19, 0
    %p172 = por %p170, %p171
    %s173 = ssub.s32 %s13, %s20
    %p174 = scmp.eq.s32.totalorder %s173, 0
    %s176 = sadd.s32 %s175, 1
    %s177 = scalar_select %p174, %s175, %s176
    %p180 = pneg %p174
    %p181 = scmp.eq.s32.totalorder %s13, 1
    %p182 = por %p180, %p181
    %p183 = scmp.ne.s32.totalorder %s175, %s178
    %p184 = scmp.eq.s32.totalorder %s13, 0
    %p185 = por %p183, %p184
    %p186 = scmp.ne.s32.totalorder %s175, %s178
    %p187 = scmp.eq.s32.totalorder %s18, 1
    %p188 = por %p186, %p187
    %p189 = scmp.ne.s32.totalorder %s178, %s179
    %p190 = scmp.eq.s32.totalorder %s18, 0
    %p191 = por %p189, %p190
    %p192 = scmp.ne.s32.totalorder %s178, %s179
    %p193 = scmp.eq.s32.totalorder %s19, 1
    %p194 = por %p192, %p193
    %p196 = scmp.ne.s32.totalorder %s179, %s195
    %p197 = scmp.eq.s32.totalorder %s19, 0
    %p198 = por %p196, %p197
    %p199 = scmp.le.s32.totalorder 1, %s13
    %p200 = scmp.lt.s32.totalorder %s13, 3
    %p201 = pnand %p199, %p200
    %p202 = pneg %p201
    // Predicated region
    $region9: #{tpu_custom_call.1} parent=5 // pred_check
      _
    $region10: #{tpu_custom_call.1} parent=5 // pred_check_branch
      %204 = sbr.rel (%p201) target = $region12
    $region11: #{tpu_custom_call.1} parent=5 // pred_region
      %s205 = ssub.s32 %s13, 1
      // Predicated region
      $region13: #{tpu_custom_call.1} parent=11 // pred_check
        %p206 = pneg %p60
      $region14: #{tpu_custom_call.1} parent=11 // pred_check_branch
        %208 = sbr.rel (%p206) target = $region16
      $region15: #{tpu_custom_call.1} parent=11 // pred_region
        _
      $region16: #{tpu_custom_call.1} parent=11 // pred_fallthru
        _
      // Predicated region
      $region17: #{tpu_custom_call.1} parent=11 // pred_check
        %p209 = pneg %p81
      $region18: #{tpu_custom_call.1} parent=11 // pred_check_branch
        %211 = sbr.rel (%p209) target = $region20
      $region19: #{tpu_custom_call.1} parent=11 // pred_region
        _
      $region20: #{tpu_custom_call.1} parent=11 // pred_fallthru
        _
      // Predicated region
      $region21: #{tpu_custom_call.1} parent=11 // pred_check
        %p212 = pneg %p102
      $region22: #{tpu_custom_call.1} parent=11 // pred_check_branch
        %214 = sbr.rel (%p212) target = $region24
      $region23: #{tpu_custom_call.1} parent=11 // pred_region
        _
      $region24: #{tpu_custom_call.1} parent=11 // pred_fallthru
        _
      // Predicated region
      $region25: #{tpu_custom_call.1} parent=11 // pred_check
        %p215 = pneg %p123
      $region26: #{tpu_custom_call.1} parent=11 // pred_check_branch
        %217 = sbr.rel (%p215) target = $region28
      $region27: #{tpu_custom_call.1} parent=11 // pred_region
        _
      $region28: #{tpu_custom_call.1} parent=11 // pred_fallthru
        _
      // Predicated region
      $region29: #{tpu_custom_call.1} parent=11 // pred_check
        %p218 = pneg %p144
      $region30: #{tpu_custom_call.1} parent=11 // pred_check_branch
        %220 = sbr.rel (%p218) target = $region32
      $region31: #{tpu_custom_call.1} parent=11 // pred_region
        _
      $region32: #{tpu_custom_call.1} parent=11 // pred_fallthru
        _
      // Predicated region
      $region33: #{tpu_custom_call.1} parent=11 // pred_check
        %p221 = pneg %p165
      $region34: #{tpu_custom_call.1} parent=11 // pred_check_branch
        %223 = sbr.rel (%p221) target = $region36
      $region35: #{tpu_custom_call.1} parent=11 // pred_region
        _
      $region36: #{tpu_custom_call.1} parent=11 // pred_fallthru
        _
    $region12: #{tpu_custom_call.1} parent=5 // pred_fallthru
      _
    %p224 = scmp.lt.s32.totalorder %s13, 2
    // Predicated region
    $region37: #{tpu_custom_call.1} parent=5 // pred_check
      %p225 = pneg %p224
    $region38: #{tpu_custom_call.1} parent=5 // pred_check_branch
      %227 = sbr.rel (%p225) target = $region40
    $region39: #{tpu_custom_call.1} parent=5 // pred_region
      // Predicated region
      $region41: #{tpu_custom_call.1} parent=39 // pred_check
        %p228 = pneg %p33
      $region42: #{tpu_custom_call.1} parent=39 // pred_check_branch
        %230 = sbr.rel (%p228) target = $region44
      $region43: #{tpu_custom_call.1} parent=39 // pred_region
        %s231 = smul.u32 2, %s13
        %p232 = scmp.lt.s32.totalorder %s231, 3
        %s233 = scalar_select %p232, %s231, 3
        %s234 = smul.addr %s233, 32
        %s235 = smul.addr %s234, 8
        %s236 = scalar_lea.vmem %s0, %s235
        %s237 = smul.u32 2, %s13
      $region44: #{tpu_custom_call.1} parent=39 // pred_fallthru
        _
    $region40: #{tpu_custom_call.1} parent=5 // pred_fallthru
      _
    %p238 = scmp.le.s32.totalorder 1, %s13
    %p239 = scmp.lt.s32.totalorder %s13, 3
    %p240 = pnand %p238, %p239
    %p241 = pneg %p240
    // Predicated region
    $region45: #{tpu_custom_call.1} parent=5 // pred_check
      _
    $region46: #{tpu_custom_call.1} parent=5 // pred_check_branch
      %243 = sbr.rel (%p240) target = $region48
    $region47: #{tpu_custom_call.1} parent=5 // pred_region
      %s244 = ssub.s32 %s13, 1
      %s245 = smul.u32 2, %s18
      %p246 = scmp.lt.s32.totalorder %s245, 3
      %s247 = scalar_select %p246, %s245, 3
      %s248 = smul.addr %s247, 32
      %s249 = smul.addr %s248, 8
      %s250 = scalar_lea.vmem %s0, %s249
      %p251 = pneg %p39
      %p252 = pneg %p36
      %p253 = pneg %p60
      %p254 = pneg %p57
      %p255 = pneg %p81
      %p256 = pneg %p78
      %p257 = pneg %p102
      %p258 = pneg %p99
      %p259 = pneg %p123
      %p260 = pneg %p120
      %p261 = pneg %p144
      %p262 = pneg %p141
      %p263 = pneg %p165
      %p264 = pneg %p162
      %p265 = pneg %p191
      %p266 = pneg %p188
      %s267 = smul.u32 2, %s18
      %p268 = scmp.lt.s32.totalorder %s267, 3
      %s269 = scalar_select %p268, %s267, 3
      %s270 = smul.addr %s269, 32
      %s271 = smul.addr %s270, 8
      %s272 = scalar_lea.vmem %s7, %s271
      %s273 = smul.u32 2, %s18
      %p274 = scmp.lt.s32.totalorder %s273, 3
      %s275 = scalar_select %p274, %s273, 3
      %s276 = smul.addr %s275, 32
      %s277 = smul.addr %s276, 8
      %s278 = scalar_lea.vmem %s0, %s277
      %s279 = smul.u32 2, %s18
      %s280 = smul.u32 2, %s18
      %p281 = scmp.lt.s32.totalorder %s280, 3
      %s282 = scalar_select %p281, %s280, 3
      %s283 = smul.addr %s282, 32
      %s284 = smul.addr %s283, 8
      %s285 = scalar_lea.vmem %s7, %s284
      %s286 = smul.u32 2, %s18
      %v287 = vld [vmem:[%s278] sm:$0xff]
      %v288 = vld [vmem:[%s278 + $0x8] sm:$0xff]
      %v289 = vld [vmem:[%s278 + $0x10] sm:$0xff]
      %v290 = vld [vmem:[%s278 + $0x18] sm:$0xff]
      %v291 = vld [vmem:[%s278 + $0x20] sm:$0xff]
      %v292 = vld [vmem:[%s278 + $0x28] sm:$0xff]
      %v293 = vld [vmem:[%s278 + $0x30] sm:$0xff]
      %v294 = vld [vmem:[%s278 + $0x38] sm:$0xff]
      %v295 = vld [vmem:[%s278 + $0x40] sm:$0xff]
      %v296 = vld [vmem:[%s278 + $0x48] sm:$0xff]
      %v297 = vld [vmem:[%s278 + $0x50] sm:$0xff]
      %v298 = vld [vmem:[%s278 + $0x58] sm:$0xff]
      %v299 = vld [vmem:[%s278 + $0x60] sm:$0xff]
      %v300 = vld [vmem:[%s278 + $0x68] sm:$0xff]
      %v301 = vld [vmem:[%s278 + $0x70] sm:$0xff]
      %v302 = vld [vmem:[%s278 + $0x78] sm:$0xff]
      %v303 = vld [vmem:[%s278 + $0x80] sm:$0xff]
      %v304 = vld [vmem:[%s278 + $0x88] sm:$0xff]
      %v305 = vld [vmem:[%s278 + $0x90] sm:$0xff]
      %v306 = vld [vmem:[%s278 + $0x98] sm:$0xff]
      %v307 = vld [vmem:[%s278 + $0xa0] sm:$0xff]
      %v308 = vld [vmem:[%s278 + $0xa8] sm:$0xff]
      %v309 = vld [vmem:[%s278 + $0xb0] sm:$0xff]
      %v310 = vld [vmem:[%s278 + $0xb8] sm:$0xff]
      %v311 = vld [vmem:[%s278 + $0xc0] sm:$0xff]
      %v312 = vld [vmem:[%s278 + $0xc8] sm:$0xff]
      %v313 = vld [vmem:[%s278 + $0xd0] sm:$0xff]
      %v314 = vld [vmem:[%s278 + $0xd8] sm:$0xff]
      %v315 = vld [vmem:[%s278 + $0xe0] sm:$0xff]
      %v316 = vld [vmem:[%s278 + $0xe8] sm:$0xff]
      %v317 = vld [vmem:[%s278 + $0xf0] sm:$0xff]
      %v318 = vld [vmem:[%s278 + $0xf8] sm:$0xff]
      %v319 = vld [vmem:[%s278 + $0x100] sm:$0xff]
      %v320 = vld [vmem:[%s278 + $0x108] sm:$0xff]
      %v321 = vld [vmem:[%s278 + $0x110] sm:$0xff]
      %v322 = vld [vmem:[%s278 + $0x118] sm:$0xff]
      %v323 = vld [vmem:[%s278 + $0x120] sm:$0xff]
      %v324 = vld [vmem:[%s278 + $0x128] sm:$0xff]
      %v325 = vld [vmem:[%s278 + $0x130] sm:$0xff]
      %v326 = vld [vmem:[%s278 + $0x138] sm:$0xff]
      %v327 = vld [vmem:[%s278 + $0x140] sm:$0xff]
      %v328 = vld [vmem:[%s278 + $0x148] sm:$0xff]
      %v329 = vld [vmem:[%s278 + $0x150] sm:$0xff]
      %v330 = vld [vmem:[%s278 + $0x158] sm:$0xff]
      %v331 = vld [vmem:[%s278 + $0x160] sm:$0xff]
      %v332 = vld [vmem:[%s278 + $0x168] sm:$0xff]
      %v333 = vld [vmem:[%s278 + $0x170] sm:$0xff]
      %v334 = vld [vmem:[%s278 + $0x178] sm:$0xff]
      %v335 = vld [vmem:[%s278 + $0x180] sm:$0xff]
      %v336 = vld [vmem:[%s278 + $0x188] sm:$0xff]
      %v337 = vld [vmem:[%s278 + $0x190] sm:$0xff]
      %v338 = vld [vmem:[%s278 + $0x198] sm:$0xff]
      %v339 = vld [vmem:[%s278 + $0x1a0] sm:$0xff]
      %v340 = vld [vmem:[%s278 + $0x1a8] sm:$0xff]
      %v341 = vld [vmem:[%s278 + $0x1b0] sm:$0xff]
      %v342 = vld [vmem:[%s278 + $0x1b8] sm:$0xff]
      %v343 = vld [vmem:[%s278 + $0x1c0] sm:$0xff]
      %v344 = vld [vmem:[%s278 + $0x1c8] sm:$0xff]
      %v345 = vld [vmem:[%s278 + $0x1d0] sm:$0xff]
      %v346 = vld [vmem:[%s278 + $0x1d8] sm:$0xff]
      %v347 = vld [vmem:[%s278 + $0x1e0] sm:$0xff]
      %v348 = vld [vmem:[%s278 + $0x1e8] sm:$0xff]
      %v349 = vld [vmem:[%s278 + $0x1f0] sm:$0xff]
      %v350 = vld [vmem:[%s278 + $0x1f8] sm:$0xff]
      %vm351 = vcmask 130048
      %v352 = vsel %vm351, %v287, 0.0
      %353 = vadd.xlane.f32.xlu0 %v352
      %v354 = vpop.xlane.xlu0 %353
      %v355 = vsel %vm351, %v288, 0.0
      %356 = vadd.xlane.f32.xlu0 %v355
      %v357 = vpop.xlane.xlu0 %356
      %v358 = vsel %vm351, %v289, 0.0
      %359 = vadd.xlane.f32.xlu0 %v358
      %v360 = vpop.xlane.xlu0 %359
      %v361 = vsel %vm351, %v290, 0.0
      %362 = vadd.xlane.f32.xlu0 %v361
      %v363 = vpop.xlane.xlu0 %362
      %v364 = vsel %vm351, %v291, 0.0
      %365 = vadd.xlane.f32.xlu0 %v364
      %v366 = vpop.xlane.xlu0 %365
      %v367 = vsel %vm351, %v292, 0.0
      %368 = vadd.xlane.f32.xlu0 %v367
      %v369 = vpop.xlane.xlu0 %368
      %v370 = vsel %vm351, %v293, 0.0
      %371 = vadd.xlane.f32.xlu0 %v370
      %v372 = vpop.xlane.xlu0 %371
      %v373 = vsel %vm351, %v294, 0.0
      %374 = vadd.xlane.f32.xlu0 %v373
      %v375 = vpop.xlane.xlu0 %374
      %v376 = vsel %vm351, %v295, 0.0
      %377 = vadd.xlane.f32.xlu0 %v376
      %v378 = vpop.xlane.xlu0 %377
      %v379 = vsel %vm351, %v296, 0.0
      %380 = vadd.xlane.f32.xlu0 %v379
      %v381 = vpop.xlane.xlu0 %380
      %v382 = vsel %vm351, %v297, 0.0
      %383 = vadd.xlane.f32.xlu0 %v382
      %v384 = vpop.xlane.xlu0 %383
      %v385 = vsel %vm351, %v298, 0.0
      %386 = vadd.xlane.f32.xlu0 %v385
      %v387 = vpop.xlane.xlu0 %386
      %v388 = vsel %vm351, %v299, 0.0
      %389 = vadd.xlane.f32.xlu0 %v388
      %v390 = vpop.xlane.xlu0 %389
      %v391 = vsel %vm351, %v300, 0.0
      %392 = vadd.xlane.f32.xlu0 %v391
      %v393 = vpop.xlane.xlu0 %392
      %v394 = vsel %vm351, %v301, 0.0
      %395 = vadd.xlane.f32.xlu0 %v394
      %v396 = vpop.xlane.xlu0 %395
      %v397 = vsel %vm351, %v302, 0.0
      %398 = vadd.xlane.f32.xlu0 %v397
      %v399 = vpop.xlane.xlu0 %398
      %v400 = vsel %vm351, %v303, 0.0
      %401 = vadd.xlane.f32.xlu0 %v400
      %v402 = vpop.xlane.xlu0 %401
      %v403 = vsel %vm351, %v304, 0.0
      %404 = vadd.xlane.f32.xlu0 %v403
      %v405 = vpop.xlane.xlu0 %404
      %v406 = vsel %vm351, %v305, 0.0
      %407 = vadd.xlane.f32.xlu0 %v406
      %v408 = vpop.xlane.xlu0 %407
      %v409 = vsel %vm351, %v306, 0.0
      %410 = vadd.xlane.f32.xlu0 %v409
      %v411 = vpop.xlane.xlu0 %410
      %v412 = vsel %vm351, %v307, 0.0
      %413 = vadd.xlane.f32.xlu0 %v412
      %v414 = vpop.xlane.xlu0 %413
      %v415 = vsel %vm351, %v308, 0.0
      %416 = vadd.xlane.f32.xlu0 %v415
      %v417 = vpop.xlane.xlu0 %416
      %v418 = vsel %vm351, %v309, 0.0
      %419 = vadd.xlane.f32.xlu0 %v418
      %v420 = vpop.xlane.xlu0 %419
      %v421 = vsel %vm351, %v310, 0.0
      %422 = vadd.xlane.f32.xlu0 %v421
      %v423 = vpop.xlane.xlu0 %422
      %v424 = vsel %vm351, %v311, 0.0
      %425 = vadd.xlane.f32.xlu0 %v424
      %v426 = vpop.xlane.xlu0 %425
      %v427 = vsel %vm351, %v312, 0.0
      %428 = vadd.xlane.f32.xlu0 %v427
      %v429 = vpop.xlane.xlu0 %428
      %v430 = vsel %vm351, %v313, 0.0
      %431 = vadd.xlane.f32.xlu0 %v430
      %v432 = vpop.xlane.xlu0 %431
      %v433 = vsel %vm351, %v314, 0.0
      %434 = vadd.xlane.f32.xlu0 %v433
      %v435 = vpop.xlane.xlu0 %434
      %v436 = vsel %vm351, %v315, 0.0
      %437 = vadd.xlane.f32.xlu0 %v436
      %v438 = vpop.xlane.xlu0 %437
      %v439 = vsel %vm351, %v316, 0.0
      %440 = vadd.xlane.f32.xlu0 %v439
      %v441 = vpop.xlane.xlu0 %440
      %v442 = vsel %vm351, %v317, 0.0
      %443 = vadd.xlane.f32.xlu0 %v442
      %v444 = vpop.xlane.xlu0 %443
      %v445 = vsel %vm351, %v318, 0.0
      %446 = vadd.xlane.f32.xlu0 %v445
      %v447 = vpop.xlane.xlu0 %446
      %v448 = vsel %vm351, %v319, 0.0
      %449 = vadd.xlane.f32.xlu0 %v448
      %v450 = vpop.xlane.xlu0 %449
      %v451 = vsel %vm351, %v320, 0.0
      %452 = vadd.xlane.f32.xlu0 %v451
      %v453 = vpop.xlane.xlu0 %452
      %v454 = vsel %vm351, %v321, 0.0
      %455 = vadd.xlane.f32.xlu0 %v454
      %v456 = vpop.xlane.xlu0 %455
      %v457 = vsel %vm351, %v322, 0.0
      %458 = vadd.xlane.f32.xlu0 %v457
      %v459 = vpop.xlane.xlu0 %458
      %v460 = vsel %vm351, %v323, 0.0
      %461 = vadd.xlane.f32.xlu0 %v460
      %v462 = vpop.xlane.xlu0 %461
      %v463 = vsel %vm351, %v324, 0.0
      %464 = vadd.xlane.f32.xlu0 %v463
      %v465 = vpop.xlane.xlu0 %464
      %v466 = vsel %vm351, %v325, 0.0
      %467 = vadd.xlane.f32.xlu0 %v466
      %v468 = vpop.xlane.xlu0 %467
      %v469 = vsel %vm351, %v326, 0.0
      %470 = vadd.xlane.f32.xlu0 %v469
      %v471 = vpop.xlane.xlu0 %470
      %v472 = vsel %vm351, %v327, 0.0
      %473 = vadd.xlane.f32.xlu0 %v472
      %v474 = vpop.xlane.xlu0 %473
      %v475 = vsel %vm351, %v328, 0.0
      %476 = vadd.xlane.f32.xlu0 %v475
      %v477 = vpop.xlane.xlu0 %476
      %v478 = vsel %vm351, %v329, 0.0
      %479 = vadd.xlane.f32.xlu0 %v478
      %v480 = vpop.xlane.xlu0 %479
      %v481 = vsel %vm351, %v330, 0.0
      %482 = vadd.xlane.f32.xlu0 %v481
      %v483 = vpop.xlane.xlu0 %482
      %v484 = vsel %vm351, %v331, 0.0
      %485 = vadd.xlane.f32.xlu0 %v484
      %v486 = vpop.xlane.xlu0 %485
      %v487 = vsel %vm351, %v332, 0.0
      %488 = vadd.xlane.f32.xlu0 %v487
      %v489 = vpop.xlane.xlu0 %488
      %v490 = vsel %vm351, %v333, 0.0
      %491 = vadd.xlane.f32.xlu0 %v490
      %v492 = vpop.xlane.xlu0 %491
      %v493 = vsel %vm351, %v334, 0.0
      %494 = vadd.xlane.f32.xlu0 %v493
      %v495 = vpop.xlane.xlu0 %494
      %v496 = vsel %vm351, %v335, 0.0
      %497 = vadd.xlane.f32.xlu0 %v496
      %v498 = vpop.xlane.xlu0 %497
      %v499 = vsel %vm351, %v336, 0.0
      %500 = vadd.xlane.f32.xlu0 %v499
      %v501 = vpop.xlane.xlu0 %500
      %v502 = vsel %vm351, %v337, 0.0
      %503 = vadd.xlane.f32.xlu0 %v502
      %v504 = vpop.xlane.xlu0 %503
      %v505 = vsel %vm351, %v338, 0.0
      %506 = vadd.xlane.f32.xlu0 %v505
      %v507 = vpop.xlane.xlu0 %506
      %v508 = vsel %vm351, %v339, 0.0
      %509 = vadd.xlane.f32.xlu0 %v508
      %v510 = vpop.xlane.xlu0 %509
      %v511 = vsel %vm351, %v340, 0.0
      %512 = vadd.xlane.f32.xlu0 %v511
      %v513 = vpop.xlane.xlu0 %512
      %v514 = vsel %vm351, %v341, 0.0
      %515 = vadd.xlane.f32.xlu0 %v514
      %v516 = vpop.xlane.xlu0 %515
      %v517 = vsel %vm351, %v342, 0.0
      %518 = vadd.xlane.f32.xlu0 %v517
      %v519 = vpop.xlane.xlu0 %518
      %v520 = vsel %vm351, %v343, 0.0
      %521 = vadd.xlane.f32.xlu0 %v520
      %v522 = vpop.xlane.xlu0 %521
      %v523 = vsel %vm351, %v344, 0.0
      %524 = vadd.xlane.f32.xlu0 %v523
      %v525 = vpop.xlane.xlu0 %524
      %v526 = vsel %vm351, %v345, 0.0
      %527 = vadd.xlane.f32.xlu0 %v526
      %v528 = vpop.xlane.xlu0 %527
      %v529 = vsel %vm351, %v346, 0.0
      %530 = vadd.xlane.f32.xlu0 %v529
      %v531 = vpop.xlane.xlu0 %530
      %v532 = vsel %vm351, %v347, 0.0
      %533 = vadd.xlane.f32.xlu0 %v532
      %v534 = vpop.xlane.xlu0 %533
      %v535 = vsel %vm351, %v348, 0.0
      %536 = vadd.xlane.f32.xlu0 %v535
      %v537 = vpop.xlane.xlu0 %536
      %v538 = vsel %vm351, %v349, 0.0
      %539 = vadd.xlane.f32.xlu0 %v538
      %v540 = vpop.xlane.xlu0 %539
      %v541 = vsel %vm351, %v350, 0.0
      %542 = vadd.xlane.f32.xlu0 %v541
      %v543 = vpop.xlane.xlu0 %542
      %v544 = vrcp.pop 16.0
      %v545 = vmul.f32 %v354, %v544
      %v546 = vmul.f32 %v357, %v544
      %v547 = vmul.f32 %v360, %v544
      %v548 = vmul.f32 %v363, %v544
      %v549 = vmul.f32 %v366, %v544
      %v550 = vmul.f32 %v369, %v544
      %v551 = vmul.f32 %v372, %v544
      %v552 = vmul.f32 %v375, %v544
      %v553 = vmul.f32 %v378, %v544
      %v554 = vmul.f32 %v381, %v544
      %v555 = vmul.f32 %v384, %v544
      %v556 = vmul.f32 %v387, %v544
      %v557 = vmul.f32 %v390, %v544
      %v558 = vmul.f32 %v393, %v544
      %v559 = vmul.f32 %v396, %v544
      %v560 = vmul.f32 %v399, %v544
      %v561 = vmul.f32 %v402, %v544
      %v562 = vmul.f32 %v405, %v544
      %v563 = vmul.f32 %v408, %v544
      %v564 = vmul.f32 %v411, %v544
      %v565 = vmul.f32 %v414, %v544
      %v566 = vmul.f32 %v417, %v544
      %v567 = vmul.f32 %v420, %v544
      %v568 = vmul.f32 %v423, %v544
      %v569 = vmul.f32 %v426, %v544
      %v570 = vmul.f32 %v429, %v544
      %v571 = vmul.f32 %v432, %v544
      %v572 = vmul.f32 %v435, %v544
      %v573 = vmul.f32 %v438, %v544
      %v574 = vmul.f32 %v441, %v544
      %v575 = vmul.f32 %v444, %v544
      %v576 = vmul.f32 %v447, %v544
      %v577 = vmul.f32 %v450, %v544
      %v578 = vmul.f32 %v453, %v544
      %v579 = vmul.f32 %v456, %v544
      %v580 = vmul.f32 %v459, %v544
      %v581 = vmul.f32 %v462, %v544
      %v582 = vmul.f32 %v465, %v544
      %v583 = vmul.f32 %v468, %v544
      %v584 = vmul.f32 %v471, %v544
      %v585 = vmul.f32 %v474, %v544
      %v586 = vmul.f32 %v477, %v544
      %v587 = vmul.f32 %v480, %v544
      %v588 = vmul.f32 %v483, %v544
      %v589 = vmul.f32 %v486, %v544
      %v590 = vmul.f32 %v489, %v544
      %v591 = vmul.f32 %v492, %v544
      %v592 = vmul.f32 %v495, %v544
      %v593 = vmul.f32 %v498, %v544
      %v594 = vmul.f32 %v501, %v544
      %v595 = vmul.f32 %v504, %v544
      %v596 = vmul.f32 %v507, %v544
      %v597 = vmul.f32 %v510, %v544
      %v598 = vmul.f32 %v513, %v544
      %v599 = vmul.f32 %v516, %v544
      %v600 = vmul.f32 %v519, %v544
      %v601 = vmul.f32 %v522, %v544
      %v602 = vmul.f32 %v525, %v544
      %v603 = vmul.f32 %v528, %v544
      %v604 = vmul.f32 %v531, %v544
      %v605 = vmul.f32 %v534, %v544
      %v606 = vmul.f32 %v537, %v544
      %v607 = vmul.f32 %v540, %v544
      %v608 = vmul.f32 %v543, %v544
      %v609 = vsub.f32 %v287, %v545
      %v610 = vsub.f32 %v288, %v546
      %v611 = vsub.f32 %v289, %v547
      %v612 = vsub.f32 %v290, %v548
      %v613 = vsub.f32 %v291, %v549
      %v614 = vsub.f32 %v292, %v550
      %v615 = vsub.f32 %v293, %v551
      %v616 = vsub.f32 %v294, %v552
      %v617 = vsub.f32 %v295, %v553
      %v618 = vsub.f32 %v296, %v554
      %v619 = vsub.f32 %v297, %v555
      %v620 = vsub.f32 %v298, %v556
      %v621 = vsub.f32 %v299, %v557
      %v622 = vsub.f32 %v300, %v558
      %v623 = vsub.f32 %v301, %v559
      %v624 = vsub.f32 %v302, %v560
      %v625 = vsub.f32 %v303, %v561
      %v626 = vsub.f32 %v304, %v562
      %v627 = vsub.f32 %v305, %v563
      %v628 = vsub.f32 %v306, %v564
      %v629 = vsub.f32 %v307, %v565
      %v630 = vsub.f32 %v308, %v566
      %v631 = vsub.f32 %v309, %v567
      %v632 = vsub.f32 %v310, %v568
      %v633 = vsub.f32 %v311, %v569
      %v634 = vsub.f32 %v312, %v570
      %v635 = vsub.f32 %v313, %v571
      %v636 = vsub.f32 %v314, %v572
      %v637 = vsub.f32 %v315, %v573
      %v638 = vsub.f32 %v316, %v574
      %v639 = vsub.f32 %v317, %v575
      %v640 = vsub.f32 %v318, %v576
      %v641 = vsub.f32 %v319, %v577
      %v642 = vsub.f32 %v320, %v578
      %v643 = vsub.f32 %v321, %v579
      %v644 = vsub.f32 %v322, %v580
      %v645 = vsub.f32 %v323, %v581
      %v646 = vsub.f32 %v324, %v582
      %v647 = vsub.f32 %v325, %v583
      %v648 = vsub.f32 %v326, %v584
      %v649 = vsub.f32 %v327, %v585
      %v650 = vsub.f32 %v328, %v586
      %v651 = vsub.f32 %v329, %v587
      %v652 = vsub.f32 %v330, %v588
      %v653 = vsub.f32 %v331, %v589
      %v654 = vsub.f32 %v332, %v590
      %v655 = vsub.f32 %v333, %v591
      %v656 = vsub.f32 %v334, %v592
      %v657 = vsub.f32 %v335, %v593
      %v658 = vsub.f32 %v336, %v594
      %v659 = vsub.f32 %v337, %v595
      %v660 = vsub.f32 %v338, %v596
      %v661 = vsub.f32 %v339, %v597
      %v662 = vsub.f32 %v340, %v598
      %v663 = vsub.f32 %v341, %v599
      %v664 = vsub.f32 %v342, %v600
      %v665 = vsub.f32 %v343, %v601
      %v666 = vsub.f32 %v344, %v602
      %v667 = vsub.f32 %v345, %v603
      %v668 = vsub.f32 %v346, %v604
      %v669 = vsub.f32 %v347, %v605
      %v670 = vsub.f32 %v348, %v606
      %v671 = vsub.f32 %v349, %v607
      %v672 = vsub.f32 %v350, %v608
      %v673 = vmul.f32 %v609, %v609
      %v674 = vmul.f32 %v610, %v610
      %v675 = vmul.f32 %v611, %v611
      %v676 = vmul.f32 %v612, %v612
      %v677 = vmul.f32 %v613, %v613
      %v678 = vmul.f32 %v614, %v614
      %v679 = vmul.f32 %v615, %v615
      %v680 = vmul.f32 %v616, %v616
      %v681 = vmul.f32 %v617, %v617
      %v682 = vmul.f32 %v618, %v618
      %v683 = vmul.f32 %v619, %v619
      %v684 = vmul.f32 %v620, %v620
      %v685 = vmul.f32 %v621, %v621
      %v686 = vmul.f32 %v622, %v622
      %v687 = vmul.f32 %v623, %v623
      %v688 = vmul.f32 %v624, %v624
      %v689 = vmul.f32 %v625, %v625
      %v690 = vmul.f32 %v626, %v626
      %v691 = vmul.f32 %v627, %v627
      %v692 = vmul.f32 %v628, %v628
      %v693 = vmul.f32 %v629, %v629
      %v694 = vmul.f32 %v630, %v630
      %v695 = vmul.f32 %v631, %v631
      %v696 = vmul.f32 %v632, %v632
      %v697 = vmul.f32 %v633, %v633
      %v698 = vmul.f32 %v634, %v634
      %v699 = vmul.f32 %v635, %v635
      %v700 = vmul.f32 %v636, %v636
      %v701 = vmul.f32 %v637, %v637
      %v702 = vmul.f32 %v638, %v638
      %v703 = vmul.f32 %v639, %v639
      %v704 = vmul.f32 %v640, %v640
      %v705 = vmul.f32 %v641, %v641
      %v706 = vmul.f32 %v642, %v642
      %v707 = vmul.f32 %v643, %v643
      %v708 = vmul.f32 %v644, %v644
      %v709 = vmul.f32 %v645, %v645
      %v710 = vmul.f32 %v646, %v646
      %v711 = vmul.f32 %v647, %v647
      %v712 = vmul.f32 %v648, %v648
      %v713 = vmul.f32 %v649, %v649
      %v714 = vmul.f32 %v650, %v650
      %v715 = vmul.f32 %v651, %v651
      %v716 = vmul.f32 %v652, %v652
      %v717 = vmul.f32 %v653, %v653
      %v718 = vmul.f32 %v654, %v654
      %v719 = vmul.f32 %v655, %v655
      %v720 = vmul.f32 %v656, %v656
      %v721 = vmul.f32 %v657, %v657
      %v722 = vmul.f32 %v658, %v658
      %v723 = vmul.f32 %v659, %v659
      %v724 = vmul.f32 %v660, %v660
      %v725 = vmul.f32 %v661, %v661
      %v726 = vmul.f32 %v662, %v662
      %v727 = vmul.f32 %v663, %v663
      %v728 = vmul.f32 %v664, %v664
      %v729 = vmul.f32 %v665, %v665
      %v730 = vmul.f32 %v666, %v666
      %v731 = vmul.f32 %v667, %v667
      %v732 = vmul.f32 %v668, %v668
      %v733 = vmul.f32 %v669, %v669
      %v734 = vmul.f32 %v670, %v670
      %v735 = vmul.f32 %v671, %v671
      %v736 = vmul.f32 %v672, %v672
      %v737 = vsel %vm351, %v673, 0.0
      %738 = vadd.xlane.f32.xlu0 %v737
      %v739 = vpop.xlane.xlu0 %738
      %v740 = vsel %vm351, %v674, 0.0
      %741 = vadd.xlane.f32.xlu0 %v740
      %v742 = vpop.xlane.xlu0 %741
      %v743 = vsel %vm351, %v675, 0.0
      %744 = vadd.xlane.f32.xlu0 %v743
      %v745 = vpop.xlane.xlu0 %744
      %v746 = vsel %vm351, %v676, 0.0
      %747 = vadd.xlane.f32.xlu0 %v746
      %v748 = vpop.xlane.xlu0 %747
      %v749 = vsel %vm351, %v677, 0.0
      %750 = vadd.xlane.f32.xlu0 %v749
      %v751 = vpop.xlane.xlu0 %750
      %v752 = vsel %vm351, %v678, 0.0
      %753 = vadd.xlane.f32.xlu0 %v752
      %v754 = vpop.xlane.xlu0 %753
      %v755 = vsel %vm351, %v679, 0.0
      %756 = vadd.xlane.f32.xlu0 %v755
      %v757 = vpop.xlane.xlu0 %756
      %v758 = vsel %vm351, %v680, 0.0
      %759 = vadd.xlane.f32.xlu0 %v758
      %v760 = vpop.xlane.xlu0 %759
      %v761 = vsel %vm351, %v681, 0.0
      %762 = vadd.xlane.f32.xlu0 %v761
      %v763 = vpop.xlane.xlu0 %762
      %v764 = vsel %vm351, %v682, 0.0
      %765 = vadd.xlane.f32.xlu0 %v764
      %v766 = vpop.xlane.xlu0 %765
      %v767 = vsel %vm351, %v683, 0.0
      %768 = vadd.xlane.f32.xlu0 %v767
      %v769 = vpop.xlane.xlu0 %768
      %v770 = vsel %vm351, %v684, 0.0
      %771 = vadd.xlane.f32.xlu0 %v770
      %v772 = vpop.xlane.xlu0 %771
      %v773 = vsel %vm351, %v685, 0.0
      %774 = vadd.xlane.f32.xlu0 %v773
      %v775 = vpop.xlane.xlu0 %774
      %v776 = vsel %vm351, %v686, 0.0
      %777 = vadd.xlane.f32.xlu0 %v776
      %v778 = vpop.xlane.xlu0 %777
      %v779 = vsel %vm351, %v687, 0.0
      %780 = vadd.xlane.f32.xlu0 %v779
      %v781 = vpop.xlane.xlu0 %780
      %v782 = vsel %vm351, %v688, 0.0
      %783 = vadd.xlane.f32.xlu0 %v782
      %v784 = vpop.xlane.xlu0 %783
      %v785 = vsel %vm351, %v689, 0.0
      %786 = vadd.xlane.f32.xlu0 %v785
      %v787 = vpop.xlane.xlu0 %786
      %v788 = vsel %vm351, %v690, 0.0
      %789 = vadd.xlane.f32.xlu0 %v788
      %v790 = vpop.xlane.xlu0 %789
      %v791 = vsel %vm351, %v691, 0.0
      %792 = vadd.xlane.f32.xlu0 %v791
      %v793 = vpop.xlane.xlu0 %792
      %v794 = vsel %vm351, %v692, 0.0
      %795 = vadd.xlane.f32.xlu0 %v794
      %v796 = vpop.xlane.xlu0 %795
      %v797 = vsel %vm351, %v693, 0.0
      %798 = vadd.xlane.f32.xlu0 %v797
      %v799 = vpop.xlane.xlu0 %798
      %v800 = vsel %vm351, %v694, 0.0
      %801 = vadd.xlane.f32.xlu0 %v800
      %v802 = vpop.xlane.xlu0 %801
      %v803 = vsel %vm351, %v695, 0.0
      %804 = vadd.xlane.f32.xlu0 %v803
      %v805 = vpop.xlane.xlu0 %804
      %v806 = vsel %vm351, %v696, 0.0
      %807 = vadd.xlane.f32.xlu0 %v806
      %v808 = vpop.xlane.xlu0 %807
      %v809 = vsel %vm351, %v697, 0.0
      %810 = vadd.xlane.f32.xlu0 %v809
      %v811 = vpop.xlane.xlu0 %810
      %v812 = vsel %vm351, %v698, 0.0
      %813 = vadd.xlane.f32.xlu0 %v812
      %v814 = vpop.xlane.xlu0 %813
      %v815 = vsel %vm351, %v699, 0.0
      %816 = vadd.xlane.f32.xlu0 %v815
      %v817 = vpop.xlane.xlu0 %816
      %v818 = vsel %vm351, %v700, 0.0
      %819 = vadd.xlane.f32.xlu0 %v818
      %v820 = vpop.xlane.xlu0 %819
      %v821 = vsel %vm351, %v701, 0.0
      %822 = vadd.xlane.f32.xlu0 %v821
      %v823 = vpop.xlane.xlu0 %822
      %v824 = vsel %vm351, %v702, 0.0
      %825 = vadd.xlane.f32.xlu0 %v824
      %v826 = vpop.xlane.xlu0 %825
      %v827 = vsel %vm351, %v703, 0.0
      %828 = vadd.xlane.f32.xlu0 %v827
      %v829 = vpop.xlane.xlu0 %828
      %v830 = vsel %vm351, %v704, 0.0
      %831 = vadd.xlane.f32.xlu0 %v830
      %v832 = vpop.xlane.xlu0 %831
      %v833 = vsel %vm351, %v705, 0.0
      %834 = vadd.xlane.f32.xlu0 %v833
      %v835 = vpop.xlane.xlu0 %834
      %v836 = vsel %vm351, %v706, 0.0
      %837 = vadd.xlane.f32.xlu0 %v836
      %v838 = vpop.xlane.xlu0 %837
      %v839 = vsel %vm351, %v707, 0.0
      %840 = vadd.xlane.f32.xlu0 %v839
      %v841 = vpop.xlane.xlu0 %840
      %v842 = vsel %vm351, %v708, 0.0
      %843 = vadd.xlane.f32.xlu0 %v842
      %v844 = vpop.xlane.xlu0 %843
      %v845 = vsel %vm351, %v709, 0.0
      %846 = vadd.xlane.f32.xlu0 %v845
      %v847 = vpop.xlane.xlu0 %846
      %v848 = vsel %vm351, %v710, 0.0
      %849 = vadd.xlane.f32.xlu0 %v848
      %v850 = vpop.xlane.xlu0 %849
      %v851 = vsel %vm351, %v711, 0.0
      %852 = vadd.xlane.f32.xlu0 %v851
      %v853 = vpop.xlane.xlu0 %852
      %v854 = vsel %vm351, %v712, 0.0
      %855 = vadd.xlane.f32.xlu0 %v854
      %v856 = vpop.xlane.xlu0 %855
      %v857 = vsel %vm351, %v713, 0.0
      %858 = vadd.xlane.f32.xlu0 %v857
      %v859 = vpop.xlane.xlu0 %858
      %v860 = vsel %vm351, %v714, 0.0
      %861 = vadd.xlane.f32.xlu0 %v860
      %v862 = vpop.xlane.xlu0 %861
      %v863 = vsel %vm351, %v715, 0.0
      %864 = vadd.xlane.f32.xlu0 %v863
      %v865 = vpop.xlane.xlu0 %864
      %v866 = vsel %vm351, %v716, 0.0
      %867 = vadd.xlane.f32.xlu0 %v866
      %v868 = vpop.xlane.xlu0 %867
      %v869 = vsel %vm351, %v717, 0.0
      %870 = vadd.xlane.f32.xlu0 %v869
      %v871 = vpop.xlane.xlu0 %870
      %v872 = vsel %vm351, %v718, 0.0
      %873 = vadd.xlane.f32.xlu0 %v872
      %v874 = vpop.xlane.xlu0 %873
      %v875 = vsel %vm351, %v719, 0.0
      %876 = vadd.xlane.f32.xlu0 %v875
      %v877 = vpop.xlane.xlu0 %876
      %v878 = vsel %vm351, %v720, 0.0
      %879 = vadd.xlane.f32.xlu0 %v878
      %v880 = vpop.xlane.xlu0 %879
      %v881 = vsel %vm351, %v721, 0.0
      %882 = vadd.xlane.f32.xlu0 %v881
      %v883 = vpop.xlane.xlu0 %882
      %v884 = vsel %vm351, %v722, 0.0
      %885 = vadd.xlane.f32.xlu0 %v884
      %v886 = vpop.xlane.xlu0 %885
      %v887 = vsel %vm351, %v723, 0.0
      %888 = vadd.xlane.f32.xlu0 %v887
      %v889 = vpop.xlane.xlu0 %888
      %v890 = vsel %vm351, %v724, 0.0
      %891 = vadd.xlane.f32.xlu0 %v890
      %v892 = vpop.xlane.xlu0 %891
      %v893 = vsel %vm351, %v725, 0.0
      %894 = vadd.xlane.f32.xlu0 %v893
      %v895 = vpop.xlane.xlu0 %894
      %v896 = vsel %vm351, %v726, 0.0
      %897 = vadd.xlane.f32.xlu0 %v896
      %v898 = vpop.xlane.xlu0 %897
      %v899 = vsel %vm351, %v727, 0.0
      %900 = vadd.xlane.f32.xlu0 %v899
      %v901 = vpop.xlane.xlu0 %900
      %v902 = vsel %vm351, %v728, 0.0
      %903 = vadd.xlane.f32.xlu0 %v902
      %v904 = vpop.xlane.xlu0 %903
      %v905 = vsel %vm351, %v729, 0.0
      %906 = vadd.xlane.f32.xlu0 %v905
      %v907 = vpop.xlane.xlu0 %906
      %v908 = vsel %vm351, %v730, 0.0
      %909 = vadd.xlane.f32.xlu0 %v908
      %v910 = vpop.xlane.xlu0 %909
      %v911 = vsel %vm351, %v731, 0.0
      %912 = vadd.xlane.f32.xlu0 %v911
      %v913 = vpop.xlane.xlu0 %912
      %v914 = vsel %vm351, %v732, 0.0
      %915 = vadd.xlane.f32.xlu0 %v914
      %v916 = vpop.xlane.xlu0 %915
      %v917 = vsel %vm351, %v733, 0.0
      %918 = vadd.xlane.f32.xlu0 %v917
      %v919 = vpop.xlane.xlu0 %918
      %v920 = vsel %vm351, %v734, 0.0
      %921 = vadd.xlane.f32.xlu0 %v920
      %v922 = vpop.xlane.xlu0 %921
      %v923 = vsel %vm351, %v735, 0.0
      %924 = vadd.xlane.f32.xlu0 %v923
      %v925 = vpop.xlane.xlu0 %924
      %v926 = vsel %vm351, %v736, 0.0
      %927 = vadd.xlane.f32.xlu0 %v926
      %v928 = vpop.xlane.xlu0 %927
      %v929 = vmul.f32 %v739, %v544
      %v930 = vmul.f32 %v742, %v544
      %v931 = vmul.f32 %v745, %v544
      %v932 = vmul.f32 %v748, %v544
      %v933 = vmul.f32 %v751, %v544
      %v934 = vmul.f32 %v754, %v544
      %v935 = vmul.f32 %v757, %v544
      %v936 = vmul.f32 %v760, %v544
      %v937 = vmul.f32 %v763, %v544
      %v938 = vmul.f32 %v766, %v544
      %v939 = vmul.f32 %v769, %v544
      %v940 = vmul.f32 %v772, %v544
      %v941 = vmul.f32 %v775, %v544
      %v942 = vmul.f32 %v778, %v544
      %v943 = vmul.f32 %v781, %v544
      %v944 = vmul.f32 %v784, %v544
      %v945 = vmul.f32 %v787, %v544
      %v946 = vmul.f32 %v790, %v544
      %v947 = vmul.f32 %v793, %v544
      %v948 = vmul.f32 %v796, %v544
      %v949 = vmul.f32 %v799, %v544
      %v950 = vmul.f32 %v802, %v544
      %v951 = vmul.f32 %v805, %v544
      %v952 = vmul.f32 %v808, %v544
      %v953 = vmul.f32 %v811, %v544
      %v954 = vmul.f32 %v814, %v544
      %v955 = vmul.f32 %v817, %v544
      %v956 = vmul.f32 %v820, %v544
      %v957 = vmul.f32 %v823, %v544
      %v958 = vmul.f32 %v826, %v544
      %v959 = vmul.f32 %v829, %v544
      %v960 = vmul.f32 %v832, %v544
      %v961 = vmul.f32 %v835, %v544
      %v962 = vmul.f32 %v838, %v544
      %v963 = vmul.f32 %v841, %v544
      %v964 = vmul.f32 %v844, %v544
      %v965 = vmul.f32 %v847, %v544
      %v966 = vmul.f32 %v850, %v544
      %v967 = vmul.f32 %v853, %v544
      %v968 = vmul.f32 %v856, %v544
      %v969 = vmul.f32 %v859, %v544
      %v970 = vmul.f32 %v862, %v544
      %v971 = vmul.f32 %v865, %v544
      %v972 = vmul.f32 %v868, %v544
      %v973 = vmul.f32 %v871, %v544
      %v974 = vmul.f32 %v874, %v544
      %v975 = vmul.f32 %v877, %v544
      %v976 = vmul.f32 %v880, %v544
      %v977 = vmul.f32 %v883, %v544
      %v978 = vmul.f32 %v886, %v544
      %v979 = vmul.f32 %v889, %v544
      %v980 = vmul.f32 %v892, %v544
      %v981 = vmul.f32 %v895, %v544
      %v982 = vmul.f32 %v898, %v544
      %v983 = vmul.f32 %v901, %v544
      %v984 = vmul.f32 %v904, %v544
      %v985 = vmul.f32 %v907, %v544
      %v986 = vmul.f32 %v910, %v544
      %v987 = vmul.f32 %v913, %v544
      %v988 = vmul.f32 %v916, %v544
      %v989 = vmul.f32 %v919, %v544
      %v990 = vmul.f32 %v922, %v544
      %v991 = vmul.f32 %v925, %v544
      %v992 = vmul.f32 %v928, %v544
      %v993 = vadd.f32 %v929, 1e-05
      %v994 = vadd.f32 %v930, 1e-05
      %v995 = vadd.f32 %v931, 1e-05
      %v996 = vadd.f32 %v932, 1e-05
      %v997 = vadd.f32 %v933, 1e-05
      %v998 = vadd.f32 %v934, 1e-05
      %v999 = vadd.f32 %v935, 1e-05
      %v1000 = vadd.f32 %v936, 1e-05
      %v1001 = vadd.f32 %v937, 1e-05
      %v1002 = vadd.f32 %v938, 1e-05
      %v1003 = vadd.f32 %v939, 1e-05
      %v1004 = vadd.f32 %v940, 1e-05
      %v1005 = vadd.f32 %v941, 1e-05
      %v1006 = vadd.f32 %v942, 1e-05
      %v1007 = vadd.f32 %v943, 1e-05
      %v1008 = vadd.f32 %v944, 1e-05
      %v1009 = vadd.f32 %v945, 1e-05
      %v1010 = vadd.f32 %v946, 1e-05
      %v1011 = vadd.f32 %v947, 1e-05
      %v1012 = vadd.f32 %v948, 1e-05
      %v1013 = vadd.f32 %v949, 1e-05
      %v1014 = vadd.f32 %v950, 1e-05
      %v1015 = vadd.f32 %v951, 1e-05
      %v1016 = vadd.f32 %v952, 1e-05
      %v1017 = vadd.f32 %v953, 1e-05
      %v1018 = vadd.f32 %v954, 1e-05
      %v1019 = vadd.f32 %v955, 1e-05
      %v1020 = vadd.f32 %v956, 1e-05
      %v1021 = vadd.f32 %v957, 1e-05
      %v1022 = vadd.f32 %v958, 1e-05
      %v1023 = vadd.f32 %v959, 1e-05
      %v1024 = vadd.f32 %v960, 1e-05
      %v1025 = vadd.f32 %v961, 1e-05
      %v1026 = vadd.f32 %v962, 1e-05
      %v1027 = vadd.f32 %v963, 1e-05
      %v1028 = vadd.f32 %v964, 1e-05
      %v1029 = vadd.f32 %v965, 1e-05
      %v1030 = vadd.f32 %v966, 1e-05
      %v1031 = vadd.f32 %v967, 1e-05
      %v1032 = vadd.f32 %v968, 1e-05
      %v1033 = vadd.f32 %v969, 1e-05
      %v1034 = vadd.f32 %v970, 1e-05
      %v1035 = vadd.f32 %v971, 1e-05
      %v1036 = vadd.f32 %v972, 1e-05
      %v1037 = vadd.f32 %v973, 1e-05
      %v1038 = vadd.f32 %v974, 1e-05
      %v1039 = vadd.f32 %v975, 1e-05
      %v1040 = vadd.f32 %v976, 1e-05
      %v1041 = vadd.f32 %v977, 1e-05
      %v1042 = vadd.f32 %v978, 1e-05
      %v1043 = vadd.f32 %v979, 1e-05
      %v1044 = vadd.f32 %v980, 1e-05
      %v1045 = vadd.f32 %v981, 1e-05
      %v1046 = vadd.f32 %v982, 1e-05
      %v1047 = vadd.f32 %v983, 1e-05
      %v1048 = vadd.f32 %v984, 1e-05
      %v1049 = vadd.f32 %v985, 1e-05
      %v1050 = vadd.f32 %v986, 1e-05
      %v1051 = vadd.f32 %v987, 1e-05
      %v1052 = vadd.f32 %v988, 1e-05
      %v1053 = vadd.f32 %v989, 1e-05
      %v1054 = vadd.f32 %v990, 1e-05
      %v1055 = vadd.f32 %v991, 1e-05
      %v1056 = vadd.f32 %v992, 1e-05
      %v1057 = vrsqrt.pop %v993
      %v1058 = vrsqrt.pop %v994
      %v1059 = vrsqrt.pop %v995
      %v1060 = vrsqrt.pop %v996
      %v1061 = vrsqrt.pop %v997
      %v1062 = vrsqrt.pop %v998
      %v1063 = vrsqrt.pop %v999
      %v1064 = vrsqrt.pop %v1000
      %v1065 = vrsqrt.pop %v1001
      %v1066 = vrsqrt.pop %v1002
      %v1067 = vrsqrt.pop %v1003
      %v1068 = vrsqrt.pop %v1004
      %v1069 = vrsqrt.pop %v1005
      %v1070 = vrsqrt.pop %v1006
      %v1071 = vrsqrt.pop %v1007
      %v1072 = vrsqrt.pop %v1008
      %v1073 = vrsqrt.pop %v1009
      %v1074 = vrsqrt.pop %v1010
      %v1075 = vrsqrt.pop %v1011
      %v1076 = vrsqrt.pop %v1012
      %v1077 = vrsqrt.pop %v1013
      %v1078 = vrsqrt.pop %v1014
      %v1079 = vrsqrt.pop %v1015
      %v1080 = vrsqrt.pop %v1016
      %v1081 = vrsqrt.pop %v1017
      %v1082 = vrsqrt.pop %v1018
      %v1083 = vrsqrt.pop %v1019
      %v1084 = vrsqrt.pop %v1020
      %v1085 = vrsqrt.pop %v1021
      %v1086 = vrsqrt.pop %v1022
      %v1087 = vrsqrt.pop %v1023
      %v1088 = vrsqrt.pop %v1024
      %v1089 = vrsqrt.pop %v1025
      %v1090 = vrsqrt.pop %v1026
      %v1091 = vrsqrt.pop %v1027
      %v1092 = vrsqrt.pop %v1028
      %v1093 = vrsqrt.pop %v1029
      %v1094 = vrsqrt.pop %v1030
      %v1095 = vrsqrt.pop %v1031
      %v1096 = vrsqrt.pop %v1032
      %v1097 = vrsqrt.pop %v1033
      %v1098 = vrsqrt.pop %v1034
      %v1099 = vrsqrt.pop %v1035
      %v1100 = vrsqrt.pop %v1036
      %v1101 = vrsqrt.pop %v1037
      %v1102 = vrsqrt.pop %v1038
      %v1103 = vrsqrt.pop %v1039
      %v1104 = vrsqrt.pop %v1040
      %v1105 = vrsqrt.pop %v1041
      %v1106 = vrsqrt.pop %v1042
      %v1107 = vrsqrt.pop %v1043
      %v1108 = vrsqrt.pop %v1044
      %v1109 = vrsqrt.pop %v1045
      %v1110 = vrsqrt.pop %v1046
      %v1111 = vrsqrt.pop %v1047
      %v1112 = vrsqrt.pop %v1048
      %v1113 = vrsqrt.pop %v1049
      %v1114 = vrsqrt.pop %v1050
      %v1115 = vrsqrt.pop %v1051
      %v1116 = vrsqrt.pop %v1052
      %v1117 = vrsqrt.pop %v1053
      %v1118 = vrsqrt.pop %v1054
      %v1119 = vrsqrt.pop %v1055
      %v1120 = vrsqrt.pop %v1056
      %v1121 = vmul.f32 %v609, %v1057
      %v1122 = vmul.f32 %v610, %v1058
      %v1123 = vmul.f32 %v611, %v1059
      %v1124 = vmul.f32 %v612, %v1060
      %v1125 = vmul.f32 %v613, %v1061
      %v1126 = vmul.f32 %v614, %v1062
      %v1127 = vmul.f32 %v615, %v1063
      %v1128 = vmul.f32 %v616, %v1064
      %v1129 = vmul.f32 %v617, %v1065
      %v1130 = vmul.f32 %v618, %v1066
      %v1131 = vmul.f32 %v619, %v1067
      %v1132 = vmul.f32 %v620, %v1068
      %v1133 = vmul.f32 %v621, %v1069
      %v1134 = vmul.f32 %v622, %v1070
      %v1135 = vmul.f32 %v623, %v1071
      %v1136 = vmul.f32 %v624, %v1072
      %v1137 = vmul.f32 %v625, %v1073
      %v1138 = vmul.f32 %v626, %v1074
      %v1139 = vmul.f32 %v627, %v1075
      %v1140 = vmul.f32 %v628, %v1076
      %v1141 = vmul.f32 %v629, %v1077
      %v1142 = vmul.f32 %v630, %v1078
      %v1143 = vmul.f32 %v631, %v1079
      %v1144 = vmul.f32 %v632, %v1080
      %v1145 = vmul.f32 %v633, %v1081
      %v1146 = vmul.f32 %v634, %v1082
      %v1147 = vmul.f32 %v635, %v1083
      %v1148 = vmul.f32 %v636, %v1084
      %v1149 = vmul.f32 %v637, %v1085
      %v1150 = vmul.f32 %v638, %v1086
      %v1151 = vmul.f32 %v639, %v1087
      %v1152 = vmul.f32 %v640, %v1088
      %v1153 = vmul.f32 %v641, %v1089
      %v1154 = vmul.f32 %v642, %v1090
      %v1155 = vmul.f32 %v643, %v1091
      %v1156 = vmul.f32 %v644, %v1092
      %v1157 = vmul.f32 %v645, %v1093
      %v1158 = vmul.f32 %v646, %v1094
      %v1159 = vmul.f32 %v647, %v1095
      %v1160 = vmul.f32 %v648, %v1096
      %v1161 = vmul.f32 %v649, %v1097
      %v1162 = vmul.f32 %v650, %v1098
      %v1163 = vmul.f32 %v651, %v1099
      %v1164 = vmul.f32 %v652, %v1100
      %v1165 = vmul.f32 %v653, %v1101
      %v1166 = vmul.f32 %v654, %v1102
      %v1167 = vmul.f32 %v655, %v1103
      %v1168 = vmul.f32 %v656, %v1104
      %v1169 = vmul.f32 %v657, %v1105
      %v1170 = vmul.f32 %v658, %v1106
      %v1171 = vmul.f32 %v659, %v1107
      %v1172 = vmul.f32 %v660, %v1108
      %v1173 = vmul.f32 %v661, %v1109
      %v1174 = vmul.f32 %v662, %v1110
      %v1175 = vmul.f32 %v663, %v1111
      %v1176 = vmul.f32 %v664, %v1112
      %v1177 = vmul.f32 %v665, %v1113
      %v1178 = vmul.f32 %v666, %v1114
      %v1179 = vmul.f32 %v667, %v1115
      %v1180 = vmul.f32 %v668, %v1116
      %v1181 = vmul.f32 %v669, %v1117
      %v1182 = vmul.f32 %v670, %v1118
      %v1183 = vmul.f32 %v671, %v1119
      %v1184 = vmul.f32 %v672, %v1120
      %v1185 = vld [vmem:[%s1] sm:$0x1]
      %v1187 = vlaneseq
      %v1188 = vshrl.u32 %v1187, 7
      %v1189 = vsub.s32 0, %v1188
      %v1190 = vrot.slane %v1185, %v1189
      %v1192 = vmul.f32 %v1121, %v1190
      %v1193 = vmul.f32 %v1122, %v1190
      %v1194 = vmul.f32 %v1123, %v1190
      %v1195 = vmul.f32 %v1124, %v1190
      %v1196 = vmul.f32 %v1125, %v1190
      %v1197 = vmul.f32 %v1126, %v1190
      %v1198 = vmul.f32 %v1127, %v1190
      %v1199 = vmul.f32 %v1128, %v1190
      %v1200 = vmul.f32 %v1129, %v1190
      %v1201 = vmul.f32 %v1130, %v1190
      %v1202 = vmul.f32 %v1131, %v1190
      %v1203 = vmul.f32 %v1132, %v1190
      %v1204 = vmul.f32 %v1133, %v1190
      %v1205 = vmul.f32 %v1134, %v1190
      %v1206 = vmul.f32 %v1135, %v1190
      %v1207 = vmul.f32 %v1136, %v1190
      %v1208 = vmul.f32 %v1137, %v1190
      %v1209 = vmul.f32 %v1138, %v1190
      %v1210 = vmul.f32 %v1139, %v1190
      %v1211 = vmul.f32 %v1140, %v1190
      %v1212 = vmul.f32 %v1141, %v1190
      %v1213 = vmul.f32 %v1142, %v1190
      %v1214 = vmul.f32 %v1143, %v1190
      %v1215 = vmul.f32 %v1144, %v1190
      %v1216 = vmul.f32 %v1145, %v1190
      %v1217 = vmul.f32 %v1146, %v1190
      %v1218 = vmul.f32 %v1147, %v1190
      %v1219 = vmul.f32 %v1148, %v1190
      %v1220 = vmul.f32 %v1149, %v1190
      %v1221 = vmul.f32 %v1150, %v1190
      %v1222 = vmul.f32 %v1151, %v1190
      %v1223 = vmul.f32 %v1152, %v1190
      %v1224 = vmul.f32 %v1153, %v1190
      %v1225 = vmul.f32 %v1154, %v1190
      %v1226 = vmul.f32 %v1155, %v1190
      %v1227 = vmul.f32 %v1156, %v1190
      %v1228 = vmul.f32 %v1157, %v1190
      %v1229 = vmul.f32 %v1158, %v1190
      %v1230 = vmul.f32 %v1159, %v1190
      %v1231 = vmul.f32 %v1160, %v1190
      %v1232 = vmul.f32 %v1161, %v1190
      %v1233 = vmul.f32 %v1162, %v1190
      %v1234 = vmul.f32 %v1163, %v1190
      %v1235 = vmul.f32 %v1164, %v1190
      %v1236 = vmul.f32 %v1165, %v1190
      %v1237 = vmul.f32 %v1166, %v1190
      %v1238 = vmul.f32 %v1167, %v1190
      %v1239 = vmul.f32 %v1168, %v1190
      %v1240 = vmul.f32 %v1169, %v1190
      %v1241 = vmul.f32 %v1170, %v1190
      %v1242 = vmul.f32 %v1171, %v1190
      %v1243 = vmul.f32 %v1172, %v1190
      %v1244 = vmul.f32 %v1173, %v1190
      %v1245 = vmul.f32 %v1174, %v1190
      %v1246 = vmul.f32 %v1175, %v1190
      %v1247 = vmul.f32 %v1176, %v1190
      %v1248 = vmul.f32 %v1177, %v1190
      %v1249 = vmul.f32 %v1178, %v1190
      %v1250 = vmul.f32 %v1179, %v1190
      %v1251 = vmul.f32 %v1180, %v1190
      %v1252 = vmul.f32 %v1181, %v1190
      %v1253 = vmul.f32 %v1182, %v1190
      %v1254 = vmul.f32 %v1183, %v1190
      %v1255 = vmul.f32 %v1184, %v1190
      %v1256 = vld [vmem:[%s2] sm:$0x1]
      %v1258 = vlaneseq
      %v1259 = vshrl.u32 %v1258, 7
      %v1260 = vsub.s32 0, %v1259
      %v1261 = vrot.slane %v1256, %v1260
      %v1263 = vadd.f32 %v1192, %v1261
      %v1264 = vadd.f32 %v1193, %v1261
      %v1265 = vadd.f32 %v1194, %v1261
      %v1266 = vadd.f32 %v1195, %v1261
      %v1267 = vadd.f32 %v1196, %v1261
      %v1268 = vadd.f32 %v1197, %v1261
      %v1269 = vadd.f32 %v1198, %v1261
      %v1270 = vadd.f32 %v1199, %v1261
      %v1271 = vadd.f32 %v1200, %v1261
      %v1272 = vadd.f32 %v1201, %v1261
      %v1273 = vadd.f32 %v1202, %v1261
      %v1274 = vadd.f32 %v1203, %v1261
      %v1275 = vadd.f32 %v1204, %v1261
      %v1276 = vadd.f32 %v1205, %v1261
      %v1277 = vadd.f32 %v1206, %v1261
      %v1278 = vadd.f32 %v1207, %v1261
      %v1279 = vadd.f32 %v1208, %v1261
      %v1280 = vadd.f32 %v1209, %v1261
      %v1281 = vadd.f32 %v1210, %v1261
      %v1282 = vadd.f32 %v1211, %v1261
      %v1283 = vadd.f32 %v1212, %v1261
      %v1284 = vadd.f32 %v1213, %v1261
      %v1285 = vadd.f32 %v1214, %v1261
      %v1286 = vadd.f32 %v1215, %v1261
      %v1287 = vadd.f32 %v1216, %v1261
      %v1288 = vadd.f32 %v1217, %v1261
      %v1289 = vadd.f32 %v1218, %v1261
      %v1290 = vadd.f32 %v1219, %v1261
      %v1291 = vadd.f32 %v1220, %v1261
      %v1292 = vadd.f32 %v1221, %v1261
      %v1293 = vadd.f32 %v1222, %v1261
      %v1294 = vadd.f32 %v1223, %v1261
      %v1295 = vadd.f32 %v1224, %v1261
      %v1296 = vadd.f32 %v1225, %v1261
      %v1297 = vadd.f32 %v1226, %v1261
      %v1298 = vadd.f32 %v1227, %v1261
      %v1299 = vadd.f32 %v1228, %v1261
      %v1300 = vadd.f32 %v1229, %v1261
      %v1301 = vadd.f32 %v1230, %v1261
      %v1302 = vadd.f32 %v1231, %v1261
      %v1303 = vadd.f32 %v1232, %v1261
      %v1304 = vadd.f32 %v1233, %v1261
      %v1305 = vadd.f32 %v1234, %v1261
      %v1306 = vadd.f32 %v1235, %v1261
      %v1307 = vadd.f32 %v1236, %v1261
      %v1308 = vadd.f32 %v1237, %v1261
      %v1309 = vadd.f32 %v1238, %v1261
      %v1310 = vadd.f32 %v1239, %v1261
      %v1311 = vadd.f32 %v1240, %v1261
      %v1312 = vadd.f32 %v1241, %v1261
      %v1313 = vadd.f32 %v1242, %v1261
      %v1314 = vadd.f32 %v1243, %v1261
      %v1315 = vadd.f32 %v1244, %v1261
      %v1316 = vadd.f32 %v1245, %v1261
      %v1317 = vadd.f32 %v1246, %v1261
      %v1318 = vadd.f32 %v1247, %v1261
      %v1319 = vadd.f32 %v1248, %v1261
      %v1320 = vadd.f32 %v1249, %v1261
      %v1321 = vadd.f32 %v1250, %v1261
      %v1322 = vadd.f32 %v1251, %v1261
      %v1323 = vadd.f32 %v1252, %v1261
      %v1324 = vadd.f32 %v1253, %v1261
      %v1325 = vadd.f32 %v1254, %v1261
      %v1326 = vadd.f32 %v1255, %v1261
      %v1327 = vld [vmem:[%s3] sm:$0xff]
      %v1328 = vld [vmem:[%s3 + $0x8] sm:$0xff]
      %v1329 = vld [vmem:[%s4] sm:$0x1]
      %v1331 = vlaneseq
      %v1332 = vshrl.u32 %v1331, 7
      %v1333 = vsub.s32 0, %v1332
      %v1334 = vrot.slane %v1329, %v1333
      %v1337 = vsel %vm351, %v1263, 0
      %v1340 = vsel %vm351, %v1264, 0
      %v1343 = vsel %vm351, %v1265, 0
      %v1346 = vsel %vm351, %v1266, 0
      %v1349 = vsel %vm351, %v1267, 0
      %v1352 = vsel %vm351, %v1268, 0
      %v1355 = vsel %vm351, %v1269, 0
      %v1358 = vsel %vm351, %v1270, 0
      %v1361 = vsel %vm351, %v1271, 0
      %v1364 = vsel %vm351, %v1272, 0
      %v1367 = vsel %vm351, %v1273, 0
      %v1370 = vsel %vm351, %v1274, 0
      %v1373 = vsel %vm351, %v1275, 0
      %v1376 = vsel %vm351, %v1276, 0
      %v1379 = vsel %vm351, %v1277, 0
      %v1382 = vsel %vm351, %v1278, 0
      %v1385 = vsel %vm351, %v1279, 0
      %v1388 = vsel %vm351, %v1280, 0
      %v1391 = vsel %vm351, %v1281, 0
      %v1394 = vsel %vm351, %v1282, 0
      %v1397 = vsel %vm351, %v1283, 0
      %v1400 = vsel %vm351, %v1284, 0
      %v1403 = vsel %vm351, %v1285, 0
      %v1406 = vsel %vm351, %v1286, 0
      %v1409 = vsel %vm351, %v1287, 0
      %v1412 = vsel %vm351, %v1288, 0
      %v1415 = vsel %vm351, %v1289, 0
      %v1418 = vsel %vm351, %v1290, 0
      %v1421 = vsel %vm351, %v1291, 0
      %v1424 = vsel %vm351, %v1292, 0
      %v1427 = vsel %vm351, %v1293, 0
      %v1430 = vsel %vm351, %v1294, 0
      %v1433 = vsel %vm351, %v1295, 0
      %v1436 = vsel %vm351, %v1296, 0
      %v1439 = vsel %vm351, %v1297, 0
      %v1442 = vsel %vm351, %v1298, 0
      %v1445 = vsel %vm351, %v1299, 0
      %v1448 = vsel %vm351, %v1300, 0
      %v1451 = vsel %vm351, %v1301, 0
      %v1454 = vsel %vm351, %v1302, 0
      %v1457 = vsel %vm351, %v1303, 0
      %v1460 = vsel %vm351, %v1304, 0
      %v1463 = vsel %vm351, %v1305, 0
      %v1466 = vsel %vm351, %v1306, 0
      %v1469 = vsel %vm351, %v1307, 0
      %v1472 = vsel %vm351, %v1308, 0
      %v1475 = vsel %vm351, %v1309, 0
      %v1478 = vsel %vm351, %v1310, 0
      %v1481 = vsel %vm351, %v1311, 0
      %v1484 = vsel %vm351, %v1312, 0
      %v1487 = vsel %vm351, %v1313, 0
      %v1490 = vsel %vm351, %v1314, 0
      %v1493 = vsel %vm351, %v1315, 0
      %v1496 = vsel %vm351, %v1316, 0
      %v1499 = vsel %vm351, %v1317, 0
      %v1502 = vsel %vm351, %v1318, 0
      %v1505 = vsel %vm351, %v1319, 0
      %v1508 = vsel %vm351, %v1320, 0
      %v1511 = vsel %vm351, %v1321, 0
      %v1514 = vsel %vm351, %v1322, 0
      %v1517 = vsel %vm351, %v1323, 0
      %v1520 = vsel %vm351, %v1324, 0
      %v1523 = vsel %vm351, %v1325, 0
      %v1526 = vsel %vm351, %v1326, 0
      %1528 = vmatprep.subr.mxu0 0.0
      %1529 = vmatpush1.msra.mxu0 %v1327
      %1530 = vmatprep.subr.mxu0 0.0
      %1531 = vmatpush1.msra.mxu0 %v1328
      %1532 = vmatprep.subr.mxu0 0.0
      %1533 = vmatpush1.msra.mxu0 0.0
      %1534 = vmatprep.subr.mxu0 0.0
      %1535 = vmatpush1.msra.mxu0 0.0
      %1536 = vmatprep.subr.mxu0 0.0
      %1537 = vmatpush1.msra.mxu0 0.0
      %1538 = vmatprep.subr.mxu0 0.0
      %1539 = vmatpush1.msra.mxu0 0.0
      %1540 = vmatprep.subr.mxu0 0.0
      %1541 = vmatpush1.msra.mxu0 0.0
      %1542 = vmatprep.subr.mxu0 0.0
      %1543 = vmatpush1.msra.mxu0 0.0
      %1544 = vmatprep.subr.mxu0 0.0
      %1545 = vmatpush1.msra.mxu0 0.0
      %1546 = vmatprep.subr.mxu0 0.0
      %1547 = vmatpush1.msra.mxu0 0.0
      %1548 = vmatprep.subr.mxu0 0.0
      %1549 = vmatpush1.msra.mxu0 0.0
      %1550 = vmatprep.subr.mxu0 0.0
      %1551 = vmatpush1.msra.mxu0 0.0
      %1552 = vmatprep.subr.mxu0 0.0
      %1553 = vmatpush1.msra.mxu0 0.0
      %1554 = vmatprep.subr.mxu0 0.0
      %1555 = vmatpush1.msra.mxu0 0.0
      %1556 = vmatprep.subr.mxu0 0.0
      %1557 = vmatpush1.msra.mxu0 0.0
      %1558 = vmatprep.subr.mxu0 0.0
      %1559 = vmatpush1.msra.mxu0 0.0
      %1560 = vmatprep.subr.mxu0 0.0
      %1561 = vmatpush1.msra.mxu0 0.0
      %1562 = vmatprep.subr.mxu0 0.0
      %1563 = vmatpush1.msra.mxu0 0.0
      %1564 = vmatprep.subr.mxu0 0.0
      %1565 = vmatpush1.msra.mxu0 0.0
      %1566 = vmatprep.subr.mxu0 0.0
      %1567 = vmatpush1.msra.mxu0 0.0
      %1568 = vmatprep.subr.mxu0 0.0
      %1569 = vmatpush1.msra.mxu0 0.0
      %1570 = vmatprep.subr.mxu0 0.0
      %1571 = vmatpush1.msra.mxu0 0.0
      %1572 = vmatprep.subr.mxu0 0.0
      %1573 = vmatpush1.msra.mxu0 0.0
      %1574 = vmatprep.subr.mxu0 0.0
      %1575 = vmatpush1.msra.mxu0 0.0
      %1576 = vmatprep.subr.mxu0 0.0
      %1577 = vmatpush1.msra.mxu0 0.0
      %1578 = vmatprep.subr.mxu0 0.0
      %1579 = vmatpush1.msra.mxu0 0.0
      %1580 = vmatprep.subr.mxu0 0.0
      %1581 = vmatpush1.msra.mxu0 0.0
      %1582 = vmatprep.subr.mxu0 0.0
      %1583 = vmatpush1.msra.mxu0 0.0
      %1584 = vmatprep.subr.mxu0 0.0
      %1585 = vmatpush1.msra.mxu0 0.0
      %1586 = vmatprep.subr.mxu0 0.0
      %1587 = vmatpush1.msra.mxu0 0.0
      %1588 = vmatprep.subr.mxu0 0.0
      %1589 = vmatpush1.msra.mxu0 0.0
      %1590 = vmatprep.subr.mxu0 0.0
      %1591 = vmatpush1.msra.mxu0 0.0
      %1592 = vmatprep.mubr.f32.mxu0 0.0
      %1593 = vmatmul.mubr.f32.gmra.mrb[0].mxu0 %v1337
      %v1594 = vpop.f32.mrb[0].mxu0
      %v1595 = vadd.f32 %v1334, %v1594
      %v1596 = vpop.f32.mrb[0].mxu0
      %1597 = vmatprep.mubr.f32.mxu0 0.0
      %1598 = vmatmul.mubr.f32.gmra.mrb[0].mxu0 %v1340
      %v1599 = vpop.f32.mrb[0].mxu0
      %v1600 = vadd.f32 %v1334, %v1599
      %v1601 = vpop.f32.mrb[0].mxu0
      %1602 = vmatprep.mubr.f32.mxu0 0.0
      %1603 = vmatmul.mubr.f32.gmra.mrb[0].mxu0 %v1343
      %v1604 = vpop.f32.mrb[0].mxu0
      %v1605 = vadd.f32 %v1334, %v1604
      %v1606 = vpop.f32.mrb[0].mxu0
      %1607 = vmatprep.mubr.f32.mxu0 0.0
      %1608 = vmatmul.mubr.f32.gmra.mrb[0].mxu0 %v1346
      %v1609 = vpop.f32.mrb[0].mxu0
      %v1610 = vadd.f32 %v1334, %v1609
      %v1611 = vpop.f32.mrb[0].mxu0
      %1612 = vmatprep.mubr.f32.mxu0 0.0
      %1613 = vmatmul.mubr.f32.gmra.mrb[0].mxu0 %v1349
      %v1614 = vpop.f32.mrb[0].mxu0
      %v1615 = vadd.f32 %v1334, %v1614
      %v1616 = vpop.f32.mrb[0].mxu0
      %1617 = vmatprep.mubr.f32.mxu0 0.0
      %1618 = vmatmul.mubr.f32.gmra.mrb[0].mxu0 %v1352
      %v1619 = vpop.f32.mrb[0].mxu0
      %v1620 = vadd.f32 %v1334, %v1619
      %v1621 = vpop.f32.mrb[0].mxu0
      %1622 = vmatprep.mubr.f32.mxu0 0.0
      %1623 = vmatmul.mubr.f32.gmra.mrb[0].mxu0 %v1355
      %v1624 = vpop.f32.mrb[0].mxu0
      %v1625 = vadd.f32 %v1334, %v1624
      %v1626 = vpop.f32.mrb[0].mxu0
      %1627 = vmatprep.mubr.f32.mxu0 0.0
      %1628 = vmatmul.mubr.f32.gmra.mrb[0].mxu0 %v1358
      %v1629 = vpop.f32.mrb[0].mxu0
      %v1630 = vadd.f32 %v1334, %v1629
      %v1631 = vpop.f32.mrb[0].mxu0
      %1632 = vmatprep.mubr.f32.mxu0 0.0
      %1633 = vmatmul.mubr.f32.gmra.mrb[0].mxu0 %v1361
      %v1634 = vpop.f32.mrb[0].mxu0
      %v1635 = vadd.f32 %v1334, %v1634
      %v1636 = vpop.f32.mrb[0].mxu0
      %1637 = vmatprep.mubr.f32.mxu0 0.0
      %1638 = vmatmul.mubr.f32.gmra.mrb[0].mxu0 %v1364
      %v1639 = vpop.f32.mrb[0].mxu0
      %v1640 = vadd.f32 %v1334, %v1639
      %v1641 = vpop.f32.mrb[0].mxu0
      %1642 = vmatprep.mubr.f32.mxu0 0.0
      %1643 = vmatmul.mubr.f32.gmra.mrb[0].mxu0 %v1367
      %v1644 = vpop.f32.mrb[0].mxu0
      %v1645 = vadd.f32 %v1334, %v1644
      %v1646 = vpop.f32.mrb[0].mxu0
      %1647 = vmatprep.mubr.f32.mxu0 0.0
      %1648 = vmatmul.mubr.f32.gmra.mrb[0].mxu0 %v1370
      %v1649 = vpop.f32.mrb[0].mxu0
      %v1650 = vadd.f32 %v1334, %v1649
      %v1651 = vpop.f32.mrb[0].mxu0
      %1652 = vmatprep.mubr.f32.mxu0 0.0
      %1653 = vmatmul.mubr.f32.gmra.mrb[0].mxu0 %v1373
      %v1654 = vpop.f32.mrb[0].mxu0
      %v1655 = vadd.f32 %v1334, %v1654
      %v1656 = vpop.f32.mrb[0].mxu0
      %1657 = vmatprep.mubr.f32.mxu0 0.0
      %1658 = vmatmul.mubr.f32.gmra.mrb[0].mxu0 %v1376
      %v1659 = vpop.f32.mrb[0].mxu0
      %v1660 = vadd.f32 %v1334, %v1659
      %v1661 = vpop.f32.mrb[0].mxu0
      %1662 = vmatprep.mubr.f32.mxu0 0.0
      %1663 = vmatmul.mubr.f32.gmra.mrb[0].mxu0 %v1379
      %v1664 = vpop.f32.mrb[0].mxu0
      %v1665 = vadd.f32 %v1334, %v1664
      %v1666 = vpop.f32.mrb[0].mxu0
      %1667 = vmatprep.mubr.f32.mxu0 0.0
      %1668 = vmatmul.mubr.f32.gmra.mrb[0].mxu0 %v1382
      %v1669 = vpop.f32.mrb[0].mxu0
      %v1670 = vadd.f32 %v1334, %v1669
      %v1671 = vpop.f32.mrb[0].mxu0
      %1672 = vmatprep.mubr.f32.mxu0 0.0
      %1673 = vmatmul.mubr.f32.gmra.mrb[0].mxu0 %v1385
      %v1674 = vpop.f32.mrb[0].mxu0
      %v1675 = vadd.f32 %v1334, %v1674
      %v1676 = vpop.f32.mrb[0].mxu0
      %1677 = vmatprep.mubr.f32.mxu0 0.0
      %1678 = vmatmul.mubr.f32.gmra.mrb[0].mxu0 %v1388
      %v1679 = vpop.f32.mrb[0].mxu0
      %v1680 = vadd.f32 %v1334, %v1679
      %v1681 = vpop.f32.mrb[0].mxu0
      %1682 = vmatprep.mubr.f32.mxu0 0.0
      %1683 = vmatmul.mubr.f32.gmra.mrb[0].mxu0 %v1391
      %v1684 = vpop.f32.mrb[0].mxu0
      %v1685 = vadd.f32 %v1334, %v1684
      %v1686 = vpop.f32.mrb[0].mxu0
      %1687 = vmatprep.mubr.f32.mxu0 0.0
      %1688 = vmatmul.mubr.f32.gmra.mrb[0].mxu0 %v1394
      %v1689 = vpop.f32.mrb[0].mxu0
      %v1690 = vadd.f32 %v1334, %v1689
      %v1691 = vpop.f32.mrb[0].mxu0
      %1692 = vmatprep.mubr.f32.mxu0 0.0
      %1693 = vmatmul.mubr.f32.gmra.mrb[0].mxu0 %v1397
      %v1694 = vpop.f32.mrb[0].mxu0
      %v1695 = vadd.f32 %v1334, %v1694
      %v1696 = vpop.f32.mrb[0].mxu0
      %1697 = vmatprep.mubr.f32.mxu0 0.0
      %1698 = vmatmul.mubr.f32.gmra.mrb[0].mxu0 %v1400
      %v1699 = vpop.f32.mrb[0].mxu0
      %v1700 = vadd.f32 %v1334, %v1699
      %v1701 = vpop.f32.mrb[0].mxu0
      %1702 = vmatprep.mubr.f32.mxu0 0.0
      %1703 = vmatmul.mubr.f32.gmra.mrb[0].mxu0 %v1403
      %v1704 = vpop.f32.mrb[0].mxu0
      %v1705 = vadd.f32 %v1334, %v1704
      %v1706 = vpop.f32.mrb[0].mxu0
      %1707 = vmatprep.mubr.f32.mxu0 0.0
      %1708 = vmatmul.mubr.f32.gmra.mrb[0].mxu0 %v1406
      %v1709 = vpop.f32.mrb[0].mxu0
      %v1710 = vadd.f32 %v1334, %v1709
      %v1711 = vpop.f32.mrb[0].mxu0
      %1712 = vmatprep.mubr.f32.mxu0 0.0
      %1713 = vmatmul.mubr.f32.gmra.mrb[0].mxu0 %v1409
      %v1714 = vpop.f32.mrb[0].mxu0
      %v1715 = vadd.f32 %v1334, %v1714
      %v1716 = vpop.f32.mrb[0].mxu0
      %1717 = vmatprep.mubr.f32.mxu0 0.0
      %1718 = vmatmul.mubr.f32.gmra.mrb[0].mxu0 %v1412
      %v1719 = vpop.f32.mrb[0].mxu0
      %v1720 = vadd.f32 %v1334, %v1719
      %v1721 = vpop.f32.mrb[0].mxu0
      %1722 = vmatprep.mubr.f32.mxu0 0.0
      %1723 = vmatmul.mubr.f32.gmra.mrb[0].mxu0 %v1415
      %v1724 = vpop.f32.mrb[0].mxu0
      %v1725 = vadd.f32 %v1334, %v1724
      %v1726 = vpop.f32.mrb[0].mxu0
      %1727 = vmatprep.mubr.f32.mxu0 0.0
      %1728 = vmatmul.mubr.f32.gmra.mrb[0].mxu0 %v1418
      %v1729 = vpop.f32.mrb[0].mxu0
      %v1730 = vadd.f32 %v1334, %v1729
      %v1731 = vpop.f32.mrb[0].mxu0
      %1732 = vmatprep.mubr.f32.mxu0 0.0
      %1733 = vmatmul.mubr.f32.gmra.mrb[0].mxu0 %v1421
      %v1734 = vpop.f32.mrb[0].mxu0
      %v1735 = vadd.f32 %v1334, %v1734
      %v1736 = vpop.f32.mrb[0].mxu0
      %1737 = vmatprep.mubr.f32.mxu0 0.0
      %1738 = vmatmul.mubr.f32.gmra.mrb[0].mxu0 %v1424
      %v1739 = vpop.f32.mrb[0].mxu0
      %v1740 = vadd.f32 %v1334, %v1739
      %v1741 = vpop.f32.mrb[0].mxu0
      %1742 = vmatprep.mubr.f32.mxu0 0.0
      %1743 = vmatmul.mubr.f32.gmra.mrb[0].mxu0 %v1427
      %v1744 = vpop.f32.mrb[0].mxu0
      %v1745 = vadd.f32 %v1334, %v1744
      %v1746 = vpop.f32.mrb[0].mxu0
      %1747 = vmatprep.mubr.f32.mxu0 0.0
      %1748 = vmatmul.mubr.f32.gmra.mrb[0].mxu0 %v1430
      %v1749 = vpop.f32.mrb[0].mxu0
      %v1750 = vadd.f32 %v1334, %v1749
      %v1751 = vpop.f32.mrb[0].mxu0
      %1752 = vmatprep.mubr.f32.mxu0 0.0
      %1753 = vmatmul.mubr.f32.gmra.mrb[0].mxu0 %v1433
      %v1754 = vpop.f32.mrb[0].mxu0
      %v1755 = vadd.f32 %v1334, %v1754
      %v1756 = vpop.f32.mrb[0].mxu0
      %1757 = vmatprep.mubr.f32.mxu0 0.0
      %1758 = vmatmul.mubr.f32.gmra.mrb[0].mxu0 %v1436
      %v1759 = vpop.f32.mrb[0].mxu0
      %v1760 = vadd.f32 %v1334, %v1759
      %v1761 = vpop.f32.mrb[0].mxu0
      %1762 = vmatprep.mubr.f32.mxu0 0.0
      %1763 = vmatmul.mubr.f32.gmra.mrb[0].mxu0 %v1439
      %v1764 = vpop.f32.mrb[0].mxu0
      %v1765 = vadd.f32 %v1334, %v1764
      %v1766 = vpop.f32.mrb[0].mxu0
      %1767 = vmatprep.mubr.f32.mxu0 0.0
      %1768 = vmatmul.mubr.f32.gmra.mrb[0].mxu0 %v1442
      %v1769 = vpop.f32.mrb[0].mxu0
      %v1770 = vadd.f32 %v1334, %v1769
      %v1771 = vpop.f32.mrb[0].mxu0
      %1772 = vmatprep.mubr.f32.mxu0 0.0
      %1773 = vmatmul.mubr.f32.gmra.mrb[0].mxu0 %v1445
      %v1774 = vpop.f32.mrb[0].mxu0
      %v1775 = vadd.f32 %v1334, %v1774
      %v1776 = vpop.f32.mrb[0].mxu0
      %1777 = vmatprep.mubr.f32.mxu0 0.0
      %1778 = vmatmul.mubr.f32.gmra.mrb[0].mxu0 %v1448
      %v1779 = vpop.f32.mrb[0].mxu0
      %v1780 = vadd.f32 %v1334, %v1779
      %v1781 = vpop.f32.mrb[0].mxu0
      %1782 = vmatprep.mubr.f32.mxu0 0.0
      %1783 = vmatmul.mubr.f32.gmra.mrb[0].mxu0 %v1451
      %v1784 = vpop.f32.mrb[0].mxu0
      %v1785 = vadd.f32 %v1334, %v1784
      %v1786 = vpop.f32.mrb[0].mxu0
      %1787 = vmatprep.mubr.f32.mxu0 0.0
      %1788 = vmatmul.mubr.f32.gmra.mrb[0].mxu0 %v1454
      %v1789 = vpop.f32.mrb[0].mxu0
      %v1790 = vadd.f32 %v1334, %v1789
      %v1791 = vpop.f32.mrb[0].mxu0
      %1792 = vmatprep.mubr.f32.mxu0 0.0
      %1793 = vmatmul.mubr.f32.gmra.mrb[0].mxu0 %v1457
      %v1794 = vpop.f32.mrb[0].mxu0
      %v1795 = vadd.f32 %v1334, %v1794
      %v1796 = vpop.f32.mrb[0].mxu0
      %1797 = vmatprep.mubr.f32.mxu0 0.0
      %1798 = vmatmul.mubr.f32.gmra.mrb[0].mxu0 %v1460
      %v1799 = vpop.f32.mrb[0].mxu0
      %v1800 = vadd.f32 %v1334, %v1799
      %v1801 = vpop.f32.mrb[0].mxu0
      %1802 = vmatprep.mubr.f32.mxu0 0.0
      %1803 = vmatmul.mubr.f32.gmra.mrb[0].mxu0 %v1463
      %v1804 = vpop.f32.mrb[0].mxu0
      %v1805 = vadd.f32 %v1334, %v1804
      %v1806 = vpop.f32.mrb[0].mxu0
      %1807 = vmatprep.mubr.f32.mxu0 0.0
      %1808 = vmatmul.mubr.f32.gmra.mrb[0].mxu0 %v1466
      %v1809 = vpop.f32.mrb[0].mxu0
      %v1810 = vadd.f32 %v1334, %v1809
      %v1811 = vpop.f32.mrb[0].mxu0
      %1812 = vmatprep.mubr.f32.mxu0 0.0
      %1813 = vmatmul.mubr.f32.gmra.mrb[0].mxu0 %v1469
      %v1814 = vpop.f32.mrb[0].mxu0
      %v1815 = vadd.f32 %v1334, %v1814
      %v1816 = vpop.f32.mrb[0].mxu0
      %1817 = vmatprep.mubr.f32.mxu0 0.0
      %1818 = vmatmul.mubr.f32.gmra.mrb[0].mxu0 %v1472
      %v1819 = vpop.f32.mrb[0].mxu0
      %v1820 = vadd.f32 %v1334, %v1819
      %v1821 = vpop.f32.mrb[0].mxu0
      %1822 = vmatprep.mubr.f32.mxu0 0.0
      %1823 = vmatmul.mubr.f32.gmra.mrb[0].mxu0 %v1475
      %v1824 = vpop.f32.mrb[0].mxu0
      %v1825 = vadd.f32 %v1334, %v1824
      %v1826 = vpop.f32.mrb[0].mxu0
      %1827 = vmatprep.mubr.f32.mxu0 0.0
      %1828 = vmatmul.mubr.f32.gmra.mrb[0].mxu0 %v1478
      %v1829 = vpop.f32.mrb[0].mxu0
      %v1830 = vadd.f32 %v1334, %v1829
      %v1831 = vpop.f32.mrb[0].mxu0
      %1832 = vmatprep.mubr.f32.mxu0 0.0
      %1833 = vmatmul.mubr.f32.gmra.mrb[0].mxu0 %v1481
      %v1834 = vpop.f32.mrb[0].mxu0
      %v1835 = vadd.f32 %v1334, %v1834
      %v1836 = vpop.f32.mrb[0].mxu0
      %1837 = vmatprep.mubr.f32.mxu0 0.0
      %1838 = vmatmul.mubr.f32.gmra.mrb[0].mxu0 %v1484
      %v1839 = vpop.f32.mrb[0].mxu0
      %v1840 = vadd.f32 %v1334, %v1839
      %v1841 = vpop.f32.mrb[0].mxu0
      %1842 = vmatprep.mubr.f32.mxu0 0.0
      %1843 = vmatmul.mubr.f32.gmra.mrb[0].mxu0 %v1487
      %v1844 = vpop.f32.mrb[0].mxu0
      %v1845 = vadd.f32 %v1334, %v1844
      %v1846 = vpop.f32.mrb[0].mxu0
      %1847 = vmatprep.mubr.f32.mxu0 0.0
      %1848 = vmatmul.mubr.f32.gmra.mrb[0].mxu0 %v1490
      %v1849 = vpop.f32.mrb[0].mxu0
      %v1850 = vadd.f32 %v1334, %v1849
      %v1851 = vpop.f32.mrb[0].mxu0
      %1852 = vmatprep.mubr.f32.mxu0 0.0
      %1853 = vmatmul.mubr.f32.gmra.mrb[0].mxu0 %v1493
      %v1854 = vpop.f32.mrb[0].mxu0
      %v1855 = vadd.f32 %v1334, %v1854
      %v1856 = vpop.f32.mrb[0].mxu0
      %1857 = vmatprep.mubr.f32.mxu0 0.0
      %1858 = vmatmul.mubr.f32.gmra.mrb[0].mxu0 %v1496
      %v1859 = vpop.f32.mrb[0].mxu0
      %v1860 = vadd.f32 %v1334, %v1859
      %v1861 = vpop.f32.mrb[0].mxu0
      %1862 = vmatprep.mubr.f32.mxu0 0.0
      %1863 = vmatmul.mubr.f32.gmra.mrb[0].mxu0 %v1499
      %v1864 = vpop.f32.mrb[0].mxu0
      %v1865 = vadd.f32 %v1334, %v1864
      %v1866 = vpop.f32.mrb[0].mxu0
      %1867 = vmatprep.mubr.f32.mxu0 0.0
      %1868 = vmatmul.mubr.f32.gmra.mrb[0].mxu0 %v1502
      %v1869 = vpop.f32.mrb[0].mxu0
      %v1870 = vadd.f32 %v1334, %v1869
      %v1871 = vpop.f32.mrb[0].mxu0
      %1872 = vmatprep.mubr.f32.mxu0 0.0
      %1873 = vmatmul.mubr.f32.gmra.mrb[0].mxu0 %v1505
      %v1874 = vpop.f32.mrb[0].mxu0
      %v1875 = vadd.f32 %v1334, %v1874
      %v1876 = vpop.f32.mrb[0].mxu0
      %1877 = vmatprep.mubr.f32.mxu0 0.0
      %1878 = vmatmul.mubr.f32.gmra.mrb[0].mxu0 %v1508
      %v1879 = vpop.f32.mrb[0].mxu0
      %v1880 = vadd.f32 %v1334, %v1879
      %v1881 = vpop.f32.mrb[0].mxu0
      %1882 = vmatprep.mubr.f32.mxu0 0.0
      %1883 = vmatmul.mubr.f32.gmra.mrb[0].mxu0 %v1511
      %v1884 = vpop.f32.mrb[0].mxu0
      %v1885 = vadd.f32 %v1334, %v1884
      %v1886 = vpop.f32.mrb[0].mxu0
      %1887 = vmatprep.mubr.f32.mxu0 0.0
      %1888 = vmatmul.mubr.f32.gmra.mrb[0].mxu0 %v1514
      %v1889 = vpop.f32.mrb[0].mxu0
      %v1890 = vadd.f32 %v1334, %v1889
      %v1891 = vpop.f32.mrb[0].mxu0
      %1892 = vmatprep.mubr.f32.mxu0 0.0
      %1893 = vmatmul.mubr.f32.gmra.mrb[0].mxu0 %v1517
      %v1894 = vpop.f32.mrb[0].mxu0
      %v1895 = vadd.f32 %v1334, %v1894
      %v1896 = vpop.f32.mrb[0].mxu0
      %1897 = vmatprep.mubr.f32.mxu0 0.0
      %1898 = vmatmul.mubr.f32.gmra.mrb[0].mxu0 %v1520
      %v1899 = vpop.f32.mrb[0].mxu0
      %v1900 = vadd.f32 %v1334, %v1899
      %v1901 = vpop.f32.mrb[0].mxu0
      %1902 = vmatprep.mubr.f32.mxu0 0.0
      %1903 = vmatmul.mubr.f32.gmra.mrb[0].mxu0 %v1523
      %v1904 = vpop.f32.mrb[0].mxu0
      %v1905 = vadd.f32 %v1334, %v1904
      %v1906 = vpop.f32.mrb[0].mxu0
      %1907 = vmatprep.mubr.f32.mxu0 0.0
      %1908 = vmatmul.mubr.f32.gmra.mrb[0].mxu0 %v1526
      %v1909 = vpop.f32.mrb[0].mxu0
      %v1910 = vadd.f32 %v1334, %v1909
      %v1911 = vpop.f32.mrb[0].mxu0
      %1912 = vdwg.mxu0
      %v1913 = vld [vmem:[%s5] sm:$0xff]
      %v1914 = vld [vmem:[%s5 + $0x8] sm:$0xff]
      %v1915 = vld [vmem:[%s5 + $0x10] sm:$0xff]
      %v1916 = vld [vmem:[%s5 + $0x18] sm:$0xff]
      %v1917 = vld [vmem:[%s6] sm:$0x1]
      %1950 = vrot.lane.b32.xlu0 %v1595, 96
      %v1951 = vpop.permute.xlu0 %1950
      %1952 = vrot.lane.b32.xlu0 %v1600, 96
      %v1953 = vpop.permute.xlu0 %1952
      %1954 = vrot.lane.b32.xlu0 %v1605, 96
      %v1955 = vpop.permute.xlu0 %1954
      %1956 = vrot.lane.b32.xlu0 %v1610, 96
      %v1957 = vpop.permute.xlu0 %1956
      %1958 = vrot.lane.b32.xlu0 %v1615, 96
      %v1959 = vpop.permute.xlu0 %1958
      %1960 = vrot.lane.b32.xlu0 %v1620, 96
      %v1961 = vpop.permute.xlu0 %1960
      %1962 = vrot.lane.b32.xlu0 %v1625, 96
      %v1963 = vpop.permute.xlu0 %1962
      %1964 = vrot.lane.b32.xlu0 %v1630, 96
      %v1965 = vpop.permute.xlu0 %1964
      %1966 = vrot.lane.b32.xlu0 %v1635, 96
      %v1967 = vpop.permute.xlu0 %1966
      %1968 = vrot.lane.b32.xlu0 %v1640, 96
      %v1969 = vpop.permute.xlu0 %1968
      %1970 = vrot.lane.b32.xlu0 %v1645, 96
      %v1971 = vpop.permute.xlu0 %1970
      %1972 = vrot.lane.b32.xlu0 %v1650, 96
      %v1973 = vpop.permute.xlu0 %1972
      %1974 = vrot.lane.b32.xlu0 %v1655, 96
      %v1975 = vpop.permute.xlu0 %1974
      %1976 = vrot.lane.b32.xlu0 %v1660, 96
      %v1977 = vpop.permute.xlu0 %1976
      %1978 = vrot.lane.b32.xlu0 %v1665, 96
      %v1979 = vpop.permute.xlu0 %1978
      %1980 = vrot.lane.b32.xlu0 %v1670, 96
      %v1981 = vpop.permute.xlu0 %1980
      %1982 = vrot.lane.b32.xlu0 %v1675, 96
      %v1983 = vpop.permute.xlu0 %1982
      %1984 = vrot.lane.b32.xlu0 %v1680, 96
      %v1985 = vpop.permute.xlu0 %1984
      %1986 = vrot.lane.b32.xlu0 %v1685, 96
      %v1987 = vpop.permute.xlu0 %1986
      %1988 = vrot.lane.b32.xlu0 %v1690, 96
      %v1989 = vpop.permute.xlu0 %1988
      %1990 = vrot.lane.b32.xlu0 %v1695, 96
      %v1991 = vpop.permute.xlu0 %1990
      %1992 = vrot.lane.b32.xlu0 %v1700, 96
      %v1993 = vpop.permute.xlu0 %1992
      %1994 = vrot.lane.b32.xlu0 %v1705, 96
      %v1995 = vpop.permute.xlu0 %1994
      %1996 = vrot.lane.b32.xlu0 %v1710, 96
      %v1997 = vpop.permute.xlu0 %1996
      %1998 = vrot.lane.b32.xlu0 %v1715, 96
      %v1999 = vpop.permute.xlu0 %1998
      %2000 = vrot.lane.b32.xlu0 %v1720, 96
      %v2001 = vpop.permute.xlu0 %2000
      %2002 = vrot.lane.b32.xlu0 %v1725, 96
      %v2003 = vpop.permute.xlu0 %2002
      %2004 = vrot.lane.b32.xlu0 %v1730, 96
      %v2005 = vpop.permute.xlu0 %2004
      %2006 = vrot.lane.b32.xlu0 %v1735, 96
      %v2007 = vpop.permute.xlu0 %2006
      %2008 = vrot.lane.b32.xlu0 %v1740, 96
      %v2009 = vpop.permute.xlu0 %2008
      %2010 = vrot.lane.b32.xlu0 %v1745, 96
      %v2011 = vpop.permute.xlu0 %2010
      %2012 = vrot.lane.b32.xlu0 %v1750, 96
      %v2013 = vpop.permute.xlu0 %2012
      %v2014 = vsel %vm351, %v1595, 0
      %v2016 = vsel %vm351, %v1600, 0
      %v2018 = vsel %vm351, %v1605, 0
      %v2020 = vsel %vm351, %v1610, 0
      %v2022 = vsel %vm351, %v1615, 0
      %v2024 = vsel %vm351, %v1620, 0
      %v2026 = vsel %vm351, %v1625, 0
      %v2028 = vsel %vm351, %v1630, 0
      %v2030 = vsel %vm351, %v1635, 0
      %v2032 = vsel %vm351, %v1640, 0
      %v2034 = vsel %vm351, %v1645, 0
      %v2036 = vsel %vm351, %v1650, 0
      %v2038 = vsel %vm351, %v1655, 0
      %v2040 = vsel %vm351, %v1660, 0
      %v2042 = vsel %vm351, %v1665, 0
      %v2044 = vsel %vm351, %v1670, 0
      %v2046 = vsel %vm351, %v1675, 0
      %v2048 = vsel %vm351, %v1680, 0
      %v2050 = vsel %vm351, %v1685, 0
      %v2052 = vsel %vm351, %v1690, 0
      %v2054 = vsel %vm351, %v1695, 0
      %v2056 = vsel %vm351, %v1700, 0
      %v2058 = vsel %vm351, %v1705, 0
      %v2060 = vsel %vm351, %v1710, 0
      %v2062 = vsel %vm351, %v1715, 0
      %v2064 = vsel %vm351, %v1720, 0
      %v2066 = vsel %vm351, %v1725, 0
      %v2068 = vsel %vm351, %v1730, 0
      %v2070 = vsel %vm351, %v1735, 0
      %v2072 = vsel %vm351, %v1740, 0
      %v2074 = vsel %vm351, %v1745, 0
      %v2076 = vsel %vm351, %v1750, 0
      %v2078 = vsel %vm351, %v1951, 0
      %v2080 = vsel %vm351, %v1953, 0
      %v2082 = vsel %vm351, %v1955, 0
      %v2084 = vsel %vm351, %v1957, 0
      %v2086 = vsel %vm351, %v1959, 0
      %v2088 = vsel %vm351, %v1961, 0
      %v2090 = vsel %vm351, %v1963, 0
      %v2092 = vsel %vm351, %v1965, 0
      %v2094 = vsel %vm351, %v1967, 0
      %v2096 = vsel %vm351, %v1969, 0
      %v2098 = vsel %vm351, %v1971, 0
      %v2100 = vsel %vm351, %v1973, 0
      %v2102 = vsel %vm351, %v1975, 0
      %v2104 = vsel %vm351, %v1977, 0
      %v2106 = vsel %vm351, %v1979, 0
      %v2108 = vsel %vm351, %v1981, 0
      %v2110 = vsel %vm351, %v1983, 0
      %v2112 = vsel %vm351, %v1985, 0
      %v2114 = vsel %vm351, %v1987, 0
      %v2116 = vsel %vm351, %v1989, 0
      %v2118 = vsel %vm351, %v1991, 0
      %v2120 = vsel %vm351, %v1993, 0
      %v2122 = vsel %vm351, %v1995, 0
      %v2124 = vsel %vm351, %v1997, 0
      %v2126 = vsel %vm351, %v1999, 0
      %v2128 = vsel %vm351, %v2001, 0
      %v2130 = vsel %vm351, %v2003, 0
      %v2132 = vsel %vm351, %v2005, 0
      %v2134 = vsel %vm351, %v2007, 0
      %v2136 = vsel %vm351, %v2009, 0
      %v2138 = vsel %vm351, %v2011, 0
      %v2140 = vsel %vm351, %v2013, 0
      %2142 = vmatprep.subr.mxu0 0.0
      %2143 = vmatpush1.xpose.msra.mxu0 %v2078
      %2144 = vmatprep.subr.mxu0 0.0
      %2145 = vmatpush1.xpose.msra.mxu0 %v2080
      %2146 = vmatprep.subr.mxu0 0.0
      %2147 = vmatpush1.xpose.msra.mxu0 %v2082
      %2148 = vmatprep.subr.mxu0 0.0
      %2149 = vmatpush1.xpose.msra.mxu0 %v2084
      %2150 = vmatprep.subr.mxu0 0.0
      %2151 = vmatpush1.xpose.msra.mxu0 %v2086
      %2152 = vmatprep.subr.mxu0 0.0
      %2153 = vmatpush1.xpose.msra.mxu0 %v2088
      %2154 = vmatprep.subr.mxu0 0.0
      %2155 = vmatpush1.xpose.msra.mxu0 %v2090
      %2156 = vmatprep.subr.mxu0 0.0
      %2157 = vmatpush1.xpose.msra.mxu0 %v2092
      %2158 = vmatprep.subr.mxu0 0.0
      %2159 = vmatpush1.xpose.msra.mxu0 %v2094
      %2160 = vmatprep.subr.mxu0 0.0
      %2161 = vmatpush1.xpose.msra.mxu0 %v2096
      %2162 = vmatprep.subr.mxu0 0.0
      %2163 = vmatpush1.xpose.msra.mxu0 %v2098
      %2164 = vmatprep.subr.mxu0 0.0
      %2165 = vmatpush1.xpose.msra.mxu0 %v2100
      %2166 = vmatprep.subr.mxu0 0.0
      %2167 = vmatpush1.xpose.msra.mxu0 %v2102
      %2168 = vmatprep.subr.mxu0 0.0
      %2169 = vmatpush1.xpose.msra.mxu0 %v2104
      %2170 = vmatprep.subr.mxu0 0.0
      %2171 = vmatpush1.xpose.msra.mxu0 %v2106
      %2172 = vmatprep.subr.mxu0 0.0
      %2173 = vmatpush1.xpose.msra.mxu0 %v2108
      %2174 = vmatprep.subr.mxu0 0.0
      %2175 = vmatpush1.xpose.msra.mxu0 %v2110
      %2176 = vmatprep.subr.mxu0 0.0
      %2177 = vmatpush1.xpose.msra.mxu0 %v2112
      %2178 = vmatprep.subr.mxu0 0.0
      %2179 = vmatpush1.xpose.msra.mxu0 %v2114
      %2180 = vmatprep.subr.mxu0 0.0
      %2181 = vmatpush1.xpose.msra.mxu0 %v2116
      %2182 = vmatprep.subr.mxu0 0.0
      %2183 = vmatpush1.xpose.msra.mxu0 %v2118
      %2184 = vmatprep.subr.mxu0 0.0
      %2185 = vmatpush1.xpose.msra.mxu0 %v2120
      %2186 = vmatprep.subr.mxu0 0.0
      %2187 = vmatpush1.xpose.msra.mxu0 %v2122
      %2188 = vmatprep.subr.mxu0 0.0
      %2189 = vmatpush1.xpose.msra.mxu0 %v2124
      %2190 = vmatprep.subr.mxu0 0.0
      %2191 = vmatpush1.xpose.msra.mxu0 %v2126
      %2192 = vmatprep.subr.mxu0 0.0
      %2193 = vmatpush1.xpose.msra.mxu0 %v2128
      %2194 = vmatprep.subr.mxu0 0.0
      %2195 = vmatpush1.xpose.msra.mxu0 %v2130
      %2196 = vmatprep.subr.mxu0 0.0
      %2197 = vmatpush1.xpose.msra.mxu0 %v2132
      %2198 = vmatprep.subr.mxu0 0.0
      %2199 = vmatpush1.xpose.msra.mxu0 %v2134
      %2200 = vmatprep.subr.mxu0 0.0
      %2201 = vmatpush1.xpose.msra.mxu0 %v2136
      %2202 = vmatprep.subr.mxu0 0.0
      %2203 = vmatpush1.xpose.msra.mxu0 %v2138
      %2204 = vmatprep.subr.mxu0 0.0
      %2205 = vmatpush1.xpose.msra.mxu0 %v2140
      %2206 = vmatprep.mubr.f32.mxu0 0.0
      %2207 = vmatmul.mubr.f32.gmra.mrb[0].mxu0 %v2014
      %v2208 = vpop.f32.mrb[0].mxu0
      %v2209 = vadd.f32 0.0, %v2208
      %v2210 = vpop.f32.mrb[0].mxu0
      %v2211 = vadd.f32 0.0, %v2210
      %2212 = vmatprep.mubr.f32.mxu0 0.0
      %2213 = vmatmul.mubr.f32.gmra.mrb[0].mxu0 %v2016
      %v2214 = vpop.f32.mrb[0].mxu0
      %v2215 = vadd.f32 0.0, %v2214
      %v2216 = vpop.f32.mrb[0].mxu0
      %v2217 = vadd.f32 0.0, %v2216
      %2218 = vmatprep.mubr.f32.mxu0 0.0
      %2219 = vmatmul.mubr.f32.gmra.mrb[0].mxu0 %v2018
      %v2220 = vpop.f32.mrb[0].mxu0
      %v2221 = vadd.f32 0.0, %v2220
      %v2222 = vpop.f32.mrb[0].mxu0
      %v2223 = vadd.f32 0.0, %v2222
      %2224 = vmatprep.mubr.f32.mxu0 0.0
      %2225 = vmatmul.mubr.f32.gmra.mrb[0].mxu0 %v2020
      %v2226 = vpop.f32.mrb[0].mxu0
      %v2227 = vadd.f32 0.0, %v2226
      %v2228 = vpop.f32.mrb[0].mxu0
      %v2229 = vadd.f32 0.0, %v2228
      %2230 = vmatprep.mubr.f32.mxu0 0.0
      %2231 = vmatmul.mubr.f32.gmra.mrb[0].mxu0 %v2022
      %v2232 = vpop.f32.mrb[0].mxu0
      %v2233 = vadd.f32 0.0, %v2232
      %v2234 = vpop.f32.mrb[0].mxu0
      %v2235 = vadd.f32 0.0, %v2234
      %2236 = vmatprep.mubr.f32.mxu0 0.0
      %2237 = vmatmul.mubr.f32.gmra.mrb[0].mxu0 %v2024
      %v2238 = vpop.f32.mrb[0].mxu0
      %v2239 = vadd.f32 0.0, %v2238
      %v2240 = vpop.f32.mrb[0].mxu0
      %v2241 = vadd.f32 0.0, %v2240
      %2242 = vmatprep.mubr.f32.mxu0 0.0
      %2243 = vmatmul.mubr.f32.gmra.mrb[0].mxu0 %v2026
      %v2244 = vpop.f32.mrb[0].mxu0
      %v2245 = vadd.f32 0.0, %v2244
      %v2246 = vpop.f32.mrb[0].mxu0
      %v2247 = vadd.f32 0.0, %v2246
      %2248 = vmatprep.mubr.f32.mxu0 0.0
      %2249 = vmatmul.mubr.f32.gmra.mrb[0].mxu0 %v2028
      %v2250 = vpop.f32.mrb[0].mxu0
      %v2251 = vadd.f32 0.0, %v2250
      %v2252 = vpop.f32.mrb[0].mxu0
      %v2253 = vadd.f32 0.0, %v2252
      %2254 = vmatprep.mubr.f32.mxu0 0.0
      %2255 = vmatmul.mubr.f32.gmra.mrb[0].mxu0 %v2030
      %v2256 = vpop.f32.mrb[0].mxu0
      %v2257 = vadd.f32 0.0, %v2256
      %v2258 = vpop.f32.mrb[0].mxu0
      %v2259 = vadd.f32 0.0, %v2258
      %2260 = vmatprep.mubr.f32.mxu0 0.0
      %2261 = vmatmul.mubr.f32.gmra.mrb[0].mxu0 %v2032
      %v2262 = vpop.f32.mrb[0].mxu0
      %v2263 = vadd.f32 0.0, %v2262
      %v2264 = vpop.f32.mrb[0].mxu0
      %v2265 = vadd.f32 0.0, %v2264
      %2266 = vmatprep.mubr.f32.mxu0 0.0
      %2267 = vmatmul.mubr.f32.gmra.mrb[0].mxu0 %v2034
      %v2268 = vpop.f32.mrb[0].mxu0
      %v2269 = vadd.f32 0.0, %v2268
      %v2270 = vpop.f32.mrb[0].mxu0
      %v2271 = vadd.f32 0.0, %v2270
      %2272 = vmatprep.mubr.f32.mxu0 0.0
      %2273 = vmatmul.mubr.f32.gmra.mrb[0].mxu0 %v2036
      %v2274 = vpop.f32.mrb[0].mxu0
      %v2275 = vadd.f32 0.0, %v2274
      %v2276 = vpop.f32.mrb[0].mxu0
      %v2277 = vadd.f32 0.0, %v2276
      %2278 = vmatprep.mubr.f32.mxu0 0.0
      %2279 = vmatmul.mubr.f32.gmra.mrb[0].mxu0 %v2038
      %v2280 = vpop.f32.mrb[0].mxu0
      %v2281 = vadd.f32 0.0, %v2280
      %v2282 = vpop.f32.mrb[0].mxu0
      %v2283 = vadd.f32 0.0, %v2282
      %2284 = vmatprep.mubr.f32.mxu0 0.0
      %2285 = vmatmul.mubr.f32.gmra.mrb[0].mxu0 %v2040
      %v2286 = vpop.f32.mrb[0].mxu0
      %v2287 = vadd.f32 0.0, %v2286
      %v2288 = vpop.f32.mrb[0].mxu0
      %v2289 = vadd.f32 0.0, %v2288
      %2290 = vmatprep.mubr.f32.mxu0 0.0
      %2291 = vmatmul.mubr.f32.gmra.mrb[0].mxu0 %v2042
      %v2292 = vpop.f32.mrb[0].mxu0
      %v2293 = vadd.f32 0.0, %v2292
      %v2294 = vpop.f32.mrb[0].mxu0
      %v2295 = vadd.f32 0.0, %v2294
      %2296 = vmatprep.mubr.f32.mxu0 0.0
      %2297 = vmatmul.mubr.f32.gmra.mrb[0].mxu0 %v2044
      %v2298 = vpop.f32.mrb[0].mxu0
      %v2299 = vadd.f32 0.0, %v2298
      %v2300 = vpop.f32.mrb[0].mxu0
      %v2301 = vadd.f32 0.0, %v2300
      %2302 = vmatprep.mubr.f32.mxu0 0.0
      %2303 = vmatmul.mubr.f32.gmra.mrb[0].mxu0 %v2046
      %v2304 = vpop.f32.mrb[0].mxu0
      %v2305 = vadd.f32 0.0, %v2304
      %v2306 = vpop.f32.mrb[0].mxu0
      %v2307 = vadd.f32 0.0, %v2306
      %2308 = vmatprep.mubr.f32.mxu0 0.0
      %2309 = vmatmul.mubr.f32.gmra.mrb[0].mxu0 %v2048
      %v2310 = vpop.f32.mrb[0].mxu0
      %v2311 = vadd.f32 0.0, %v2310
      %v2312 = vpop.f32.mrb[0].mxu0
      %v2313 = vadd.f32 0.0, %v2312
      %2314 = vmatprep.mubr.f32.mxu0 0.0
      %2315 = vmatmul.mubr.f32.gmra.mrb[0].mxu0 %v2050
      %v2316 = vpop.f32.mrb[0].mxu0
      %v2317 = vadd.f32 0.0, %v2316
      %v2318 = vpop.f32.mrb[0].mxu0
      %v2319 = vadd.f32 0.0, %v2318
      %2320 = vmatprep.mubr.f32.mxu0 0.0
      %2321 = vmatmul.mubr.f32.gmra.mrb[0].mxu0 %v2052
      %v2322 = vpop.f32.mrb[0].mxu0
      %v2323 = vadd.f32 0.0, %v2322
      %v2324 = vpop.f32.mrb[0].mxu0
      %v2325 = vadd.f32 0.0, %v2324
      %2326 = vmatprep.mubr.f32.mxu0 0.0
      %2327 = vmatmul.mubr.f32.gmra.mrb[0].mxu0 %v2054
      %v2328 = vpop.f32.mrb[0].mxu0
      %v2329 = vadd.f32 0.0, %v2328
      %v2330 = vpop.f32.mrb[0].mxu0
      %v2331 = vadd.f32 0.0, %v2330
      %2332 = vmatprep.mubr.f32.mxu0 0.0
      %2333 = vmatmul.mubr.f32.gmra.mrb[0].mxu0 %v2056
      %v2334 = vpop.f32.mrb[0].mxu0
      %v2335 = vadd.f32 0.0, %v2334
      %v2336 = vpop.f32.mrb[0].mxu0
      %v2337 = vadd.f32 0.0, %v2336
      %2338 = vmatprep.mubr.f32.mxu0 0.0
      %2339 = vmatmul.mubr.f32.gmra.mrb[0].mxu0 %v2058
      %v2340 = vpop.f32.mrb[0].mxu0
      %v2341 = vadd.f32 0.0, %v2340
      %v2342 = vpop.f32.mrb[0].mxu0
      %v2343 = vadd.f32 0.0, %v2342
      %2344 = vmatprep.mubr.f32.mxu0 0.0
      %2345 = vmatmul.mubr.f32.gmra.mrb[0].mxu0 %v2060
      %v2346 = vpop.f32.mrb[0].mxu0
      %v2347 = vadd.f32 0.0, %v2346
      %v2348 = vpop.f32.mrb[0].mxu0
      %v2349 = vadd.f32 0.0, %v2348
      %2350 = vmatprep.mubr.f32.mxu0 0.0
      %2351 = vmatmul.mubr.f32.gmra.mrb[0].mxu0 %v2062
      %v2352 = vpop.f32.mrb[0].mxu0
      %v2353 = vadd.f32 0.0, %v2352
      %v2354 = vpop.f32.mrb[0].mxu0
      %v2355 = vadd.f32 0.0, %v2354
      %2356 = vmatprep.mubr.f32.mxu0 0.0
      %2357 = vmatmul.mubr.f32.gmra.mrb[0].mxu0 %v2064
      %v2358 = vpop.f32.mrb[0].mxu0
      %v2359 = vadd.f32 0.0, %v2358
      %v2360 = vpop.f32.mrb[0].mxu0
      %v2361 = vadd.f32 0.0, %v2360
      %2362 = vmatprep.mubr.f32.mxu0 0.0
      %2363 = vmatmul.mubr.f32.gmra.mrb[0].mxu0 %v2066
      %v2364 = vpop.f32.mrb[0].mxu0
      %v2365 = vadd.f32 0.0, %v2364
      %v2366 = vpop.f32.mrb[0].mxu0
      %v2367 = vadd.f32 0.0, %v2366
      %2368 = vmatprep.mubr.f32.mxu0 0.0
      %2369 = vmatmul.mubr.f32.gmra.mrb[0].mxu0 %v2068
      %v2370 = vpop.f32.mrb[0].mxu0
      %v2371 = vadd.f32 0.0, %v2370
      %v2372 = vpop.f32.mrb[0].mxu0
      %v2373 = vadd.f32 0.0, %v2372
      %2374 = vmatprep.mubr.f32.mxu0 0.0
      %2375 = vmatmul.mubr.f32.gmra.mrb[0].mxu0 %v2070
      %v2376 = vpop.f32.mrb[0].mxu0
      %v2377 = vadd.f32 0.0, %v2376
      %v2378 = vpop.f32.mrb[0].mxu0
      %v2379 = vadd.f32 0.0, %v2378
      %2380 = vmatprep.mubr.f32.mxu0 0.0
      %2381 = vmatmul.mubr.f32.gmra.mrb[0].mxu0 %v2072
      %v2382 = vpop.f32.mrb[0].mxu0
      %v2383 = vadd.f32 0.0, %v2382
      %v2384 = vpop.f32.mrb[0].mxu0
      %v2385 = vadd.f32 0.0, %v2384
      %2386 = vmatprep.mubr.f32.mxu0 0.0
      %2387 = vmatmul.mubr.f32.gmra.mrb[0].mxu0 %v2074
      %v2388 = vpop.f32.mrb[0].mxu0
      %v2389 = vadd.f32 0.0, %v2388
      %v2390 = vpop.f32.mrb[0].mxu0
      %v2391 = vadd.f32 0.0, %v2390
      %2392 = vmatprep.mubr.f32.mxu0 0.0
      %2393 = vmatmul.mubr.f32.gmra.mrb[0].mxu0 %v2076
      %v2394 = vpop.f32.mrb[0].mxu0
      %v2395 = vadd.f32 0.0, %v2394
      %v2396 = vpop.f32.mrb[0].mxu0
      %v2397 = vadd.f32 0.0, %v2396
      %2398 = vdwg.mxu0
      %v2399 = vmax.f32 %v2209, %v2211
      %2400 = vmax.xlane.f32.xlu0 %v2399
      %v2401 = vpop.xlane.xlu0 %2400
      %v2402 = vmax.f32 %v2215, %v2217
      %2403 = vmax.xlane.f32.xlu0 %v2402
      %v2404 = vpop.xlane.xlu0 %2403
      %v2405 = vmax.f32 %v2221, %v2223
      %2406 = vmax.xlane.f32.xlu0 %v2405
      %v2407 = vpop.xlane.xlu0 %2406
      %v2408 = vmax.f32 %v2227, %v2229
      %2409 = vmax.xlane.f32.xlu0 %v2408
      %v2410 = vpop.xlane.xlu0 %2409
      %v2411 = vmax.f32 %v2233, %v2235
      %2412 = vmax.xlane.f32.xlu0 %v2411
      %v2413 = vpop.xlane.xlu0 %2412
      %v2414 = vmax.f32 %v2239, %v2241
      %2415 = vmax.xlane.f32.xlu0 %v2414
      %v2416 = vpop.xlane.xlu0 %2415
      %v2417 = vmax.f32 %v2245, %v2247
      %2418 = vmax.xlane.f32.xlu0 %v2417
      %v2419 = vpop.xlane.xlu0 %2418
      %v2420 = vmax.f32 %v2251, %v2253
      %2421 = vmax.xlane.f32.xlu0 %v2420
      %v2422 = vpop.xlane.xlu0 %2421
      %v2423 = vmax.f32 %v2257, %v2259
      %2424 = vmax.xlane.f32.xlu0 %v2423
      %v2425 = vpop.xlane.xlu0 %2424
      %v2426 = vmax.f32 %v2263, %v2265
      %2427 = vmax.xlane.f32.xlu0 %v2426
      %v2428 = vpop.xlane.xlu0 %2427
      %v2429 = vmax.f32 %v2269, %v2271
      %2430 = vmax.xlane.f32.xlu0 %v2429
      %v2431 = vpop.xlane.xlu0 %2430
      %v2432 = vmax.f32 %v2275, %v2277
      %2433 = vmax.xlane.f32.xlu0 %v2432
      %v2434 = vpop.xlane.xlu0 %2433
      %v2435 = vmax.f32 %v2281, %v2283
      %2436 = vmax.xlane.f32.xlu0 %v2435
      %v2437 = vpop.xlane.xlu0 %2436
      %v2438 = vmax.f32 %v2287, %v2289
      %2439 = vmax.xlane.f32.xlu0 %v2438
      %v2440 = vpop.xlane.xlu0 %2439
      %v2441 = vmax.f32 %v2293, %v2295
      %2442 = vmax.xlane.f32.xlu0 %v2441
      %v2443 = vpop.xlane.xlu0 %2442
      %v2444 = vmax.f32 %v2299, %v2301
      %2445 = vmax.xlane.f32.xlu0 %v2444
      %v2446 = vpop.xlane.xlu0 %2445
      %v2447 = vmax.f32 %v2305, %v2307
      %2448 = vmax.xlane.f32.xlu0 %v2447
      %v2449 = vpop.xlane.xlu0 %2448
      %v2450 = vmax.f32 %v2311, %v2313
      %2451 = vmax.xlane.f32.xlu0 %v2450
      %v2452 = vpop.xlane.xlu0 %2451
      %v2453 = vmax.f32 %v2317, %v2319
      %2454 = vmax.xlane.f32.xlu0 %v2453
      %v2455 = vpop.xlane.xlu0 %2454
      %v2456 = vmax.f32 %v2323, %v2325
      %2457 = vmax.xlane.f32.xlu0 %v2456
      %v2458 = vpop.xlane.xlu0 %2457
      %v2459 = vmax.f32 %v2329, %v2331
      %2460 = vmax.xlane.f32.xlu0 %v2459
      %v2461 = vpop.xlane.xlu0 %2460
      %v2462 = vmax.f32 %v2335, %v2337
      %2463 = vmax.xlane.f32.xlu0 %v2462
      %v2464 = vpop.xlane.xlu0 %2463
      %v2465 = vmax.f32 %v2341, %v2343
      %2466 = vmax.xlane.f32.xlu0 %v2465
      %v2467 = vpop.xlane.xlu0 %2466
      %v2468 = vmax.f32 %v2347, %v2349
      %2469 = vmax.xlane.f32.xlu0 %v2468
      %v2470 = vpop.xlane.xlu0 %2469
      %v2471 = vmax.f32 %v2353, %v2355
      %2472 = vmax.xlane.f32.xlu0 %v2471
      %v2473 = vpop.xlane.xlu0 %2472
      %v2474 = vmax.f32 %v2359, %v2361
      %2475 = vmax.xlane.f32.xlu0 %v2474
      %v2476 = vpop.xlane.xlu0 %2475
      %v2477 = vmax.f32 %v2365, %v2367
      %2478 = vmax.xlane.f32.xlu0 %v2477
      %v2479 = vpop.xlane.xlu0 %2478
      %v2480 = vmax.f32 %v2371, %v2373
      %2481 = vmax.xlane.f32.xlu0 %v2480
      %v2482 = vpop.xlane.xlu0 %2481
      %v2483 = vmax.f32 %v2377, %v2379
      %2484 = vmax.xlane.f32.xlu0 %v2483
      %v2485 = vpop.xlane.xlu0 %2484
      %v2486 = vmax.f32 %v2383, %v2385
      %2487 = vmax.xlane.f32.xlu0 %v2486
      %v2488 = vpop.xlane.xlu0 %2487
      %v2489 = vmax.f32 %v2389, %v2391
      %2490 = vmax.xlane.f32.xlu0 %v2489
      %v2491 = vpop.xlane.xlu0 %2490
      %v2492 = vmax.f32 %v2395, %v2397
      %2493 = vmax.xlane.f32.xlu0 %v2492
      %v2494 = vpop.xlane.xlu0 %2493
      %v2495 = vsub.f32 %v2209, %v2401
      %v2496 = vsub.f32 %v2211, %v2401
      %v2497 = vsub.f32 %v2215, %v2404
      %v2498 = vsub.f32 %v2217, %v2404
      %v2499 = vsub.f32 %v2221, %v2407
      %v2500 = vsub.f32 %v2223, %v2407
      %v2501 = vsub.f32 %v2227, %v2410
      %v2502 = vsub.f32 %v2229, %v2410
      %v2503 = vsub.f32 %v2233, %v2413
      %v2504 = vsub.f32 %v2235, %v2413
      %v2505 = vsub.f32 %v2239, %v2416
      %v2506 = vsub.f32 %v2241, %v2416
      %v2507 = vsub.f32 %v2245, %v2419
      %v2508 = vsub.f32 %v2247, %v2419
      %v2509 = vsub.f32 %v2251, %v2422
      %v2510 = vsub.f32 %v2253, %v2422
      %v2511 = vsub.f32 %v2257, %v2425
      %v2512 = vsub.f32 %v2259, %v2425
      %v2513 = vsub.f32 %v2263, %v2428
      %v2514 = vsub.f32 %v2265, %v2428
      %v2515 = vsub.f32 %v2269, %v2431
      %v2516 = vsub.f32 %v2271, %v2431
      %v2517 = vsub.f32 %v2275, %v2434
      %v2518 = vsub.f32 %v2277, %v2434
      %v2519 = vsub.f32 %v2281, %v2437
      %v2520 = vsub.f32 %v2283, %v2437
      %v2521 = vsub.f32 %v2287, %v2440
      %v2522 = vsub.f32 %v2289, %v2440
      %v2523 = vsub.f32 %v2293, %v2443
      %v2524 = vsub.f32 %v2295, %v2443
      %v2525 = vsub.f32 %v2299, %v2446
      %v2526 = vsub.f32 %v2301, %v2446
      %v2527 = vsub.f32 %v2305, %v2449
      %v2528 = vsub.f32 %v2307, %v2449
      %v2529 = vsub.f32 %v2311, %v2452
      %v2530 = vsub.f32 %v2313, %v2452
      %v2531 = vsub.f32 %v2317, %v2455
      %v2532 = vsub.f32 %v2319, %v2455
      %v2533 = vsub.f32 %v2323, %v2458
      %v2534 = vsub.f32 %v2325, %v2458
      %v2535 = vsub.f32 %v2329, %v2461
      %v2536 = vsub.f32 %v2331, %v2461
      %v2537 = vsub.f32 %v2335, %v2464
      %v2538 = vsub.f32 %v2337, %v2464
      %v2539 = vsub.f32 %v2341, %v2467
      %v2540 = vsub.f32 %v2343, %v2467
      %v2541 = vsub.f32 %v2347, %v2470
      %v2542 = vsub.f32 %v2349, %v2470
      %v2543 = vsub.f32 %v2353, %v2473
      %v2544 = vsub.f32 %v2355, %v2473
      %v2545 = vsub.f32 %v2359, %v2476
      %v2546 = vsub.f32 %v2361, %v2476
      %v2547 = vsub.f32 %v2365, %v2479
      %v2548 = vsub.f32 %v2367, %v2479
      %v2549 = vsub.f32 %v2371, %v2482
      %v2550 = vsub.f32 %v2373, %v2482
      %v2551 = vsub.f32 %v2377, %v2485
      %v2552 = vsub.f32 %v2379, %v2485
      %v2553 = vsub.f32 %v2383, %v2488
      %v2554 = vsub.f32 %v2385, %v2488
      %v2555 = vsub.f32 %v2389, %v2491
      %v2556 = vsub.f32 %v2391, %v2491
      %v2557 = vsub.f32 %v2395, %v2494
      %v2558 = vsub.f32 %v2397, %v2494
      %v2559 = vmul.f32 %v2495, 1.442695
      %v2560 = vpow.pop %v2559
      %v2561 = vmul.f32 %v2496, 1.442695
      %v2562 = vpow.pop %v2561
      %v2563 = vmul.f32 %v2497, 1.442695
      %v2564 = vpow.pop %v2563
      %v2565 = vmul.f32 %v2498, 1.442695
      %v2566 = vpow.pop %v2565
      %v2567 = vmul.f32 %v2499, 1.442695
      %v2568 = vpow.pop %v2567
      %v2569 = vmul.f32 %v2500, 1.442695
      %v2570 = vpow.pop %v2569
      %v2571 = vmul.f32 %v2501, 1.442695
      %v2572 = vpow.pop %v2571
      %v2573 = vmul.f32 %v2502, 1.442695
      %v2574 = vpow.pop %v2573
      %v2575 = vmul.f32 %v2503, 1.442695
      %v2576 = vpow.pop %v2575
      %v2577 = vmul.f32 %v2504, 1.442695
      %v2578 = vpow.pop %v2577
      %v2579 = vmul.f32 %v2505, 1.442695
      %v2580 = vpow.pop %v2579
      %v2581 = vmul.f32 %v2506, 1.442695
      %v2582 = vpow.pop %v2581
      %v2583 = vmul.f32 %v2507, 1.442695
      %v2584 = vpow.pop %v2583
      %v2585 = vmul.f32 %v2508, 1.442695
      %v2586 = vpow.pop %v2585
      %v2587 = vmul.f32 %v2509, 1.442695
      %v2588 = vpow.pop %v2587
      %v2589 = vmul.f32 %v2510, 1.442695
      %v2590 = vpow.pop %v2589
      %v2591 = vmul.f32 %v2511, 1.442695
      %v2592 = vpow.pop %v2591
      %v2593 = vmul.f32 %v2512, 1.442695
      %v2594 = vpow.pop %v2593
      %v2595 = vmul.f32 %v2513, 1.442695
      %v2596 = vpow.pop %v2595
      %v2597 = vmul.f32 %v2514, 1.442695
      %v2598 = vpow.pop %v2597
      %v2599 = vmul.f32 %v2515, 1.442695
      %v2600 = vpow.pop %v2599
      %v2601 = vmul.f32 %v2516, 1.442695
      %v2602 = vpow.pop %v2601
      %v2603 = vmul.f32 %v2517, 1.442695
      %v2604 = vpow.pop %v2603
      %v2605 = vmul.f32 %v2518, 1.442695
      %v2606 = vpow.pop %v2605
      %v2607 = vmul.f32 %v2519, 1.442695
      %v2608 = vpow.pop %v2607
      %v2609 = vmul.f32 %v2520, 1.442695
      %v2610 = vpow.pop %v2609
      %v2611 = vmul.f32 %v2521, 1.442695
      %v2612 = vpow.pop %v2611
      %v2613 = vmul.f32 %v2522, 1.442695
      %v2614 = vpow.pop %v2613
      %v2615 = vmul.f32 %v2523, 1.442695
      %v2616 = vpow.pop %v2615
      %v2617 = vmul.f32 %v2524, 1.442695
      %v2618 = vpow.pop %v2617
      %v2619 = vmul.f32 %v2525, 1.442695
      %v2620 = vpow.pop %v2619
      %v2621 = vmul.f32 %v2526, 1.442695
      %v2622 = vpow.pop %v2621
      %v2623 = vmul.f32 %v2527, 1.442695
      %v2624 = vpow.pop %v2623
      %v2625 = vmul.f32 %v2528, 1.442695
      %v2626 = vpow.pop %v2625
      %v2627 = vmul.f32 %v2529, 1.442695
      %v2628 = vpow.pop %v2627
      %v2629 = vmul.f32 %v2530, 1.442695
      %v2630 = vpow.pop %v2629
      %v2631 = vmul.f32 %v2531, 1.442695
      %v2632 = vpow.pop %v2631
      %v2633 = vmul.f32 %v2532, 1.442695
      %v2634 = vpow.pop %v2633
      %v2635 = vmul.f32 %v2533, 1.442695
      %v2636 = vpow.pop %v2635
      %v2637 = vmul.f32 %v2534, 1.442695
      %v2638 = vpow.pop %v2637
      %v2639 = vmul.f32 %v2535, 1.442695
      %v2640 = vpow.pop %v2639
      %v2641 = vmul.f32 %v2536, 1.442695
      %v2642 = vpow.pop %v2641
      %v2643 = vmul.f32 %v2537, 1.442695
      %v2644 = vpow.pop %v2643
      %v2645 = vmul.f32 %v2538, 1.442695
      %v2646 = vpow.pop %v2645
      %v2647 = vmul.f32 %v2539, 1.442695
      %v2648 = vpow.pop %v2647
      %v2649 = vmul.f32 %v2540, 1.442695
      %v2650 = vpow.pop %v2649
      %v2651 = vmul.f32 %v2541, 1.442695
      %v2652 = vpow.pop %v2651
      %v2653 = vmul.f32 %v2542, 1.442695
      %v2654 = vpow.pop %v2653
      %v2655 = vmul.f32 %v2543, 1.442695
      %v2656 = vpow.pop %v2655
      %v2657 = vmul.f32 %v2544, 1.442695
      %v2658 = vpow.pop %v2657
      %v2659 = vmul.f32 %v2545, 1.442695
      %v2660 = vpow.pop %v2659
      %v2661 = vmul.f32 %v2546, 1.442695
      %v2662 = vpow.pop %v2661
      %v2663 = vmul.f32 %v2547, 1.442695
      %v2664 = vpow.pop %v2663
      %v2665 = vmul.f32 %v2548, 1.442695
      %v2666 = vpow.pop %v2665
      %v2667 = vmul.f32 %v2549, 1.442695
      %v2668 = vpow.pop %v2667
      %v2669 = vmul.f32 %v2550, 1.442695
      %v2670 = vpow.pop %v2669
      %v2671 = vmul.f32 %v2551, 1.442695
      %v2672 = vpow.pop %v2671
      %v2673 = vmul.f32 %v2552, 1.442695
      %v2674 = vpow.pop %v2673
      %v2675 = vmul.f32 %v2553, 1.442695
      %v2676 = vpow.pop %v2675
      %v2677 = vmul.f32 %v2554, 1.442695
      %v2678 = vpow.pop %v2677
      %v2679 = vmul.f32 %v2555, 1.442695
      %v2680 = vpow.pop %v2679
      %v2681 = vmul.f32 %v2556, 1.442695
      %v2682 = vpow.pop %v2681
      %v2683 = vmul.f32 %v2557, 1.442695
      %v2684 = vpow.pop %v2683
      %v2685 = vmul.f32 %v2558, 1.442695
      %v2686 = vpow.pop %v2685
      %v2687 = vadd.f32 %v2560, %v2562
      %2688 = vadd.xlane.f32.xlu0 %v2687
      %v2689 = vpop.xlane.xlu0 %2688
      %v2690 = vadd.f32 %v2564, %v2566
      %2691 = vadd.xlane.f32.xlu0 %v2690
      %v2692 = vpop.xlane.xlu0 %2691
      %v2693 = vadd.f32 %v2568, %v2570
      %2694 = vadd.xlane.f32.xlu0 %v2693
      %v2695 = vpop.xlane.xlu0 %2694
      %v2696 = vadd.f32 %v2572, %v2574
      %2697 = vadd.xlane.f32.xlu0 %v2696
      %v2698 = vpop.xlane.xlu0 %2697
      %v2699 = vadd.f32 %v2576, %v2578
      %2700 = vadd.xlane.f32.xlu0 %v2699
      %v2701 = vpop.xlane.xlu0 %2700
      %v2702 = vadd.f32 %v2580, %v2582
      %2703 = vadd.xlane.f32.xlu0 %v2702
      %v2704 = vpop.xlane.xlu0 %2703
      %v2705 = vadd.f32 %v2584, %v2586
      %2706 = vadd.xlane.f32.xlu0 %v2705
      %v2707 = vpop.xlane.xlu0 %2706
      %v2708 = vadd.f32 %v2588, %v2590
      %2709 = vadd.xlane.f32.xlu0 %v2708
      %v2710 = vpop.xlane.xlu0 %2709
      %v2711 = vadd.f32 %v2592, %v2594
      %2712 = vadd.xlane.f32.xlu0 %v2711
      %v2713 = vpop.xlane.xlu0 %2712
      %v2714 = vadd.f32 %v2596, %v2598
      %2715 = vadd.xlane.f32.xlu0 %v2714
      %v2716 = vpop.xlane.xlu0 %2715
      %v2717 = vadd.f32 %v2600, %v2602
      %2718 = vadd.xlane.f32.xlu0 %v2717
      %v2719 = vpop.xlane.xlu0 %2718
      %v2720 = vadd.f32 %v2604, %v2606
      %2721 = vadd.xlane.f32.xlu0 %v2720
      %v2722 = vpop.xlane.xlu0 %2721
      %v2723 = vadd.f32 %v2608, %v2610
      %2724 = vadd.xlane.f32.xlu0 %v2723
      %v2725 = vpop.xlane.xlu0 %2724
      %v2726 = vadd.f32 %v2612, %v2614
      %2727 = vadd.xlane.f32.xlu0 %v2726
      %v2728 = vpop.xlane.xlu0 %2727
      %v2729 = vadd.f32 %v2616, %v2618
      %2730 = vadd.xlane.f32.xlu0 %v2729
      %v2731 = vpop.xlane.xlu0 %2730
      %v2732 = vadd.f32 %v2620, %v2622
      %2733 = vadd.xlane.f32.xlu0 %v2732
      %v2734 = vpop.xlane.xlu0 %2733
      %v2735 = vadd.f32 %v2624, %v2626
      %2736 = vadd.xlane.f32.xlu0 %v2735
      %v2737 = vpop.xlane.xlu0 %2736
      %v2738 = vadd.f32 %v2628, %v2630
      %2739 = vadd.xlane.f32.xlu0 %v2738
      %v2740 = vpop.xlane.xlu0 %2739
      %v2741 = vadd.f32 %v2632, %v2634
      %2742 = vadd.xlane.f32.xlu0 %v2741
      %v2743 = vpop.xlane.xlu0 %2742
      %v2744 = vadd.f32 %v2636, %v2638
      %2745 = vadd.xlane.f32.xlu0 %v2744
      %v2746 = vpop.xlane.xlu0 %2745
      %v2747 = vadd.f32 %v2640, %v2642
      %2748 = vadd.xlane.f32.xlu0 %v2747
      %v2749 = vpop.xlane.xlu0 %2748
      %v2750 = vadd.f32 %v2644, %v2646
      %2751 = vadd.xlane.f32.xlu0 %v2750
      %v2752 = vpop.xlane.xlu0 %2751
      %v2753 = vadd.f32 %v2648, %v2650
      %2754 = vadd.xlane.f32.xlu0 %v2753
      %v2755 = vpop.xlane.xlu0 %2754
      %v2756 = vadd.f32 %v2652, %v2654
      %2757 = vadd.xlane.f32.xlu0 %v2756
      %v2758 = vpop.xlane.xlu0 %2757
      %v2759 = vadd.f32 %v2656, %v2658
      %2760 = vadd.xlane.f32.xlu0 %v2759
      %v2761 = vpop.xlane.xlu0 %2760
      %v2762 = vadd.f32 %v2660, %v2662
      %2763 = vadd.xlane.f32.xlu0 %v2762
      %v2764 = vpop.xlane.xlu0 %2763
      %v2765 = vadd.f32 %v2664, %v2666
      %2766 = vadd.xlane.f32.xlu0 %v2765
      %v2767 = vpop.xlane.xlu0 %2766
      %v2768 = vadd.f32 %v2668, %v2670
      %2769 = vadd.xlane.f32.xlu0 %v2768
      %v2770 = vpop.xlane.xlu0 %2769
      %v2771 = vadd.f32 %v2672, %v2674
      %2772 = vadd.xlane.f32.xlu0 %v2771
      %v2773 = vpop.xlane.xlu0 %2772
      %v2774 = vadd.f32 %v2676, %v2678
      %2775 = vadd.xlane.f32.xlu0 %v2774
      %v2776 = vpop.xlane.xlu0 %2775
      %v2777 = vadd.f32 %v2680, %v2682
      %2778 = vadd.xlane.f32.xlu0 %v2777
      %v2779 = vpop.xlane.xlu0 %2778
      %v2780 = vadd.f32 %v2684, %v2686
      %2781 = vadd.xlane.f32.xlu0 %v2780
      %v2782 = vpop.xlane.xlu0 %2781
      %2783 = vrot.lane.b32.xlu0 %v1595, 64
      %v2784 = vpop.permute.xlu0 %2783
      %2785 = vrot.lane.b32.xlu0 %v1600, 64
      %v2786 = vpop.permute.xlu0 %2785
      %2787 = vrot.lane.b32.xlu0 %v1605, 64
      %v2788 = vpop.permute.xlu0 %2787
      %2789 = vrot.lane.b32.xlu0 %v1610, 64
      %v2790 = vpop.permute.xlu0 %2789
      %2791 = vrot.lane.b32.xlu0 %v1615, 64
      %v2792 = vpop.permute.xlu0 %2791
      %2793 = vrot.lane.b32.xlu0 %v1620, 64
      %v2794 = vpop.permute.xlu0 %2793
      %2795 = vrot.lane.b32.xlu0 %v1625, 64
      %v2796 = vpop.permute.xlu0 %2795
      %2797 = vrot.lane.b32.xlu0 %v1630, 64
      %v2798 = vpop.permute.xlu0 %2797
      %2799 = vrot.lane.b32.xlu0 %v1635, 64
      %v2800 = vpop.permute.xlu0 %2799
      %2801 = vrot.lane.b32.xlu0 %v1640, 64
      %v2802 = vpop.permute.xlu0 %2801
      %2803 = vrot.lane.b32.xlu0 %v1645, 64
      %v2804 = vpop.permute.xlu0 %2803
      %2805 = vrot.lane.b32.xlu0 %v1650, 64
      %v2806 = vpop.permute.xlu0 %2805
      %2807 = vrot.lane.b32.xlu0 %v1655, 64
      %v2808 = vpop.permute.xlu0 %2807
      %2809 = vrot.lane.b32.xlu0 %v1660, 64
      %v2810 = vpop.permute.xlu0 %2809
      %2811 = vrot.lane.b32.xlu0 %v1665, 64
      %v2812 = vpop.permute.xlu0 %2811
      %2813 = vrot.lane.b32.xlu0 %v1670, 64
      %v2814 = vpop.permute.xlu0 %2813
      %2815 = vrot.lane.b32.xlu0 %v1675, 64
      %v2816 = vpop.permute.xlu0 %2815
      %2817 = vrot.lane.b32.xlu0 %v1680, 64
      %v2818 = vpop.permute.xlu0 %2817
      %2819 = vrot.lane.b32.xlu0 %v1685, 64
      %v2820 = vpop.permute.xlu0 %2819
      %2821 = vrot.lane.b32.xlu0 %v1690, 64
      %v2822 = vpop.permute.xlu0 %2821
      %2823 = vrot.lane.b32.xlu0 %v1695, 64
      %v2824 = vpop.permute.xlu0 %2823
      %2825 = vrot.lane.b32.xlu0 %v1700, 64
      %v2826 = vpop.permute.xlu0 %2825
      %2827 = vrot.lane.b32.xlu0 %v1705, 64
      %v2828 = vpop.permute.xlu0 %2827
      %2829 = vrot.lane.b32.xlu0 %v1710, 64
      %v2830 = vpop.permute.xlu0 %2829
      %2831 = vrot.lane.b32.xlu0 %v1715, 64
      %v2832 = vpop.permute.xlu0 %2831
      %2833 = vrot.lane.b32.xlu0 %v1720, 64
      %v2834 = vpop.permute.xlu0 %2833
      %2835 = vrot.lane.b32.xlu0 %v1725, 64
      %v2836 = vpop.permute.xlu0 %2835
      %2837 = vrot.lane.b32.xlu0 %v1730, 64
      %v2838 = vpop.permute.xlu0 %2837
      %2839 = vrot.lane.b32.xlu0 %v1735, 64
      %v2840 = vpop.permute.xlu0 %2839
      %2841 = vrot.lane.b32.xlu0 %v1740, 64
      %v2842 = vpop.permute.xlu0 %2841
      %2843 = vrot.lane.b32.xlu0 %v1745, 64
      %v2844 = vpop.permute.xlu0 %2843
      %2845 = vrot.lane.b32.xlu0 %v1750, 64
      %v2846 = vpop.permute.xlu0 %2845
      %2879 = vmatprep.subr.mxu0 0.0
      %2880 = vmatpush1.msra.mxu0 %v2784
      %2881 = vmatprep.subr.mxu0 0.0
      %2882 = vmatpush1.msra.mxu0 %v2786
      %2883 = vmatprep.subr.mxu0 0.0
      %2884 = vmatpush1.msra.mxu0 %v2788
      %2885 = vmatprep.subr.mxu0 0.0
      %2886 = vmatpush1.msra.mxu0 %v2790
      %2887 = vmatprep.subr.mxu0 0.0
      %2888 = vmatpush1.msra.mxu0 %v2792
      %2889 = vmatprep.subr.mxu0 0.0
      %2890 = vmatpush1.msra.mxu0 %v2794
      %2891 = vmatprep.subr.mxu0 0.0
      %2892 = vmatpush1.msra.mxu0 %v2796
      %2893 = vmatprep.subr.mxu0 0.0
      %2894 = vmatpush1.msra.mxu0 %v2798
      %2895 = vmatprep.subr.mxu0 0.0
      %2896 = vmatpush1.msra.mxu0 %v2800
      %2897 = vmatprep.subr.mxu0 0.0
      %2898 = vmatpush1.msra.mxu0 %v2802
      %2899 = vmatprep.subr.mxu0 0.0
      %2900 = vmatpush1.msra.mxu0 %v2804
      %2901 = vmatprep.subr.mxu0 0.0
      %2902 = vmatpush1.msra.mxu0 %v2806
      %2903 = vmatprep.subr.mxu0 0.0
      %2904 = vmatpush1.msra.mxu0 %v2808
      %2905 = vmatprep.subr.mxu0 0.0
      %2906 = vmatpush1.msra.mxu0 %v2810
      %2907 = vmatprep.subr.mxu0 0.0
      %2908 = vmatpush1.msra.mxu0 %v2812
      %2909 = vmatprep.subr.mxu0 0.0
      %2910 = vmatpush1.msra.mxu0 %v2814
      %2911 = vmatprep.subr.mxu0 0.0
      %2912 = vmatpush1.msra.mxu0 %v2816
      %2913 = vmatprep.subr.mxu0 0.0
      %2914 = vmatpush1.msra.mxu0 %v2818
      %2915 = vmatprep.subr.mxu0 0.0
      %2916 = vmatpush1.msra.mxu0 %v2820
      %2917 = vmatprep.subr.mxu0 0.0
      %2918 = vmatpush1.msra.mxu0 %v2822
      %2919 = vmatprep.subr.mxu0 0.0
      %2920 = vmatpush1.msra.mxu0 %v2824
      %2921 = vmatprep.subr.mxu0 0.0
      %2922 = vmatpush1.msra.mxu0 %v2826
      %2923 = vmatprep.subr.mxu0 0.0
      %2924 = vmatpush1.msra.mxu0 %v2828
      %2925 = vmatprep.subr.mxu0 0.0
      %2926 = vmatpush1.msra.mxu0 %v2830
      %2927 = vmatprep.subr.mxu0 0.0
      %2928 = vmatpush1.msra.mxu0 %v2832
      %2929 = vmatprep.subr.mxu0 0.0
      %2930 = vmatpush1.msra.mxu0 %v2834
      %2931 = vmatprep.subr.mxu0 0.0
      %2932 = vmatpush1.msra.mxu0 %v2836
      %2933 = vmatprep.subr.mxu0 0.0
      %2934 = vmatpush1.msra.mxu0 %v2838
      %2935 = vmatprep.subr.mxu0 0.0
      %2936 = vmatpush1.msra.mxu0 %v2840
      %2937 = vmatprep.subr.mxu0 0.0
      %2938 = vmatpush1.msra.mxu0 %v2842
      %2939 = vmatprep.subr.mxu0 0.0
      %2940 = vmatpush1.msra.mxu0 %v2844
      %2941 = vmatprep.subr.mxu0 0.0
      %2942 = vmatpush1.msra.mxu0 %v2846
      %2943 = vmatprep.mubr.f32.mxu0 %v2562
      %2944 = vmatmul.mubr.f32.gmra.mrb[0].mxu0 %v2560
      %v2945 = vpop.f32.mrb[0].mxu0
      %v2946 = vadd.f32 0.0, %v2945
      %v2947 = vpop.f32.mrb[0].mxu0
      %2948 = vmatprep.mubr.f32.mxu0 %v2566
      %2949 = vmatmul.mubr.f32.gmra.mrb[0].mxu0 %v2564
      %v2950 = vpop.f32.mrb[0].mxu0
      %v2951 = vadd.f32 0.0, %v2950
      %v2952 = vpop.f32.mrb[0].mxu0
      %2953 = vmatprep.mubr.f32.mxu0 %v2570
      %2954 = vmatmul.mubr.f32.gmra.mrb[0].mxu0 %v2568
      %v2955 = vpop.f32.mrb[0].mxu0
      %v2956 = vadd.f32 0.0, %v2955
      %v2957 = vpop.f32.mrb[0].mxu0
      %2958 = vmatprep.mubr.f32.mxu0 %v2574
      %2959 = vmatmul.mubr.f32.gmra.mrb[0].mxu0 %v2572
      %v2960 = vpop.f32.mrb[0].mxu0
      %v2961 = vadd.f32 0.0, %v2960
      %v2962 = vpop.f32.mrb[0].mxu0
      %2963 = vmatprep.mubr.f32.mxu0 %v2578
      %2964 = vmatmul.mubr.f32.gmra.mrb[0].mxu0 %v2576
      %v2965 = vpop.f32.mrb[0].mxu0
      %v2966 = vadd.f32 0.0, %v2965
      %v2967 = vpop.f32.mrb[0].mxu0
      %2968 = vmatprep.mubr.f32.mxu0 %v2582
      %2969 = vmatmul.mubr.f32.gmra.mrb[0].mxu0 %v2580
      %v2970 = vpop.f32.mrb[0].mxu0
      %v2971 = vadd.f32 0.0, %v2970
      %v2972 = vpop.f32.mrb[0].mxu0
      %2973 = vmatprep.mubr.f32.mxu0 %v2586
      %2974 = vmatmul.mubr.f32.gmra.mrb[0].mxu0 %v2584
      %v2975 = vpop.f32.mrb[0].mxu0
      %v2976 = vadd.f32 0.0, %v2975
      %v2977 = vpop.f32.mrb[0].mxu0
      %2978 = vmatprep.mubr.f32.mxu0 %v2590
      %2979 = vmatmul.mubr.f32.gmra.mrb[0].mxu0 %v2588
      %v2980 = vpop.f32.mrb[0].mxu0
      %v2981 = vadd.f32 0.0, %v2980
      %v2982 = vpop.f32.mrb[0].mxu0
      %2983 = vmatprep.mubr.f32.mxu0 %v2594
      %2984 = vmatmul.mubr.f32.gmra.mrb[0].mxu0 %v2592
      %v2985 = vpop.f32.mrb[0].mxu0
      %v2986 = vadd.f32 0.0, %v2985
      %v2987 = vpop.f32.mrb[0].mxu0
      %2988 = vmatprep.mubr.f32.mxu0 %v2598
      %2989 = vmatmul.mubr.f32.gmra.mrb[0].mxu0 %v2596
      %v2990 = vpop.f32.mrb[0].mxu0
      %v2991 = vadd.f32 0.0, %v2990
      %v2992 = vpop.f32.mrb[0].mxu0
      %2993 = vmatprep.mubr.f32.mxu0 %v2602
      %2994 = vmatmul.mubr.f32.gmra.mrb[0].mxu0 %v2600
      %v2995 = vpop.f32.mrb[0].mxu0
      %v2996 = vadd.f32 0.0, %v2995
      %v2997 = vpop.f32.mrb[0].mxu0
      %2998 = vmatprep.mubr.f32.mxu0 %v2606
      %2999 = vmatmul.mubr.f32.gmra.mrb[0].mxu0 %v2604
      %v3000 = vpop.f32.mrb[0].mxu0
      %v3001 = vadd.f32 0.0, %v3000
      %v3002 = vpop.f32.mrb[0].mxu0
      %3003 = vmatprep.mubr.f32.mxu0 %v2610
      %3004 = vmatmul.mubr.f32.gmra.mrb[0].mxu0 %v2608
      %v3005 = vpop.f32.mrb[0].mxu0
      %v3006 = vadd.f32 0.0, %v3005
      %v3007 = vpop.f32.mrb[0].mxu0
      %3008 = vmatprep.mubr.f32.mxu0 %v2614
      %3009 = vmatmul.mubr.f32.gmra.mrb[0].mxu0 %v2612
      %v3010 = vpop.f32.mrb[0].mxu0
      %v3011 = vadd.f32 0.0, %v3010
      %v3012 = vpop.f32.mrb[0].mxu0
      %3013 = vmatprep.mubr.f32.mxu0 %v2618
      %3014 = vmatmul.mubr.f32.gmra.mrb[0].mxu0 %v2616
      %v3015 = vpop.f32.mrb[0].mxu0
      %v3016 = vadd.f32 0.0, %v3015
      %v3017 = vpop.f32.mrb[0].mxu0
      %3018 = vmatprep.mubr.f32.mxu0 %v2622
      %3019 = vmatmul.mubr.f32.gmra.mrb[0].mxu0 %v2620
      %v3020 = vpop.f32.mrb[0].mxu0
      %v3021 = vadd.f32 0.0, %v3020
      %v3022 = vpop.f32.mrb[0].mxu0
      %3023 = vmatprep.mubr.f32.mxu0 %v2626
      %3024 = vmatmul.mubr.f32.gmra.mrb[0].mxu0 %v2624
      %v3025 = vpop.f32.mrb[0].mxu0
      %v3026 = vadd.f32 0.0, %v3025
      %v3027 = vpop.f32.mrb[0].mxu0
      %3028 = vmatprep.mubr.f32.mxu0 %v2630
      %3029 = vmatmul.mubr.f32.gmra.mrb[0].mxu0 %v2628
      %v3030 = vpop.f32.mrb[0].mxu0
      %v3031 = vadd.f32 0.0, %v3030
      %v3032 = vpop.f32.mrb[0].mxu0
      %3033 = vmatprep.mubr.f32.mxu0 %v2634
      %3034 = vmatmul.mubr.f32.gmra.mrb[0].mxu0 %v2632
      %v3035 = vpop.f32.mrb[0].mxu0
      %v3036 = vadd.f32 0.0, %v3035
      %v3037 = vpop.f32.mrb[0].mxu0
      %3038 = vmatprep.mubr.f32.mxu0 %v2638
      %3039 = vmatmul.mubr.f32.gmra.mrb[0].mxu0 %v2636
      %v3040 = vpop.f32.mrb[0].mxu0
      %v3041 = vadd.f32 0.0, %v3040
      %v3042 = vpop.f32.mrb[0].mxu0
      %3043 = vmatprep.mubr.f32.mxu0 %v2642
      %3044 = vmatmul.mubr.f32.gmra.mrb[0].mxu0 %v2640
      %v3045 = vpop.f32.mrb[0].mxu0
      %v3046 = vadd.f32 0.0, %v3045
      %v3047 = vpop.f32.mrb[0].mxu0
      %3048 = vmatprep.mubr.f32.mxu0 %v2646
      %3049 = vmatmul.mubr.f32.gmra.mrb[0].mxu0 %v2644
      %v3050 = vpop.f32.mrb[0].mxu0
      %v3051 = vadd.f32 0.0, %v3050
      %v3052 = vpop.f32.mrb[0].mxu0
      %3053 = vmatprep.mubr.f32.mxu0 %v2650
      %3054 = vmatmul.mubr.f32.gmra.mrb[0].mxu0 %v2648
      %v3055 = vpop.f32.mrb[0].mxu0
      %v3056 = vadd.f32 0.0, %v3055
      %v3057 = vpop.f32.mrb[0].mxu0
      %3058 = vmatprep.mubr.f32.mxu0 %v2654
      %3059 = vmatmul.mubr.f32.gmra.mrb[0].mxu0 %v2652
      %v3060 = vpop.f32.mrb[0].mxu0
      %v3061 = vadd.f32 0.0, %v3060
      %v3062 = vpop.f32.mrb[0].mxu0
      %3063 = vmatprep.mubr.f32.mxu0 %v2658
      %3064 = vmatmul.mubr.f32.gmra.mrb[0].mxu0 %v2656
      %v3065 = vpop.f32.mrb[0].mxu0
      %v3066 = vadd.f32 0.0, %v3065
      %v3067 = vpop.f32.mrb[0].mxu0
      %3068 = vmatprep.mubr.f32.mxu0 %v2662
      %3069 = vmatmul.mubr.f32.gmra.mrb[0].mxu0 %v2660
      %v3070 = vpop.f32.mrb[0].mxu0
      %v3071 = vadd.f32 0.0, %v3070
      %v3072 = vpop.f32.mrb[0].mxu0
      %3073 = vmatprep.mubr.f32.mxu0 %v2666
      %3074 = vmatmul.mubr.f32.gmra.mrb[0].mxu0 %v2664
      %v3075 = vpop.f32.mrb[0].mxu0
      %v3076 = vadd.f32 0.0, %v3075
      %v3077 = vpop.f32.mrb[0].mxu0
      %3078 = vmatprep.mubr.f32.mxu0 %v2670
      %3079 = vmatmul.mubr.f32.gmra.mrb[0].mxu0 %v2668
      %v3080 = vpop.f32.mrb[0].mxu0
      %v3081 = vadd.f32 0.0, %v3080
      %v3082 = vpop.f32.mrb[0].mxu0
      %3083 = vmatprep.mubr.f32.mxu0 %v2674
      %3084 = vmatmul.mubr.f32.gmra.mrb[0].mxu0 %v2672
      %v3085 = vpop.f32.mrb[0].mxu0
      %v3086 = vadd.f32 0.0, %v3085
      %v3087 = vpop.f32.mrb[0].mxu0
      %3088 = vmatprep.mubr.f32.mxu0 %v2678
      %3089 = vmatmul.mubr.f32.gmra.mrb[0].mxu0 %v2676
      %v3090 = vpop.f32.mrb[0].mxu0
      %v3091 = vadd.f32 0.0, %v3090
      %v3092 = vpop.f32.mrb[0].mxu0
      %3093 = vmatprep.mubr.f32.mxu0 %v2682
      %3094 = vmatmul.mubr.f32.gmra.mrb[0].mxu0 %v2680
      %v3095 = vpop.f32.mrb[0].mxu0
      %v3096 = vadd.f32 0.0, %v3095
      %v3097 = vpop.f32.mrb[0].mxu0
      %3098 = vmatprep.mubr.f32.mxu0 %v2686
      %3099 = vmatmul.mubr.f32.gmra.mrb[0].mxu0 %v2684
      %v3100 = vpop.f32.mrb[0].mxu0
      %v3101 = vadd.f32 0.0, %v3100
      %v3102 = vpop.f32.mrb[0].mxu0
      %3103 = vdwg.mxu0
      %v3104 = vrcp.pop %v2689
      %v3105 = vrcp.pop %v2692
      %v3106 = vrcp.pop %v2695
      %v3107 = vrcp.pop %v2698
      %v3108 = vrcp.pop %v2701
      %v3109 = vrcp.pop %v2704
      %v3110 = vrcp.pop %v2707
      %v3111 = vrcp.pop %v2710
      %v3112 = vrcp.pop %v2713
      %v3113 = vrcp.pop %v2716
      %v3114 = vrcp.pop %v2719
      %v3115 = vrcp.pop %v2722
      %v3116 = vrcp.pop %v2725
      %v3117 = vrcp.pop %v2728
      %v3118 = vrcp.pop %v2731
      %v3119 = vrcp.pop %v2734
      %v3120 = vrcp.pop %v2737
      %v3121 = vrcp.pop %v2740
      %v3122 = vrcp.pop %v2743
      %v3123 = vrcp.pop %v2746
      %v3124 = vrcp.pop %v2749
      %v3125 = vrcp.pop %v2752
      %v3126 = vrcp.pop %v2755
      %v3127 = vrcp.pop %v2758
      %v3128 = vrcp.pop %v2761
      %v3129 = vrcp.pop %v2764
      %v3130 = vrcp.pop %v2767
      %v3131 = vrcp.pop %v2770
      %v3132 = vrcp.pop %v2773
      %v3133 = vrcp.pop %v2776
      %v3134 = vrcp.pop %v2779
      %v3135 = vrcp.pop %v2782
      %v3136 = vmul.f32 %v2946, %v3104
      %v3137 = vmul.f32 %v2951, %v3105
      %v3138 = vmul.f32 %v2956, %v3106
      %v3139 = vmul.f32 %v2961, %v3107
      %v3140 = vmul.f32 %v2966, %v3108
      %v3141 = vmul.f32 %v2971, %v3109
      %v3142 = vmul.f32 %v2976, %v3110
      %v3143 = vmul.f32 %v2981, %v3111
      %v3144 = vmul.f32 %v2986, %v3112
      %v3145 = vmul.f32 %v2991, %v3113
      %v3146 = vmul.f32 %v2996, %v3114
      %v3147 = vmul.f32 %v3001, %v3115
      %v3148 = vmul.f32 %v3006, %v3116
      %v3149 = vmul.f32 %v3011, %v3117
      %v3150 = vmul.f32 %v3016, %v3118
      %v3151 = vmul.f32 %v3021, %v3119
      %v3152 = vmul.f32 %v3026, %v3120
      %v3153 = vmul.f32 %v3031, %v3121
      %v3154 = vmul.f32 %v3036, %v3122
      %v3155 = vmul.f32 %v3041, %v3123
      %v3156 = vmul.f32 %v3046, %v3124
      %v3157 = vmul.f32 %v3051, %v3125
      %v3158 = vmul.f32 %v3056, %v3126
      %v3159 = vmul.f32 %v3061, %v3127
      %v3160 = vmul.f32 %v3066, %v3128
      %v3161 = vmul.f32 %v3071, %v3129
      %v3162 = vmul.f32 %v3076, %v3130
      %v3163 = vmul.f32 %v3081, %v3131
      %v3164 = vmul.f32 %v3086, %v3132
      %v3165 = vmul.f32 %v3091, %v3133
      %v3166 = vmul.f32 %v3096, %v3134
      %v3167 = vmul.f32 %v3101, %v3135
      %vm3168 = vcmask 654848
      %v3169 = vsel %vm3168, %v1595, 0.0
      %v3170 = vsel %vm3168, %v1600, 0.0
      %v3171 = vadd.f32 %v3169, %v3170
      %v3172 = vsel %vm3168, %v1605, 0.0
      %v3173 = vadd.f32 %v3171, %v3172
      %v3174 = vsel %vm3168, %v1610, 0.0
      %v3175 = vadd.f32 %v3173, %v3174
      %v3176 = vsel %vm3168, %v1615, 0.0
      %v3177 = vadd.f32 %v3175, %v3176
      %v3178 = vsel %vm3168, %v1620, 0.0
      %v3179 = vadd.f32 %v3177, %v3178
      %v3180 = vsel %vm3168, %v1625, 0.0
      %v3181 = vadd.f32 %v3179, %v3180
      %v3182 = vsel %vm3168, %v1630, 0.0
      %v3183 = vadd.f32 %v3181, %v3182
      %v3184 = vsel %vm3168, %v1635, 0.0
      %v3185 = vadd.f32 %v3183, %v3184
      %v3186 = vsel %vm3168, %v1640, 0.0
      %v3187 = vadd.f32 %v3185, %v3186
      %v3188 = vsel %vm3168, %v1645, 0.0
      %v3189 = vadd.f32 %v3187, %v3188
      %v3190 = vsel %vm3168, %v1650, 0.0
      %v3191 = vadd.f32 %v3189, %v3190
      %v3192 = vsel %vm3168, %v1655, 0.0
      %v3193 = vadd.f32 %v3191, %v3192
      %v3194 = vsel %vm3168, %v1660, 0.0
      %v3195 = vadd.f32 %v3193, %v3194
      %v3196 = vsel %vm3168, %v1665, 0.0
      %v3197 = vadd.f32 %v3195, %v3196
      %v3198 = vsel %vm3168, %v1670, 0.0
      %v3199 = vadd.f32 %v3197, %v3198
      %v3200 = vsel %vm3168, %v1675, 0.0
      %v3201 = vadd.f32 %v3199, %v3200
      %v3202 = vsel %vm3168, %v1680, 0.0
      %v3203 = vadd.f32 %v3201, %v3202
      %v3204 = vsel %vm3168, %v1685, 0.0
      %v3205 = vadd.f32 %v3203, %v3204
      %v3206 = vsel %vm3168, %v1690, 0.0
      %v3207 = vadd.f32 %v3205, %v3206
      %v3208 = vsel %vm3168, %v1695, 0.0
      %v3209 = vadd.f32 %v3207, %v3208
      %v3210 = vsel %vm3168, %v1700, 0.0
      %v3211 = vadd.f32 %v3209, %v3210
      %v3212 = vsel %vm3168, %v1705, 0.0
      %v3213 = vadd.f32 %v3211, %v3212
      %v3214 = vsel %vm3168, %v1710, 0.0
      %v3215 = vadd.f32 %v3213, %v3214
      %v3216 = vsel %vm3168, %v1715, 0.0
      %v3217 = vadd.f32 %v3215, %v3216
      %v3218 = vsel %vm3168, %v1720, 0.0
      %v3219 = vadd.f32 %v3217, %v3218
      %v3220 = vsel %vm3168, %v1725, 0.0
      %v3221 = vadd.f32 %v3219, %v3220
      %v3222 = vsel %vm3168, %v1730, 0.0
      %v3223 = vadd.f32 %v3221, %v3222
      %v3224 = vsel %vm3168, %v1735, 0.0
      %v3225 = vadd.f32 %v3223, %v3224
      %v3226 = vsel %vm3168, %v1740, 0.0
      %v3227 = vadd.f32 %v3225, %v3226
      %v3228 = vsel %vm3168, %v1745, 0.0
      %v3229 = vadd.f32 %v3227, %v3228
      %v3230 = vsel %vm3168, %v1750, 0.0
      %v3231 = vadd.f32 %v3229, %v3230
      %v3232 = vrot.slane %v3231, 4
      %v3233 = vadd.f32 %v3231, %v3232
      %v3234 = vrot.slane %v3233, 2
      %v3235 = vadd.f32 %v3233, %v3234
      %v3236 = vrot.slane %v3235, 1
      %v3237 = vadd.f32 %v3235, %v3236
      %v3238 = vmul.f32 %v3237, 1e-09
      %3240 = vrot.lane.b32.xlu0 %v3238, 64
      %v3241 = vpop.permute.xlu0 %3240
      %v3243 = vadd.f32 %v3136, %v3241
      %v3244 = vadd.f32 %v3137, %v3241
      %v3245 = vadd.f32 %v3138, %v3241
      %v3246 = vadd.f32 %v3139, %v3241
      %v3247 = vadd.f32 %v3140, %v3241
      %v3248 = vadd.f32 %v3141, %v3241
      %v3249 = vadd.f32 %v3142, %v3241
      %v3250 = vadd.f32 %v3143, %v3241
      %v3251 = vadd.f32 %v3144, %v3241
      %v3252 = vadd.f32 %v3145, %v3241
      %v3253 = vadd.f32 %v3146, %v3241
      %v3254 = vadd.f32 %v3147, %v3241
      %v3255 = vadd.f32 %v3148, %v3241
      %v3256 = vadd.f32 %v3149, %v3241
      %v3257 = vadd.f32 %v3150, %v3241
      %v3258 = vadd.f32 %v3151, %v3241
      %v3259 = vadd.f32 %v3152, %v3241
      %v3260 = vadd.f32 %v3153, %v3241
      %v3261 = vadd.f32 %v3154, %v3241
      %v3262 = vadd.f32 %v3155, %v3241
      %v3263 = vadd.f32 %v3156, %v3241
      %v3264 = vadd.f32 %v3157, %v3241
      %v3265 = vadd.f32 %v3158, %v3241
      %v3266 = vadd.f32 %v3159, %v3241
      %v3267 = vadd.f32 %v3160, %v3241
      %v3268 = vadd.f32 %v3161, %v3241
      %v3269 = vadd.f32 %v3162, %v3241
      %v3270 = vadd.f32 %v3163, %v3241
      %v3271 = vadd.f32 %v3164, %v3241
      %v3272 = vadd.f32 %v3165, %v3241
      %v3273 = vadd.f32 %v3166, %v3241
      %v3274 = vadd.f32 %v3167, %v3241
      %3275 = vrot.lane.b32.xlu0 %v1595, 112
      %v3276 = vpop.permute.xlu0 %3275
      %3277 = vrot.lane.b32.xlu0 %v1600, 112
      %v3278 = vpop.permute.xlu0 %3277
      %3279 = vrot.lane.b32.xlu0 %v1605, 112
      %v3280 = vpop.permute.xlu0 %3279
      %3281 = vrot.lane.b32.xlu0 %v1610, 112
      %v3282 = vpop.permute.xlu0 %3281
      %3283 = vrot.lane.b32.xlu0 %v1615, 112
      %v3284 = vpop.permute.xlu0 %3283
      %3285 = vrot.lane.b32.xlu0 %v1620, 112
      %v3286 = vpop.permute.xlu0 %3285
      %3287 = vrot.lane.b32.xlu0 %v1625, 112
      %v3288 = vpop.permute.xlu0 %3287
      %3289 = vrot.lane.b32.xlu0 %v1630, 112
      %v3290 = vpop.permute.xlu0 %3289
      %3291 = vrot.lane.b32.xlu0 %v1635, 112
      %v3292 = vpop.permute.xlu0 %3291
      %3293 = vrot.lane.b32.xlu0 %v1640, 112
      %v3294 = vpop.permute.xlu0 %3293
      %3295 = vrot.lane.b32.xlu0 %v1645, 112
      %v3296 = vpop.permute.xlu0 %3295
      %3297 = vrot.lane.b32.xlu0 %v1650, 112
      %v3298 = vpop.permute.xlu0 %3297
      %3299 = vrot.lane.b32.xlu0 %v1655, 112
      %v3300 = vpop.permute.xlu0 %3299
      %3301 = vrot.lane.b32.xlu0 %v1660, 112
      %v3302 = vpop.permute.xlu0 %3301
      %3303 = vrot.lane.b32.xlu0 %v1665, 112
      %v3304 = vpop.permute.xlu0 %3303
      %3305 = vrot.lane.b32.xlu0 %v1670, 112
      %v3306 = vpop.permute.xlu0 %3305
      %3307 = vrot.lane.b32.xlu0 %v1675, 112
      %v3308 = vpop.permute.xlu0 %3307
      %3309 = vrot.lane.b32.xlu0 %v1680, 112
      %v3310 = vpop.permute.xlu0 %3309
      %3311 = vrot.lane.b32.xlu0 %v1685, 112
      %v3312 = vpop.permute.xlu0 %3311
      %3313 = vrot.lane.b32.xlu0 %v1690, 112
      %v3314 = vpop.permute.xlu0 %3313
      %3315 = vrot.lane.b32.xlu0 %v1695, 112
      %v3316 = vpop.permute.xlu0 %3315
      %3317 = vrot.lane.b32.xlu0 %v1700, 112
      %v3318 = vpop.permute.xlu0 %3317
      %3319 = vrot.lane.b32.xlu0 %v1705, 112
      %v3320 = vpop.permute.xlu0 %3319
      %3321 = vrot.lane.b32.xlu0 %v1710, 112
      %v3322 = vpop.permute.xlu0 %3321
      %3323 = vrot.lane.b32.xlu0 %v1715, 112
      %v3324 = vpop.permute.xlu0 %3323
      %3325 = vrot.lane.b32.xlu0 %v1720, 112
      %v3326 = vpop.permute.xlu0 %3325
      %3327 = vrot.lane.b32.xlu0 %v1725, 112
      %v3328 = vpop.permute.xlu0 %3327
      %3329 = vrot.lane.b32.xlu0 %v1730, 112
      %v3330 = vpop.permute.xlu0 %3329
      %3331 = vrot.lane.b32.xlu0 %v1735, 112
      %v3332 = vpop.permute.xlu0 %3331
      %3333 = vrot.lane.b32.xlu0 %v1740, 112
      %v3334 = vpop.permute.xlu0 %3333
      %3335 = vrot.lane.b32.xlu0 %v1745, 112
      %v3336 = vpop.permute.xlu0 %3335
      %3337 = vrot.lane.b32.xlu0 %v1750, 112
      %v3338 = vpop.permute.xlu0 %3337
      %3339 = vrot.lane.b32.xlu0 %v1595, 80
      %v3340 = vpop.permute.xlu0 %3339
      %3341 = vrot.lane.b32.xlu0 %v1600, 80
      %v3342 = vpop.permute.xlu0 %3341
      %3343 = vrot.lane.b32.xlu0 %v1605, 80
      %v3344 = vpop.permute.xlu0 %3343
      %3345 = vrot.lane.b32.xlu0 %v1610, 80
      %v3346 = vpop.permute.xlu0 %3345
      %3347 = vrot.lane.b32.xlu0 %v1615, 80
      %v3348 = vpop.permute.xlu0 %3347
      %3349 = vrot.lane.b32.xlu0 %v1620, 80
      %v3350 = vpop.permute.xlu0 %3349
      %3351 = vrot.lane.b32.xlu0 %v1625, 80
      %v3352 = vpop.permute.xlu0 %3351
      %3353 = vrot.lane.b32.xlu0 %v1630, 80
      %v3354 = vpop.permute.xlu0 %3353
      %3355 = vrot.lane.b32.xlu0 %v1635, 80
      %v3356 = vpop.permute.xlu0 %3355
      %3357 = vrot.lane.b32.xlu0 %v1640, 80
      %v3358 = vpop.permute.xlu0 %3357
      %3359 = vrot.lane.b32.xlu0 %v1645, 80
      %v3360 = vpop.permute.xlu0 %3359
      %3361 = vrot.lane.b32.xlu0 %v1650, 80
      %v3362 = vpop.permute.xlu0 %3361
      %3363 = vrot.lane.b32.xlu0 %v1655, 80
      %v3364 = vpop.permute.xlu0 %3363
      %3365 = vrot.lane.b32.xlu0 %v1660, 80
      %v3366 = vpop.permute.xlu0 %3365
      %3367 = vrot.lane.b32.xlu0 %v1665, 80
      %v3368 = vpop.permute.xlu0 %3367
      %3369 = vrot.lane.b32.xlu0 %v1670, 80
      %v3370 = vpop.permute.xlu0 %3369
      %3371 = vrot.lane.b32.xlu0 %v1675, 80
      %v3372 = vpop.permute.xlu0 %3371
      %3373 = vrot.lane.b32.xlu0 %v1680, 80
      %v3374 = vpop.permute.xlu0 %3373
      %3375 = vrot.lane.b32.xlu0 %v1685, 80
      %v3376 = vpop.permute.xlu0 %3375
      %3377 = vrot.lane.b32.xlu0 %v1690, 80
      %v3378 = vpop.permute.xlu0 %3377
      %3379 = vrot.lane.b32.xlu0 %v1695, 80
      %v3380 = vpop.permute.xlu0 %3379
      %3381 = vrot.lane.b32.xlu0 %v1700, 80
      %v3382 = vpop.permute.xlu0 %3381
      %3383 = vrot.lane.b32.xlu0 %v1705, 80
      %v3384 = vpop.permute.xlu0 %3383
      %3385 = vrot.lane.b32.xlu0 %v1710, 80
      %v3386 = vpop.permute.xlu0 %3385
      %3387 = vrot.lane.b32.xlu0 %v1715, 80
      %v3388 = vpop.permute.xlu0 %3387
      %3389 = vrot.lane.b32.xlu0 %v1720, 80
      %v3390 = vpop.permute.xlu0 %3389
      %3391 = vrot.lane.b32.xlu0 %v1725, 80
      %v3392 = vpop.permute.xlu0 %3391
      %3393 = vrot.lane.b32.xlu0 %v1730, 80
      %v3394 = vpop.permute.xlu0 %3393
      %3395 = vrot.lane.b32.xlu0 %v1735, 80
      %v3396 = vpop.permute.xlu0 %3395
      %3397 = vrot.lane.b32.xlu0 %v1740, 80
      %v3398 = vpop.permute.xlu0 %3397
      %3399 = vrot.lane.b32.xlu0 %v1745, 80
      %v3400 = vpop.permute.xlu0 %3399
      %3401 = vrot.lane.b32.xlu0 %v1750, 80
      %v3402 = vpop.permute.xlu0 %3401
      %v3403 = vsel %vm351, %v3276, 0
      %v3405 = vsel %vm351, %v3278, 0
      %v3407 = vsel %vm351, %v3280, 0
      %v3409 = vsel %vm351, %v3282, 0
      %v3411 = vsel %vm351, %v3284, 0
      %v3413 = vsel %vm351, %v3286, 0
      %v3415 = vsel %vm351, %v3288, 0
      %v3417 = vsel %vm351, %v3290, 0
      %v3419 = vsel %vm351, %v3292, 0
      %v3421 = vsel %vm351, %v3294, 0
      %v3423 = vsel %vm351, %v3296, 0
      %v3425 = vsel %vm351, %v3298, 0
      %v3427 = vsel %vm351, %v3300, 0
      %v3429 = vsel %vm351, %v3302, 0
      %v3431 = vsel %vm351, %v3304, 0
      %v3433 = vsel %vm351, %v3306, 0
      %v3435 = vsel %vm351, %v3308, 0
      %v3437 = vsel %vm351, %v3310, 0
      %v3439 = vsel %vm351, %v3312, 0
      %v3441 = vsel %vm351, %v3314, 0
      %v3443 = vsel %vm351, %v3316, 0
      %v3445 = vsel %vm351, %v3318, 0
      %v3447 = vsel %vm351, %v3320, 0
      %v3449 = vsel %vm351, %v3322, 0
      %v3451 = vsel %vm351, %v3324, 0
      %v3453 = vsel %vm351, %v3326, 0
      %v3455 = vsel %vm351, %v3328, 0
      %v3457 = vsel %vm351, %v3330, 0
      %v3459 = vsel %vm351, %v3332, 0
      %v3461 = vsel %vm351, %v3334, 0
      %v3463 = vsel %vm351, %v3336, 0
      %v3465 = vsel %vm351, %v3338, 0
      %v3467 = vsel %vm351, %v3340, 0
      %v3469 = vsel %vm351, %v3342, 0
      %v3471 = vsel %vm351, %v3344, 0
      %v3473 = vsel %vm351, %v3346, 0
      %v3475 = vsel %vm351, %v3348, 0
      %v3477 = vsel %vm351, %v3350, 0
      %v3479 = vsel %vm351, %v3352, 0
      %v3481 = vsel %vm351, %v3354, 0
      %v3483 = vsel %vm351, %v3356, 0
      %v3485 = vsel %vm351, %v3358, 0
      %v3487 = vsel %vm351, %v3360, 0
      %v3489 = vsel %vm351, %v3362, 0
      %v3491 = vsel %vm351, %v3364, 0
      %v3493 = vsel %vm351, %v3366, 0
      %v3495 = vsel %vm351, %v3368, 0
      %v3497 = vsel %vm351, %v3370, 0
      %v3499 = vsel %vm351, %v3372, 0
      %v3501 = vsel %vm351, %v3374, 0
      %v3503 = vsel %vm351, %v3376, 0
      %v3505 = vsel %vm351, %v3378, 0
      %v3507 = vsel %vm351, %v3380, 0
      %v3509 = vsel %vm351, %v3382, 0
      %v3511 = vsel %vm351, %v3384, 0
      %v3513 = vsel %vm351, %v3386, 0
      %v3515 = vsel %vm351, %v3388, 0
      %v3517 = vsel %vm351, %v3390, 0
      %v3519 = vsel %vm351, %v3392, 0
      %v3521 = vsel %vm351, %v3394, 0
      %v3523 = vsel %vm351, %v3396, 0
      %v3525 = vsel %vm351, %v3398, 0
      %v3527 = vsel %vm351, %v3400, 0
      %v3529 = vsel %vm351, %v3402, 0
      %3531 = vmatprep.subr.mxu0 0.0
      %3532 = vmatpush1.xpose.msra.mxu0 %v3467
      %3533 = vmatprep.subr.mxu0 0.0
      %3534 = vmatpush1.xpose.msra.mxu0 %v3469
      %3535 = vmatprep.subr.mxu0 0.0
      %3536 = vmatpush1.xpose.msra.mxu0 %v3471
      %3537 = vmatprep.subr.mxu0 0.0
      %3538 = vmatpush1.xpose.msra.mxu0 %v3473
      %3539 = vmatprep.subr.mxu0 0.0
      %3540 = vmatpush1.xpose.msra.mxu0 %v3475
      %3541 = vmatprep.subr.mxu0 0.0
      %3542 = vmatpush1.xpose.msra.mxu0 %v3477
      %3543 = vmatprep.subr.mxu0 0.0
      %3544 = vmatpush1.xpose.msra.mxu0 %v3479
      %3545 = vmatprep.subr.mxu0 0.0
      %3546 = vmatpush1.xpose.msra.mxu0 %v3481
      %3547 = vmatprep.subr.mxu0 0.0
      %3548 = vmatpush1.xpose.msra.mxu0 %v3483
      %3549 = vmatprep.subr.mxu0 0.0
      %3550 = vmatpush1.xpose.msra.mxu0 %v3485
      %3551 = vmatprep.subr.mxu0 0.0
      %3552 = vmatpush1.xpose.msra.mxu0 %v3487
      %3553 = vmatprep.subr.mxu0 0.0
      %3554 = vmatpush1.xpose.msra.mxu0 %v3489
      %3555 = vmatprep.subr.mxu0 0.0
      %3556 = vmatpush1.xpose.msra.mxu0 %v3491
      %3557 = vmatprep.subr.mxu0 0.0
      %3558 = vmatpush1.xpose.msra.mxu0 %v3493
      %3559 = vmatprep.subr.mxu0 0.0
      %3560 = vmatpush1.xpose.msra.mxu0 %v3495
      %3561 = vmatprep.subr.mxu0 0.0
      %3562 = vmatpush1.xpose.msra.mxu0 %v3497
      %3563 = vmatprep.subr.mxu0 0.0
      %3564 = vmatpush1.xpose.msra.mxu0 %v3499
      %3565 = vmatprep.subr.mxu0 0.0
      %3566 = vmatpush1.xpose.msra.mxu0 %v3501
      %3567 = vmatprep.subr.mxu0 0.0
      %3568 = vmatpush1.xpose.msra.mxu0 %v3503
      %3569 = vmatprep.subr.mxu0 0.0
      %3570 = vmatpush1.xpose.msra.mxu0 %v3505
      %3571 = vmatprep.subr.mxu0 0.0
      %3572 = vmatpush1.xpose.msra.mxu0 %v3507
      %3573 = vmatprep.subr.mxu0 0.0
      %3574 = vmatpush1.xpose.msra.mxu0 %v3509
      %3575 = vmatprep.subr.mxu0 0.0
      %3576 = vmatpush1.xpose.msra.mxu0 %v3511
      %3577 = vmatprep.subr.mxu0 0.0
      %3578 = vmatpush1.xpose.msra.mxu0 %v3513
      %3579 = vmatprep.subr.mxu0 0.0
      %3580 = vmatpush1.xpose.msra.mxu0 %v3515
      %3581 = vmatprep.subr.mxu0 0.0
      %3582 = vmatpush1.xpose.msra.mxu0 %v3517
      %3583 = vmatprep.subr.mxu0 0.0
      %3584 = vmatpush1.xpose.msra.mxu0 %v3519
      %3585 = vmatprep.subr.mxu0 0.0
      %3586 = vmatpush1.xpose.msra.mxu0 %v3521
      %3587 = vmatprep.subr.mxu0 0.0
      %3588 = vmatpush1.xpose.msra.mxu0 %v3523
      %3589 = vmatprep.subr.mxu0 0.0
      %3590 = vmatpush1.xpose.msra.mxu0 %v3525
      %3591 = vmatprep.subr.mxu0 0.0
      %3592 = vmatpush1.xpose.msra.mxu0 %v3527
      %3593 = vmatprep.subr.mxu0 0.0
      %3594 = vmatpush1.xpose.msra.mxu0 %v3529
      %3595 = vmatprep.mubr.f32.mxu0 0.0
      %3596 = vmatmul.mubr.f32.gmra.mrb[0].mxu0 %v3403
      %v3597 = vpop.f32.mrb[0].mxu0
      %v3598 = vadd.f32 0.0, %v3597
      %v3599 = vpop.f32.mrb[0].mxu0
      %v3600 = vadd.f32 0.0, %v3599
      %3601 = vmatprep.mubr.f32.mxu0 0.0
      %3602 = vmatmul.mubr.f32.gmra.mrb[0].mxu0 %v3405
      %v3603 = vpop.f32.mrb[0].mxu0
      %v3604 = vadd.f32 0.0, %v3603
      %v3605 = vpop.f32.mrb[0].mxu0
      %v3606 = vadd.f32 0.0, %v3605
      %3607 = vmatprep.mubr.f32.mxu0 0.0
      %3608 = vmatmul.mubr.f32.gmra.mrb[0].mxu0 %v3407
      %v3609 = vpop.f32.mrb[0].mxu0
      %v3610 = vadd.f32 0.0, %v3609
      %v3611 = vpop.f32.mrb[0].mxu0
      %v3612 = vadd.f32 0.0, %v3611
      %3613 = vmatprep.mubr.f32.mxu0 0.0
      %3614 = vmatmul.mubr.f32.gmra.mrb[0].mxu0 %v3409
      %v3615 = vpop.f32.mrb[0].mxu0
      %v3616 = vadd.f32 0.0, %v3615
      %v3617 = vpop.f32.mrb[0].mxu0
      %v3618 = vadd.f32 0.0, %v3617
      %3619 = vmatprep.mubr.f32.mxu0 0.0
      %3620 = vmatmul.mubr.f32.gmra.mrb[0].mxu0 %v3411
      %v3621 = vpop.f32.mrb[0].mxu0
      %v3622 = vadd.f32 0.0, %v3621
      %v3623 = vpop.f32.mrb[0].mxu0
      %v3624 = vadd.f32 0.0, %v3623
      %3625 = vmatprep.mubr.f32.mxu0 0.0
      %3626 = vmatmul.mubr.f32.gmra.mrb[0].mxu0 %v3413
      %v3627 = vpop.f32.mrb[0].mxu0
      %v3628 = vadd.f32 0.0, %v3627
      %v3629 = vpop.f32.mrb[0].mxu0
      %v3630 = vadd.f32 0.0, %v3629
      %3631 = vmatprep.mubr.f32.mxu0 0.0
      %3632 = vmatmul.mubr.f32.gmra.mrb[0].mxu0 %v3415
      %v3633 = vpop.f32.mrb[0].mxu0
      %v3634 = vadd.f32 0.0, %v3633
      %v3635 = vpop.f32.mrb[0].mxu0
      %v3636 = vadd.f32 0.0, %v3635
      %3637 = vmatprep.mubr.f32.mxu0 0.0
      %3638 = vmatmul.mubr.f32.gmra.mrb[0].mxu0 %v3417
      %v3639 = vpop.f32.mrb[0].mxu0
      %v3640 = vadd.f32 0.0, %v3639
      %v3641 = vpop.f32.mrb[0].mxu0
      %v3642 = vadd.f32 0.0, %v3641
      %3643 = vmatprep.mubr.f32.mxu0 0.0
      %3644 = vmatmul.mubr.f32.gmra.mrb[0].mxu0 %v3419
      %v3645 = vpop.f32.mrb[0].mxu0
      %v3646 = vadd.f32 0.0, %v3645
      %v3647 = vpop.f32.mrb[0].mxu0
      %v3648 = vadd.f32 0.0, %v3647
      %3649 = vmatprep.mubr.f32.mxu0 0.0
      %3650 = vmatmul.mubr.f32.gmra.mrb[0].mxu0 %v3421
      %v3651 = vpop.f32.mrb[0].mxu0
      %v3652 = vadd.f32 0.0, %v3651
      %v3653 = vpop.f32.mrb[0].mxu0
      %v3654 = vadd.f32 0.0, %v3653
      %3655 = vmatprep.mubr.f32.mxu0 0.0
      %3656 = vmatmul.mubr.f32.gmra.mrb[0].mxu0 %v3423
      %v3657 = vpop.f32.mrb[0].mxu0
      %v3658 = vadd.f32 0.0, %v3657
      %v3659 = vpop.f32.mrb[0].mxu0
      %v3660 = vadd.f32 0.0, %v3659
      %3661 = vmatprep.mubr.f32.mxu0 0.0
      %3662 = vmatmul.mubr.f32.gmra.mrb[0].mxu0 %v3425
      %v3663 = vpop.f32.mrb[0].mxu0
      %v3664 = vadd.f32 0.0, %v3663
      %v3665 = vpop.f32.mrb[0].mxu0
      %v3666 = vadd.f32 0.0, %v3665
      %3667 = vmatprep.mubr.f32.mxu0 0.0
      %3668 = vmatmul.mubr.f32.gmra.mrb[0].mxu0 %v3427
      %v3669 = vpop.f32.mrb[0].mxu0
      %v3670 = vadd.f32 0.0, %v3669
      %v3671 = vpop.f32.mrb[0].mxu0
      %v3672 = vadd.f32 0.0, %v3671
      %3673 = vmatprep.mubr.f32.mxu0 0.0
      %3674 = vmatmul.mubr.f32.gmra.mrb[0].mxu0 %v3429
      %v3675 = vpop.f32.mrb[0].mxu0
      %v3676 = vadd.f32 0.0, %v3675
      %v3677 = vpop.f32.mrb[0].mxu0
      %v3678 = vadd.f32 0.0, %v3677
      %3679 = vmatprep.mubr.f32.mxu0 0.0
      %3680 = vmatmul.mubr.f32.gmra.mrb[0].mxu0 %v3431
      %v3681 = vpop.f32.mrb[0].mxu0
      %v3682 = vadd.f32 0.0, %v3681
      %v3683 = vpop.f32.mrb[0].mxu0
      %v3684 = vadd.f32 0.0, %v3683
      %3685 = vmatprep.mubr.f32.mxu0 0.0
      %3686 = vmatmul.mubr.f32.gmra.mrb[0].mxu0 %v3433
      %v3687 = vpop.f32.mrb[0].mxu0
      %v3688 = vadd.f32 0.0, %v3687
      %v3689 = vpop.f32.mrb[0].mxu0
      %v3690 = vadd.f32 0.0, %v3689
      %3691 = vmatprep.mubr.f32.mxu0 0.0
      %3692 = vmatmul.mubr.f32.gmra.mrb[0].mxu0 %v3435
      %v3693 = vpop.f32.mrb[0].mxu0
      %v3694 = vadd.f32 0.0, %v3693
      %v3695 = vpop.f32.mrb[0].mxu0
      %v3696 = vadd.f32 0.0, %v3695
      %3697 = vmatprep.mubr.f32.mxu0 0.0
      %3698 = vmatmul.mubr.f32.gmra.mrb[0].mxu0 %v3437
      %v3699 = vpop.f32.mrb[0].mxu0
      %v3700 = vadd.f32 0.0, %v3699
      %v3701 = vpop.f32.mrb[0].mxu0
      %v3702 = vadd.f32 0.0, %v3701
      %3703 = vmatprep.mubr.f32.mxu0 0.0
      %3704 = vmatmul.mubr.f32.gmra.mrb[0].mxu0 %v3439
      %v3705 = vpop.f32.mrb[0].mxu0
      %v3706 = vadd.f32 0.0, %v3705
      %v3707 = vpop.f32.mrb[0].mxu0
      %v3708 = vadd.f32 0.0, %v3707
      %3709 = vmatprep.mubr.f32.mxu0 0.0
      %3710 = vmatmul.mubr.f32.gmra.mrb[0].mxu0 %v3441
      %v3711 = vpop.f32.mrb[0].mxu0
      %v3712 = vadd.f32 0.0, %v3711
      %v3713 = vpop.f32.mrb[0].mxu0
      %v3714 = vadd.f32 0.0, %v3713
      %3715 = vmatprep.mubr.f32.mxu0 0.0
      %3716 = vmatmul.mubr.f32.gmra.mrb[0].mxu0 %v3443
      %v3717 = vpop.f32.mrb[0].mxu0
      %v3718 = vadd.f32 0.0, %v3717
      %v3719 = vpop.f32.mrb[0].mxu0
      %v3720 = vadd.f32 0.0, %v3719
      %3721 = vmatprep.mubr.f32.mxu0 0.0
      %3722 = vmatmul.mubr.f32.gmra.mrb[0].mxu0 %v3445
      %v3723 = vpop.f32.mrb[0].mxu0
      %v3724 = vadd.f32 0.0, %v3723
      %v3725 = vpop.f32.mrb[0].mxu0
      %v3726 = vadd.f32 0.0, %v3725
      %3727 = vmatprep.mubr.f32.mxu0 0.0
      %3728 = vmatmul.mubr.f32.gmra.mrb[0].mxu0 %v3447
      %v3729 = vpop.f32.mrb[0].mxu0
      %v3730 = vadd.f32 0.0, %v3729
      %v3731 = vpop.f32.mrb[0].mxu0
      %v3732 = vadd.f32 0.0, %v3731
      %3733 = vmatprep.mubr.f32.mxu0 0.0
      %3734 = vmatmul.mubr.f32.gmra.mrb[0].mxu0 %v3449
      %v3735 = vpop.f32.mrb[0].mxu0
      %v3736 = vadd.f32 0.0, %v3735
      %v3737 = vpop.f32.mrb[0].mxu0
      %v3738 = vadd.f32 0.0, %v3737
      %3739 = vmatprep.mubr.f32.mxu0 0.0
      %3740 = vmatmul.mubr.f32.gmra.mrb[0].mxu0 %v3451
      %v3741 = vpop.f32.mrb[0].mxu0
      %v3742 = vadd.f32 0.0, %v3741
      %v3743 = vpop.f32.mrb[0].mxu0
      %v3744 = vadd.f32 0.0, %v3743
      %3745 = vmatprep.mubr.f32.mxu0 0.0
      %3746 = vmatmul.mubr.f32.gmra.mrb[0].mxu0 %v3453
      %v3747 = vpop.f32.mrb[0].mxu0
      %v3748 = vadd.f32 0.0, %v3747
      %v3749 = vpop.f32.mrb[0].mxu0
      %v3750 = vadd.f32 0.0, %v3749
      %3751 = vmatprep.mubr.f32.mxu0 0.0
      %3752 = vmatmul.mubr.f32.gmra.mrb[0].mxu0 %v3455
      %v3753 = vpop.f32.mrb[0].mxu0
      %v3754 = vadd.f32 0.0, %v3753
      %v3755 = vpop.f32.mrb[0].mxu0
      %v3756 = vadd.f32 0.0, %v3755
      %3757 = vmatprep.mubr.f32.mxu0 0.0
      %3758 = vmatmul.mubr.f32.gmra.mrb[0].mxu0 %v3457
      %v3759 = vpop.f32.mrb[0].mxu0
      %v3760 = vadd.f32 0.0, %v3759
      %v3761 = vpop.f32.mrb[0].mxu0
      %v3762 = vadd.f32 0.0, %v3761
      %3763 = vmatprep.mubr.f32.mxu0 0.0
      %3764 = vmatmul.mubr.f32.gmra.mrb[0].mxu0 %v3459
      %v3765 = vpop.f32.mrb[0].mxu0
      %v3766 = vadd.f32 0.0, %v3765
      %v3767 = vpop.f32.mrb[0].mxu0
      %v3768 = vadd.f32 0.0, %v3767
      %3769 = vmatprep.mubr.f32.mxu0 0.0
      %3770 = vmatmul.mubr.f32.gmra.mrb[0].mxu0 %v3461
      %v3771 = vpop.f32.mrb[0].mxu0
      %v3772 = vadd.f32 0.0, %v3771
      %v3773 = vpop.f32.mrb[0].mxu0
      %v3774 = vadd.f32 0.0, %v3773
      %3775 = vmatprep.mubr.f32.mxu0 0.0
      %3776 = vmatmul.mubr.f32.gmra.mrb[0].mxu0 %v3463
      %v3777 = vpop.f32.mrb[0].mxu0
      %v3778 = vadd.f32 0.0, %v3777
      %v3779 = vpop.f32.mrb[0].mxu0
      %v3780 = vadd.f32 0.0, %v3779
      %3781 = vmatprep.mubr.f32.mxu0 0.0
      %3782 = vmatmul.mubr.f32.gmra.mrb[0].mxu0 %v3465
      %v3783 = vpop.f32.mrb[0].mxu0
      %v3784 = vadd.f32 0.0, %v3783
      %v3785 = vpop.f32.mrb[0].mxu0
      %v3786 = vadd.f32 0.0, %v3785
      %3787 = vdwg.mxu0
      %v3788 = vmax.f32 %v3598, %v3600
      %3789 = vmax.xlane.f32.xlu0 %v3788
      %v3790 = vpop.xlane.xlu0 %3789
      %v3791 = vmax.f32 %v3604, %v3606
      %3792 = vmax.xlane.f32.xlu0 %v3791
      %v3793 = vpop.xlane.xlu0 %3792
      %v3794 = vmax.f32 %v3610, %v3612
      %3795 = vmax.xlane.f32.xlu0 %v3794
      %v3796 = vpop.xlane.xlu0 %3795
      %v3797 = vmax.f32 %v3616, %v3618
      %3798 = vmax.xlane.f32.xlu0 %v3797
      %v3799 = vpop.xlane.xlu0 %3798
      %v3800 = vmax.f32 %v3622, %v3624
      %3801 = vmax.xlane.f32.xlu0 %v3800
      %v3802 = vpop.xlane.xlu0 %3801
      %v3803 = vmax.f32 %v3628, %v3630
      %3804 = vmax.xlane.f32.xlu0 %v3803
      %v3805 = vpop.xlane.xlu0 %3804
      %v3806 = vmax.f32 %v3634, %v3636
      %3807 = vmax.xlane.f32.xlu0 %v3806
      %v3808 = vpop.xlane.xlu0 %3807
      %v3809 = vmax.f32 %v3640, %v3642
      %3810 = vmax.xlane.f32.xlu0 %v3809
      %v3811 = vpop.xlane.xlu0 %3810
      %v3812 = vmax.f32 %v3646, %v3648
      %3813 = vmax.xlane.f32.xlu0 %v3812
      %v3814 = vpop.xlane.xlu0 %3813
      %v3815 = vmax.f32 %v3652, %v3654
      %3816 = vmax.xlane.f32.xlu0 %v3815
      %v3817 = vpop.xlane.xlu0 %3816
      %v3818 = vmax.f32 %v3658, %v3660
      %3819 = vmax.xlane.f32.xlu0 %v3818
      %v3820 = vpop.xlane.xlu0 %3819
      %v3821 = vmax.f32 %v3664, %v3666
      %3822 = vmax.xlane.f32.xlu0 %v3821
      %v3823 = vpop.xlane.xlu0 %3822
      %v3824 = vmax.f32 %v3670, %v3672
      %3825 = vmax.xlane.f32.xlu0 %v3824
      %v3826 = vpop.xlane.xlu0 %3825
      %v3827 = vmax.f32 %v3676, %v3678
      %3828 = vmax.xlane.f32.xlu0 %v3827
      %v3829 = vpop.xlane.xlu0 %3828
      %v3830 = vmax.f32 %v3682, %v3684
      %3831 = vmax.xlane.f32.xlu0 %v3830
      %v3832 = vpop.xlane.xlu0 %3831
      %v3833 = vmax.f32 %v3688, %v3690
      %3834 = vmax.xlane.f32.xlu0 %v3833
      %v3835 = vpop.xlane.xlu0 %3834
      %v3836 = vmax.f32 %v3694, %v3696
      %3837 = vmax.xlane.f32.xlu0 %v3836
      %v3838 = vpop.xlane.xlu0 %3837
      %v3839 = vmax.f32 %v3700, %v3702
      %3840 = vmax.xlane.f32.xlu0 %v3839
      %v3841 = vpop.xlane.xlu0 %3840
      %v3842 = vmax.f32 %v3706, %v3708
      %3843 = vmax.xlane.f32.xlu0 %v3842
      %v3844 = vpop.xlane.xlu0 %3843
      %v3845 = vmax.f32 %v3712, %v3714
      %3846 = vmax.xlane.f32.xlu0 %v3845
      %v3847 = vpop.xlane.xlu0 %3846
      %v3848 = vmax.f32 %v3718, %v3720
      %3849 = vmax.xlane.f32.xlu0 %v3848
      %v3850 = vpop.xlane.xlu0 %3849
      %v3851 = vmax.f32 %v3724, %v3726
      %3852 = vmax.xlane.f32.xlu0 %v3851
      %v3853 = vpop.xlane.xlu0 %3852
      %v3854 = vmax.f32 %v3730, %v3732
      %3855 = vmax.xlane.f32.xlu0 %v3854
      %v3856 = vpop.xlane.xlu0 %3855
      %v3857 = vmax.f32 %v3736, %v3738
      %3858 = vmax.xlane.f32.xlu0 %v3857
      %v3859 = vpop.xlane.xlu0 %3858
      %v3860 = vmax.f32 %v3742, %v3744
      %3861 = vmax.xlane.f32.xlu0 %v3860
      %v3862 = vpop.xlane.xlu0 %3861
      %v3863 = vmax.f32 %v3748, %v3750
      %3864 = vmax.xlane.f32.xlu0 %v3863
      %v3865 = vpop.xlane.xlu0 %3864
      %v3866 = vmax.f32 %v3754, %v3756
      %3867 = vmax.xlane.f32.xlu0 %v3866
      %v3868 = vpop.xlane.xlu0 %3867
      %v3869 = vmax.f32 %v3760, %v3762
      %3870 = vmax.xlane.f32.xlu0 %v3869
      %v3871 = vpop.xlane.xlu0 %3870
      %v3872 = vmax.f32 %v3766, %v3768
      %3873 = vmax.xlane.f32.xlu0 %v3872
      %v3874 = vpop.xlane.xlu0 %3873
      %v3875 = vmax.f32 %v3772, %v3774
      %3876 = vmax.xlane.f32.xlu0 %v3875
      %v3877 = vpop.xlane.xlu0 %3876
      %v3878 = vmax.f32 %v3778, %v3780
      %3879 = vmax.xlane.f32.xlu0 %v3878
      %v3880 = vpop.xlane.xlu0 %3879
      %v3881 = vmax.f32 %v3784, %v3786
      %3882 = vmax.xlane.f32.xlu0 %v3881
      %v3883 = vpop.xlane.xlu0 %3882
      %v3884 = vsub.f32 %v3598, %v3790
      %v3885 = vsub.f32 %v3600, %v3790
      %v3886 = vsub.f32 %v3604, %v3793
      %v3887 = vsub.f32 %v3606, %v3793
      %v3888 = vsub.f32 %v3610, %v3796
      %v3889 = vsub.f32 %v3612, %v3796
      %v3890 = vsub.f32 %v3616, %v3799
      %v3891 = vsub.f32 %v3618, %v3799
      %v3892 = vsub.f32 %v3622, %v3802
      %v3893 = vsub.f32 %v3624, %v3802
      %v3894 = vsub.f32 %v3628, %v3805
      %v3895 = vsub.f32 %v3630, %v3805
      %v3896 = vsub.f32 %v3634, %v3808
      %v3897 = vsub.f32 %v3636, %v3808
      %v3898 = vsub.f32 %v3640, %v3811
      %v3899 = vsub.f32 %v3642, %v3811
      %v3900 = vsub.f32 %v3646, %v3814
      %v3901 = vsub.f32 %v3648, %v3814
      %v3902 = vsub.f32 %v3652, %v3817
      %v3903 = vsub.f32 %v3654, %v3817
      %v3904 = vsub.f32 %v3658, %v3820
      %v3905 = vsub.f32 %v3660, %v3820
      %v3906 = vsub.f32 %v3664, %v3823
      %v3907 = vsub.f32 %v3666, %v3823
      %v3908 = vsub.f32 %v3670, %v3826
      %v3909 = vsub.f32 %v3672, %v3826
      %v3910 = vsub.f32 %v3676, %v3829
      %v3911 = vsub.f32 %v3678, %v3829
      %v3912 = vsub.f32 %v3682, %v3832
      %v3913 = vsub.f32 %v3684, %v3832
      %v3914 = vsub.f32 %v3688, %v3835
      %v3915 = vsub.f32 %v3690, %v3835
      %v3916 = vsub.f32 %v3694, %v3838
      %v3917 = vsub.f32 %v3696, %v3838
      %v3918 = vsub.f32 %v3700, %v3841
      %v3919 = vsub.f32 %v3702, %v3841
      %v3920 = vsub.f32 %v3706, %v3844
      %v3921 = vsub.f32 %v3708, %v3844
      %v3922 = vsub.f32 %v3712, %v3847
      %v3923 = vsub.f32 %v3714, %v3847
      %v3924 = vsub.f32 %v3718, %v3850
      %v3925 = vsub.f32 %v3720, %v3850
      %v3926 = vsub.f32 %v3724, %v3853
      %v3927 = vsub.f32 %v3726, %v3853
      %v3928 = vsub.f32 %v3730, %v3856
      %v3929 = vsub.f32 %v3732, %v3856
      %v3930 = vsub.f32 %v3736, %v3859
      %v3931 = vsub.f32 %v3738, %v3859
      %v3932 = vsub.f32 %v3742, %v3862
      %v3933 = vsub.f32 %v3744, %v3862
      %v3934 = vsub.f32 %v3748, %v3865
      %v3935 = vsub.f32 %v3750, %v3865
      %v3936 = vsub.f32 %v3754, %v3868
      %v3937 = vsub.f32 %v3756, %v3868
      %v3938 = vsub.f32 %v3760, %v3871
      %v3939 = vsub.f32 %v3762, %v3871
      %v3940 = vsub.f32 %v3766, %v3874
      %v3941 = vsub.f32 %v3768, %v3874
      %v3942 = vsub.f32 %v3772, %v3877
      %v3943 = vsub.f32 %v3774, %v3877
      %v3944 = vsub.f32 %v3778, %v3880
      %v3945 = vsub.f32 %v3780, %v3880
      %v3946 = vsub.f32 %v3784, %v3883
      %v3947 = vsub.f32 %v3786, %v3883
      %v3948 = vmul.f32 %v3884, 1.442695
      %v3949 = vpow.pop %v3948
      %v3950 = vmul.f32 %v3885, 1.442695
      %v3951 = vpow.pop %v3950
      %v3952 = vmul.f32 %v3886, 1.442695
      %v3953 = vpow.pop %v3952
      %v3954 = vmul.f32 %v3887, 1.442695
      %v3955 = vpow.pop %v3954
      %v3956 = vmul.f32 %v3888, 1.442695
      %v3957 = vpow.pop %v3956
      %v3958 = vmul.f32 %v3889, 1.442695
      %v3959 = vpow.pop %v3958
      %v3960 = vmul.f32 %v3890, 1.442695
      %v3961 = vpow.pop %v3960
      %v3962 = vmul.f32 %v3891, 1.442695
      %v3963 = vpow.pop %v3962
      %v3964 = vmul.f32 %v3892, 1.442695
      %v3965 = vpow.pop %v3964
      %v3966 = vmul.f32 %v3893, 1.442695
      %v3967 = vpow.pop %v3966
      %v3968 = vmul.f32 %v3894, 1.442695
      %v3969 = vpow.pop %v3968
      %v3970 = vmul.f32 %v3895, 1.442695
      %v3971 = vpow.pop %v3970
      %v3972 = vmul.f32 %v3896, 1.442695
      %v3973 = vpow.pop %v3972
      %v3974 = vmul.f32 %v3897, 1.442695
      %v3975 = vpow.pop %v3974
      %v3976 = vmul.f32 %v3898, 1.442695
      %v3977 = vpow.pop %v3976
      %v3978 = vmul.f32 %v3899, 1.442695
      %v3979 = vpow.pop %v3978
      %v3980 = vmul.f32 %v3900, 1.442695
      %v3981 = vpow.pop %v3980
      %v3982 = vmul.f32 %v3901, 1.442695
      %v3983 = vpow.pop %v3982
      %v3984 = vmul.f32 %v3902, 1.442695
      %v3985 = vpow.pop %v3984
      %v3986 = vmul.f32 %v3903, 1.442695
      %v3987 = vpow.pop %v3986
      %v3988 = vmul.f32 %v3904, 1.442695
      %v3989 = vpow.pop %v3988
      %v3990 = vmul.f32 %v3905, 1.442695
      %v3991 = vpow.pop %v3990
      %v3992 = vmul.f32 %v3906, 1.442695
      %v3993 = vpow.pop %v3992
      %v3994 = vmul.f32 %v3907, 1.442695
      %v3995 = vpow.pop %v3994
      %v3996 = vmul.f32 %v3908, 1.442695
      %v3997 = vpow.pop %v3996
      %v3998 = vmul.f32 %v3909, 1.442695
      %v3999 = vpow.pop %v3998
      %v4000 = vmul.f32 %v3910, 1.442695
      %v4001 = vpow.pop %v4000
      %v4002 = vmul.f32 %v3911, 1.442695
      %v4003 = vpow.pop %v4002
      %v4004 = vmul.f32 %v3912, 1.442695
      %v4005 = vpow.pop %v4004
      %v4006 = vmul.f32 %v3913, 1.442695
      %v4007 = vpow.pop %v4006
      %v4008 = vmul.f32 %v3914, 1.442695
      %v4009 = vpow.pop %v4008
      %v4010 = vmul.f32 %v3915, 1.442695
      %v4011 = vpow.pop %v4010
      %v4012 = vmul.f32 %v3916, 1.442695
      %v4013 = vpow.pop %v4012
      %v4014 = vmul.f32 %v3917, 1.442695
      %v4015 = vpow.pop %v4014
      %v4016 = vmul.f32 %v3918, 1.442695
      %v4017 = vpow.pop %v4016
      %v4018 = vmul.f32 %v3919, 1.442695
      %v4019 = vpow.pop %v4018
      %v4020 = vmul.f32 %v3920, 1.442695
      %v4021 = vpow.pop %v4020
      %v4022 = vmul.f32 %v3921, 1.442695
      %v4023 = vpow.pop %v4022
      %v4024 = vmul.f32 %v3922, 1.442695
      %v4025 = vpow.pop %v4024
      %v4026 = vmul.f32 %v3923, 1.442695
      %v4027 = vpow.pop %v4026
      %v4028 = vmul.f32 %v3924, 1.442695
      %v4029 = vpow.pop %v4028
      %v4030 = vmul.f32 %v3925, 1.442695
      %v4031 = vpow.pop %v4030
      %v4032 = vmul.f32 %v3926, 1.442695
      %v4033 = vpow.pop %v4032
      %v4034 = vmul.f32 %v3927, 1.442695
      %v4035 = vpow.pop %v4034
      %v4036 = vmul.f32 %v3928, 1.442695
      %v4037 = vpow.pop %v4036
      %v4038 = vmul.f32 %v3929, 1.442695
      %v4039 = vpow.pop %v4038
      %v4040 = vmul.f32 %v3930, 1.442695
      %v4041 = vpow.pop %v4040
      %v4042 = vmul.f32 %v3931, 1.442695
      %v4043 = vpow.pop %v4042
      %v4044 = vmul.f32 %v3932, 1.442695
      %v4045 = vpow.pop %v4044
      %v4046 = vmul.f32 %v3933, 1.442695
      %v4047 = vpow.pop %v4046
      %v4048 = vmul.f32 %v3934, 1.442695
      %v4049 = vpow.pop %v4048
      %v4050 = vmul.f32 %v3935, 1.442695
      %v4051 = vpow.pop %v4050
      %v4052 = vmul.f32 %v3936, 1.442695
      %v4053 = vpow.pop %v4052
      %v4054 = vmul.f32 %v3937, 1.442695
      %v4055 = vpow.pop %v4054
      %v4056 = vmul.f32 %v3938, 1.442695
      %v4057 = vpow.pop %v4056
      %v4058 = vmul.f32 %v3939, 1.442695
      %v4059 = vpow.pop %v4058
      %v4060 = vmul.f32 %v3940, 1.442695
      %v4061 = vpow.pop %v4060
      %v4062 = vmul.f32 %v3941, 1.442695
      %v4063 = vpow.pop %v4062
      %v4064 = vmul.f32 %v3942, 1.442695
      %v4065 = vpow.pop %v4064
      %v4066 = vmul.f32 %v3943, 1.442695
      %v4067 = vpow.pop %v4066
      %v4068 = vmul.f32 %v3944, 1.442695
      %v4069 = vpow.pop %v4068
      %v4070 = vmul.f32 %v3945, 1.442695
      %v4071 = vpow.pop %v4070
      %v4072 = vmul.f32 %v3946, 1.442695
      %v4073 = vpow.pop %v4072
      %v4074 = vmul.f32 %v3947, 1.442695
      %v4075 = vpow.pop %v4074
      %v4076 = vadd.f32 %v3949, %v3951
      %4077 = vadd.xlane.f32.xlu0 %v4076
      %v4078 = vpop.xlane.xlu0 %4077
      %v4079 = vadd.f32 %v3953, %v3955
      %4080 = vadd.xlane.f32.xlu0 %v4079
      %v4081 = vpop.xlane.xlu0 %4080
      %v4082 = vadd.f32 %v3957, %v3959
      %4083 = vadd.xlane.f32.xlu0 %v4082
      %v4084 = vpop.xlane.xlu0 %4083
      %v4085 = vadd.f32 %v3961, %v3963
      %4086 = vadd.xlane.f32.xlu0 %v4085
      %v4087 = vpop.xlane.xlu0 %4086
      %v4088 = vadd.f32 %v3965, %v3967
      %4089 = vadd.xlane.f32.xlu0 %v4088
      %v4090 = vpop.xlane.xlu0 %4089
      %v4091 = vadd.f32 %v3969, %v3971
      %4092 = vadd.xlane.f32.xlu0 %v4091
      %v4093 = vpop.xlane.xlu0 %4092
      %v4094 = vadd.f32 %v3973, %v3975
      %4095 = vadd.xlane.f32.xlu0 %v4094
      %v4096 = vpop.xlane.xlu0 %4095
      %v4097 = vadd.f32 %v3977, %v3979
      %4098 = vadd.xlane.f32.xlu0 %v4097
      %v4099 = vpop.xlane.xlu0 %4098
      %v4100 = vadd.f32 %v3981, %v3983
      %4101 = vadd.xlane.f32.xlu0 %v4100
      %v4102 = vpop.xlane.xlu0 %4101
      %v4103 = vadd.f32 %v3985, %v3987
      %4104 = vadd.xlane.f32.xlu0 %v4103
      %v4105 = vpop.xlane.xlu0 %4104
      %v4106 = vadd.f32 %v3989, %v3991
      %4107 = vadd.xlane.f32.xlu0 %v4106
      %v4108 = vpop.xlane.xlu0 %4107
      %v4109 = vadd.f32 %v3993, %v3995
      %4110 = vadd.xlane.f32.xlu0 %v4109
      %v4111 = vpop.xlane.xlu0 %4110
      %v4112 = vadd.f32 %v3997, %v3999
      %4113 = vadd.xlane.f32.xlu0 %v4112
      %v4114 = vpop.xlane.xlu0 %4113
      %v4115 = vadd.f32 %v4001, %v4003
      %4116 = vadd.xlane.f32.xlu0 %v4115
      %v4117 = vpop.xlane.xlu0 %4116
      %v4118 = vadd.f32 %v4005, %v4007
      %4119 = vadd.xlane.f32.xlu0 %v4118
      %v4120 = vpop.xlane.xlu0 %4119
      %v4121 = vadd.f32 %v4009, %v4011
      %4122 = vadd.xlane.f32.xlu0 %v4121
      %v4123 = vpop.xlane.xlu0 %4122
      %v4124 = vadd.f32 %v4013, %v4015
      %4125 = vadd.xlane.f32.xlu0 %v4124
      %v4126 = vpop.xlane.xlu0 %4125
      %v4127 = vadd.f32 %v4017, %v4019
      %4128 = vadd.xlane.f32.xlu0 %v4127
      %v4129 = vpop.xlane.xlu0 %4128
      %v4130 = vadd.f32 %v4021, %v4023
      %4131 = vadd.xlane.f32.xlu0 %v4130
      %v4132 = vpop.xlane.xlu0 %4131
      %v4133 = vadd.f32 %v4025, %v4027
      %4134 = vadd.xlane.f32.xlu0 %v4133
      %v4135 = vpop.xlane.xlu0 %4134
      %v4136 = vadd.f32 %v4029, %v4031
      %4137 = vadd.xlane.f32.xlu0 %v4136
      %v4138 = vpop.xlane.xlu0 %4137
      %v4139 = vadd.f32 %v4033, %v4035
      %4140 = vadd.xlane.f32.xlu0 %v4139
      %v4141 = vpop.xlane.xlu0 %4140
      %v4142 = vadd.f32 %v4037, %v4039
      %4143 = vadd.xlane.f32.xlu0 %v4142
      %v4144 = vpop.xlane.xlu0 %4143
      %v4145 = vadd.f32 %v4041, %v4043
      %4146 = vadd.xlane.f32.xlu0 %v4145
      %v4147 = vpop.xlane.xlu0 %4146
      %v4148 = vadd.f32 %v4045, %v4047
      %4149 = vadd.xlane.f32.xlu0 %v4148
      %v4150 = vpop.xlane.xlu0 %4149
      %v4151 = vadd.f32 %v4049, %v4051
      %4152 = vadd.xlane.f32.xlu0 %v4151
      %v4153 = vpop.xlane.xlu0 %4152
      %v4154 = vadd.f32 %v4053, %v4055
      %4155 = vadd.xlane.f32.xlu0 %v4154
      %v4156 = vpop.xlane.xlu0 %4155
      %v4157 = vadd.f32 %v4057, %v4059
      %4158 = vadd.xlane.f32.xlu0 %v4157
      %v4159 = vpop.xlane.xlu0 %4158
      %v4160 = vadd.f32 %v4061, %v4063
      %4161 = vadd.xlane.f32.xlu0 %v4160
      %v4162 = vpop.xlane.xlu0 %4161
      %v4163 = vadd.f32 %v4065, %v4067
      %4164 = vadd.xlane.f32.xlu0 %v4163
      %v4165 = vpop.xlane.xlu0 %4164
      %v4166 = vadd.f32 %v4069, %v4071
      %4167 = vadd.xlane.f32.xlu0 %v4166
      %v4168 = vpop.xlane.xlu0 %4167
      %v4169 = vadd.f32 %v4073, %v4075
      %4170 = vadd.xlane.f32.xlu0 %v4169
      %v4171 = vpop.xlane.xlu0 %4170
      %4172 = vrot.lane.b32.xlu0 %v1595, 48
      %v4173 = vpop.permute.xlu0 %4172
      %4174 = vrot.lane.b32.xlu0 %v1600, 48
      %v4175 = vpop.permute.xlu0 %4174
      %4176 = vrot.lane.b32.xlu0 %v1605, 48
      %v4177 = vpop.permute.xlu0 %4176
      %4178 = vrot.lane.b32.xlu0 %v1610, 48
      %v4179 = vpop.permute.xlu0 %4178
      %4180 = vrot.lane.b32.xlu0 %v1615, 48
      %v4181 = vpop.permute.xlu0 %4180
      %4182 = vrot.lane.b32.xlu0 %v1620, 48
      %v4183 = vpop.permute.xlu0 %4182
      %4184 = vrot.lane.b32.xlu0 %v1625, 48
      %v4185 = vpop.permute.xlu0 %4184
      %4186 = vrot.lane.b32.xlu0 %v1630, 48
      %v4187 = vpop.permute.xlu0 %4186
      %4188 = vrot.lane.b32.xlu0 %v1635, 48
      %v4189 = vpop.permute.xlu0 %4188
      %4190 = vrot.lane.b32.xlu0 %v1640, 48
      %v4191 = vpop.permute.xlu0 %4190
      %4192 = vrot.lane.b32.xlu0 %v1645, 48
      %v4193 = vpop.permute.xlu0 %4192
      %4194 = vrot.lane.b32.xlu0 %v1650, 48
      %v4195 = vpop.permute.xlu0 %4194
      %4196 = vrot.lane.b32.xlu0 %v1655, 48
      %v4197 = vpop.permute.xlu0 %4196
      %4198 = vrot.lane.b32.xlu0 %v1660, 48
      %v4199 = vpop.permute.xlu0 %4198
      %4200 = vrot.lane.b32.xlu0 %v1665, 48
      %v4201 = vpop.permute.xlu0 %4200
      %4202 = vrot.lane.b32.xlu0 %v1670, 48
      %v4203 = vpop.permute.xlu0 %4202
      %4204 = vrot.lane.b32.xlu0 %v1675, 48
      %v4205 = vpop.permute.xlu0 %4204
      %4206 = vrot.lane.b32.xlu0 %v1680, 48
      %v4207 = vpop.permute.xlu0 %4206
      %4208 = vrot.lane.b32.xlu0 %v1685, 48
      %v4209 = vpop.permute.xlu0 %4208
      %4210 = vrot.lane.b32.xlu0 %v1690, 48
      %v4211 = vpop.permute.xlu0 %4210
      %4212 = vrot.lane.b32.xlu0 %v1695, 48
      %v4213 = vpop.permute.xlu0 %4212
      %4214 = vrot.lane.b32.xlu0 %v1700, 48
      %v4215 = vpop.permute.xlu0 %4214
      %4216 = vrot.lane.b32.xlu0 %v1705, 48
      %v4217 = vpop.permute.xlu0 %4216
      %4218 = vrot.lane.b32.xlu0 %v1710, 48
      %v4219 = vpop.permute.xlu0 %4218
      %4220 = vrot.lane.b32.xlu0 %v1715, 48
      %v4221 = vpop.permute.xlu0 %4220
      %4222 = vrot.lane.b32.xlu0 %v1720, 48
      %v4223 = vpop.permute.xlu0 %4222
      %4224 = vrot.lane.b32.xlu0 %v1725, 48
      %v4225 = vpop.permute.xlu0 %4224
      %4226 = vrot.lane.b32.xlu0 %v1730, 48
      %v4227 = vpop.permute.xlu0 %4226
      %4228 = vrot.lane.b32.xlu0 %v1735, 48
      %v4229 = vpop.permute.xlu0 %4228
      %4230 = vrot.lane.b32.xlu0 %v1740, 48
      %v4231 = vpop.permute.xlu0 %4230
      %4232 = vrot.lane.b32.xlu0 %v1745, 48
      %v4233 = vpop.permute.xlu0 %4232
      %4234 = vrot.lane.b32.xlu0 %v1750, 48
      %v4235 = vpop.permute.xlu0 %4234
      %4268 = vmatprep.subr.mxu0 0.0
      %4269 = vmatpush1.msra.mxu0 %v4173
      %4270 = vmatprep.subr.mxu0 0.0
      %4271 = vmatpush1.msra.mxu0 %v4175
      %4272 = vmatprep.subr.mxu0 0.0
      %4273 = vmatpush1.msra.mxu0 %v4177
      %4274 = vmatprep.subr.mxu0 0.0
      %4275 = vmatpush1.msra.mxu0 %v4179
      %4276 = vmatprep.subr.mxu0 0.0
      %4277 = vmatpush1.msra.mxu0 %v4181
      %4278 = vmatprep.subr.mxu0 0.0
      %4279 = vmatpush1.msra.mxu0 %v4183
      %4280 = vmatprep.subr.mxu0 0.0
      %4281 = vmatpush1.msra.mxu0 %v4185
      %4282 = vmatprep.subr.mxu0 0.0
      %4283 = vmatpush1.msra.mxu0 %v4187
      %4284 = vmatprep.subr.mxu0 0.0
      %4285 = vmatpush1.msra.mxu0 %v4189
      %4286 = vmatprep.subr.mxu0 0.0
      %4287 = vmatpush1.msra.mxu0 %v4191
      %4288 = vmatprep.subr.mxu0 0.0
      %4289 = vmatpush1.msra.mxu0 %v4193
      %4290 = vmatprep.subr.mxu0 0.0
      %4291 = vmatpush1.msra.mxu0 %v4195
      %4292 = vmatprep.subr.mxu0 0.0
      %4293 = vmatpush1.msra.mxu0 %v4197
      %4294 = vmatprep.subr.mxu0 0.0
      %4295 = vmatpush1.msra.mxu0 %v4199
      %4296 = vmatprep.subr.mxu0 0.0
      %4297 = vmatpush1.msra.mxu0 %v4201
      %4298 = vmatprep.subr.mxu0 0.0
      %4299 = vmatpush1.msra.mxu0 %v4203
      %4300 = vmatprep.subr.mxu0 0.0
      %4301 = vmatpush1.msra.mxu0 %v4205
      %4302 = vmatprep.subr.mxu0 0.0
      %4303 = vmatpush1.msra.mxu0 %v4207
      %4304 = vmatprep.subr.mxu0 0.0
      %4305 = vmatpush1.msra.mxu0 %v4209
      %4306 = vmatprep.subr.mxu0 0.0
      %4307 = vmatpush1.msra.mxu0 %v4211
      %4308 = vmatprep.subr.mxu0 0.0
      %4309 = vmatpush1.msra.mxu0 %v4213
      %4310 = vmatprep.subr.mxu0 0.0
      %4311 = vmatpush1.msra.mxu0 %v4215
      %4312 = vmatprep.subr.mxu0 0.0
      %4313 = vmatpush1.msra.mxu0 %v4217
      %4314 = vmatprep.subr.mxu0 0.0
      %4315 = vmatpush1.msra.mxu0 %v4219
      %4316 = vmatprep.subr.mxu0 0.0
      %4317 = vmatpush1.msra.mxu0 %v4221
      %4318 = vmatprep.subr.mxu0 0.0
      %4319 = vmatpush1.msra.mxu0 %v4223
      %4320 = vmatprep.subr.mxu0 0.0
      %4321 = vmatpush1.msra.mxu0 %v4225
      %4322 = vmatprep.subr.mxu0 0.0
      %4323 = vmatpush1.msra.mxu0 %v4227
      %4324 = vmatprep.subr.mxu0 0.0
      %4325 = vmatpush1.msra.mxu0 %v4229
      %4326 = vmatprep.subr.mxu0 0.0
      %4327 = vmatpush1.msra.mxu0 %v4231
      %4328 = vmatprep.subr.mxu0 0.0
      %4329 = vmatpush1.msra.mxu0 %v4233
      %4330 = vmatprep.subr.mxu0 0.0
      %4331 = vmatpush1.msra.mxu0 %v4235
      %4332 = vmatprep.mubr.f32.mxu0 %v3951
      %4333 = vmatmul.mubr.f32.gmra.mrb[0].mxu0 %v3949
      %v4334 = vpop.f32.mrb[0].mxu0
      %v4335 = vadd.f32 0.0, %v4334
      %v4336 = vpop.f32.mrb[0].mxu0
      %4337 = vmatprep.mubr.f32.mxu0 %v3955
      %4338 = vmatmul.mubr.f32.gmra.mrb[0].mxu0 %v3953
      %v4339 = vpop.f32.mrb[0].mxu0
      %v4340 = vadd.f32 0.0, %v4339
      %v4341 = vpop.f32.mrb[0].mxu0
      %4342 = vmatprep.mubr.f32.mxu0 %v3959
      %4343 = vmatmul.mubr.f32.gmra.mrb[0].mxu0 %v3957
      %v4344 = vpop.f32.mrb[0].mxu0
      %v4345 = vadd.f32 0.0, %v4344
      %v4346 = vpop.f32.mrb[0].mxu0
      %4347 = vmatprep.mubr.f32.mxu0 %v3963
      %4348 = vmatmul.mubr.f32.gmra.mrb[0].mxu0 %v3961
      %v4349 = vpop.f32.mrb[0].mxu0
      %v4350 = vadd.f32 0.0, %v4349
      %v4351 = vpop.f32.mrb[0].mxu0
      %4352 = vmatprep.mubr.f32.mxu0 %v3967
      %4353 = vmatmul.mubr.f32.gmra.mrb[0].mxu0 %v3965
      %v4354 = vpop.f32.mrb[0].mxu0
      %v4355 = vadd.f32 0.0, %v4354
      %v4356 = vpop.f32.mrb[0].mxu0
      %4357 = vmatprep.mubr.f32.mxu0 %v3971
      %4358 = vmatmul.mubr.f32.gmra.mrb[0].mxu0 %v3969
      %v4359 = vpop.f32.mrb[0].mxu0
      %v4360 = vadd.f32 0.0, %v4359
      %v4361 = vpop.f32.mrb[0].mxu0
      %4362 = vmatprep.mubr.f32.mxu0 %v3975
      %4363 = vmatmul.mubr.f32.gmra.mrb[0].mxu0 %v3973
      %v4364 = vpop.f32.mrb[0].mxu0
      %v4365 = vadd.f32 0.0, %v4364
      %v4366 = vpop.f32.mrb[0].mxu0
      %4367 = vmatprep.mubr.f32.mxu0 %v3979
      %4368 = vmatmul.mubr.f32.gmra.mrb[0].mxu0 %v3977
      %v4369 = vpop.f32.mrb[0].mxu0
      %v4370 = vadd.f32 0.0, %v4369
      %v4371 = vpop.f32.mrb[0].mxu0
      %4372 = vmatprep.mubr.f32.mxu0 %v3983
      %4373 = vmatmul.mubr.f32.gmra.mrb[0].mxu0 %v3981
      %v4374 = vpop.f32.mrb[0].mxu0
      %v4375 = vadd.f32 0.0, %v4374
      %v4376 = vpop.f32.mrb[0].mxu0
      %4377 = vmatprep.mubr.f32.mxu0 %v3987
      %4378 = vmatmul.mubr.f32.gmra.mrb[0].mxu0 %v3985
      %v4379 = vpop.f32.mrb[0].mxu0
      %v4380 = vadd.f32 0.0, %v4379
      %v4381 = vpop.f32.mrb[0].mxu0
      %4382 = vmatprep.mubr.f32.mxu0 %v3991
      %4383 = vmatmul.mubr.f32.gmra.mrb[0].mxu0 %v3989
      %v4384 = vpop.f32.mrb[0].mxu0
      %v4385 = vadd.f32 0.0, %v4384
      %v4386 = vpop.f32.mrb[0].mxu0
      %4387 = vmatprep.mubr.f32.mxu0 %v3995
      %4388 = vmatmul.mubr.f32.gmra.mrb[0].mxu0 %v3993
      %v4389 = vpop.f32.mrb[0].mxu0
      %v4390 = vadd.f32 0.0, %v4389
      %v4391 = vpop.f32.mrb[0].mxu0
      %4392 = vmatprep.mubr.f32.mxu0 %v3999
      %4393 = vmatmul.mubr.f32.gmra.mrb[0].mxu0 %v3997
      %v4394 = vpop.f32.mrb[0].mxu0
      %v4395 = vadd.f32 0.0, %v4394
      %v4396 = vpop.f32.mrb[0].mxu0
      %4397 = vmatprep.mubr.f32.mxu0 %v4003
      %4398 = vmatmul.mubr.f32.gmra.mrb[0].mxu0 %v4001
      %v4399 = vpop.f32.mrb[0].mxu0
      %v4400 = vadd.f32 0.0, %v4399
      %v4401 = vpop.f32.mrb[0].mxu0
      %4402 = vmatprep.mubr.f32.mxu0 %v4007
      %4403 = vmatmul.mubr.f32.gmra.mrb[0].mxu0 %v4005
      %v4404 = vpop.f32.mrb[0].mxu0
      %v4405 = vadd.f32 0.0, %v4404
      %v4406 = vpop.f32.mrb[0].mxu0
      %4407 = vmatprep.mubr.f32.mxu0 %v4011
      %4408 = vmatmul.mubr.f32.gmra.mrb[0].mxu0 %v4009
      %v4409 = vpop.f32.mrb[0].mxu0
      %v4410 = vadd.f32 0.0, %v4409
      %v4411 = vpop.f32.mrb[0].mxu0
      %4412 = vmatprep.mubr.f32.mxu0 %v4015
      %4413 = vmatmul.mubr.f32.gmra.mrb[0].mxu0 %v4013
      %v4414 = vpop.f32.mrb[0].mxu0
      %v4415 = vadd.f32 0.0, %v4414
      %v4416 = vpop.f32.mrb[0].mxu0
      %4417 = vmatprep.mubr.f32.mxu0 %v4019
      %4418 = vmatmul.mubr.f32.gmra.mrb[0].mxu0 %v4017
      %v4419 = vpop.f32.mrb[0].mxu0
      %v4420 = vadd.f32 0.0, %v4419
      %v4421 = vpop.f32.mrb[0].mxu0
      %4422 = vmatprep.mubr.f32.mxu0 %v4023
      %4423 = vmatmul.mubr.f32.gmra.mrb[0].mxu0 %v4021
      %v4424 = vpop.f32.mrb[0].mxu0
      %v4425 = vadd.f32 0.0, %v4424
      %v4426 = vpop.f32.mrb[0].mxu0
      %4427 = vmatprep.mubr.f32.mxu0 %v4027
      %4428 = vmatmul.mubr.f32.gmra.mrb[0].mxu0 %v4025
      %v4429 = vpop.f32.mrb[0].mxu0
      %v4430 = vadd.f32 0.0, %v4429
      %v4431 = vpop.f32.mrb[0].mxu0
      %4432 = vmatprep.mubr.f32.mxu0 %v4031
      %4433 = vmatmul.mubr.f32.gmra.mrb[0].mxu0 %v4029
      %v4434 = vpop.f32.mrb[0].mxu0
      %v4435 = vadd.f32 0.0, %v4434
      %v4436 = vpop.f32.mrb[0].mxu0
      %4437 = vmatprep.mubr.f32.mxu0 %v4035
      %4438 = vmatmul.mubr.f32.gmra.mrb[0].mxu0 %v4033
      %v4439 = vpop.f32.mrb[0].mxu0
      %v4440 = vadd.f32 0.0, %v4439
      %v4441 = vpop.f32.mrb[0].mxu0
      %4442 = vmatprep.mubr.f32.mxu0 %v4039
      %4443 = vmatmul.mubr.f32.gmra.mrb[0].mxu0 %v4037
      %v4444 = vpop.f32.mrb[0].mxu0
      %v4445 = vadd.f32 0.0, %v4444
      %v4446 = vpop.f32.mrb[0].mxu0
      %4447 = vmatprep.mubr.f32.mxu0 %v4043
      %4448 = vmatmul.mubr.f32.gmra.mrb[0].mxu0 %v4041
      %v4449 = vpop.f32.mrb[0].mxu0
      %v4450 = vadd.f32 0.0, %v4449
      %v4451 = vpop.f32.mrb[0].mxu0
      %4452 = vmatprep.mubr.f32.mxu0 %v4047
      %4453 = vmatmul.mubr.f32.gmra.mrb[0].mxu0 %v4045
      %v4454 = vpop.f32.mrb[0].mxu0
      %v4455 = vadd.f32 0.0, %v4454
      %v4456 = vpop.f32.mrb[0].mxu0
      %4457 = vmatprep.mubr.f32.mxu0 %v4051
      %4458 = vmatmul.mubr.f32.gmra.mrb[0].mxu0 %v4049
      %v4459 = vpop.f32.mrb[0].mxu0
      %v4460 = vadd.f32 0.0, %v4459
      %v4461 = vpop.f32.mrb[0].mxu0
      %4462 = vmatprep.mubr.f32.mxu0 %v4055
      %4463 = vmatmul.mubr.f32.gmra.mrb[0].mxu0 %v4053
      %v4464 = vpop.f32.mrb[0].mxu0
      %v4465 = vadd.f32 0.0, %v4464
      %v4466 = vpop.f32.mrb[0].mxu0
      %4467 = vmatprep.mubr.f32.mxu0 %v4059
      %4468 = vmatmul.mubr.f32.gmra.mrb[0].mxu0 %v4057
      %v4469 = vpop.f32.mrb[0].mxu0
      %v4470 = vadd.f32 0.0, %v4469
      %v4471 = vpop.f32.mrb[0].mxu0
      %4472 = vmatprep.mubr.f32.mxu0 %v4063
      %4473 = vmatmul.mubr.f32.gmra.mrb[0].mxu0 %v4061
      %v4474 = vpop.f32.mrb[0].mxu0
      %v4475 = vadd.f32 0.0, %v4474
      %v4476 = vpop.f32.mrb[0].mxu0
      %4477 = vmatprep.mubr.f32.mxu0 %v4067
      %4478 = vmatmul.mubr.f32.gmra.mrb[0].mxu0 %v4065
      %v4479 = vpop.f32.mrb[0].mxu0
      %v4480 = vadd.f32 0.0, %v4479
      %v4481 = vpop.f32.mrb[0].mxu0
      %4482 = vmatprep.mubr.f32.mxu0 %v4071
      %4483 = vmatmul.mubr.f32.gmra.mrb[0].mxu0 %v4069
      %v4484 = vpop.f32.mrb[0].mxu0
      %v4485 = vadd.f32 0.0, %v4484
      %v4486 = vpop.f32.mrb[0].mxu0
      %4487 = vmatprep.mubr.f32.mxu0 %v4075
      %4488 = vmatmul.mubr.f32.gmra.mrb[0].mxu0 %v4073
      %v4489 = vpop.f32.mrb[0].mxu0
      %v4490 = vadd.f32 0.0, %v4489
      %v4491 = vpop.f32.mrb[0].mxu0
      %4492 = vdwg.mxu0
      %v4493 = vrcp.pop %v4078
      %v4494 = vrcp.pop %v4081
      %v4495 = vrcp.pop %v4084
      %v4496 = vrcp.pop %v4087
      %v4497 = vrcp.pop %v4090
      %v4498 = vrcp.pop %v4093
      %v4499 = vrcp.pop %v4096
      %v4500 = vrcp.pop %v4099
      %v4501 = vrcp.pop %v4102
      %v4502 = vrcp.pop %v4105
      %v4503 = vrcp.pop %v4108
      %v4504 = vrcp.pop %v4111
      %v4505 = vrcp.pop %v4114
      %v4506 = vrcp.pop %v4117
      %v4507 = vrcp.pop %v4120
      %v4508 = vrcp.pop %v4123
      %v4509 = vrcp.pop %v4126
      %v4510 = vrcp.pop %v4129
      %v4511 = vrcp.pop %v4132
      %v4512 = vrcp.pop %v4135
      %v4513 = vrcp.pop %v4138
      %v4514 = vrcp.pop %v4141
      %v4515 = vrcp.pop %v4144
      %v4516 = vrcp.pop %v4147
      %v4517 = vrcp.pop %v4150
      %v4518 = vrcp.pop %v4153
      %v4519 = vrcp.pop %v4156
      %v4520 = vrcp.pop %v4159
      %v4521 = vrcp.pop %v4162
      %v4522 = vrcp.pop %v4165
      %v4523 = vrcp.pop %v4168
      %v4524 = vrcp.pop %v4171
      %v4525 = vmul.f32 %v4335, %v4493
      %v4526 = vmul.f32 %v4340, %v4494
      %v4527 = vmul.f32 %v4345, %v4495
      %v4528 = vmul.f32 %v4350, %v4496
      %v4529 = vmul.f32 %v4355, %v4497
      %v4530 = vmul.f32 %v4360, %v4498
      %v4531 = vmul.f32 %v4365, %v4499
      %v4532 = vmul.f32 %v4370, %v4500
      %v4533 = vmul.f32 %v4375, %v4501
      %v4534 = vmul.f32 %v4380, %v4502
      %v4535 = vmul.f32 %v4385, %v4503
      %v4536 = vmul.f32 %v4390, %v4504
      %v4537 = vmul.f32 %v4395, %v4505
      %v4538 = vmul.f32 %v4400, %v4506
      %v4539 = vmul.f32 %v4405, %v4507
      %v4540 = vmul.f32 %v4410, %v4508
      %v4541 = vmul.f32 %v4415, %v4509
      %v4542 = vmul.f32 %v4420, %v4510
      %v4543 = vmul.f32 %v4425, %v4511
      %v4544 = vmul.f32 %v4430, %v4512
      %v4545 = vmul.f32 %v4435, %v4513
      %v4546 = vmul.f32 %v4440, %v4514
      %v4547 = vmul.f32 %v4445, %v4515
      %v4548 = vmul.f32 %v4450, %v4516
      %v4549 = vmul.f32 %v4455, %v4517
      %v4550 = vmul.f32 %v4460, %v4518
      %v4551 = vmul.f32 %v4465, %v4519
      %v4552 = vmul.f32 %v4470, %v4520
      %v4553 = vmul.f32 %v4475, %v4521
      %v4554 = vmul.f32 %v4480, %v4522
      %v4555 = vmul.f32 %v4485, %v4523
      %v4556 = vmul.f32 %v4490, %v4524
      %vm4557 = vcmask 786048
      %v4558 = vsel %vm4557, %v1595, 0.0
      %v4559 = vsel %vm4557, %v1600, 0.0
      %v4560 = vadd.f32 %v4558, %v4559
      %v4561 = vsel %vm4557, %v1605, 0.0
      %v4562 = vadd.f32 %v4560, %v4561
      %v4563 = vsel %vm4557, %v1610, 0.0
      %v4564 = vadd.f32 %v4562, %v4563
      %v4565 = vsel %vm4557, %v1615, 0.0
      %v4566 = vadd.f32 %v4564, %v4565
      %v4567 = vsel %vm4557, %v1620, 0.0
      %v4568 = vadd.f32 %v4566, %v4567
      %v4569 = vsel %vm4557, %v1625, 0.0
      %v4570 = vadd.f32 %v4568, %v4569
      %v4571 = vsel %vm4557, %v1630, 0.0
      %v4572 = vadd.f32 %v4570, %v4571
      %v4573 = vsel %vm4557, %v1635, 0.0
      %v4574 = vadd.f32 %v4572, %v4573
      %v4575 = vsel %vm4557, %v1640, 0.0
      %v4576 = vadd.f32 %v4574, %v4575
      %v4577 = vsel %vm4557, %v1645, 0.0
      %v4578 = vadd.f32 %v4576, %v4577
      %v4579 = vsel %vm4557, %v1650, 0.0
      %v4580 = vadd.f32 %v4578, %v4579
      %v4581 = vsel %vm4557, %v1655, 0.0
      %v4582 = vadd.f32 %v4580, %v4581
      %v4583 = vsel %vm4557, %v1660, 0.0
      %v4584 = vadd.f32 %v4582, %v4583
      %v4585 = vsel %vm4557, %v1665, 0.0
      %v4586 = vadd.f32 %v4584, %v4585
      %v4587 = vsel %vm4557, %v1670, 0.0
      %v4588 = vadd.f32 %v4586, %v4587
      %v4589 = vsel %vm4557, %v1675, 0.0
      %v4590 = vadd.f32 %v4588, %v4589
      %v4591 = vsel %vm4557, %v1680, 0.0
      %v4592 = vadd.f32 %v4590, %v4591
      %v4593 = vsel %vm4557, %v1685, 0.0
      %v4594 = vadd.f32 %v4592, %v4593
      %v4595 = vsel %vm4557, %v1690, 0.0
      %v4596 = vadd.f32 %v4594, %v4595
      %v4597 = vsel %vm4557, %v1695, 0.0
      %v4598 = vadd.f32 %v4596, %v4597
      %v4599 = vsel %vm4557, %v1700, 0.0
      %v4600 = vadd.f32 %v4598, %v4599
      %v4601 = vsel %vm4557, %v1705, 0.0
      %v4602 = vadd.f32 %v4600, %v4601
      %v4603 = vsel %vm4557, %v1710, 0.0
      %v4604 = vadd.f32 %v4602, %v4603
      %v4605 = vsel %vm4557, %v1715, 0.0
      %v4606 = vadd.f32 %v4604, %v4605
      %v4607 = vsel %vm4557, %v1720, 0.0
      %v4608 = vadd.f32 %v4606, %v4607
      %v4609 = vsel %vm4557, %v1725, 0.0
      %v4610 = vadd.f32 %v4608, %v4609
      %v4611 = vsel %vm4557, %v1730, 0.0
      %v4612 = vadd.f32 %v4610, %v4611
      %v4613 = vsel %vm4557, %v1735, 0.0
      %v4614 = vadd.f32 %v4612, %v4613
      %v4615 = vsel %vm4557, %v1740, 0.0
      %v4616 = vadd.f32 %v4614, %v4615
      %v4617 = vsel %vm4557, %v1745, 0.0
      %v4618 = vadd.f32 %v4616, %v4617
      %v4619 = vsel %vm4557, %v1750, 0.0
      %v4620 = vadd.f32 %v4618, %v4619
      %v4621 = vrot.slane %v4620, 4
      %v4622 = vadd.f32 %v4620, %v4621
      %v4623 = vrot.slane %v4622, 2
      %v4624 = vadd.f32 %v4622, %v4623
      %v4625 = vrot.slane %v4624, 1
      %v4626 = vadd.f32 %v4624, %v4625
      %v4627 = vmul.f32 %v4626, 1e-09
      %4629 = vrot.lane.b32.xlu0 %v4627, 48
      %v4630 = vpop.permute.xlu0 %4629
      %v4632 = vadd.f32 %v4525, %v4630
      %v4633 = vadd.f32 %v4526, %v4630
      %v4634 = vadd.f32 %v4527, %v4630
      %v4635 = vadd.f32 %v4528, %v4630
      %v4636 = vadd.f32 %v4529, %v4630
      %v4637 = vadd.f32 %v4530, %v4630
      %v4638 = vadd.f32 %v4531, %v4630
      %v4639 = vadd.f32 %v4532, %v4630
      %v4640 = vadd.f32 %v4533, %v4630
      %v4641 = vadd.f32 %v4534, %v4630
      %v4642 = vadd.f32 %v4535, %v4630
      %v4643 = vadd.f32 %v4536, %v4630
      %v4644 = vadd.f32 %v4537, %v4630
      %v4645 = vadd.f32 %v4538, %v4630
      %v4646 = vadd.f32 %v4539, %v4630
      %v4647 = vadd.f32 %v4540, %v4630
      %v4648 = vadd.f32 %v4541, %v4630
      %v4649 = vadd.f32 %v4542, %v4630
      %v4650 = vadd.f32 %v4543, %v4630
      %v4651 = vadd.f32 %v4544, %v4630
      %v4652 = vadd.f32 %v4545, %v4630
      %v4653 = vadd.f32 %v4546, %v4630
      %v4654 = vadd.f32 %v4547, %v4630
      %v4655 = vadd.f32 %v4548, %v4630
      %v4656 = vadd.f32 %v4549, %v4630
      %v4657 = vadd.f32 %v4550, %v4630
      %v4658 = vadd.f32 %v4551, %v4630
      %v4659 = vadd.f32 %v4552, %v4630
      %v4660 = vadd.f32 %v4553, %v4630
      %v4661 = vadd.f32 %v4554, %v4630
      %v4662 = vadd.f32 %v4555, %v4630
      %v4663 = vadd.f32 %v4556, %v4630
      %v4665 = vsel %vm351, %v4632, 0
      %v4668 = vsel %vm351, %v4633, 0
      %v4671 = vsel %vm351, %v4634, 0
      %v4674 = vsel %vm351, %v4635, 0
      %v4677 = vsel %vm351, %v4636, 0
      %v4680 = vsel %vm351, %v4637, 0
      %v4683 = vsel %vm351, %v4638, 0
      %v4686 = vsel %vm351, %v4639, 0
      %v4689 = vsel %vm351, %v4640, 0
      %v4692 = vsel %vm351, %v4641, 0
      %v4695 = vsel %vm351, %v4642, 0
      %v4698 = vsel %vm351, %v4643, 0
      %v4701 = vsel %vm351, %v4644, 0
      %v4704 = vsel %vm351, %v4645, 0
      %v4707 = vsel %vm351, %v4646, 0
      %v4710 = vsel %vm351, %v4647, 0
      %v4713 = vsel %vm351, %v4648, 0
      %v4716 = vsel %vm351, %v4649, 0
      %v4719 = vsel %vm351, %v4650, 0
      %v4722 = vsel %vm351, %v4651, 0
      %v4725 = vsel %vm351, %v4652, 0
      %v4728 = vsel %vm351, %v4653, 0
      %v4731 = vsel %vm351, %v4654, 0
      %v4734 = vsel %vm351, %v4655, 0
      %v4737 = vsel %vm351, %v4656, 0
      %v4740 = vsel %vm351, %v4657, 0
      %v4743 = vsel %vm351, %v4658, 0
      %v4746 = vsel %vm351, %v4659, 0
      %v4749 = vsel %vm351, %v4660, 0
      %v4752 = vsel %vm351, %v4661, 0
      %v4755 = vsel %vm351, %v4662, 0
      %v4758 = vsel %vm351, %v4663, 0
      %4760 = vmatprep.subr.mxu0 0.0
      %4761 = vmatpush1.msra.mxu0 %v1915
      %4762 = vmatprep.subr.mxu0 0.0
      %4763 = vmatpush1.msra.mxu0 %v1916
      %4764 = vmatprep.subr.mxu0 0.0
      %4765 = vmatpush1.msra.mxu0 0.0
      %4766 = vmatprep.subr.mxu0 0.0
      %4767 = vmatpush1.msra.mxu0 0.0
      %4768 = vmatprep.subr.mxu0 0.0
      %4769 = vmatpush1.msra.mxu0 0.0
      %4770 = vmatprep.subr.mxu0 0.0
      %4771 = vmatpush1.msra.mxu0 0.0
      %4772 = vmatprep.subr.mxu0 0.0
      %4773 = vmatpush1.msra.mxu0 0.0
      %4774 = vmatprep.subr.mxu0 0.0
      %4775 = vmatpush1.msra.mxu0 0.0
      %4776 = vmatprep.subr.mxu0 0.0
      %4777 = vmatpush1.msra.mxu0 0.0
      %4778 = vmatprep.subr.mxu0 0.0
      %4779 = vmatpush1.msra.mxu0 0.0
      %4780 = vmatprep.subr.mxu0 0.0
      %4781 = vmatpush1.msra.mxu0 0.0
      %4782 = vmatprep.subr.mxu0 0.0
      %4783 = vmatpush1.msra.mxu0 0.0
      %4784 = vmatprep.subr.mxu0 0.0
      %4785 = vmatpush1.msra.mxu0 0.0
      %4786 = vmatprep.subr.mxu0 0.0
      %4787 = vmatpush1.msra.mxu0 0.0
      %4788 = vmatprep.subr.mxu0 0.0
      %4789 = vmatpush1.msra.mxu0 0.0
      %4790 = vmatprep.subr.mxu0 0.0
      %4791 = vmatpush1.msra.mxu0 0.0
      %4792 = vmatprep.subr.mxu0 0.0
      %4793 = vmatpush1.msra.mxu0 0.0
      %4794 = vmatprep.subr.mxu0 0.0
      %4795 = vmatpush1.msra.mxu0 0.0
      %4796 = vmatprep.subr.mxu0 0.0
      %4797 = vmatpush1.msra.mxu0 0.0
      %4798 = vmatprep.subr.mxu0 0.0
      %4799 = vmatpush1.msra.mxu0 0.0
      %4800 = vmatprep.subr.mxu0 0.0
      %4801 = vmatpush1.msra.mxu0 0.0
      %4802 = vmatprep.subr.mxu0 0.0
      %4803 = vmatpush1.msra.mxu0 0.0
      %4804 = vmatprep.subr.mxu0 0.0
      %4805 = vmatpush1.msra.mxu0 0.0
      %4806 = vmatprep.subr.mxu0 0.0
      %4807 = vmatpush1.msra.mxu0 0.0
      %4808 = vmatprep.subr.mxu0 0.0
      %4809 = vmatpush1.msra.mxu0 0.0
      %4810 = vmatprep.subr.mxu0 0.0
      %4811 = vmatpush1.msra.mxu0 0.0
      %4812 = vmatprep.subr.mxu0 0.0
      %4813 = vmatpush1.msra.mxu0 0.0
      %4814 = vmatprep.subr.mxu0 0.0
      %4815 = vmatpush1.msra.mxu0 0.0
      %4816 = vmatprep.subr.mxu0 0.0
      %4817 = vmatpush1.msra.mxu0 0.0
      %4818 = vmatprep.subr.mxu0 0.0
      %4819 = vmatpush1.msra.mxu0 0.0
      %4820 = vmatprep.subr.mxu0 0.0
      %4821 = vmatpush1.msra.mxu0 0.0
      %4822 = vmatprep.subr.mxu0 0.0
      %4823 = vmatpush1.msra.mxu0 0.0
      %4824 = vmatprep.mubr.f32.mxu0 0.0
      %4825 = vmatmul.mubr.f32.gmra.mrb[0].mxu0 %v4665
      %v4826 = vpop.f32.mrb[0].mxu0
      %v4827 = vadd.f32 0.0, %v4826
      %v4828 = vpop.f32.mrb[0].mxu0
      %4829 = vmatprep.mubr.f32.mxu0 0.0
      %4830 = vmatmul.mubr.f32.gmra.mrb[0].mxu0 %v4668
      %v4831 = vpop.f32.mrb[0].mxu0
      %v4832 = vadd.f32 0.0, %v4831
      %v4833 = vpop.f32.mrb[0].mxu0
      %4834 = vmatprep.mubr.f32.mxu0 0.0
      %4835 = vmatmul.mubr.f32.gmra.mrb[0].mxu0 %v4671
      %v4836 = vpop.f32.mrb[0].mxu0
      %v4837 = vadd.f32 0.0, %v4836
      %v4838 = vpop.f32.mrb[0].mxu0
      %4839 = vmatprep.mubr.f32.mxu0 0.0
      %4840 = vmatmul.mubr.f32.gmra.mrb[0].mxu0 %v4674
      %v4841 = vpop.f32.mrb[0].mxu0
      %v4842 = vadd.f32 0.0, %v4841
      %v4843 = vpop.f32.mrb[0].mxu0
      %4844 = vmatprep.mubr.f32.mxu0 0.0
      %4845 = vmatmul.mubr.f32.gmra.mrb[0].mxu0 %v4677
      %v4846 = vpop.f32.mrb[0].mxu0
      %v4847 = vadd.f32 0.0, %v4846
      %v4848 = vpop.f32.mrb[0].mxu0
      %4849 = vmatprep.mubr.f32.mxu0 0.0
      %4850 = vmatmul.mubr.f32.gmra.mrb[0].mxu0 %v4680
      %v4851 = vpop.f32.mrb[0].mxu0
      %v4852 = vadd.f32 0.0, %v4851
      %v4853 = vpop.f32.mrb[0].mxu0
      %4854 = vmatprep.mubr.f32.mxu0 0.0
      %4855 = vmatmul.mubr.f32.gmra.mrb[0].mxu0 %v4683
      %v4856 = vpop.f32.mrb[0].mxu0
      %v4857 = vadd.f32 0.0, %v4856
      %v4858 = vpop.f32.mrb[0].mxu0
      %4859 = vmatprep.mubr.f32.mxu0 0.0
      %4860 = vmatmul.mubr.f32.gmra.mrb[0].mxu0 %v4686
      %v4861 = vpop.f32.mrb[0].mxu0
      %v4862 = vadd.f32 0.0, %v4861
      %v4863 = vpop.f32.mrb[0].mxu0
      %4864 = vmatprep.mubr.f32.mxu0 0.0
      %4865 = vmatmul.mubr.f32.gmra.mrb[0].mxu0 %v4689
      %v4866 = vpop.f32.mrb[0].mxu0
      %v4867 = vadd.f32 0.0, %v4866
      %v4868 = vpop.f32.mrb[0].mxu0
      %4869 = vmatprep.mubr.f32.mxu0 0.0
      %4870 = vmatmul.mubr.f32.gmra.mrb[0].mxu0 %v4692
      %v4871 = vpop.f32.mrb[0].mxu0
      %v4872 = vadd.f32 0.0, %v4871
      %v4873 = vpop.f32.mrb[0].mxu0
      %4874 = vmatprep.mubr.f32.mxu0 0.0
      %4875 = vmatmul.mubr.f32.gmra.mrb[0].mxu0 %v4695
      %v4876 = vpop.f32.mrb[0].mxu0
      %v4877 = vadd.f32 0.0, %v4876
      %v4878 = vpop.f32.mrb[0].mxu0
      %4879 = vmatprep.mubr.f32.mxu0 0.0
      %4880 = vmatmul.mubr.f32.gmra.mrb[0].mxu0 %v4698
      %v4881 = vpop.f32.mrb[0].mxu0
      %v4882 = vadd.f32 0.0, %v4881
      %v4883 = vpop.f32.mrb[0].mxu0
      %4884 = vmatprep.mubr.f32.mxu0 0.0
      %4885 = vmatmul.mubr.f32.gmra.mrb[0].mxu0 %v4701
      %v4886 = vpop.f32.mrb[0].mxu0
      %v4887 = vadd.f32 0.0, %v4886
      %v4888 = vpop.f32.mrb[0].mxu0
      %4889 = vmatprep.mubr.f32.mxu0 0.0
      %4890 = vmatmul.mubr.f32.gmra.mrb[0].mxu0 %v4704
      %v4891 = vpop.f32.mrb[0].mxu0
      %v4892 = vadd.f32 0.0, %v4891
      %v4893 = vpop.f32.mrb[0].mxu0
      %4894 = vmatprep.mubr.f32.mxu0 0.0
      %4895 = vmatmul.mubr.f32.gmra.mrb[0].mxu0 %v4707
      %v4896 = vpop.f32.mrb[0].mxu0
      %v4897 = vadd.f32 0.0, %v4896
      %v4898 = vpop.f32.mrb[0].mxu0
      %4899 = vmatprep.mubr.f32.mxu0 0.0
      %4900 = vmatmul.mubr.f32.gmra.mrb[0].mxu0 %v4710
      %v4901 = vpop.f32.mrb[0].mxu0
      %v4902 = vadd.f32 0.0, %v4901
      %v4903 = vpop.f32.mrb[0].mxu0
      %4904 = vmatprep.mubr.f32.mxu0 0.0
      %4905 = vmatmul.mubr.f32.gmra.mrb[0].mxu0 %v4713
      %v4906 = vpop.f32.mrb[0].mxu0
      %v4907 = vadd.f32 0.0, %v4906
      %v4908 = vpop.f32.mrb[0].mxu0
      %4909 = vmatprep.mubr.f32.mxu0 0.0
      %4910 = vmatmul.mubr.f32.gmra.mrb[0].mxu0 %v4716
      %v4911 = vpop.f32.mrb[0].mxu0
      %v4912 = vadd.f32 0.0, %v4911
      %v4913 = vpop.f32.mrb[0].mxu0
      %4914 = vmatprep.mubr.f32.mxu0 0.0
      %4915 = vmatmul.mubr.f32.gmra.mrb[0].mxu0 %v4719
      %v4916 = vpop.f32.mrb[0].mxu0
      %v4917 = vadd.f32 0.0, %v4916
      %v4918 = vpop.f32.mrb[0].mxu0
      %4919 = vmatprep.mubr.f32.mxu0 0.0
      %4920 = vmatmul.mubr.f32.gmra.mrb[0].mxu0 %v4722
      %v4921 = vpop.f32.mrb[0].mxu0
      %v4922 = vadd.f32 0.0, %v4921
      %v4923 = vpop.f32.mrb[0].mxu0
      %4924 = vmatprep.mubr.f32.mxu0 0.0
      %4925 = vmatmul.mubr.f32.gmra.mrb[0].mxu0 %v4725
      %v4926 = vpop.f32.mrb[0].mxu0
      %v4927 = vadd.f32 0.0, %v4926
      %v4928 = vpop.f32.mrb[0].mxu0
      %4929 = vmatprep.mubr.f32.mxu0 0.0
      %4930 = vmatmul.mubr.f32.gmra.mrb[0].mxu0 %v4728
      %v4931 = vpop.f32.mrb[0].mxu0
      %v4932 = vadd.f32 0.0, %v4931
      %v4933 = vpop.f32.mrb[0].mxu0
      %4934 = vmatprep.mubr.f32.mxu0 0.0
      %4935 = vmatmul.mubr.f32.gmra.mrb[0].mxu0 %v4731
      %v4936 = vpop.f32.mrb[0].mxu0
      %v4937 = vadd.f32 0.0, %v4936
      %v4938 = vpop.f32.mrb[0].mxu0
      %4939 = vmatprep.mubr.f32.mxu0 0.0
      %4940 = vmatmul.mubr.f32.gmra.mrb[0].mxu0 %v4734
      %v4941 = vpop.f32.mrb[0].mxu0
      %v4942 = vadd.f32 0.0, %v4941
      %v4943 = vpop.f32.mrb[0].mxu0
      %4944 = vmatprep.mubr.f32.mxu0 0.0
      %4945 = vmatmul.mubr.f32.gmra.mrb[0].mxu0 %v4737
      %v4946 = vpop.f32.mrb[0].mxu0
      %v4947 = vadd.f32 0.0, %v4946
      %v4948 = vpop.f32.mrb[0].mxu0
      %4949 = vmatprep.mubr.f32.mxu0 0.0
      %4950 = vmatmul.mubr.f32.gmra.mrb[0].mxu0 %v4740
      %v4951 = vpop.f32.mrb[0].mxu0
      %v4952 = vadd.f32 0.0, %v4951
      %v4953 = vpop.f32.mrb[0].mxu0
      %4954 = vmatprep.mubr.f32.mxu0 0.0
      %4955 = vmatmul.mubr.f32.gmra.mrb[0].mxu0 %v4743
      %v4956 = vpop.f32.mrb[0].mxu0
      %v4957 = vadd.f32 0.0, %v4956
      %v4958 = vpop.f32.mrb[0].mxu0
      %4959 = vmatprep.mubr.f32.mxu0 0.0
      %4960 = vmatmul.mubr.f32.gmra.mrb[0].mxu0 %v4746
      %v4961 = vpop.f32.mrb[0].mxu0
      %v4962 = vadd.f32 0.0, %v4961
      %v4963 = vpop.f32.mrb[0].mxu0
      %4964 = vmatprep.mubr.f32.mxu0 0.0
      %4965 = vmatmul.mubr.f32.gmra.mrb[0].mxu0 %v4749
      %v4966 = vpop.f32.mrb[0].mxu0
      %v4967 = vadd.f32 0.0, %v4966
      %v4968 = vpop.f32.mrb[0].mxu0
      %4969 = vmatprep.mubr.f32.mxu0 0.0
      %4970 = vmatmul.mubr.f32.gmra.mrb[0].mxu0 %v4752
      %v4971 = vpop.f32.mrb[0].mxu0
      %v4972 = vadd.f32 0.0, %v4971
      %v4973 = vpop.f32.mrb[0].mxu0
      %4974 = vmatprep.mubr.f32.mxu0 0.0
      %4975 = vmatmul.mubr.f32.gmra.mrb[0].mxu0 %v4755
      %v4976 = vpop.f32.mrb[0].mxu0
      %v4977 = vadd.f32 0.0, %v4976
      %v4978 = vpop.f32.mrb[0].mxu0
      %4979 = vmatprep.mubr.f32.mxu0 0.0
      %4980 = vmatmul.mubr.f32.gmra.mrb[0].mxu0 %v4758
      %v4981 = vpop.f32.mrb[0].mxu0
      %v4982 = vadd.f32 0.0, %v4981
      %v4983 = vpop.f32.mrb[0].mxu0
      %4984 = vdwg.mxu0
      %v4986 = vsel %vm351, %v3243, 0
      %v4989 = vsel %vm351, %v3244, 0
      %v4992 = vsel %vm351, %v3245, 0
      %v4995 = vsel %vm351, %v3246, 0
      %v4998 = vsel %vm351, %v3247, 0
      %v5001 = vsel %vm351, %v3248, 0
      %v5004 = vsel %vm351, %v3249, 0
      %v5007 = vsel %vm351, %v3250, 0
      %v5010 = vsel %vm351, %v3251, 0
      %v5013 = vsel %vm351, %v3252, 0
      %v5016 = vsel %vm351, %v3253, 0
      %v5019 = vsel %vm351, %v3254, 0
      %v5022 = vsel %vm351, %v3255, 0
      %v5025 = vsel %vm351, %v3256, 0
      %v5028 = vsel %vm351, %v3257, 0
      %v5031 = vsel %vm351, %v3258, 0
      %v5034 = vsel %vm351, %v3259, 0
      %v5037 = vsel %vm351, %v3260, 0
      %v5040 = vsel %vm351, %v3261, 0
      %v5043 = vsel %vm351, %v3262, 0
      %v5046 = vsel %vm351, %v3263, 0
      %v5049 = vsel %vm351, %v3264, 0
      %v5052 = vsel %vm351, %v3265, 0
      %v5055 = vsel %vm351, %v3266, 0
      %v5058 = vsel %vm351, %v3267, 0
      %v5061 = vsel %vm351, %v3268, 0
      %v5064 = vsel %vm351, %v3269, 0
      %v5067 = vsel %vm351, %v3270, 0
      %v5070 = vsel %vm351, %v3271, 0
      %v5073 = vsel %vm351, %v3272, 0
      %v5076 = vsel %vm351, %v3273, 0
      %v5079 = vsel %vm351, %v3274, 0
      %5081 = vmatprep.subr.mxu0 0.0
      %5082 = vmatpush1.msra.mxu0 %v1913
      %5083 = vmatprep.subr.mxu0 0.0
      %5084 = vmatpush1.msra.mxu0 %v1914
      %5085 = vmatprep.subr.mxu0 0.0
      %5086 = vmatpush1.msra.mxu0 0.0
      %5087 = vmatprep.subr.mxu0 0.0
      %5088 = vmatpush1.msra.mxu0 0.0
      %5089 = vmatprep.subr.mxu0 0.0
      %5090 = vmatpush1.msra.mxu0 0.0
      %5091 = vmatprep.subr.mxu0 0.0
      %5092 = vmatpush1.msra.mxu0 0.0
      %5093 = vmatprep.subr.mxu0 0.0
      %5094 = vmatpush1.msra.mxu0 0.0
      %5095 = vmatprep.subr.mxu0 0.0
      %5096 = vmatpush1.msra.mxu0 0.0
      %5097 = vmatprep.subr.mxu0 0.0
      %5098 = vmatpush1.msra.mxu0 0.0
      %5099 = vmatprep.subr.mxu0 0.0
      %5100 = vmatpush1.msra.mxu0 0.0
      %5101 = vmatprep.subr.mxu0 0.0
      %5102 = vmatpush1.msra.mxu0 0.0
      %5103 = vmatprep.subr.mxu0 0.0
      %5104 = vmatpush1.msra.mxu0 0.0
      %5105 = vmatprep.subr.mxu0 0.0
      %5106 = vmatpush1.msra.mxu0 0.0
      %5107 = vmatprep.subr.mxu0 0.0
      %5108 = vmatpush1.msra.mxu0 0.0
      %5109 = vmatprep.subr.mxu0 0.0
      %5110 = vmatpush1.msra.mxu0 0.0
      %5111 = vmatprep.subr.mxu0 0.0
      %5112 = vmatpush1.msra.mxu0 0.0
      %5113 = vmatprep.subr.mxu0 0.0
      %5114 = vmatpush1.msra.mxu0 0.0
      %5115 = vmatprep.subr.mxu0 0.0
      %5116 = vmatpush1.msra.mxu0 0.0
      %5117 = vmatprep.subr.mxu0 0.0
      %5118 = vmatpush1.msra.mxu0 0.0
      %5119 = vmatprep.subr.mxu0 0.0
      %5120 = vmatpush1.msra.mxu0 0.0
      %5121 = vmatprep.subr.mxu0 0.0
      %5122 = vmatpush1.msra.mxu0 0.0
      %5123 = vmatprep.subr.mxu0 0.0
      %5124 = vmatpush1.msra.mxu0 0.0
      %5125 = vmatprep.subr.mxu0 0.0
      %5126 = vmatpush1.msra.mxu0 0.0
      %5127 = vmatprep.subr.mxu0 0.0
      %5128 = vmatpush1.msra.mxu0 0.0
      %5129 = vmatprep.subr.mxu0 0.0
      %5130 = vmatpush1.msra.mxu0 0.0
      %5131 = vmatprep.subr.mxu0 0.0
      %5132 = vmatpush1.msra.mxu0 0.0
      %5133 = vmatprep.subr.mxu0 0.0
      %5134 = vmatpush1.msra.mxu0 0.0
      %5135 = vmatprep.subr.mxu0 0.0
      %5136 = vmatpush1.msra.mxu0 0.0
      %5137 = vmatprep.subr.mxu0 0.0
      %5138 = vmatpush1.msra.mxu0 0.0
      %5139 = vmatprep.subr.mxu0 0.0
      %5140 = vmatpush1.msra.mxu0 0.0
      %5141 = vmatprep.subr.mxu0 0.0
      %5142 = vmatpush1.msra.mxu0 0.0
      %5143 = vmatprep.subr.mxu0 0.0
      %5144 = vmatpush1.msra.mxu0 0.0
      %5145 = vmatprep.mubr.f32.mxu0 0.0
      %5146 = vmatmul.mubr.f32.gmra.mrb[0].mxu0 %v4986
      %v5147 = vpop.f32.mrb[0].mxu0
      %v5148 = vadd.f32 %v4827, %v5147
      %v5149 = vpop.f32.mrb[0].mxu0
      %5150 = vmatprep.mubr.f32.mxu0 0.0
      %5151 = vmatmul.mubr.f32.gmra.mrb[0].mxu0 %v4989
      %v5152 = vpop.f32.mrb[0].mxu0
      %v5153 = vadd.f32 %v4832, %v5152
      %v5154 = vpop.f32.mrb[0].mxu0
      %5155 = vmatprep.mubr.f32.mxu0 0.0
      %5156 = vmatmul.mubr.f32.gmra.mrb[0].mxu0 %v4992
      %v5157 = vpop.f32.mrb[0].mxu0
      %v5158 = vadd.f32 %v4837, %v5157
      %v5159 = vpop.f32.mrb[0].mxu0
      %5160 = vmatprep.mubr.f32.mxu0 0.0
      %5161 = vmatmul.mubr.f32.gmra.mrb[0].mxu0 %v4995
      %v5162 = vpop.f32.mrb[0].mxu0
      %v5163 = vadd.f32 %v4842, %v5162
      %v5164 = vpop.f32.mrb[0].mxu0
      %5165 = vmatprep.mubr.f32.mxu0 0.0
      %5166 = vmatmul.mubr.f32.gmra.mrb[0].mxu0 %v4998
      %v5167 = vpop.f32.mrb[0].mxu0
      %v5168 = vadd.f32 %v4847, %v5167
      %v5169 = vpop.f32.mrb[0].mxu0
      %5170 = vmatprep.mubr.f32.mxu0 0.0
      %5171 = vmatmul.mubr.f32.gmra.mrb[0].mxu0 %v5001
      %v5172 = vpop.f32.mrb[0].mxu0
      %v5173 = vadd.f32 %v4852, %v5172
      %v5174 = vpop.f32.mrb[0].mxu0
      %5175 = vmatprep.mubr.f32.mxu0 0.0
      %5176 = vmatmul.mubr.f32.gmra.mrb[0].mxu0 %v5004
      %v5177 = vpop.f32.mrb[0].mxu0
      %v5178 = vadd.f32 %v4857, %v5177
      %v5179 = vpop.f32.mrb[0].mxu0
      %5180 = vmatprep.mubr.f32.mxu0 0.0
      %5181 = vmatmul.mubr.f32.gmra.mrb[0].mxu0 %v5007
      %v5182 = vpop.f32.mrb[0].mxu0
      %v5183 = vadd.f32 %v4862, %v5182
      %v5184 = vpop.f32.mrb[0].mxu0
      %5185 = vmatprep.mubr.f32.mxu0 0.0
      %5186 = vmatmul.mubr.f32.gmra.mrb[0].mxu0 %v5010
      %v5187 = vpop.f32.mrb[0].mxu0
      %v5188 = vadd.f32 %v4867, %v5187
      %v5189 = vpop.f32.mrb[0].mxu0
      %5190 = vmatprep.mubr.f32.mxu0 0.0
      %5191 = vmatmul.mubr.f32.gmra.mrb[0].mxu0 %v5013
      %v5192 = vpop.f32.mrb[0].mxu0
      %v5193 = vadd.f32 %v4872, %v5192
      %v5194 = vpop.f32.mrb[0].mxu0
      %5195 = vmatprep.mubr.f32.mxu0 0.0
      %5196 = vmatmul.mubr.f32.gmra.mrb[0].mxu0 %v5016
      %v5197 = vpop.f32.mrb[0].mxu0
      %v5198 = vadd.f32 %v4877, %v5197
      %v5199 = vpop.f32.mrb[0].mxu0
      %5200 = vmatprep.mubr.f32.mxu0 0.0
      %5201 = vmatmul.mubr.f32.gmra.mrb[0].mxu0 %v5019
      %v5202 = vpop.f32.mrb[0].mxu0
      %v5203 = vadd.f32 %v4882, %v5202
      %v5204 = vpop.f32.mrb[0].mxu0
      %5205 = vmatprep.mubr.f32.mxu0 0.0
      %5206 = vmatmul.mubr.f32.gmra.mrb[0].mxu0 %v5022
      %v5207 = vpop.f32.mrb[0].mxu0
      %v5208 = vadd.f32 %v4887, %v5207
      %v5209 = vpop.f32.mrb[0].mxu0
      %5210 = vmatprep.mubr.f32.mxu0 0.0
      %5211 = vmatmul.mubr.f32.gmra.mrb[0].mxu0 %v5025
      %v5212 = vpop.f32.mrb[0].mxu0
      %v5213 = vadd.f32 %v4892, %v5212
      %v5214 = vpop.f32.mrb[0].mxu0
      %5215 = vmatprep.mubr.f32.mxu0 0.0
      %5216 = vmatmul.mubr.f32.gmra.mrb[0].mxu0 %v5028
      %v5217 = vpop.f32.mrb[0].mxu0
      %v5218 = vadd.f32 %v4897, %v5217
      %v5219 = vpop.f32.mrb[0].mxu0
      %5220 = vmatprep.mubr.f32.mxu0 0.0
      %5221 = vmatmul.mubr.f32.gmra.mrb[0].mxu0 %v5031
      %v5222 = vpop.f32.mrb[0].mxu0
      %v5223 = vadd.f32 %v4902, %v5222
      %v5224 = vpop.f32.mrb[0].mxu0
      %5225 = vmatprep.mubr.f32.mxu0 0.0
      %5226 = vmatmul.mubr.f32.gmra.mrb[0].mxu0 %v5034
      %v5227 = vpop.f32.mrb[0].mxu0
      %v5228 = vadd.f32 %v4907, %v5227
      %v5229 = vpop.f32.mrb[0].mxu0
      %5230 = vmatprep.mubr.f32.mxu0 0.0
      %5231 = vmatmul.mubr.f32.gmra.mrb[0].mxu0 %v5037
      %v5232 = vpop.f32.mrb[0].mxu0
      %v5233 = vadd.f32 %v4912, %v5232
      %v5234 = vpop.f32.mrb[0].mxu0
      %5235 = vmatprep.mubr.f32.mxu0 0.0
      %5236 = vmatmul.mubr.f32.gmra.mrb[0].mxu0 %v5040
      %v5237 = vpop.f32.mrb[0].mxu0
      %v5238 = vadd.f32 %v4917, %v5237
      %v5239 = vpop.f32.mrb[0].mxu0
      %5240 = vmatprep.mubr.f32.mxu0 0.0
      %5241 = vmatmul.mubr.f32.gmra.mrb[0].mxu0 %v5043
      %v5242 = vpop.f32.mrb[0].mxu0
      %v5243 = vadd.f32 %v4922, %v5242
      %v5244 = vpop.f32.mrb[0].mxu0
      %5245 = vmatprep.mubr.f32.mxu0 0.0
      %5246 = vmatmul.mubr.f32.gmra.mrb[0].mxu0 %v5046
      %v5247 = vpop.f32.mrb[0].mxu0
      %v5248 = vadd.f32 %v4927, %v5247
      %v5249 = vpop.f32.mrb[0].mxu0
      %5250 = vmatprep.mubr.f32.mxu0 0.0
      %5251 = vmatmul.mubr.f32.gmra.mrb[0].mxu0 %v5049
      %v5252 = vpop.f32.mrb[0].mxu0
      %v5253 = vadd.f32 %v4932, %v5252
      %v5254 = vpop.f32.mrb[0].mxu0
      %5255 = vmatprep.mubr.f32.mxu0 0.0
      %5256 = vmatmul.mubr.f32.gmra.mrb[0].mxu0 %v5052
      %v5257 = vpop.f32.mrb[0].mxu0
      %v5258 = vadd.f32 %v4937, %v5257
      %v5259 = vpop.f32.mrb[0].mxu0
      %5260 = vmatprep.mubr.f32.mxu0 0.0
      %5261 = vmatmul.mubr.f32.gmra.mrb[0].mxu0 %v5055
      %v5262 = vpop.f32.mrb[0].mxu0
      %v5263 = vadd.f32 %v4942, %v5262
      %v5264 = vpop.f32.mrb[0].mxu0
      %5265 = vmatprep.mubr.f32.mxu0 0.0
      %5266 = vmatmul.mubr.f32.gmra.mrb[0].mxu0 %v5058
      %v5267 = vpop.f32.mrb[0].mxu0
      %v5268 = vadd.f32 %v4947, %v5267
      %v5269 = vpop.f32.mrb[0].mxu0
      %5270 = vmatprep.mubr.f32.mxu0 0.0
      %5271 = vmatmul.mubr.f32.gmra.mrb[0].mxu0 %v5061
      %v5272 = vpop.f32.mrb[0].mxu0
      %v5273 = vadd.f32 %v4952, %v5272
      %v5274 = vpop.f32.mrb[0].mxu0
      %5275 = vmatprep.mubr.f32.mxu0 0.0
      %5276 = vmatmul.mubr.f32.gmra.mrb[0].mxu0 %v5064
      %v5277 = vpop.f32.mrb[0].mxu0
      %v5278 = vadd.f32 %v4957, %v5277
      %v5279 = vpop.f32.mrb[0].mxu0
      %5280 = vmatprep.mubr.f32.mxu0 0.0
      %5281 = vmatmul.mubr.f32.gmra.mrb[0].mxu0 %v5067
      %v5282 = vpop.f32.mrb[0].mxu0
      %v5283 = vadd.f32 %v4962, %v5282
      %v5284 = vpop.f32.mrb[0].mxu0
      %5285 = vmatprep.mubr.f32.mxu0 0.0
      %5286 = vmatmul.mubr.f32.gmra.mrb[0].mxu0 %v5070
      %v5287 = vpop.f32.mrb[0].mxu0
      %v5288 = vadd.f32 %v4967, %v5287
      %v5289 = vpop.f32.mrb[0].mxu0
      %5290 = vmatprep.mubr.f32.mxu0 0.0
      %5291 = vmatmul.mubr.f32.gmra.mrb[0].mxu0 %v5073
      %v5292 = vpop.f32.mrb[0].mxu0
      %v5293 = vadd.f32 %v4972, %v5292
      %v5294 = vpop.f32.mrb[0].mxu0
      %5295 = vmatprep.mubr.f32.mxu0 0.0
      %5296 = vmatmul.mubr.f32.gmra.mrb[0].mxu0 %v5076
      %v5297 = vpop.f32.mrb[0].mxu0
      %v5298 = vadd.f32 %v4977, %v5297
      %v5299 = vpop.f32.mrb[0].mxu0
      %5300 = vmatprep.mubr.f32.mxu0 0.0
      %5301 = vmatmul.mubr.f32.gmra.mrb[0].mxu0 %v5079
      %v5302 = vpop.f32.mrb[0].mxu0
      %v5303 = vadd.f32 %v4982, %v5302
      %v5304 = vpop.f32.mrb[0].mxu0
      %5305 = vdwg.mxu0
      %v5307 = vlaneseq
      %v5308 = vshrl.u32 %v5307, 7
      %v5309 = vsub.s32 0, %v5308
      %v5310 = vrot.slane %v1917, %v5309
      %v5312 = vadd.f32 %v5148, %v5310
      %v5313 = vadd.f32 %v5153, %v5310
      %v5314 = vadd.f32 %v5158, %v5310
      %v5315 = vadd.f32 %v5163, %v5310
      %v5316 = vadd.f32 %v5168, %v5310
      %v5317 = vadd.f32 %v5173, %v5310
      %v5318 = vadd.f32 %v5178, %v5310
      %v5319 = vadd.f32 %v5183, %v5310
      %v5320 = vadd.f32 %v5188, %v5310
      %v5321 = vadd.f32 %v5193, %v5310
      %v5322 = vadd.f32 %v5198, %v5310
      %v5323 = vadd.f32 %v5203, %v5310
      %v5324 = vadd.f32 %v5208, %v5310
      %v5325 = vadd.f32 %v5213, %v5310
      %v5326 = vadd.f32 %v5218, %v5310
      %v5327 = vadd.f32 %v5223, %v5310
      %v5328 = vadd.f32 %v5228, %v5310
      %v5329 = vadd.f32 %v5233, %v5310
      %v5330 = vadd.f32 %v5238, %v5310
      %v5331 = vadd.f32 %v5243, %v5310
      %v5332 = vadd.f32 %v5248, %v5310
      %v5333 = vadd.f32 %v5253, %v5310
      %v5334 = vadd.f32 %v5258, %v5310
      %v5335 = vadd.f32 %v5263, %v5310
      %v5336 = vadd.f32 %v5268, %v5310
      %v5337 = vadd.f32 %v5273, %v5310
      %v5338 = vadd.f32 %v5278, %v5310
      %v5339 = vadd.f32 %v5283, %v5310
      %v5340 = vadd.f32 %v5288, %v5310
      %v5341 = vadd.f32 %v5293, %v5310
      %v5342 = vadd.f32 %v5298, %v5310
      %v5343 = vadd.f32 %v5303, %v5310
      %5344 = vst.msk [vmem:[%s285] sm:$0xff] %vm351, %v5312
      %5345 = vst.msk [vmem:[%s285 + $0x8] sm:$0xff] %vm351, %v5313
      %5346 = vst.msk [vmem:[%s285 + $0x10] sm:$0xff] %vm351, %v5314
      %5347 = vst.msk [vmem:[%s285 + $0x18] sm:$0xff] %vm351, %v5315
      %5348 = vst.msk [vmem:[%s285 + $0x20] sm:$0xff] %vm351, %v5316
      %5349 = vst.msk [vmem:[%s285 + $0x28] sm:$0xff] %vm351, %v5317
      %5350 = vst.msk [vmem:[%s285 + $0x30] sm:$0xff] %vm351, %v5318
      %5351 = vst.msk [vmem:[%s285 + $0x38] sm:$0xff] %vm351, %v5319
      %5352 = vst.msk [vmem:[%s285 + $0x40] sm:$0xff] %vm351, %v5320
      %5353 = vst.msk [vmem:[%s285 + $0x48] sm:$0xff] %vm351, %v5321
      %5354 = vst.msk [vmem:[%s285 + $0x50] sm:$0xff] %vm351, %v5322
      %5355 = vst.msk [vmem:[%s285 + $0x58] sm:$0xff] %vm351, %v5323
      %5356 = vst.msk [vmem:[%s285 + $0x60] sm:$0xff] %vm351, %v5324
      %5357 = vst.msk [vmem:[%s285 + $0x68] sm:$0xff] %vm351, %v5325
      %5358 = vst.msk [vmem:[%s285 + $0x70] sm:$0xff] %vm351, %v5326
      %5359 = vst.msk [vmem:[%s285 + $0x78] sm:$0xff] %vm351, %v5327
      %5360 = vst.msk [vmem:[%s285 + $0x80] sm:$0xff] %vm351, %v5328
      %5361 = vst.msk [vmem:[%s285 + $0x88] sm:$0xff] %vm351, %v5329
      %5362 = vst.msk [vmem:[%s285 + $0x90] sm:$0xff] %vm351, %v5330
      %5363 = vst.msk [vmem:[%s285 + $0x98] sm:$0xff] %vm351, %v5331
      %5364 = vst.msk [vmem:[%s285 + $0xa0] sm:$0xff] %vm351, %v5332
      %5365 = vst.msk [vmem:[%s285 + $0xa8] sm:$0xff] %vm351, %v5333
      %5366 = vst.msk [vmem:[%s285 + $0xb0] sm:$0xff] %vm351, %v5334
      %5367 = vst.msk [vmem:[%s285 + $0xb8] sm:$0xff] %vm351, %v5335
      %5368 = vst.msk [vmem:[%s285 + $0xc0] sm:$0xff] %vm351, %v5336
      %5369 = vst.msk [vmem:[%s285 + $0xc8] sm:$0xff] %vm351, %v5337
      %5370 = vst.msk [vmem:[%s285 + $0xd0] sm:$0xff] %vm351, %v5338
      %5371 = vst.msk [vmem:[%s285 + $0xd8] sm:$0xff] %vm351, %v5339
      %5372 = vst.msk [vmem:[%s285 + $0xe0] sm:$0xff] %vm351, %v5340
      %5373 = vst.msk [vmem:[%s285 + $0xe8] sm:$0xff] %vm351, %v5341
      %5374 = vst.msk [vmem:[%s285 + $0xf0] sm:$0xff] %vm351, %v5342
      %5375 = vst.msk [vmem:[%s285 + $0xf8] sm:$0xff] %vm351, %v5343
      %5408 = vrot.lane.b32.xlu0 %v1755, 96
      %v5409 = vpop.permute.xlu0 %5408
      %5410 = vrot.lane.b32.xlu0 %v1760, 96
      %v5411 = vpop.permute.xlu0 %5410
      %5412 = vrot.lane.b32.xlu0 %v1765, 96
      %v5413 = vpop.permute.xlu0 %5412
      %5414 = vrot.lane.b32.xlu0 %v1770, 96
      %v5415 = vpop.permute.xlu0 %5414
      %5416 = vrot.lane.b32.xlu0 %v1775, 96
      %v5417 = vpop.permute.xlu0 %5416
      %5418 = vrot.lane.b32.xlu0 %v1780, 96
      %v5419 = vpop.permute.xlu0 %5418
      %5420 = vrot.lane.b32.xlu0 %v1785, 96
      %v5421 = vpop.permute.xlu0 %5420
      %5422 = vrot.lane.b32.xlu0 %v1790, 96
      %v5423 = vpop.permute.xlu0 %5422
      %5424 = vrot.lane.b32.xlu0 %v1795, 96
      %v5425 = vpop.permute.xlu0 %5424
      %5426 = vrot.lane.b32.xlu0 %v1800, 96
      %v5427 = vpop.permute.xlu0 %5426
      %5428 = vrot.lane.b32.xlu0 %v1805, 96
      %v5429 = vpop.permute.xlu0 %5428
      %5430 = vrot.lane.b32.xlu0 %v1810, 96
      %v5431 = vpop.permute.xlu0 %5430
      %5432 = vrot.lane.b32.xlu0 %v1815, 96
      %v5433 = vpop.permute.xlu0 %5432
      %5434 = vrot.lane.b32.xlu0 %v1820, 96
      %v5435 = vpop.permute.xlu0 %5434
      %5436 = vrot.lane.b32.xlu0 %v1825, 96
      %v5437 = vpop.permute.xlu0 %5436
      %5438 = vrot.lane.b32.xlu0 %v1830, 96
      %v5439 = vpop.permute.xlu0 %5438
      %5440 = vrot.lane.b32.xlu0 %v1835, 96
      %v5441 = vpop.permute.xlu0 %5440
      %5442 = vrot.lane.b32.xlu0 %v1840, 96
      %v5443 = vpop.permute.xlu0 %5442
      %5444 = vrot.lane.b32.xlu0 %v1845, 96
      %v5445 = vpop.permute.xlu0 %5444
      %5446 = vrot.lane.b32.xlu0 %v1850, 96
      %v5447 = vpop.permute.xlu0 %5446
      %5448 = vrot.lane.b32.xlu0 %v1855, 96
      %v5449 = vpop.permute.xlu0 %5448
      %5450 = vrot.lane.b32.xlu0 %v1860, 96
      %v5451 = vpop.permute.xlu0 %5450
      %5452 = vrot.lane.b32.xlu0 %v1865, 96
      %v5453 = vpop.permute.xlu0 %5452
      %5454 = vrot.lane.b32.xlu0 %v1870, 96
      %v5455 = vpop.permute.xlu0 %5454
      %5456 = vrot.lane.b32.xlu0 %v1875, 96
      %v5457 = vpop.permute.xlu0 %5456
      %5458 = vrot.lane.b32.xlu0 %v1880, 96
      %v5459 = vpop.permute.xlu0 %5458
      %5460 = vrot.lane.b32.xlu0 %v1885, 96
      %v5461 = vpop.permute.xlu0 %5460
      %5462 = vrot.lane.b32.xlu0 %v1890, 96
      %v5463 = vpop.permute.xlu0 %5462
      %5464 = vrot.lane.b32.xlu0 %v1895, 96
      %v5465 = vpop.permute.xlu0 %5464
      %5466 = vrot.lane.b32.xlu0 %v1900, 96
      %v5467 = vpop.permute.xlu0 %5466
      %5468 = vrot.lane.b32.xlu0 %v1905, 96
      %v5469 = vpop.permute.xlu0 %5468
      %5470 = vrot.lane.b32.xlu0 %v1910, 96
      %v5471 = vpop.permute.xlu0 %5470
      %v5472 = vsel %vm351, %v1755, 0
      %v5474 = vsel %vm351, %v1760, 0
      %v5476 = vsel %vm351, %v1765, 0
      %v5478 = vsel %vm351, %v1770, 0
      %v5480 = vsel %vm351, %v1775, 0
      %v5482 = vsel %vm351, %v1780, 0
      %v5484 = vsel %vm351, %v1785, 0
      %v5486 = vsel %vm351, %v1790, 0
      %v5488 = vsel %vm351, %v1795, 0
      %v5490 = vsel %vm351, %v1800, 0
      %v5492 = vsel %vm351, %v1805, 0
      %v5494 = vsel %vm351, %v1810, 0
      %v5496 = vsel %vm351, %v1815, 0
      %v5498 = vsel %vm351, %v1820, 0
      %v5500 = vsel %vm351, %v1825, 0
      %v5502 = vsel %vm351, %v1830, 0
      %v5504 = vsel %vm351, %v1835, 0
      %v5506 = vsel %vm351, %v1840, 0
      %v5508 = vsel %vm351, %v1845, 0
      %v5510 = vsel %vm351, %v1850, 0
      %v5512 = vsel %vm351, %v1855, 0
      %v5514 = vsel %vm351, %v1860, 0
      %v5516 = vsel %vm351, %v1865, 0
      %v5518 = vsel %vm351, %v1870, 0
      %v5520 = vsel %vm351, %v1875, 0
      %v5522 = vsel %vm351, %v1880, 0
      %v5524 = vsel %vm351, %v1885, 0
      %v5526 = vsel %vm351, %v1890, 0
      %v5528 = vsel %vm351, %v1895, 0
      %v5530 = vsel %vm351, %v1900, 0
      %v5532 = vsel %vm351, %v1905, 0
      %v5534 = vsel %vm351, %v1910, 0
      %v5536 = vsel %vm351, %v5409, 0
      %v5538 = vsel %vm351, %v5411, 0
      %v5540 = vsel %vm351, %v5413, 0
      %v5542 = vsel %vm351, %v5415, 0
      %v5544 = vsel %vm351, %v5417, 0
      %v5546 = vsel %vm351, %v5419, 0
      %v5548 = vsel %vm351, %v5421, 0
      %v5550 = vsel %vm351, %v5423, 0
      %v5552 = vsel %vm351, %v5425, 0
      %v5554 = vsel %vm351, %v5427, 0
      %v5556 = vsel %vm351, %v5429, 0
      %v5558 = vsel %vm351, %v5431, 0
      %v5560 = vsel %vm351, %v5433, 0
      %v5562 = vsel %vm351, %v5435, 0
      %v5564 = vsel %vm351, %v5437, 0
      %v5566 = vsel %vm351, %v5439, 0
      %v5568 = vsel %vm351, %v5441, 0
      %v5570 = vsel %vm351, %v5443, 0
      %v5572 = vsel %vm351, %v5445, 0
      %v5574 = vsel %vm351, %v5447, 0
      %v5576 = vsel %vm351, %v5449, 0
      %v5578 = vsel %vm351, %v5451, 0
      %v5580 = vsel %vm351, %v5453, 0
      %v5582 = vsel %vm351, %v5455, 0
      %v5584 = vsel %vm351, %v5457, 0
      %v5586 = vsel %vm351, %v5459, 0
      %v5588 = vsel %vm351, %v5461, 0
      %v5590 = vsel %vm351, %v5463, 0
      %v5592 = vsel %vm351, %v5465, 0
      %v5594 = vsel %vm351, %v5467, 0
      %v5596 = vsel %vm351, %v5469, 0
      %v5598 = vsel %vm351, %v5471, 0
      %5600 = vmatprep.subr.mxu0 0.0
      %5601 = vmatpush1.xpose.msra.mxu0 %v5536
      %5602 = vmatprep.subr.mxu0 0.0
      %5603 = vmatpush1.xpose.msra.mxu0 %v5538
      %5604 = vmatprep.subr.mxu0 0.0
      %5605 = vmatpush1.xpose.msra.mxu0 %v5540
      %5606 = vmatprep.subr.mxu0 0.0
      %5607 = vmatpush1.xpose.msra.mxu0 %v5542
      %5608 = vmatprep.subr.mxu0 0.0
      %5609 = vmatpush1.xpose.msra.mxu0 %v5544
      %5610 = vmatprep.subr.mxu0 0.0
      %5611 = vmatpush1.xpose.msra.mxu0 %v5546
      %5612 = vmatprep.subr.mxu0 0.0
      %5613 = vmatpush1.xpose.msra.mxu0 %v5548
      %5614 = vmatprep.subr.mxu0 0.0
      %5615 = vmatpush1.xpose.msra.mxu0 %v5550
      %5616 = vmatprep.subr.mxu0 0.0
      %5617 = vmatpush1.xpose.msra.mxu0 %v5552
      %5618 = vmatprep.subr.mxu0 0.0
      %5619 = vmatpush1.xpose.msra.mxu0 %v5554
      %5620 = vmatprep.subr.mxu0 0.0
      %5621 = vmatpush1.xpose.msra.mxu0 %v5556
      %5622 = vmatprep.subr.mxu0 0.0
      %5623 = vmatpush1.xpose.msra.mxu0 %v5558
      %5624 = vmatprep.subr.mxu0 0.0
      %5625 = vmatpush1.xpose.msra.mxu0 %v5560
      %5626 = vmatprep.subr.mxu0 0.0
      %5627 = vmatpush1.xpose.msra.mxu0 %v5562
      %5628 = vmatprep.subr.mxu0 0.0
      %5629 = vmatpush1.xpose.msra.mxu0 %v5564
      %5630 = vmatprep.subr.mxu0 0.0
      %5631 = vmatpush1.xpose.msra.mxu0 %v5566
      %5632 = vmatprep.subr.mxu0 0.0
      %5633 = vmatpush1.xpose.msra.mxu0 %v5568
      %5634 = vmatprep.subr.mxu0 0.0
      %5635 = vmatpush1.xpose.msra.mxu0 %v5570
      %5636 = vmatprep.subr.mxu0 0.0
      %5637 = vmatpush1.xpose.msra.mxu0 %v5572
      %5638 = vmatprep.subr.mxu0 0.0
      %5639 = vmatpush1.xpose.msra.mxu0 %v5574
      %5640 = vmatprep.subr.mxu0 0.0
      %5641 = vmatpush1.xpose.msra.mxu0 %v5576
      %5642 = vmatprep.subr.mxu0 0.0
      %5643 = vmatpush1.xpose.msra.mxu0 %v5578
      %5644 = vmatprep.subr.mxu0 0.0
      %5645 = vmatpush1.xpose.msra.mxu0 %v5580
      %5646 = vmatprep.subr.mxu0 0.0
      %5647 = vmatpush1.xpose.msra.mxu0 %v5582
      %5648 = vmatprep.subr.mxu0 0.0
      %5649 = vmatpush1.xpose.msra.mxu0 %v5584
      %5650 = vmatprep.subr.mxu0 0.0
      %5651 = vmatpush1.xpose.msra.mxu0 %v5586
      %5652 = vmatprep.subr.mxu0 0.0
      %5653 = vmatpush1.xpose.msra.mxu0 %v5588
      %5654 = vmatprep.subr.mxu0 0.0
      %5655 = vmatpush1.xpose.msra.mxu0 %v5590
      %5656 = vmatprep.subr.mxu0 0.0
      %5657 = vmatpush1.xpose.msra.mxu0 %v5592
      %5658 = vmatprep.subr.mxu0 0.0
      %5659 = vmatpush1.xpose.msra.mxu0 %v5594
      %5660 = vmatprep.subr.mxu0 0.0
      %5661 = vmatpush1.xpose.msra.mxu0 %v5596
      %5662 = vmatprep.subr.mxu0 0.0
      %5663 = vmatpush1.xpose.msra.mxu0 %v5598
      %5664 = vmatprep.mubr.f32.mxu0 0.0
      %5665 = vmatmul.mubr.f32.gmra.mrb[0].mxu0 %v5472
      %v5666 = vpop.f32.mrb[0].mxu0
      %v5667 = vadd.f32 0.0, %v5666
      %v5668 = vpop.f32.mrb[0].mxu0
      %v5669 = vadd.f32 0.0, %v5668
      %5670 = vmatprep.mubr.f32.mxu0 0.0
      %5671 = vmatmul.mubr.f32.gmra.mrb[0].mxu0 %v5474
      %v5672 = vpop.f32.mrb[0].mxu0
      %v5673 = vadd.f32 0.0, %v5672
      %v5674 = vpop.f32.mrb[0].mxu0
      %v5675 = vadd.f32 0.0, %v5674
      %5676 = vmatprep.mubr.f32.mxu0 0.0
      %5677 = vmatmul.mubr.f32.gmra.mrb[0].mxu0 %v5476
      %v5678 = vpop.f32.mrb[0].mxu0
      %v5679 = vadd.f32 0.0, %v5678
      %v5680 = vpop.f32.mrb[0].mxu0
      %v5681 = vadd.f32 0.0, %v5680
      %5682 = vmatprep.mubr.f32.mxu0 0.0
      %5683 = vmatmul.mubr.f32.gmra.mrb[0].mxu0 %v5478
      %v5684 = vpop.f32.mrb[0].mxu0
      %v5685 = vadd.f32 0.0, %v5684
      %v5686 = vpop.f32.mrb[0].mxu0
      %v5687 = vadd.f32 0.0, %v5686
      %5688 = vmatprep.mubr.f32.mxu0 0.0
      %5689 = vmatmul.mubr.f32.gmra.mrb[0].mxu0 %v5480
      %v5690 = vpop.f32.mrb[0].mxu0
      %v5691 = vadd.f32 0.0, %v5690
      %v5692 = vpop.f32.mrb[0].mxu0
      %v5693 = vadd.f32 0.0, %v5692
      %5694 = vmatprep.mubr.f32.mxu0 0.0
      %5695 = vmatmul.mubr.f32.gmra.mrb[0].mxu0 %v5482
      %v5696 = vpop.f32.mrb[0].mxu0
      %v5697 = vadd.f32 0.0, %v5696
      %v5698 = vpop.f32.mrb[0].mxu0
      %v5699 = vadd.f32 0.0, %v5698
      %5700 = vmatprep.mubr.f32.mxu0 0.0
      %5701 = vmatmul.mubr.f32.gmra.mrb[0].mxu0 %v5484
      %v5702 = vpop.f32.mrb[0].mxu0
      %v5703 = vadd.f32 0.0, %v5702
      %v5704 = vpop.f32.mrb[0].mxu0
      %v5705 = vadd.f32 0.0, %v5704
      %5706 = vmatprep.mubr.f32.mxu0 0.0
      %5707 = vmatmul.mubr.f32.gmra.mrb[0].mxu0 %v5486
      %v5708 = vpop.f32.mrb[0].mxu0
      %v5709 = vadd.f32 0.0, %v5708
      %v5710 = vpop.f32.mrb[0].mxu0
      %v5711 = vadd.f32 0.0, %v5710
      %5712 = vmatprep.mubr.f32.mxu0 0.0
      %5713 = vmatmul.mubr.f32.gmra.mrb[0].mxu0 %v5488
      %v5714 = vpop.f32.mrb[0].mxu0
      %v5715 = vadd.f32 0.0, %v5714
      %v5716 = vpop.f32.mrb[0].mxu0
      %v5717 = vadd.f32 0.0, %v5716
      %5718 = vmatprep.mubr.f32.mxu0 0.0
      %5719 = vmatmul.mubr.f32.gmra.mrb[0].mxu0 %v5490
      %v5720 = vpop.f32.mrb[0].mxu0
      %v5721 = vadd.f32 0.0, %v5720
      %v5722 = vpop.f32.mrb[0].mxu0
      %v5723 = vadd.f32 0.0, %v5722
      %5724 = vmatprep.mubr.f32.mxu0 0.0
      %5725 = vmatmul.mubr.f32.gmra.mrb[0].mxu0 %v5492
      %v5726 = vpop.f32.mrb[0].mxu0
      %v5727 = vadd.f32 0.0, %v5726
      %v5728 = vpop.f32.mrb[0].mxu0
      %v5729 = vadd.f32 0.0, %v5728
      %5730 = vmatprep.mubr.f32.mxu0 0.0
      %5731 = vmatmul.mubr.f32.gmra.mrb[0].mxu0 %v5494
      %v5732 = vpop.f32.mrb[0].mxu0
      %v5733 = vadd.f32 0.0, %v5732
      %v5734 = vpop.f32.mrb[0].mxu0
      %v5735 = vadd.f32 0.0, %v5734
      %5736 = vmatprep.mubr.f32.mxu0 0.0
      %5737 = vmatmul.mubr.f32.gmra.mrb[0].mxu0 %v5496
      %v5738 = vpop.f32.mrb[0].mxu0
      %v5739 = vadd.f32 0.0, %v5738
      %v5740 = vpop.f32.mrb[0].mxu0
      %v5741 = vadd.f32 0.0, %v5740
      %5742 = vmatprep.mubr.f32.mxu0 0.0
      %5743 = vmatmul.mubr.f32.gmra.mrb[0].mxu0 %v5498
      %v5744 = vpop.f32.mrb[0].mxu0
      %v5745 = vadd.f32 0.0, %v5744
      %v5746 = vpop.f32.mrb[0].mxu0
      %v5747 = vadd.f32 0.0, %v5746
      %5748 = vmatprep.mubr.f32.mxu0 0.0
      %5749 = vmatmul.mubr.f32.gmra.mrb[0].mxu0 %v5500
      %v5750 = vpop.f32.mrb[0].mxu0
      %v5751 = vadd.f32 0.0, %v5750
      %v5752 = vpop.f32.mrb[0].mxu0
      %v5753 = vadd.f32 0.0, %v5752
      %5754 = vmatprep.mubr.f32.mxu0 0.0
      %5755 = vmatmul.mubr.f32.gmra.mrb[0].mxu0 %v5502
      %v5756 = vpop.f32.mrb[0].mxu0
      %v5757 = vadd.f32 0.0, %v5756
      %v5758 = vpop.f32.mrb[0].mxu0
      %v5759 = vadd.f32 0.0, %v5758
      %5760 = vmatprep.mubr.f32.mxu0 0.0
      %5761 = vmatmul.mubr.f32.gmra.mrb[0].mxu0 %v5504
      %v5762 = vpop.f32.mrb[0].mxu0
      %v5763 = vadd.f32 0.0, %v5762
      %v5764 = vpop.f32.mrb[0].mxu0
      %v5765 = vadd.f32 0.0, %v5764
      %5766 = vmatprep.mubr.f32.mxu0 0.0
      %5767 = vmatmul.mubr.f32.gmra.mrb[0].mxu0 %v5506
      %v5768 = vpop.f32.mrb[0].mxu0
      %v5769 = vadd.f32 0.0, %v5768
      %v5770 = vpop.f32.mrb[0].mxu0
      %v5771 = vadd.f32 0.0, %v5770
      %5772 = vmatprep.mubr.f32.mxu0 0.0
      %5773 = vmatmul.mubr.f32.gmra.mrb[0].mxu0 %v5508
      %v5774 = vpop.f32.mrb[0].mxu0
      %v5775 = vadd.f32 0.0, %v5774
      %v5776 = vpop.f32.mrb[0].mxu0
      %v5777 = vadd.f32 0.0, %v5776
      %5778 = vmatprep.mubr.f32.mxu0 0.0
      %5779 = vmatmul.mubr.f32.gmra.mrb[0].mxu0 %v5510
      %v5780 = vpop.f32.mrb[0].mxu0
      %v5781 = vadd.f32 0.0, %v5780
      %v5782 = vpop.f32.mrb[0].mxu0
      %v5783 = vadd.f32 0.0, %v5782
      %5784 = vmatprep.mubr.f32.mxu0 0.0
      %5785 = vmatmul.mubr.f32.gmra.mrb[0].mxu0 %v5512
      %v5786 = vpop.f32.mrb[0].mxu0
      %v5787 = vadd.f32 0.0, %v5786
      %v5788 = vpop.f32.mrb[0].mxu0
      %v5789 = vadd.f32 0.0, %v5788
      %5790 = vmatprep.mubr.f32.mxu0 0.0
      %5791 = vmatmul.mubr.f32.gmra.mrb[0].mxu0 %v5514
      %v5792 = vpop.f32.mrb[0].mxu0
      %v5793 = vadd.f32 0.0, %v5792
      %v5794 = vpop.f32.mrb[0].mxu0
      %v5795 = vadd.f32 0.0, %v5794
      %5796 = vmatprep.mubr.f32.mxu0 0.0
      %5797 = vmatmul.mubr.f32.gmra.mrb[0].mxu0 %v5516
      %v5798 = vpop.f32.mrb[0].mxu0
      %v5799 = vadd.f32 0.0, %v5798
      %v5800 = vpop.f32.mrb[0].mxu0
      %v5801 = vadd.f32 0.0, %v5800
      %5802 = vmatprep.mubr.f32.mxu0 0.0
      %5803 = vmatmul.mubr.f32.gmra.mrb[0].mxu0 %v5518
      %v5804 = vpop.f32.mrb[0].mxu0
      %v5805 = vadd.f32 0.0, %v5804
      %v5806 = vpop.f32.mrb[0].mxu0
      %v5807 = vadd.f32 0.0, %v5806
      %5808 = vmatprep.mubr.f32.mxu0 0.0
      %5809 = vmatmul.mubr.f32.gmra.mrb[0].mxu0 %v5520
      %v5810 = vpop.f32.mrb[0].mxu0
      %v5811 = vadd.f32 0.0, %v5810
      %v5812 = vpop.f32.mrb[0].mxu0
      %v5813 = vadd.f32 0.0, %v5812
      %5814 = vmatprep.mubr.f32.mxu0 0.0
      %5815 = vmatmul.mubr.f32.gmra.mrb[0].mxu0 %v5522
      %v5816 = vpop.f32.mrb[0].mxu0
      %v5817 = vadd.f32 0.0, %v5816
      %v5818 = vpop.f32.mrb[0].mxu0
      %v5819 = vadd.f32 0.0, %v5818
      %5820 = vmatprep.mubr.f32.mxu0 0.0
      %5821 = vmatmul.mubr.f32.gmra.mrb[0].mxu0 %v5524
      %v5822 = vpop.f32.mrb[0].mxu0
      %v5823 = vadd.f32 0.0, %v5822
      %v5824 = vpop.f32.mrb[0].mxu0
      %v5825 = vadd.f32 0.0, %v5824
      %5826 = vmatprep.mubr.f32.mxu0 0.0
      %5827 = vmatmul.mubr.f32.gmra.mrb[0].mxu0 %v5526
      %v5828 = vpop.f32.mrb[0].mxu0
      %v5829 = vadd.f32 0.0, %v5828
      %v5830 = vpop.f32.mrb[0].mxu0
      %v5831 = vadd.f32 0.0, %v5830
      %5832 = vmatprep.mubr.f32.mxu0 0.0
      %5833 = vmatmul.mubr.f32.gmra.mrb[0].mxu0 %v5528
      %v5834 = vpop.f32.mrb[0].mxu0
      %v5835 = vadd.f32 0.0, %v5834
      %v5836 = vpop.f32.mrb[0].mxu0
      %v5837 = vadd.f32 0.0, %v5836
      %5838 = vmatprep.mubr.f32.mxu0 0.0
      %5839 = vmatmul.mubr.f32.gmra.mrb[0].mxu0 %v5530
      %v5840 = vpop.f32.mrb[0].mxu0
      %v5841 = vadd.f32 0.0, %v5840
      %v5842 = vpop.f32.mrb[0].mxu0
      %v5843 = vadd.f32 0.0, %v5842
      %5844 = vmatprep.mubr.f32.mxu0 0.0
      %5845 = vmatmul.mubr.f32.gmra.mrb[0].mxu0 %v5532
      %v5846 = vpop.f32.mrb[0].mxu0
      %v5847 = vadd.f32 0.0, %v5846
      %v5848 = vpop.f32.mrb[0].mxu0
      %v5849 = vadd.f32 0.0, %v5848
      %5850 = vmatprep.mubr.f32.mxu0 0.0
      %5851 = vmatmul.mubr.f32.gmra.mrb[0].mxu0 %v5534
      %v5852 = vpop.f32.mrb[0].mxu0
      %v5853 = vadd.f32 0.0, %v5852
      %v5854 = vpop.f32.mrb[0].mxu0
      %v5855 = vadd.f32 0.0, %v5854
      %5856 = vdwg.mxu0
      %v5857 = vmax.f32 %v5667, %v5669
      %5858 = vmax.xlane.f32.xlu0 %v5857
      %v5859 = vpop.xlane.xlu0 %5858
      %v5860 = vmax.f32 %v5673, %v5675
      %5861 = vmax.xlane.f32.xlu0 %v5860
      %v5862 = vpop.xlane.xlu0 %5861
      %v5863 = vmax.f32 %v5679, %v5681
      %5864 = vmax.xlane.f32.xlu0 %v5863
      %v5865 = vpop.xlane.xlu0 %5864
      %v5866 = vmax.f32 %v5685, %v5687
      %5867 = vmax.xlane.f32.xlu0 %v5866
      %v5868 = vpop.xlane.xlu0 %5867
      %v5869 = vmax.f32 %v5691, %v5693
      %5870 = vmax.xlane.f32.xlu0 %v5869
      %v5871 = vpop.xlane.xlu0 %5870
      %v5872 = vmax.f32 %v5697, %v5699
      %5873 = vmax.xlane.f32.xlu0 %v5872
      %v5874 = vpop.xlane.xlu0 %5873
      %v5875 = vmax.f32 %v5703, %v5705
      %5876 = vmax.xlane.f32.xlu0 %v5875
      %v5877 = vpop.xlane.xlu0 %5876
      %v5878 = vmax.f32 %v5709, %v5711
      %5879 = vmax.xlane.f32.xlu0 %v5878
      %v5880 = vpop.xlane.xlu0 %5879
      %v5881 = vmax.f32 %v5715, %v5717
      %5882 = vmax.xlane.f32.xlu0 %v5881
      %v5883 = vpop.xlane.xlu0 %5882
      %v5884 = vmax.f32 %v5721, %v5723
      %5885 = vmax.xlane.f32.xlu0 %v5884
      %v5886 = vpop.xlane.xlu0 %5885
      %v5887 = vmax.f32 %v5727, %v5729
      %5888 = vmax.xlane.f32.xlu0 %v5887
      %v5889 = vpop.xlane.xlu0 %5888
      %v5890 = vmax.f32 %v5733, %v5735
      %5891 = vmax.xlane.f32.xlu0 %v5890
      %v5892 = vpop.xlane.xlu0 %5891
      %v5893 = vmax.f32 %v5739, %v5741
      %5894 = vmax.xlane.f32.xlu0 %v5893
      %v5895 = vpop.xlane.xlu0 %5894
      %v5896 = vmax.f32 %v5745, %v5747
      %5897 = vmax.xlane.f32.xlu0 %v5896
      %v5898 = vpop.xlane.xlu0 %5897
      %v5899 = vmax.f32 %v5751, %v5753
      %5900 = vmax.xlane.f32.xlu0 %v5899
      %v5901 = vpop.xlane.xlu0 %5900
      %v5902 = vmax.f32 %v5757, %v5759
      %5903 = vmax.xlane.f32.xlu0 %v5902
      %v5904 = vpop.xlane.xlu0 %5903
      %v5905 = vmax.f32 %v5763, %v5765
      %5906 = vmax.xlane.f32.xlu0 %v5905
      %v5907 = vpop.xlane.xlu0 %5906
      %v5908 = vmax.f32 %v5769, %v5771
      %5909 = vmax.xlane.f32.xlu0 %v5908
      %v5910 = vpop.xlane.xlu0 %5909
      %v5911 = vmax.f32 %v5775, %v5777
      %5912 = vmax.xlane.f32.xlu0 %v5911
      %v5913 = vpop.xlane.xlu0 %5912
      %v5914 = vmax.f32 %v5781, %v5783
      %5915 = vmax.xlane.f32.xlu0 %v5914
      %v5916 = vpop.xlane.xlu0 %5915
      %v5917 = vmax.f32 %v5787, %v5789
      %5918 = vmax.xlane.f32.xlu0 %v5917
      %v5919 = vpop.xlane.xlu0 %5918
      %v5920 = vmax.f32 %v5793, %v5795
      %5921 = vmax.xlane.f32.xlu0 %v5920
      %v5922 = vpop.xlane.xlu0 %5921
      %v5923 = vmax.f32 %v5799, %v5801
      %5924 = vmax.xlane.f32.xlu0 %v5923
      %v5925 = vpop.xlane.xlu0 %5924
      %v5926 = vmax.f32 %v5805, %v5807
      %5927 = vmax.xlane.f32.xlu0 %v5926
      %v5928 = vpop.xlane.xlu0 %5927
      %v5929 = vmax.f32 %v5811, %v5813
      %5930 = vmax.xlane.f32.xlu0 %v5929
      %v5931 = vpop.xlane.xlu0 %5930
      %v5932 = vmax.f32 %v5817, %v5819
      %5933 = vmax.xlane.f32.xlu0 %v5932
      %v5934 = vpop.xlane.xlu0 %5933
      %v5935 = vmax.f32 %v5823, %v5825
      %5936 = vmax.xlane.f32.xlu0 %v5935
      %v5937 = vpop.xlane.xlu0 %5936
      %v5938 = vmax.f32 %v5829, %v5831
      %5939 = vmax.xlane.f32.xlu0 %v5938
      %v5940 = vpop.xlane.xlu0 %5939
      %v5941 = vmax.f32 %v5835, %v5837
      %5942 = vmax.xlane.f32.xlu0 %v5941
      %v5943 = vpop.xlane.xlu0 %5942
      %v5944 = vmax.f32 %v5841, %v5843
      %5945 = vmax.xlane.f32.xlu0 %v5944
      %v5946 = vpop.xlane.xlu0 %5945
      %v5947 = vmax.f32 %v5847, %v5849
      %5948 = vmax.xlane.f32.xlu0 %v5947
      %v5949 = vpop.xlane.xlu0 %5948
      %v5950 = vmax.f32 %v5853, %v5855
      %5951 = vmax.xlane.f32.xlu0 %v5950
      %v5952 = vpop.xlane.xlu0 %5951
      %v5953 = vsub.f32 %v5667, %v5859
      %v5954 = vsub.f32 %v5669, %v5859
      %v5955 = vsub.f32 %v5673, %v5862
      %v5956 = vsub.f32 %v5675, %v5862
      %v5957 = vsub.f32 %v5679, %v5865
      %v5958 = vsub.f32 %v5681, %v5865
      %v5959 = vsub.f32 %v5685, %v5868
      %v5960 = vsub.f32 %v5687, %v5868
      %v5961 = vsub.f32 %v5691, %v5871
      %v5962 = vsub.f32 %v5693, %v5871
      %v5963 = vsub.f32 %v5697, %v5874
      %v5964 = vsub.f32 %v5699, %v5874
      %v5965 = vsub.f32 %v5703, %v5877
      %v5966 = vsub.f32 %v5705, %v5877
      %v5967 = vsub.f32 %v5709, %v5880
      %v5968 = vsub.f32 %v5711, %v5880
      %v5969 = vsub.f32 %v5715, %v5883
      %v5970 = vsub.f32 %v5717, %v5883
      %v5971 = vsub.f32 %v5721, %v5886
      %v5972 = vsub.f32 %v5723, %v5886
      %v5973 = vsub.f32 %v5727, %v5889
      %v5974 = vsub.f32 %v5729, %v5889
      %v5975 = vsub.f32 %v5733, %v5892
      %v5976 = vsub.f32 %v5735, %v5892
      %v5977 = vsub.f32 %v5739, %v5895
      %v5978 = vsub.f32 %v5741, %v5895
      %v5979 = vsub.f32 %v5745, %v5898
      %v5980 = vsub.f32 %v5747, %v5898
      %v5981 = vsub.f32 %v5751, %v5901
      %v5982 = vsub.f32 %v5753, %v5901
      %v5983 = vsub.f32 %v5757, %v5904
      %v5984 = vsub.f32 %v5759, %v5904
      %v5985 = vsub.f32 %v5763, %v5907
      %v5986 = vsub.f32 %v5765, %v5907
      %v5987 = vsub.f32 %v5769, %v5910
      %v5988 = vsub.f32 %v5771, %v5910
      %v5989 = vsub.f32 %v5775, %v5913
      %v5990 = vsub.f32 %v5777, %v5913
      %v5991 = vsub.f32 %v5781, %v5916
      %v5992 = vsub.f32 %v5783, %v5916
      %v5993 = vsub.f32 %v5787, %v5919
      %v5994 = vsub.f32 %v5789, %v5919
      %v5995 = vsub.f32 %v5793, %v5922
      %v5996 = vsub.f32 %v5795, %v5922
      %v5997 = vsub.f32 %v5799, %v5925
      %v5998 = vsub.f32 %v5801, %v5925
      %v5999 = vsub.f32 %v5805, %v5928
      %v6000 = vsub.f32 %v5807, %v5928
      %v6001 = vsub.f32 %v5811, %v5931
      %v6002 = vsub.f32 %v5813, %v5931
      %v6003 = vsub.f32 %v5817, %v5934
      %v6004 = vsub.f32 %v5819, %v5934
      %v6005 = vsub.f32 %v5823, %v5937
      %v6006 = vsub.f32 %v5825, %v5937
      %v6007 = vsub.f32 %v5829, %v5940
      %v6008 = vsub.f32 %v5831, %v5940
      %v6009 = vsub.f32 %v5835, %v5943
      %v6010 = vsub.f32 %v5837, %v5943
      %v6011 = vsub.f32 %v5841, %v5946
      %v6012 = vsub.f32 %v5843, %v5946
      %v6013 = vsub.f32 %v5847, %v5949
      %v6014 = vsub.f32 %v5849, %v5949
      %v6015 = vsub.f32 %v5853, %v5952
      %v6016 = vsub.f32 %v5855, %v5952
      %v6017 = vmul.f32 %v5953, 1.442695
      %v6018 = vpow.pop %v6017
      %v6019 = vmul.f32 %v5954, 1.442695
      %v6020 = vpow.pop %v6019
      %v6021 = vmul.f32 %v5955, 1.442695
      %v6022 = vpow.pop %v6021
      %v6023 = vmul.f32 %v5956, 1.442695
      %v6024 = vpow.pop %v6023
      %v6025 = vmul.f32 %v5957, 1.442695
      %v6026 = vpow.pop %v6025
      %v6027 = vmul.f32 %v5958, 1.442695
      %v6028 = vpow.pop %v6027
      %v6029 = vmul.f32 %v5959, 1.442695
      %v6030 = vpow.pop %v6029
      %v6031 = vmul.f32 %v5960, 1.442695
      %v6032 = vpow.pop %v6031
      %v6033 = vmul.f32 %v5961, 1.442695
      %v6034 = vpow.pop %v6033
      %v6035 = vmul.f32 %v5962, 1.442695
      %v6036 = vpow.pop %v6035
      %v6037 = vmul.f32 %v5963, 1.442695
      %v6038 = vpow.pop %v6037
      %v6039 = vmul.f32 %v5964, 1.442695
      %v6040 = vpow.pop %v6039
      %v6041 = vmul.f32 %v5965, 1.442695
      %v6042 = vpow.pop %v6041
      %v6043 = vmul.f32 %v5966, 1.442695
      %v6044 = vpow.pop %v6043
      %v6045 = vmul.f32 %v5967, 1.442695
      %v6046 = vpow.pop %v6045
      %v6047 = vmul.f32 %v5968, 1.442695
      %v6048 = vpow.pop %v6047
      %v6049 = vmul.f32 %v5969, 1.442695
      %v6050 = vpow.pop %v6049
      %v6051 = vmul.f32 %v5970, 1.442695
      %v6052 = vpow.pop %v6051
      %v6053 = vmul.f32 %v5971, 1.442695
      %v6054 = vpow.pop %v6053
      %v6055 = vmul.f32 %v5972, 1.442695
      %v6056 = vpow.pop %v6055
      %v6057 = vmul.f32 %v5973, 1.442695
      %v6058 = vpow.pop %v6057
      %v6059 = vmul.f32 %v5974, 1.442695
      %v6060 = vpow.pop %v6059
      %v6061 = vmul.f32 %v5975, 1.442695
      %v6062 = vpow.pop %v6061
      %v6063 = vmul.f32 %v5976, 1.442695
      %v6064 = vpow.pop %v6063
      %v6065 = vmul.f32 %v5977, 1.442695
      %v6066 = vpow.pop %v6065
      %v6067 = vmul.f32 %v5978, 1.442695
      %v6068 = vpow.pop %v6067
      %v6069 = vmul.f32 %v5979, 1.442695
      %v6070 = vpow.pop %v6069
      %v6071 = vmul.f32 %v5980, 1.442695
      %v6072 = vpow.pop %v6071
      %v6073 = vmul.f32 %v5981, 1.442695
      %v6074 = vpow.pop %v6073
      %v6075 = vmul.f32 %v5982, 1.442695
      %v6076 = vpow.pop %v6075
      %v6077 = vmul.f32 %v5983, 1.442695
      %v6078 = vpow.pop %v6077
      %v6079 = vmul.f32 %v5984, 1.442695
      %v6080 = vpow.pop %v6079
      %v6081 = vmul.f32 %v5985, 1.442695
      %v6082 = vpow.pop %v6081
      %v6083 = vmul.f32 %v5986, 1.442695
      %v6084 = vpow.pop %v6083
      %v6085 = vmul.f32 %v5987, 1.442695
      %v6086 = vpow.pop %v6085
      %v6087 = vmul.f32 %v5988, 1.442695
      %v6088 = vpow.pop %v6087
      %v6089 = vmul.f32 %v5989, 1.442695
      %v6090 = vpow.pop %v6089
      %v6091 = vmul.f32 %v5990, 1.442695
      %v6092 = vpow.pop %v6091
      %v6093 = vmul.f32 %v5991, 1.442695
      %v6094 = vpow.pop %v6093
      %v6095 = vmul.f32 %v5992, 1.442695
      %v6096 = vpow.pop %v6095
      %v6097 = vmul.f32 %v5993, 1.442695
      %v6098 = vpow.pop %v6097
      %v6099 = vmul.f32 %v5994, 1.442695
      %v6100 = vpow.pop %v6099
      %v6101 = vmul.f32 %v5995, 1.442695
      %v6102 = vpow.pop %v6101
      %v6103 = vmul.f32 %v5996, 1.442695
      %v6104 = vpow.pop %v6103
      %v6105 = vmul.f32 %v5997, 1.442695
      %v6106 = vpow.pop %v6105
      %v6107 = vmul.f32 %v5998, 1.442695
      %v6108 = vpow.pop %v6107
      %v6109 = vmul.f32 %v5999, 1.442695
      %v6110 = vpow.pop %v6109
      %v6111 = vmul.f32 %v6000, 1.442695
      %v6112 = vpow.pop %v6111
      %v6113 = vmul.f32 %v6001, 1.442695
      %v6114 = vpow.pop %v6113
      %v6115 = vmul.f32 %v6002, 1.442695
      %v6116 = vpow.pop %v6115
      %v6117 = vmul.f32 %v6003, 1.442695
      %v6118 = vpow.pop %v6117
      %v6119 = vmul.f32 %v6004, 1.442695
      %v6120 = vpow.pop %v6119
      %v6121 = vmul.f32 %v6005, 1.442695
      %v6122 = vpow.pop %v6121
      %v6123 = vmul.f32 %v6006, 1.442695
      %v6124 = vpow.pop %v6123
      %v6125 = vmul.f32 %v6007, 1.442695
      %v6126 = vpow.pop %v6125
      %v6127 = vmul.f32 %v6008, 1.442695
      %v6128 = vpow.pop %v6127
      %v6129 = vmul.f32 %v6009, 1.442695
      %v6130 = vpow.pop %v6129
      %v6131 = vmul.f32 %v6010, 1.442695
      %v6132 = vpow.pop %v6131
      %v6133 = vmul.f32 %v6011, 1.442695
      %v6134 = vpow.pop %v6133
      %v6135 = vmul.f32 %v6012, 1.442695
      %v6136 = vpow.pop %v6135
      %v6137 = vmul.f32 %v6013, 1.442695
      %v6138 = vpow.pop %v6137
      %v6139 = vmul.f32 %v6014, 1.442695
      %v6140 = vpow.pop %v6139
      %v6141 = vmul.f32 %v6015, 1.442695
      %v6142 = vpow.pop %v6141
      %v6143 = vmul.f32 %v6016, 1.442695
      %v6144 = vpow.pop %v6143
      %v6145 = vadd.f32 %v6018, %v6020
      %6146 = vadd.xlane.f32.xlu0 %v6145
      %v6147 = vpop.xlane.xlu0 %6146
      %v6148 = vadd.f32 %v6022, %v6024
      %6149 = vadd.xlane.f32.xlu0 %v6148
      %v6150 = vpop.xlane.xlu0 %6149
      %v6151 = vadd.f32 %v6026, %v6028
      %6152 = vadd.xlane.f32.xlu0 %v6151
      %v6153 = vpop.xlane.xlu0 %6152
      %v6154 = vadd.f32 %v6030, %v6032
      %6155 = vadd.xlane.f32.xlu0 %v6154
      %v6156 = vpop.xlane.xlu0 %6155
      %v6157 = vadd.f32 %v6034, %v6036
      %6158 = vadd.xlane.f32.xlu0 %v6157
      %v6159 = vpop.xlane.xlu0 %6158
      %v6160 = vadd.f32 %v6038, %v6040
      %6161 = vadd.xlane.f32.xlu0 %v6160
      %v6162 = vpop.xlane.xlu0 %6161
      %v6163 = vadd.f32 %v6042, %v6044
      %6164 = vadd.xlane.f32.xlu0 %v6163
      %v6165 = vpop.xlane.xlu0 %6164
      %v6166 = vadd.f32 %v6046, %v6048
      %6167 = vadd.xlane.f32.xlu0 %v6166
      %v6168 = vpop.xlane.xlu0 %6167
      %v6169 = vadd.f32 %v6050, %v6052
      %6170 = vadd.xlane.f32.xlu0 %v6169
      %v6171 = vpop.xlane.xlu0 %6170
      %v6172 = vadd.f32 %v6054, %v6056
      %6173 = vadd.xlane.f32.xlu0 %v6172
      %v6174 = vpop.xlane.xlu0 %6173
      %v6175 = vadd.f32 %v6058, %v6060
      %6176 = vadd.xlane.f32.xlu0 %v6175
      %v6177 = vpop.xlane.xlu0 %6176
      %v6178 = vadd.f32 %v6062, %v6064
      %6179 = vadd.xlane.f32.xlu0 %v6178
      %v6180 = vpop.xlane.xlu0 %6179
      %v6181 = vadd.f32 %v6066, %v6068
      %6182 = vadd.xlane.f32.xlu0 %v6181
      %v6183 = vpop.xlane.xlu0 %6182
      %v6184 = vadd.f32 %v6070, %v6072
      %6185 = vadd.xlane.f32.xlu0 %v6184
      %v6186 = vpop.xlane.xlu0 %6185
      %v6187 = vadd.f32 %v6074, %v6076
      %6188 = vadd.xlane.f32.xlu0 %v6187
      %v6189 = vpop.xlane.xlu0 %6188
      %v6190 = vadd.f32 %v6078, %v6080
      %6191 = vadd.xlane.f32.xlu0 %v6190
      %v6192 = vpop.xlane.xlu0 %6191
      %v6193 = vadd.f32 %v6082, %v6084
      %6194 = vadd.xlane.f32.xlu0 %v6193
      %v6195 = vpop.xlane.xlu0 %6194
      %v6196 = vadd.f32 %v6086, %v6088
      %6197 = vadd.xlane.f32.xlu0 %v6196
      %v6198 = vpop.xlane.xlu0 %6197
      %v6199 = vadd.f32 %v6090, %v6092
      %6200 = vadd.xlane.f32.xlu0 %v6199
      %v6201 = vpop.xlane.xlu0 %6200
      %v6202 = vadd.f32 %v6094, %v6096
      %6203 = vadd.xlane.f32.xlu0 %v6202
      %v6204 = vpop.xlane.xlu0 %6203
      %v6205 = vadd.f32 %v6098, %v6100
      %6206 = vadd.xlane.f32.xlu0 %v6205
      %v6207 = vpop.xlane.xlu0 %6206
      %v6208 = vadd.f32 %v6102, %v6104
      %6209 = vadd.xlane.f32.xlu0 %v6208
      %v6210 = vpop.xlane.xlu0 %6209
      %v6211 = vadd.f32 %v6106, %v6108
      %6212 = vadd.xlane.f32.xlu0 %v6211
      %v6213 = vpop.xlane.xlu0 %6212
      %v6214 = vadd.f32 %v6110, %v6112
      %6215 = vadd.xlane.f32.xlu0 %v6214
      %v6216 = vpop.xlane.xlu0 %6215
      %v6217 = vadd.f32 %v6114, %v6116
      %6218 = vadd.xlane.f32.xlu0 %v6217
      %v6219 = vpop.xlane.xlu0 %6218
      %v6220 = vadd.f32 %v6118, %v6120
      %6221 = vadd.xlane.f32.xlu0 %v6220
      %v6222 = vpop.xlane.xlu0 %6221
      %v6223 = vadd.f32 %v6122, %v6124
      %6224 = vadd.xlane.f32.xlu0 %v6223
      %v6225 = vpop.xlane.xlu0 %6224
      %v6226 = vadd.f32 %v6126, %v6128
      %6227 = vadd.xlane.f32.xlu0 %v6226
      %v6228 = vpop.xlane.xlu0 %6227
      %v6229 = vadd.f32 %v6130, %v6132
      %6230 = vadd.xlane.f32.xlu0 %v6229
      %v6231 = vpop.xlane.xlu0 %6230
      %v6232 = vadd.f32 %v6134, %v6136
      %6233 = vadd.xlane.f32.xlu0 %v6232
      %v6234 = vpop.xlane.xlu0 %6233
      %v6235 = vadd.f32 %v6138, %v6140
      %6236 = vadd.xlane.f32.xlu0 %v6235
      %v6237 = vpop.xlane.xlu0 %6236
      %v6238 = vadd.f32 %v6142, %v6144
      %6239 = vadd.xlane.f32.xlu0 %v6238
      %v6240 = vpop.xlane.xlu0 %6239
      %6241 = vrot.lane.b32.xlu0 %v1755, 64
      %v6242 = vpop.permute.xlu0 %6241
      %6243 = vrot.lane.b32.xlu0 %v1760, 64
      %v6244 = vpop.permute.xlu0 %6243
      %6245 = vrot.lane.b32.xlu0 %v1765, 64
      %v6246 = vpop.permute.xlu0 %6245
      %6247 = vrot.lane.b32.xlu0 %v1770, 64
      %v6248 = vpop.permute.xlu0 %6247
      %6249 = vrot.lane.b32.xlu0 %v1775, 64
      %v6250 = vpop.permute.xlu0 %6249
      %6251 = vrot.lane.b32.xlu0 %v1780, 64
      %v6252 = vpop.permute.xlu0 %6251
      %6253 = vrot.lane.b32.xlu0 %v1785, 64
      %v6254 = vpop.permute.xlu0 %6253
      %6255 = vrot.lane.b32.xlu0 %v1790, 64
      %v6256 = vpop.permute.xlu0 %6255
      %6257 = vrot.lane.b32.xlu0 %v1795, 64
      %v6258 = vpop.permute.xlu0 %6257
      %6259 = vrot.lane.b32.xlu0 %v1800, 64
      %v6260 = vpop.permute.xlu0 %6259
      %6261 = vrot.lane.b32.xlu0 %v1805, 64
      %v6262 = vpop.permute.xlu0 %6261
      %6263 = vrot.lane.b32.xlu0 %v1810, 64
      %v6264 = vpop.permute.xlu0 %6263
      %6265 = vrot.lane.b32.xlu0 %v1815, 64
      %v6266 = vpop.permute.xlu0 %6265
      %6267 = vrot.lane.b32.xlu0 %v1820, 64
      %v6268 = vpop.permute.xlu0 %6267
      %6269 = vrot.lane.b32.xlu0 %v1825, 64
      %v6270 = vpop.permute.xlu0 %6269
      %6271 = vrot.lane.b32.xlu0 %v1830, 64
      %v6272 = vpop.permute.xlu0 %6271
      %6273 = vrot.lane.b32.xlu0 %v1835, 64
      %v6274 = vpop.permute.xlu0 %6273
      %6275 = vrot.lane.b32.xlu0 %v1840, 64
      %v6276 = vpop.permute.xlu0 %6275
      %6277 = vrot.lane.b32.xlu0 %v1845, 64
      %v6278 = vpop.permute.xlu0 %6277
      %6279 = vrot.lane.b32.xlu0 %v1850, 64
      %v6280 = vpop.permute.xlu0 %6279
      %6281 = vrot.lane.b32.xlu0 %v1855, 64
      %v6282 = vpop.permute.xlu0 %6281
      %6283 = vrot.lane.b32.xlu0 %v1860, 64
      %v6284 = vpop.permute.xlu0 %6283
      %6285 = vrot.lane.b32.xlu0 %v1865, 64
      %v6286 = vpop.permute.xlu0 %6285
      %6287 = vrot.lane.b32.xlu0 %v1870, 64
      %v6288 = vpop.permute.xlu0 %6287
      %6289 = vrot.lane.b32.xlu0 %v1875, 64
      %v6290 = vpop.permute.xlu0 %6289
      %6291 = vrot.lane.b32.xlu0 %v1880, 64
      %v6292 = vpop.permute.xlu0 %6291
      %6293 = vrot.lane.b32.xlu0 %v1885, 64
      %v6294 = vpop.permute.xlu0 %6293
      %6295 = vrot.lane.b32.xlu0 %v1890, 64
      %v6296 = vpop.permute.xlu0 %6295
      %6297 = vrot.lane.b32.xlu0 %v1895, 64
      %v6298 = vpop.permute.xlu0 %6297
      %6299 = vrot.lane.b32.xlu0 %v1900, 64
      %v6300 = vpop.permute.xlu0 %6299
      %6301 = vrot.lane.b32.xlu0 %v1905, 64
      %v6302 = vpop.permute.xlu0 %6301
      %6303 = vrot.lane.b32.xlu0 %v1910, 64
      %v6304 = vpop.permute.xlu0 %6303
      %6337 = vmatprep.subr.mxu0 0.0
      %6338 = vmatpush1.msra.mxu0 %v6242
      %6339 = vmatprep.subr.mxu0 0.0
      %6340 = vmatpush1.msra.mxu0 %v6244
      %6341 = vmatprep.subr.mxu0 0.0
      %6342 = vmatpush1.msra.mxu0 %v6246
      %6343 = vmatprep.subr.mxu0 0.0
      %6344 = vmatpush1.msra.mxu0 %v6248
      %6345 = vmatprep.subr.mxu0 0.0
      %6346 = vmatpush1.msra.mxu0 %v6250
      %6347 = vmatprep.subr.mxu0 0.0
      %6348 = vmatpush1.msra.mxu0 %v6252
      %6349 = vmatprep.subr.mxu0 0.0
      %6350 = vmatpush1.msra.mxu0 %v6254
      %6351 = vmatprep.subr.mxu0 0.0
      %6352 = vmatpush1.msra.mxu0 %v6256
      %6353 = vmatprep.subr.mxu0 0.0
      %6354 = vmatpush1.msra.mxu0 %v6258
      %6355 = vmatprep.subr.mxu0 0.0
      %6356 = vmatpush1.msra.mxu0 %v6260
      %6357 = vmatprep.subr.mxu0 0.0
      %6358 = vmatpush1.msra.mxu0 %v6262
      %6359 = vmatprep.subr.mxu0 0.0
      %6360 = vmatpush1.msra.mxu0 %v6264
      %6361 = vmatprep.subr.mxu0 0.0
      %6362 = vmatpush1.msra.mxu0 %v6266
      %6363 = vmatprep.subr.mxu0 0.0
      %6364 = vmatpush1.msra.mxu0 %v6268
      %6365 = vmatprep.subr.mxu0 0.0
      %6366 = vmatpush1.msra.mxu0 %v6270
      %6367 = vmatprep.subr.mxu0 0.0
      %6368 = vmatpush1.msra.mxu0 %v6272
      %6369 = vmatprep.subr.mxu0 0.0
      %6370 = vmatpush1.msra.mxu0 %v6274
      %6371 = vmatprep.subr.mxu0 0.0
      %6372 = vmatpush1.msra.mxu0 %v6276
      %6373 = vmatprep.subr.mxu0 0.0
      %6374 = vmatpush1.msra.mxu0 %v6278
      %6375 = vmatprep.subr.mxu0 0.0
      %6376 = vmatpush1.msra.mxu0 %v6280
      %6377 = vmatprep.subr.mxu0 0.0
      %6378 = vmatpush1.msra.mxu0 %v6282
      %6379 = vmatprep.subr.mxu0 0.0
      %6380 = vmatpush1.msra.mxu0 %v6284
      %6381 = vmatprep.subr.mxu0 0.0
      %6382 = vmatpush1.msra.mxu0 %v6286
      %6383 = vmatprep.subr.mxu0 0.0
      %6384 = vmatpush1.msra.mxu0 %v6288
      %6385 = vmatprep.subr.mxu0 0.0
      %6386 = vmatpush1.msra.mxu0 %v6290
      %6387 = vmatprep.subr.mxu0 0.0
      %6388 = vmatpush1.msra.mxu0 %v6292
      %6389 = vmatprep.subr.mxu0 0.0
      %6390 = vmatpush1.msra.mxu0 %v6294
      %6391 = vmatprep.subr.mxu0 0.0
      %6392 = vmatpush1.msra.mxu0 %v6296
      %6393 = vmatprep.subr.mxu0 0.0
      %6394 = vmatpush1.msra.mxu0 %v6298
      %6395 = vmatprep.subr.mxu0 0.0
      %6396 = vmatpush1.msra.mxu0 %v6300
      %6397 = vmatprep.subr.mxu0 0.0
      %6398 = vmatpush1.msra.mxu0 %v6302
      %6399 = vmatprep.subr.mxu0 0.0
      %6400 = vmatpush1.msra.mxu0 %v6304
      %6401 = vmatprep.mubr.f32.mxu0 %v6020
      %6402 = vmatmul.mubr.f32.gmra.mrb[0].mxu0 %v6018
      %v6403 = vpop.f32.mrb[0].mxu0
      %v6404 = vadd.f32 0.0, %v6403
      %v6405 = vpop.f32.mrb[0].mxu0
      %6406 = vmatprep.mubr.f32.mxu0 %v6024
      %6407 = vmatmul.mubr.f32.gmra.mrb[0].mxu0 %v6022
      %v6408 = vpop.f32.mrb[0].mxu0
      %v6409 = vadd.f32 0.0, %v6408
      %v6410 = vpop.f32.mrb[0].mxu0
      %6411 = vmatprep.mubr.f32.mxu0 %v6028
      %6412 = vmatmul.mubr.f32.gmra.mrb[0].mxu0 %v6026
      %v6413 = vpop.f32.mrb[0].mxu0
      %v6414 = vadd.f32 0.0, %v6413
      %v6415 = vpop.f32.mrb[0].mxu0
      %6416 = vmatprep.mubr.f32.mxu0 %v6032
      %6417 = vmatmul.mubr.f32.gmra.mrb[0].mxu0 %v6030
      %v6418 = vpop.f32.mrb[0].mxu0
      %v6419 = vadd.f32 0.0, %v6418
      %v6420 = vpop.f32.mrb[0].mxu0
      %6421 = vmatprep.mubr.f32.mxu0 %v6036
      %6422 = vmatmul.mubr.f32.gmra.mrb[0].mxu0 %v6034
      %v6423 = vpop.f32.mrb[0].mxu0
      %v6424 = vadd.f32 0.0, %v6423
      %v6425 = vpop.f32.mrb[0].mxu0
      %6426 = vmatprep.mubr.f32.mxu0 %v6040
      %6427 = vmatmul.mubr.f32.gmra.mrb[0].mxu0 %v6038
      %v6428 = vpop.f32.mrb[0].mxu0
      %v6429 = vadd.f32 0.0, %v6428
      %v6430 = vpop.f32.mrb[0].mxu0
      %6431 = vmatprep.mubr.f32.mxu0 %v6044
      %6432 = vmatmul.mubr.f32.gmra.mrb[0].mxu0 %v6042
      %v6433 = vpop.f32.mrb[0].mxu0
      %v6434 = vadd.f32 0.0, %v6433
      %v6435 = vpop.f32.mrb[0].mxu0
      %6436 = vmatprep.mubr.f32.mxu0 %v6048
      %6437 = vmatmul.mubr.f32.gmra.mrb[0].mxu0 %v6046
      %v6438 = vpop.f32.mrb[0].mxu0
      %v6439 = vadd.f32 0.0, %v6438
      %v6440 = vpop.f32.mrb[0].mxu0
      %6441 = vmatprep.mubr.f32.mxu0 %v6052
      %6442 = vmatmul.mubr.f32.gmra.mrb[0].mxu0 %v6050
      %v6443 = vpop.f32.mrb[0].mxu0
      %v6444 = vadd.f32 0.0, %v6443
      %v6445 = vpop.f32.mrb[0].mxu0
      %6446 = vmatprep.mubr.f32.mxu0 %v6056
      %6447 = vmatmul.mubr.f32.gmra.mrb[0].mxu0 %v6054
      %v6448 = vpop.f32.mrb[0].mxu0
      %v6449 = vadd.f32 0.0, %v6448
      %v6450 = vpop.f32.mrb[0].mxu0
      %6451 = vmatprep.mubr.f32.mxu0 %v6060
      %6452 = vmatmul.mubr.f32.gmra.mrb[0].mxu0 %v6058
      %v6453 = vpop.f32.mrb[0].mxu0
      %v6454 = vadd.f32 0.0, %v6453
      %v6455 = vpop.f32.mrb[0].mxu0
      %6456 = vmatprep.mubr.f32.mxu0 %v6064
      %6457 = vmatmul.mubr.f32.gmra.mrb[0].mxu0 %v6062
      %v6458 = vpop.f32.mrb[0].mxu0
      %v6459 = vadd.f32 0.0, %v6458
      %v6460 = vpop.f32.mrb[0].mxu0
      %6461 = vmatprep.mubr.f32.mxu0 %v6068
      %6462 = vmatmul.mubr.f32.gmra.mrb[0].mxu0 %v6066
      %v6463 = vpop.f32.mrb[0].mxu0
      %v6464 = vadd.f32 0.0, %v6463
      %v6465 = vpop.f32.mrb[0].mxu0
      %6466 = vmatprep.mubr.f32.mxu0 %v6072
      %6467 = vmatmul.mubr.f32.gmra.mrb[0].mxu0 %v6070
      %v6468 = vpop.f32.mrb[0].mxu0
      %v6469 = vadd.f32 0.0, %v6468
      %v6470 = vpop.f32.mrb[0].mxu0
      %6471 = vmatprep.mubr.f32.mxu0 %v6076
      %6472 = vmatmul.mubr.f32.gmra.mrb[0].mxu0 %v6074
      %v6473 = vpop.f32.mrb[0].mxu0
      %v6474 = vadd.f32 0.0, %v6473
      %v6475 = vpop.f32.mrb[0].mxu0
      %6476 = vmatprep.mubr.f32.mxu0 %v6080
      %6477 = vmatmul.mubr.f32.gmra.mrb[0].mxu0 %v6078
      %v6478 = vpop.f32.mrb[0].mxu0
      %v6479 = vadd.f32 0.0, %v6478
      %v6480 = vpop.f32.mrb[0].mxu0
      %6481 = vmatprep.mubr.f32.mxu0 %v6084
      %6482 = vmatmul.mubr.f32.gmra.mrb[0].mxu0 %v6082
      %v6483 = vpop.f32.mrb[0].mxu0
      %v6484 = vadd.f32 0.0, %v6483
      %v6485 = vpop.f32.mrb[0].mxu0
      %6486 = vmatprep.mubr.f32.mxu0 %v6088
      %6487 = vmatmul.mubr.f32.gmra.mrb[0].mxu0 %v6086
      %v6488 = vpop.f32.mrb[0].mxu0
      %v6489 = vadd.f32 0.0, %v6488
      %v6490 = vpop.f32.mrb[0].mxu0
      %6491 = vmatprep.mubr.f32.mxu0 %v6092
      %6492 = vmatmul.mubr.f32.gmra.mrb[0].mxu0 %v6090
      %v6493 = vpop.f32.mrb[0].mxu0
      %v6494 = vadd.f32 0.0, %v6493
      %v6495 = vpop.f32.mrb[0].mxu0
      %6496 = vmatprep.mubr.f32.mxu0 %v6096
      %6497 = vmatmul.mubr.f32.gmra.mrb[0].mxu0 %v6094
      %v6498 = vpop.f32.mrb[0].mxu0
      %v6499 = vadd.f32 0.0, %v6498
      %v6500 = vpop.f32.mrb[0].mxu0
      %6501 = vmatprep.mubr.f32.mxu0 %v6100
      %6502 = vmatmul.mubr.f32.gmra.mrb[0].mxu0 %v6098
      %v6503 = vpop.f32.mrb[0].mxu0
      %v6504 = vadd.f32 0.0, %v6503
      %v6505 = vpop.f32.mrb[0].mxu0
      %6506 = vmatprep.mubr.f32.mxu0 %v6104
      %6507 = vmatmul.mubr.f32.gmra.mrb[0].mxu0 %v6102
      %v6508 = vpop.f32.mrb[0].mxu0
      %v6509 = vadd.f32 0.0, %v6508
      %v6510 = vpop.f32.mrb[0].mxu0
      %6511 = vmatprep.mubr.f32.mxu0 %v6108
      %6512 = vmatmul.mubr.f32.gmra.mrb[0].mxu0 %v6106
      %v6513 = vpop.f32.mrb[0].mxu0
      %v6514 = vadd.f32 0.0, %v6513
      %v6515 = vpop.f32.mrb[0].mxu0
      %6516 = vmatprep.mubr.f32.mxu0 %v6112
      %6517 = vmatmul.mubr.f32.gmra.mrb[0].mxu0 %v6110
      %v6518 = vpop.f32.mrb[0].mxu0
      %v6519 = vadd.f32 0.0, %v6518
      %v6520 = vpop.f32.mrb[0].mxu0
      %6521 = vmatprep.mubr.f32.mxu0 %v6116
      %6522 = vmatmul.mubr.f32.gmra.mrb[0].mxu0 %v6114
      %v6523 = vpop.f32.mrb[0].mxu0
      %v6524 = vadd.f32 0.0, %v6523
      %v6525 = vpop.f32.mrb[0].mxu0
      %6526 = vmatprep.mubr.f32.mxu0 %v6120
      %6527 = vmatmul.mubr.f32.gmra.mrb[0].mxu0 %v6118
      %v6528 = vpop.f32.mrb[0].mxu0
      %v6529 = vadd.f32 0.0, %v6528
      %v6530 = vpop.f32.mrb[0].mxu0
      %6531 = vmatprep.mubr.f32.mxu0 %v6124
      %6532 = vmatmul.mubr.f32.gmra.mrb[0].mxu0 %v6122
      %v6533 = vpop.f32.mrb[0].mxu0
      %v6534 = vadd.f32 0.0, %v6533
      %v6535 = vpop.f32.mrb[0].mxu0
      %6536 = vmatprep.mubr.f32.mxu0 %v6128
      %6537 = vmatmul.mubr.f32.gmra.mrb[0].mxu0 %v6126
      %v6538 = vpop.f32.mrb[0].mxu0
      %v6539 = vadd.f32 0.0, %v6538
      %v6540 = vpop.f32.mrb[0].mxu0
      %6541 = vmatprep.mubr.f32.mxu0 %v6132
      %6542 = vmatmul.mubr.f32.gmra.mrb[0].mxu0 %v6130
      %v6543 = vpop.f32.mrb[0].mxu0
      %v6544 = vadd.f32 0.0, %v6543
      %v6545 = vpop.f32.mrb[0].mxu0
      %6546 = vmatprep.mubr.f32.mxu0 %v6136
      %6547 = vmatmul.mubr.f32.gmra.mrb[0].mxu0 %v6134
      %v6548 = vpop.f32.mrb[0].mxu0
      %v6549 = vadd.f32 0.0, %v6548
      %v6550 = vpop.f32.mrb[0].mxu0
      %6551 = vmatprep.mubr.f32.mxu0 %v6140
      %6552 = vmatmul.mubr.f32.gmra.mrb[0].mxu0 %v6138
      %v6553 = vpop.f32.mrb[0].mxu0
      %v6554 = vadd.f32 0.0, %v6553
      %v6555 = vpop.f32.mrb[0].mxu0
      %6556 = vmatprep.mubr.f32.mxu0 %v6144
      %6557 = vmatmul.mubr.f32.gmra.mrb[0].mxu0 %v6142
      %v6558 = vpop.f32.mrb[0].mxu0
      %v6559 = vadd.f32 0.0, %v6558
      %v6560 = vpop.f32.mrb[0].mxu0
      %6561 = vdwg.mxu0
      %v6562 = vrcp.pop %v6147
      %v6563 = vrcp.pop %v6150
      %v6564 = vrcp.pop %v6153
      %v6565 = vrcp.pop %v6156
      %v6566 = vrcp.pop %v6159
      %v6567 = vrcp.pop %v6162
      %v6568 = vrcp.pop %v6165
      %v6569 = vrcp.pop %v6168
      %v6570 = vrcp.pop %v6171
      %v6571 = vrcp.pop %v6174
      %v6572 = vrcp.pop %v6177
      %v6573 = vrcp.pop %v6180
      %v6574 = vrcp.pop %v6183
      %v6575 = vrcp.pop %v6186
      %v6576 = vrcp.pop %v6189
      %v6577 = vrcp.pop %v6192
      %v6578 = vrcp.pop %v6195
      %v6579 = vrcp.pop %v6198
      %v6580 = vrcp.pop %v6201
      %v6581 = vrcp.pop %v6204
      %v6582 = vrcp.pop %v6207
      %v6583 = vrcp.pop %v6210
      %v6584 = vrcp.pop %v6213
      %v6585 = vrcp.pop %v6216
      %v6586 = vrcp.pop %v6219
      %v6587 = vrcp.pop %v6222
      %v6588 = vrcp.pop %v6225
      %v6589 = vrcp.pop %v6228
      %v6590 = vrcp.pop %v6231
      %v6591 = vrcp.pop %v6234
      %v6592 = vrcp.pop %v6237
      %v6593 = vrcp.pop %v6240
      %v6594 = vmul.f32 %v6404, %v6562
      %v6595 = vmul.f32 %v6409, %v6563
      %v6596 = vmul.f32 %v6414, %v6564
      %v6597 = vmul.f32 %v6419, %v6565
      %v6598 = vmul.f32 %v6424, %v6566
      %v6599 = vmul.f32 %v6429, %v6567
      %v6600 = vmul.f32 %v6434, %v6568
      %v6601 = vmul.f32 %v6439, %v6569
      %v6602 = vmul.f32 %v6444, %v6570
      %v6603 = vmul.f32 %v6449, %v6571
      %v6604 = vmul.f32 %v6454, %v6572
      %v6605 = vmul.f32 %v6459, %v6573
      %v6606 = vmul.f32 %v6464, %v6574
      %v6607 = vmul.f32 %v6469, %v6575
      %v6608 = vmul.f32 %v6474, %v6576
      %v6609 = vmul.f32 %v6479, %v6577
      %v6610 = vmul.f32 %v6484, %v6578
      %v6611 = vmul.f32 %v6489, %v6579
      %v6612 = vmul.f32 %v6494, %v6580
      %v6613 = vmul.f32 %v6499, %v6581
      %v6614 = vmul.f32 %v6504, %v6582
      %v6615 = vmul.f32 %v6509, %v6583
      %v6616 = vmul.f32 %v6514, %v6584
      %v6617 = vmul.f32 %v6519, %v6585
      %v6618 = vmul.f32 %v6524, %v6586
      %v6619 = vmul.f32 %v6529, %v6587
      %v6620 = vmul.f32 %v6534, %v6588
      %v6621 = vmul.f32 %v6539, %v6589
      %v6622 = vmul.f32 %v6544, %v6590
      %v6623 = vmul.f32 %v6549, %v6591
      %v6624 = vmul.f32 %v6554, %v6592
      %v6625 = vmul.f32 %v6559, %v6593
      %v6626 = vsel %vm3168, %v1755, 0.0
      %v6627 = vsel %vm3168, %v1760, 0.0
      %v6628 = vadd.f32 %v6626, %v6627
      %v6629 = vsel %vm3168, %v1765, 0.0
      %v6630 = vadd.f32 %v6628, %v6629
      %v6631 = vsel %vm3168, %v1770, 0.0
      %v6632 = vadd.f32 %v6630, %v6631
      %v6633 = vsel %vm3168, %v1775, 0.0
      %v6634 = vadd.f32 %v6632, %v6633
      %v6635 = vsel %vm3168, %v1780, 0.0
      %v6636 = vadd.f32 %v6634, %v6635
      %v6637 = vsel %vm3168, %v1785, 0.0
      %v6638 = vadd.f32 %v6636, %v6637
      %v6639 = vsel %vm3168, %v1790, 0.0
      %v6640 = vadd.f32 %v6638, %v6639
      %v6641 = vsel %vm3168, %v1795, 0.0
      %v6642 = vadd.f32 %v6640, %v6641
      %v6643 = vsel %vm3168, %v1800, 0.0
      %v6644 = vadd.f32 %v6642, %v6643
      %v6645 = vsel %vm3168, %v1805, 0.0
      %v6646 = vadd.f32 %v6644, %v6645
      %v6647 = vsel %vm3168, %v1810, 0.0
      %v6648 = vadd.f32 %v6646, %v6647
      %v6649 = vsel %vm3168, %v1815, 0.0
      %v6650 = vadd.f32 %v6648, %v6649
      %v6651 = vsel %vm3168, %v1820, 0.0
      %v6652 = vadd.f32 %v6650, %v6651
      %v6653 = vsel %vm3168, %v1825, 0.0
      %v6654 = vadd.f32 %v6652, %v6653
      %v6655 = vsel %vm3168, %v1830, 0.0
      %v6656 = vadd.f32 %v6654, %v6655
      %v6657 = vsel %vm3168, %v1835, 0.0
      %v6658 = vadd.f32 %v6656, %v6657
      %v6659 = vsel %vm3168, %v1840, 0.0
      %v6660 = vadd.f32 %v6658, %v6659
      %v6661 = vsel %vm3168, %v1845, 0.0
      %v6662 = vadd.f32 %v6660, %v6661
      %v6663 = vsel %vm3168, %v1850, 0.0
      %v6664 = vadd.f32 %v6662, %v6663
      %v6665 = vsel %vm3168, %v1855, 0.0
      %v6666 = vadd.f32 %v6664, %v6665
      %v6667 = vsel %vm3168, %v1860, 0.0
      %v6668 = vadd.f32 %v6666, %v6667
      %v6669 = vsel %vm3168, %v1865, 0.0
      %v6670 = vadd.f32 %v6668, %v6669
      %v6671 = vsel %vm3168, %v1870, 0.0
      %v6672 = vadd.f32 %v6670, %v6671
      %v6673 = vsel %vm3168, %v1875, 0.0
      %v6674 = vadd.f32 %v6672, %v6673
      %v6675 = vsel %vm3168, %v1880, 0.0
      %v6676 = vadd.f32 %v6674, %v6675
      %v6677 = vsel %vm3168, %v1885, 0.0
      %v6678 = vadd.f32 %v6676, %v6677
      %v6679 = vsel %vm3168, %v1890, 0.0
      %v6680 = vadd.f32 %v6678, %v6679
      %v6681 = vsel %vm3168, %v1895, 0.0
      %v6682 = vadd.f32 %v6680, %v6681
      %v6683 = vsel %vm3168, %v1900, 0.0
      %v6684 = vadd.f32 %v6682, %v6683
      %v6685 = vsel %vm3168, %v1905, 0.0
      %v6686 = vadd.f32 %v6684, %v6685
      %v6687 = vsel %vm3168, %v1910, 0.0
      %v6688 = vadd.f32 %v6686, %v6687
      %v6689 = vrot.slane %v6688, 4
      %v6690 = vadd.f32 %v6688, %v6689
      %v6691 = vrot.slane %v6690, 2
      %v6692 = vadd.f32 %v6690, %v6691
      %v6693 = vrot.slane %v6692, 1
      %v6694 = vadd.f32 %v6692, %v6693
      %v6695 = vmul.f32 %v6694, 1e-09
      %6697 = vrot.lane.b32.xlu0 %v6695, 64
      %v6698 = vpop.permute.xlu0 %6697
      %v6700 = vadd.f32 %v6594, %v6698
      %v6701 = vadd.f32 %v6595, %v6698
      %v6702 = vadd.f32 %v6596, %v6698
      %v6703 = vadd.f32 %v6597, %v6698
      %v6704 = vadd.f32 %v6598, %v6698
      %v6705 = vadd.f32 %v6599, %v6698
      %v6706 = vadd.f32 %v6600, %v6698
      %v6707 = vadd.f32 %v6601, %v6698
      %v6708 = vadd.f32 %v6602, %v6698
      %v6709 = vadd.f32 %v6603, %v6698
      %v6710 = vadd.f32 %v6604, %v6698
      %v6711 = vadd.f32 %v6605, %v6698
      %v6712 = vadd.f32 %v6606, %v6698
      %v6713 = vadd.f32 %v6607, %v6698
      %v6714 = vadd.f32 %v6608, %v6698
      %v6715 = vadd.f32 %v6609, %v6698
      %v6716 = vadd.f32 %v6610, %v6698
      %v6717 = vadd.f32 %v6611, %v6698
      %v6718 = vadd.f32 %v6612, %v6698
      %v6719 = vadd.f32 %v6613, %v6698
      %v6720 = vadd.f32 %v6614, %v6698
      %v6721 = vadd.f32 %v6615, %v6698
      %v6722 = vadd.f32 %v6616, %v6698
      %v6723 = vadd.f32 %v6617, %v6698
      %v6724 = vadd.f32 %v6618, %v6698
      %v6725 = vadd.f32 %v6619, %v6698
      %v6726 = vadd.f32 %v6620, %v6698
      %v6727 = vadd.f32 %v6621, %v6698
      %v6728 = vadd.f32 %v6622, %v6698
      %v6729 = vadd.f32 %v6623, %v6698
      %v6730 = vadd.f32 %v6624, %v6698
      %v6731 = vadd.f32 %v6625, %v6698
      %6732 = vrot.lane.b32.xlu0 %v1755, 112
      %v6733 = vpop.permute.xlu0 %6732
      %6734 = vrot.lane.b32.xlu0 %v1760, 112
      %v6735 = vpop.permute.xlu0 %6734
      %6736 = vrot.lane.b32.xlu0 %v1765, 112
      %v6737 = vpop.permute.xlu0 %6736
      %6738 = vrot.lane.b32.xlu0 %v1770, 112
      %v6739 = vpop.permute.xlu0 %6738
      %6740 = vrot.lane.b32.xlu0 %v1775, 112
      %v6741 = vpop.permute.xlu0 %6740
      %6742 = vrot.lane.b32.xlu0 %v1780, 112
      %v6743 = vpop.permute.xlu0 %6742
      %6744 = vrot.lane.b32.xlu0 %v1785, 112
      %v6745 = vpop.permute.xlu0 %6744
      %6746 = vrot.lane.b32.xlu0 %v1790, 112
      %v6747 = vpop.permute.xlu0 %6746
      %6748 = vrot.lane.b32.xlu0 %v1795, 112
      %v6749 = vpop.permute.xlu0 %6748
      %6750 = vrot.lane.b32.xlu0 %v1800, 112
      %v6751 = vpop.permute.xlu0 %6750
      %6752 = vrot.lane.b32.xlu0 %v1805, 112
      %v6753 = vpop.permute.xlu0 %6752
      %6754 = vrot.lane.b32.xlu0 %v1810, 112
      %v6755 = vpop.permute.xlu0 %6754
      %6756 = vrot.lane.b32.xlu0 %v1815, 112
      %v6757 = vpop.permute.xlu0 %6756
      %6758 = vrot.lane.b32.xlu0 %v1820, 112
      %v6759 = vpop.permute.xlu0 %6758
      %6760 = vrot.lane.b32.xlu0 %v1825, 112
      %v6761 = vpop.permute.xlu0 %6760
      %6762 = vrot.lane.b32.xlu0 %v1830, 112
      %v6763 = vpop.permute.xlu0 %6762
      %6764 = vrot.lane.b32.xlu0 %v1835, 112
      %v6765 = vpop.permute.xlu0 %6764
      %6766 = vrot.lane.b32.xlu0 %v1840, 112
      %v6767 = vpop.permute.xlu0 %6766
      %6768 = vrot.lane.b32.xlu0 %v1845, 112
      %v6769 = vpop.permute.xlu0 %6768
      %6770 = vrot.lane.b32.xlu0 %v1850, 112
      %v6771 = vpop.permute.xlu0 %6770
      %6772 = vrot.lane.b32.xlu0 %v1855, 112
      %v6773 = vpop.permute.xlu0 %6772
      %6774 = vrot.lane.b32.xlu0 %v1860, 112
      %v6775 = vpop.permute.xlu0 %6774
      %6776 = vrot.lane.b32.xlu0 %v1865, 112
      %v6777 = vpop.permute.xlu0 %6776
      %6778 = vrot.lane.b32.xlu0 %v1870, 112
      %v6779 = vpop.permute.xlu0 %6778
      %6780 = vrot.lane.b32.xlu0 %v1875, 112
      %v6781 = vpop.permute.xlu0 %6780
      %6782 = vrot.lane.b32.xlu0 %v1880, 112
      %v6783 = vpop.permute.xlu0 %6782
      %6784 = vrot.lane.b32.xlu0 %v1885, 112
      %v6785 = vpop.permute.xlu0 %6784
      %6786 = vrot.lane.b32.xlu0 %v1890, 112
      %v6787 = vpop.permute.xlu0 %6786
      %6788 = vrot.lane.b32.xlu0 %v1895, 112
      %v6789 = vpop.permute.xlu0 %6788
      %6790 = vrot.lane.b32.xlu0 %v1900, 112
      %v6791 = vpop.permute.xlu0 %6790
      %6792 = vrot.lane.b32.xlu0 %v1905, 112
      %v6793 = vpop.permute.xlu0 %6792
      %6794 = vrot.lane.b32.xlu0 %v1910, 112
      %v6795 = vpop.permute.xlu0 %6794
      %6796 = vrot.lane.b32.xlu0 %v1755, 80
      %v6797 = vpop.permute.xlu0 %6796
      %6798 = vrot.lane.b32.xlu0 %v1760, 80
      %v6799 = vpop.permute.xlu0 %6798
      %6800 = vrot.lane.b32.xlu0 %v1765, 80
      %v6801 = vpop.permute.xlu0 %6800
      %6802 = vrot.lane.b32.xlu0 %v1770, 80
      %v6803 = vpop.permute.xlu0 %6802
      %6804 = vrot.lane.b32.xlu0 %v1775, 80
      %v6805 = vpop.permute.xlu0 %6804
      %6806 = vrot.lane.b32.xlu0 %v1780, 80
      %v6807 = vpop.permute.xlu0 %6806
      %6808 = vrot.lane.b32.xlu0 %v1785, 80
      %v6809 = vpop.permute.xlu0 %6808
      %6810 = vrot.lane.b32.xlu0 %v1790, 80
      %v6811 = vpop.permute.xlu0 %6810
      %6812 = vrot.lane.b32.xlu0 %v1795, 80
      %v6813 = vpop.permute.xlu0 %6812
      %6814 = vrot.lane.b32.xlu0 %v1800, 80
      %v6815 = vpop.permute.xlu0 %6814
      %6816 = vrot.lane.b32.xlu0 %v1805, 80
      %v6817 = vpop.permute.xlu0 %6816
      %6818 = vrot.lane.b32.xlu0 %v1810, 80
      %v6819 = vpop.permute.xlu0 %6818
      %6820 = vrot.lane.b32.xlu0 %v1815, 80
      %v6821 = vpop.permute.xlu0 %6820
      %6822 = vrot.lane.b32.xlu0 %v1820, 80
      %v6823 = vpop.permute.xlu0 %6822
      %6824 = vrot.lane.b32.xlu0 %v1825, 80
      %v6825 = vpop.permute.xlu0 %6824
      %6826 = vrot.lane.b32.xlu0 %v1830, 80
      %v6827 = vpop.permute.xlu0 %6826
      %6828 = vrot.lane.b32.xlu0 %v1835, 80
      %v6829 = vpop.permute.xlu0 %6828
      %6830 = vrot.lane.b32.xlu0 %v1840, 80
      %v6831 = vpop.permute.xlu0 %6830
      %6832 = vrot.lane.b32.xlu0 %v1845, 80
      %v6833 = vpop.permute.xlu0 %6832
      %6834 = vrot.lane.b32.xlu0 %v1850, 80
      %v6835 = vpop.permute.xlu0 %6834
      %6836 = vrot.lane.b32.xlu0 %v1855, 80
      %v6837 = vpop.permute.xlu0 %6836
      %6838 = vrot.lane.b32.xlu0 %v1860, 80
      %v6839 = vpop.permute.xlu0 %6838
      %6840 = vrot.lane.b32.xlu0 %v1865, 80
      %v6841 = vpop.permute.xlu0 %6840
      %6842 = vrot.lane.b32.xlu0 %v1870, 80
      %v6843 = vpop.permute.xlu0 %6842
      %6844 = vrot.lane.b32.xlu0 %v1875, 80
      %v6845 = vpop.permute.xlu0 %6844
      %6846 = vrot.lane.b32.xlu0 %v1880, 80
      %v6847 = vpop.permute.xlu0 %6846
      %6848 = vrot.lane.b32.xlu0 %v1885, 80
      %v6849 = vpop.permute.xlu0 %6848
      %6850 = vrot.lane.b32.xlu0 %v1890, 80
      %v6851 = vpop.permute.xlu0 %6850
      %6852 = vrot.lane.b32.xlu0 %v1895, 80
      %v6853 = vpop.permute.xlu0 %6852
      %6854 = vrot.lane.b32.xlu0 %v1900, 80
      %v6855 = vpop.permute.xlu0 %6854
      %6856 = vrot.lane.b32.xlu0 %v1905, 80
      %v6857 = vpop.permute.xlu0 %6856
      %6858 = vrot.lane.b32.xlu0 %v1910, 80
      %v6859 = vpop.permute.xlu0 %6858
      %v6860 = vsel %vm351, %v6733, 0
      %v6862 = vsel %vm351, %v6735, 0
      %v6864 = vsel %vm351, %v6737, 0
      %v6866 = vsel %vm351, %v6739, 0
      %v6868 = vsel %vm351, %v6741, 0
      %v6870 = vsel %vm351, %v6743, 0
      %v6872 = vsel %vm351, %v6745, 0
      %v6874 = vsel %vm351, %v6747, 0
      %v6876 = vsel %vm351, %v6749, 0
      %v6878 = vsel %vm351, %v6751, 0
      %v6880 = vsel %vm351, %v6753, 0
      %v6882 = vsel %vm351, %v6755, 0
      %v6884 = vsel %vm351, %v6757, 0
      %v6886 = vsel %vm351, %v6759, 0
      %v6888 = vsel %vm351, %v6761, 0
      %v6890 = vsel %vm351, %v6763, 0
      %v6892 = vsel %vm351, %v6765, 0
      %v6894 = vsel %vm351, %v6767, 0
      %v6896 = vsel %vm351, %v6769, 0
      %v6898 = vsel %vm351, %v6771, 0
      %v6900 = vsel %vm351, %v6773, 0
      %v6902 = vsel %vm351, %v6775, 0
      %v6904 = vsel %vm351, %v6777, 0
      %v6906 = vsel %vm351, %v6779, 0
      %v6908 = vsel %vm351, %v6781, 0
      %v6910 = vsel %vm351, %v6783, 0
      %v6912 = vsel %vm351, %v6785, 0
      %v6914 = vsel %vm351, %v6787, 0
      %v6916 = vsel %vm351, %v6789, 0
      %v6918 = vsel %vm351, %v6791, 0
      %v6920 = vsel %vm351, %v6793, 0
      %v6922 = vsel %vm351, %v6795, 0
      %v6924 = vsel %vm351, %v6797, 0
      %v6926 = vsel %vm351, %v6799, 0
      %v6928 = vsel %vm351, %v6801, 0
      %v6930 = vsel %vm351, %v6803, 0
      %v6932 = vsel %vm351, %v6805, 0
      %v6934 = vsel %vm351, %v6807, 0
      %v6936 = vsel %vm351, %v6809, 0
      %v6938 = vsel %vm351, %v6811, 0
      %v6940 = vsel %vm351, %v6813, 0
      %v6942 = vsel %vm351, %v6815, 0
      %v6944 = vsel %vm351, %v6817, 0
      %v6946 = vsel %vm351, %v6819, 0
      %v6948 = vsel %vm351, %v6821, 0
      %v6950 = vsel %vm351, %v6823, 0
      %v6952 = vsel %vm351, %v6825, 0
      %v6954 = vsel %vm351, %v6827, 0
      %v6956 = vsel %vm351, %v6829, 0
      %v6958 = vsel %vm351, %v6831, 0
      %v6960 = vsel %vm351, %v6833, 0
      %v6962 = vsel %vm351, %v6835, 0
      %v6964 = vsel %vm351, %v6837, 0
      %v6966 = vsel %vm351, %v6839, 0
      %v6968 = vsel %vm351, %v6841, 0
      %v6970 = vsel %vm351, %v6843, 0
      %v6972 = vsel %vm351, %v6845, 0
      %v6974 = vsel %vm351, %v6847, 0
      %v6976 = vsel %vm351, %v6849, 0
      %v6978 = vsel %vm351, %v6851, 0
      %v6980 = vsel %vm351, %v6853, 0
      %v6982 = vsel %vm351, %v6855, 0
      %v6984 = vsel %vm351, %v6857, 0
      %v6986 = vsel %vm351, %v6859, 0
      %6988 = vmatprep.subr.mxu0 0.0
      %6989 = vmatpush1.xpose.msra.mxu0 %v6924
      %6990 = vmatprep.subr.mxu0 0.0
      %6991 = vmatpush1.xpose.msra.mxu0 %v6926
      %6992 = vmatprep.subr.mxu0 0.0
      %6993 = vmatpush1.xpose.msra.mxu0 %v6928
      %6994 = vmatprep.subr.mxu0 0.0
      %6995 = vmatpush1.xpose.msra.mxu0 %v6930
      %6996 = vmatprep.subr.mxu0 0.0
      %6997 = vmatpush1.xpose.msra.mxu0 %v6932
      %6998 = vmatprep.subr.mxu0 0.0
      %6999 = vmatpush1.xpose.msra.mxu0 %v6934
      %7000 = vmatprep.subr.mxu0 0.0
      %7001 = vmatpush1.xpose.msra.mxu0 %v6936
      %7002 = vmatprep.subr.mxu0 0.0
      %7003 = vmatpush1.xpose.msra.mxu0 %v6938
      %7004 = vmatprep.subr.mxu0 0.0
      %7005 = vmatpush1.xpose.msra.mxu0 %v6940
      %7006 = vmatprep.subr.mxu0 0.0
      %7007 = vmatpush1.xpose.msra.mxu0 %v6942
      %7008 = vmatprep.subr.mxu0 0.0
      %7009 = vmatpush1.xpose.msra.mxu0 %v6944
      %7010 = vmatprep.subr.mxu0 0.0
      %7011 = vmatpush1.xpose.msra.mxu0 %v6946
      %7012 = vmatprep.subr.mxu0 0.0
      %7013 = vmatpush1.xpose.msra.mxu0 %v6948
      %7014 = vmatprep.subr.mxu0 0.0
      %7015 = vmatpush1.xpose.msra.mxu0 %v6950
      %7016 = vmatprep.subr.mxu0 0.0
      %7017 = vmatpush1.xpose.msra.mxu0 %v6952
      %7018 = vmatprep.subr.mxu0 0.0
      %7019 = vmatpush1.xpose.msra.mxu0 %v6954
      %7020 = vmatprep.subr.mxu0 0.0
      %7021 = vmatpush1.xpose.msra.mxu0 %v6956
      %7022 = vmatprep.subr.mxu0 0.0
      %7023 = vmatpush1.xpose.msra.mxu0 %v6958
      %7024 = vmatprep.subr.mxu0 0.0
      %7025 = vmatpush1.xpose.msra.mxu0 %v6960
      %7026 = vmatprep.subr.mxu0 0.0
      %7027 = vmatpush1.xpose.msra.mxu0 %v6962
      %7028 = vmatprep.subr.mxu0 0.0
      %7029 = vmatpush1.xpose.msra.mxu0 %v6964
      %7030 = vmatprep.subr.mxu0 0.0
      %7031 = vmatpush1.xpose.msra.mxu0 %v6966
      %7032 = vmatprep.subr.mxu0 0.0
      %7033 = vmatpush1.xpose.msra.mxu0 %v6968
      %7034 = vmatprep.subr.mxu0 0.0
      %7035 = vmatpush1.xpose.msra.mxu0 %v6970
      %7036 = vmatprep.subr.mxu0 0.0
      %7037 = vmatpush1.xpose.msra.mxu0 %v6972
      %7038 = vmatprep.subr.mxu0 0.0
      %7039 = vmatpush1.xpose.msra.mxu0 %v6974
      %7040 = vmatprep.subr.mxu0 0.0
      %7041 = vmatpush1.xpose.msra.mxu0 %v6976
      %7042 = vmatprep.subr.mxu0 0.0
      %7043 = vmatpush1.xpose.msra.mxu0 %v6978
      %7044 = vmatprep.subr.mxu0 0.0
      %7045 = vmatpush1.xpose.msra.mxu0 %v6980
      %7046 = vmatprep.subr.mxu0 0.0
      %7047 = vmatpush1.xpose.msra.mxu0 %v6982
      %7048 = vmatprep.subr.mxu0 0.0
      %7049 = vmatpush1.xpose.msra.mxu0 %v6984
      %7050 = vmatprep.subr.mxu0 0.0
      %7051 = vmatpush1.xpose.msra.mxu0 %v6986
      %7052 = vmatprep.mubr.f32.mxu0 0.0
      %7053 = vmatmul.mubr.f32.gmra.mrb[0].mxu0 %v6860
      %v7054 = vpop.f32.mrb[0].mxu0
      %v7055 = vadd.f32 0.0, %v7054
      %v7056 = vpop.f32.mrb[0].mxu0
      %v7057 = vadd.f32 0.0, %v7056
      %7058 = vmatprep.mubr.f32.mxu0 0.0
      %7059 = vmatmul.mubr.f32.gmra.mrb[0].mxu0 %v6862
      %v7060 = vpop.f32.mrb[0].mxu0
      %v7061 = vadd.f32 0.0, %v7060
      %v7062 = vpop.f32.mrb[0].mxu0
      %v7063 = vadd.f32 0.0, %v7062
      %7064 = vmatprep.mubr.f32.mxu0 0.0
      %7065 = vmatmul.mubr.f32.gmra.mrb[0].mxu0 %v6864
      %v7066 = vpop.f32.mrb[0].mxu0
      %v7067 = vadd.f32 0.0, %v7066
      %v7068 = vpop.f32.mrb[0].mxu0
      %v7069 = vadd.f32 0.0, %v7068
      %7070 = vmatprep.mubr.f32.mxu0 0.0
      %7071 = vmatmul.mubr.f32.gmra.mrb[0].mxu0 %v6866
      %v7072 = vpop.f32.mrb[0].mxu0
      %v7073 = vadd.f32 0.0, %v7072
      %v7074 = vpop.f32.mrb[0].mxu0
      %v7075 = vadd.f32 0.0, %v7074
      %7076 = vmatprep.mubr.f32.mxu0 0.0
      %7077 = vmatmul.mubr.f32.gmra.mrb[0].mxu0 %v6868
      %v7078 = vpop.f32.mrb[0].mxu0
      %v7079 = vadd.f32 0.0, %v7078
      %v7080 = vpop.f32.mrb[0].mxu0
      %v7081 = vadd.f32 0.0, %v7080
      %7082 = vmatprep.mubr.f32.mxu0 0.0
      %7083 = vmatmul.mubr.f32.gmra.mrb[0].mxu0 %v6870
      %v7084 = vpop.f32.mrb[0].mxu0
      %v7085 = vadd.f32 0.0, %v7084
      %v7086 = vpop.f32.mrb[0].mxu0
      %v7087 = vadd.f32 0.0, %v7086
      %7088 = vmatprep.mubr.f32.mxu0 0.0
      %7089 = vmatmul.mubr.f32.gmra.mrb[0].mxu0 %v6872
      %v7090 = vpop.f32.mrb[0].mxu0
      %v7091 = vadd.f32 0.0, %v7090
      %v7092 = vpop.f32.mrb[0].mxu0
      %v7093 = vadd.f32 0.0, %v7092
      %7094 = vmatprep.mubr.f32.mxu0 0.0
      %7095 = vmatmul.mubr.f32.gmra.mrb[0].mxu0 %v6874
      %v7096 = vpop.f32.mrb[0].mxu0
      %v7097 = vadd.f32 0.0, %v7096
      %v7098 = vpop.f32.mrb[0].mxu0
      %v7099 = vadd.f32 0.0, %v7098
      %7100 = vmatprep.mubr.f32.mxu0 0.0
      %7101 = vmatmul.mubr.f32.gmra.mrb[0].mxu0 %v6876
      %v7102 = vpop.f32.mrb[0].mxu0
      %v7103 = vadd.f32 0.0, %v7102
      %v7104 = vpop.f32.mrb[0].mxu0
      %v7105 = vadd.f32 0.0, %v7104
      %7106 = vmatprep.mubr.f32.mxu0 0.0
      %7107 = vmatmul.mubr.f32.gmra.mrb[0].mxu0 %v6878
      %v7108 = vpop.f32.mrb[0].mxu0
      %v7109 = vadd.f32 0.0, %v7108
      %v7110 = vpop.f32.mrb[0].mxu0
      %v7111 = vadd.f32 0.0, %v7110
      %7112 = vmatprep.mubr.f32.mxu0 0.0
      %7113 = vmatmul.mubr.f32.gmra.mrb[0].mxu0 %v6880
      %v7114 = vpop.f32.mrb[0].mxu0
      %v7115 = vadd.f32 0.0, %v7114
      %v7116 = vpop.f32.mrb[0].mxu0
      %v7117 = vadd.f32 0.0, %v7116
      %7118 = vmatprep.mubr.f32.mxu0 0.0
      %7119 = vmatmul.mubr.f32.gmra.mrb[0].mxu0 %v6882
      %v7120 = vpop.f32.mrb[0].mxu0
      %v7121 = vadd.f32 0.0, %v7120
      %v7122 = vpop.f32.mrb[0].mxu0
      %v7123 = vadd.f32 0.0, %v7122
      %7124 = vmatprep.mubr.f32.mxu0 0.0
      %7125 = vmatmul.mubr.f32.gmra.mrb[0].mxu0 %v6884
      %v7126 = vpop.f32.mrb[0].mxu0
      %v7127 = vadd.f32 0.0, %v7126
      %v7128 = vpop.f32.mrb[0].mxu0
      %v7129 = vadd.f32 0.0, %v7128
      %7130 = vmatprep.mubr.f32.mxu0 0.0
      %7131 = vmatmul.mubr.f32.gmra.mrb[0].mxu0 %v6886
      %v7132 = vpop.f32.mrb[0].mxu0
      %v7133 = vadd.f32 0.0, %v7132
      %v7134 = vpop.f32.mrb[0].mxu0
      %v7135 = vadd.f32 0.0, %v7134
      %7136 = vmatprep.mubr.f32.mxu0 0.0
      %7137 = vmatmul.mubr.f32.gmra.mrb[0].mxu0 %v6888
      %v7138 = vpop.f32.mrb[0].mxu0
      %v7139 = vadd.f32 0.0, %v7138
      %v7140 = vpop.f32.mrb[0].mxu0
      %v7141 = vadd.f32 0.0, %v7140
      %7142 = vmatprep.mubr.f32.mxu0 0.0
      %7143 = vmatmul.mubr.f32.gmra.mrb[0].mxu0 %v6890
      %v7144 = vpop.f32.mrb[0].mxu0
      %v7145 = vadd.f32 0.0, %v7144
      %v7146 = vpop.f32.mrb[0].mxu0
      %v7147 = vadd.f32 0.0, %v7146
      %7148 = vmatprep.mubr.f32.mxu0 0.0
      %7149 = vmatmul.mubr.f32.gmra.mrb[0].mxu0 %v6892
      %v7150 = vpop.f32.mrb[0].mxu0
      %v7151 = vadd.f32 0.0, %v7150
      %v7152 = vpop.f32.mrb[0].mxu0
      %v7153 = vadd.f32 0.0, %v7152
      %7154 = vmatprep.mubr.f32.mxu0 0.0
      %7155 = vmatmul.mubr.f32.gmra.mrb[0].mxu0 %v6894
      %v7156 = vpop.f32.mrb[0].mxu0
      %v7157 = vadd.f32 0.0, %v7156
      %v7158 = vpop.f32.mrb[0].mxu0
      %v7159 = vadd.f32 0.0, %v7158
      %7160 = vmatprep.mubr.f32.mxu0 0.0
      %7161 = vmatmul.mubr.f32.gmra.mrb[0].mxu0 %v6896
      %v7162 = vpop.f32.mrb[0].mxu0
      %v7163 = vadd.f32 0.0, %v7162
      %v7164 = vpop.f32.mrb[0].mxu0
      %v7165 = vadd.f32 0.0, %v7164
      %7166 = vmatprep.mubr.f32.mxu0 0.0
      %7167 = vmatmul.mubr.f32.gmra.mrb[0].mxu0 %v6898
      %v7168 = vpop.f32.mrb[0].mxu0
      %v7169 = vadd.f32 0.0, %v7168
      %v7170 = vpop.f32.mrb[0].mxu0
      %v7171 = vadd.f32 0.0, %v7170
      %7172 = vmatprep.mubr.f32.mxu0 0.0
      %7173 = vmatmul.mubr.f32.gmra.mrb[0].mxu0 %v6900
      %v7174 = vpop.f32.mrb[0].mxu0
      %v7175 = vadd.f32 0.0, %v7174
      %v7176 = vpop.f32.mrb[0].mxu0
      %v7177 = vadd.f32 0.0, %v7176
      %7178 = vmatprep.mubr.f32.mxu0 0.0
      %7179 = vmatmul.mubr.f32.gmra.mrb[0].mxu0 %v6902
      %v7180 = vpop.f32.mrb[0].mxu0
      %v7181 = vadd.f32 0.0, %v7180
      %v7182 = vpop.f32.mrb[0].mxu0
      %v7183 = vadd.f32 0.0, %v7182
      %7184 = vmatprep.mubr.f32.mxu0 0.0
      %7185 = vmatmul.mubr.f32.gmra.mrb[0].mxu0 %v6904
      %v7186 = vpop.f32.mrb[0].mxu0
      %v7187 = vadd.f32 0.0, %v7186
      %v7188 = vpop.f32.mrb[0].mxu0
      %v7189 = vadd.f32 0.0, %v7188
      %7190 = vmatprep.mubr.f32.mxu0 0.0
      %7191 = vmatmul.mubr.f32.gmra.mrb[0].mxu0 %v6906
      %v7192 = vpop.f32.mrb[0].mxu0
      %v7193 = vadd.f32 0.0, %v7192
      %v7194 = vpop.f32.mrb[0].mxu0
      %v7195 = vadd.f32 0.0, %v7194
      %7196 = vmatprep.mubr.f32.mxu0 0.0
      %7197 = vmatmul.mubr.f32.gmra.mrb[0].mxu0 %v6908
      %v7198 = vpop.f32.mrb[0].mxu0
      %v7199 = vadd.f32 0.0, %v7198
      %v7200 = vpop.f32.mrb[0].mxu0
      %v7201 = vadd.f32 0.0, %v7200
      %7202 = vmatprep.mubr.f32.mxu0 0.0
      %7203 = vmatmul.mubr.f32.gmra.mrb[0].mxu0 %v6910
      %v7204 = vpop.f32.mrb[0].mxu0
      %v7205 = vadd.f32 0.0, %v7204
      %v7206 = vpop.f32.mrb[0].mxu0
      %v7207 = vadd.f32 0.0, %v7206
      %7208 = vmatprep.mubr.f32.mxu0 0.0
      %7209 = vmatmul.mubr.f32.gmra.mrb[0].mxu0 %v6912
      %v7210 = vpop.f32.mrb[0].mxu0
      %v7211 = vadd.f32 0.0, %v7210
      %v7212 = vpop.f32.mrb[0].mxu0
      %v7213 = vadd.f32 0.0, %v7212
      %7214 = vmatprep.mubr.f32.mxu0 0.0
      %7215 = vmatmul.mubr.f32.gmra.mrb[0].mxu0 %v6914
      %v7216 = vpop.f32.mrb[0].mxu0
      %v7217 = vadd.f32 0.0, %v7216
      %v7218 = vpop.f32.mrb[0].mxu0
      %v7219 = vadd.f32 0.0, %v7218
      %7220 = vmatprep.mubr.f32.mxu0 0.0
      %7221 = vmatmul.mubr.f32.gmra.mrb[0].mxu0 %v6916
      %v7222 = vpop.f32.mrb[0].mxu0
      %v7223 = vadd.f32 0.0, %v7222
      %v7224 = vpop.f32.mrb[0].mxu0
      %v7225 = vadd.f32 0.0, %v7224
      %7226 = vmatprep.mubr.f32.mxu0 0.0
      %7227 = vmatmul.mubr.f32.gmra.mrb[0].mxu0 %v6918
      %v7228 = vpop.f32.mrb[0].mxu0
      %v7229 = vadd.f32 0.0, %v7228
      %v7230 = vpop.f32.mrb[0].mxu0
      %v7231 = vadd.f32 0.0, %v7230
      %7232 = vmatprep.mubr.f32.mxu0 0.0
      %7233 = vmatmul.mubr.f32.gmra.mrb[0].mxu0 %v6920
      %v7234 = vpop.f32.mrb[0].mxu0
      %v7235 = vadd.f32 0.0, %v7234
      %v7236 = vpop.f32.mrb[0].mxu0
      %v7237 = vadd.f32 0.0, %v7236
      %7238 = vmatprep.mubr.f32.mxu0 0.0
      %7239 = vmatmul.mubr.f32.gmra.mrb[0].mxu0 %v6922
      %v7240 = vpop.f32.mrb[0].mxu0
      %v7241 = vadd.f32 0.0, %v7240
      %v7242 = vpop.f32.mrb[0].mxu0
      %v7243 = vadd.f32 0.0, %v7242
      %7244 = vdwg.mxu0
      %v7245 = vmax.f32 %v7055, %v7057
      %7246 = vmax.xlane.f32.xlu0 %v7245
      %v7247 = vpop.xlane.xlu0 %7246
      %v7248 = vmax.f32 %v7061, %v7063
      %7249 = vmax.xlane.f32.xlu0 %v7248
      %v7250 = vpop.xlane.xlu0 %7249
      %v7251 = vmax.f32 %v7067, %v7069
      %7252 = vmax.xlane.f32.xlu0 %v7251
      %v7253 = vpop.xlane.xlu0 %7252
      %v7254 = vmax.f32 %v7073, %v7075
      %7255 = vmax.xlane.f32.xlu0 %v7254
      %v7256 = vpop.xlane.xlu0 %7255
      %v7257 = vmax.f32 %v7079, %v7081
      %7258 = vmax.xlane.f32.xlu0 %v7257
      %v7259 = vpop.xlane.xlu0 %7258
      %v7260 = vmax.f32 %v7085, %v7087
      %7261 = vmax.xlane.f32.xlu0 %v7260
      %v7262 = vpop.xlane.xlu0 %7261
      %v7263 = vmax.f32 %v7091, %v7093
      %7264 = vmax.xlane.f32.xlu0 %v7263
      %v7265 = vpop.xlane.xlu0 %7264
      %v7266 = vmax.f32 %v7097, %v7099
      %7267 = vmax.xlane.f32.xlu0 %v7266
      %v7268 = vpop.xlane.xlu0 %7267
      %v7269 = vmax.f32 %v7103, %v7105
      %7270 = vmax.xlane.f32.xlu0 %v7269
      %v7271 = vpop.xlane.xlu0 %7270
      %v7272 = vmax.f32 %v7109, %v7111
      %7273 = vmax.xlane.f32.xlu0 %v7272
      %v7274 = vpop.xlane.xlu0 %7273
      %v7275 = vmax.f32 %v7115, %v7117
      %7276 = vmax.xlane.f32.xlu0 %v7275
      %v7277 = vpop.xlane.xlu0 %7276
      %v7278 = vmax.f32 %v7121, %v7123
      %7279 = vmax.xlane.f32.xlu0 %v7278
      %v7280 = vpop.xlane.xlu0 %7279
      %v7281 = vmax.f32 %v7127, %v7129
      %7282 = vmax.xlane.f32.xlu0 %v7281
      %v7283 = vpop.xlane.xlu0 %7282
      %v7284 = vmax.f32 %v7133, %v7135
      %7285 = vmax.xlane.f32.xlu0 %v7284
      %v7286 = vpop.xlane.xlu0 %7285
      %v7287 = vmax.f32 %v7139, %v7141
      %7288 = vmax.xlane.f32.xlu0 %v7287
      %v7289 = vpop.xlane.xlu0 %7288
      %v7290 = vmax.f32 %v7145, %v7147
      %7291 = vmax.xlane.f32.xlu0 %v7290
      %v7292 = vpop.xlane.xlu0 %7291
      %v7293 = vmax.f32 %v7151, %v7153
      %7294 = vmax.xlane.f32.xlu0 %v7293
      %v7295 = vpop.xlane.xlu0 %7294
      %v7296 = vmax.f32 %v7157, %v7159
      %7297 = vmax.xlane.f32.xlu0 %v7296
      %v7298 = vpop.xlane.xlu0 %7297
      %v7299 = vmax.f32 %v7163, %v7165
      %7300 = vmax.xlane.f32.xlu0 %v7299
      %v7301 = vpop.xlane.xlu0 %7300
      %v7302 = vmax.f32 %v7169, %v7171
      %7303 = vmax.xlane.f32.xlu0 %v7302
      %v7304 = vpop.xlane.xlu0 %7303
      %v7305 = vmax.f32 %v7175, %v7177
      %7306 = vmax.xlane.f32.xlu0 %v7305
      %v7307 = vpop.xlane.xlu0 %7306
      %v7308 = vmax.f32 %v7181, %v7183
      %7309 = vmax.xlane.f32.xlu0 %v7308
      %v7310 = vpop.xlane.xlu0 %7309
      %v7311 = vmax.f32 %v7187, %v7189
      %7312 = vmax.xlane.f32.xlu0 %v7311
      %v7313 = vpop.xlane.xlu0 %7312
      %v7314 = vmax.f32 %v7193, %v7195
      %7315 = vmax.xlane.f32.xlu0 %v7314
      %v7316 = vpop.xlane.xlu0 %7315
      %v7317 = vmax.f32 %v7199, %v7201
      %7318 = vmax.xlane.f32.xlu0 %v7317
      %v7319 = vpop.xlane.xlu0 %7318
      %v7320 = vmax.f32 %v7205, %v7207
      %7321 = vmax.xlane.f32.xlu0 %v7320
      %v7322 = vpop.xlane.xlu0 %7321
      %v7323 = vmax.f32 %v7211, %v7213
      %7324 = vmax.xlane.f32.xlu0 %v7323
      %v7325 = vpop.xlane.xlu0 %7324
      %v7326 = vmax.f32 %v7217, %v7219
      %7327 = vmax.xlane.f32.xlu0 %v7326
      %v7328 = vpop.xlane.xlu0 %7327
      %v7329 = vmax.f32 %v7223, %v7225
      %7330 = vmax.xlane.f32.xlu0 %v7329
      %v7331 = vpop.xlane.xlu0 %7330
      %v7332 = vmax.f32 %v7229, %v7231
      %7333 = vmax.xlane.f32.xlu0 %v7332
      %v7334 = vpop.xlane.xlu0 %7333
      %v7335 = vmax.f32 %v7235, %v7237
      %7336 = vmax.xlane.f32.xlu0 %v7335
      %v7337 = vpop.xlane.xlu0 %7336
      %v7338 = vmax.f32 %v7241, %v7243
      %7339 = vmax.xlane.f32.xlu0 %v7338
      %v7340 = vpop.xlane.xlu0 %7339
      %v7341 = vsub.f32 %v7055, %v7247
      %v7342 = vsub.f32 %v7057, %v7247
      %v7343 = vsub.f32 %v7061, %v7250
      %v7344 = vsub.f32 %v7063, %v7250
      %v7345 = vsub.f32 %v7067, %v7253
      %v7346 = vsub.f32 %v7069, %v7253
      %v7347 = vsub.f32 %v7073, %v7256
      %v7348 = vsub.f32 %v7075, %v7256
      %v7349 = vsub.f32 %v7079, %v7259
      %v7350 = vsub.f32 %v7081, %v7259
      %v7351 = vsub.f32 %v7085, %v7262
      %v7352 = vsub.f32 %v7087, %v7262
      %v7353 = vsub.f32 %v7091, %v7265
      %v7354 = vsub.f32 %v7093, %v7265
      %v7355 = vsub.f32 %v7097, %v7268
      %v7356 = vsub.f32 %v7099, %v7268
      %v7357 = vsub.f32 %v7103, %v7271
      %v7358 = vsub.f32 %v7105, %v7271
      %v7359 = vsub.f32 %v7109, %v7274
      %v7360 = vsub.f32 %v7111, %v7274
      %v7361 = vsub.f32 %v7115, %v7277
      %v7362 = vsub.f32 %v7117, %v7277
      %v7363 = vsub.f32 %v7121, %v7280
      %v7364 = vsub.f32 %v7123, %v7280
      %v7365 = vsub.f32 %v7127, %v7283
      %v7366 = vsub.f32 %v7129, %v7283
      %v7367 = vsub.f32 %v7133, %v7286
      %v7368 = vsub.f32 %v7135, %v7286
      %v7369 = vsub.f32 %v7139, %v7289
      %v7370 = vsub.f32 %v7141, %v7289
      %v7371 = vsub.f32 %v7145, %v7292
      %v7372 = vsub.f32 %v7147, %v7292
      %v7373 = vsub.f32 %v7151, %v7295
      %v7374 = vsub.f32 %v7153, %v7295
      %v7375 = vsub.f32 %v7157, %v7298
      %v7376 = vsub.f32 %v7159, %v7298
      %v7377 = vsub.f32 %v7163, %v7301
      %v7378 = vsub.f32 %v7165, %v7301
      %v7379 = vsub.f32 %v7169, %v7304
      %v7380 = vsub.f32 %v7171, %v7304
      %v7381 = vsub.f32 %v7175, %v7307
      %v7382 = vsub.f32 %v7177, %v7307
      %v7383 = vsub.f32 %v7181, %v7310
      %v7384 = vsub.f32 %v7183, %v7310
      %v7385 = vsub.f32 %v7187, %v7313
      %v7386 = vsub.f32 %v7189, %v7313
      %v7387 = vsub.f32 %v7193, %v7316
      %v7388 = vsub.f32 %v7195, %v7316
      %v7389 = vsub.f32 %v7199, %v7319
      %v7390 = vsub.f32 %v7201, %v7319
      %v7391 = vsub.f32 %v7205, %v7322
      %v7392 = vsub.f32 %v7207, %v7322
      %v7393 = vsub.f32 %v7211, %v7325
      %v7394 = vsub.f32 %v7213, %v7325
      %v7395 = vsub.f32 %v7217, %v7328
      %v7396 = vsub.f32 %v7219, %v7328
      %v7397 = vsub.f32 %v7223, %v7331
      %v7398 = vsub.f32 %v7225, %v7331
      %v7399 = vsub.f32 %v7229, %v7334
      %v7400 = vsub.f32 %v7231, %v7334
      %v7401 = vsub.f32 %v7235, %v7337
      %v7402 = vsub.f32 %v7237, %v7337
      %v7403 = vsub.f32 %v7241, %v7340
      %v7404 = vsub.f32 %v7243, %v7340
      %v7405 = vmul.f32 %v7341, 1.442695
      %v7406 = vpow.pop %v7405
      %v7407 = vmul.f32 %v7342, 1.442695
      %v7408 = vpow.pop %v7407
      %v7409 = vmul.f32 %v7343, 1.442695
      %v7410 = vpow.pop %v7409
      %v7411 = vmul.f32 %v7344, 1.442695
      %v7412 = vpow.pop %v7411
      %v7413 = vmul.f32 %v7345, 1.442695
      %v7414 = vpow.pop %v7413
      %v7415 = vmul.f32 %v7346, 1.442695
      %v7416 = vpow.pop %v7415
      %v7417 = vmul.f32 %v7347, 1.442695
      %v7418 = vpow.pop %v7417
      %v7419 = vmul.f32 %v7348, 1.442695
      %v7420 = vpow.pop %v7419
      %v7421 = vmul.f32 %v7349, 1.442695
      %v7422 = vpow.pop %v7421
      %v7423 = vmul.f32 %v7350, 1.442695
      %v7424 = vpow.pop %v7423
      %v7425 = vmul.f32 %v7351, 1.442695
      %v7426 = vpow.pop %v7425
      %v7427 = vmul.f32 %v7352, 1.442695
      %v7428 = vpow.pop %v7427
      %v7429 = vmul.f32 %v7353, 1.442695
      %v7430 = vpow.pop %v7429
      %v7431 = vmul.f32 %v7354, 1.442695
      %v7432 = vpow.pop %v7431
      %v7433 = vmul.f32 %v7355, 1.442695
      %v7434 = vpow.pop %v7433
      %v7435 = vmul.f32 %v7356, 1.442695
      %v7436 = vpow.pop %v7435
      %v7437 = vmul.f32 %v7357, 1.442695
      %v7438 = vpow.pop %v7437
      %v7439 = vmul.f32 %v7358, 1.442695
      %v7440 = vpow.pop %v7439
      %v7441 = vmul.f32 %v7359, 1.442695
      %v7442 = vpow.pop %v7441
      %v7443 = vmul.f32 %v7360, 1.442695
      %v7444 = vpow.pop %v7443
      %v7445 = vmul.f32 %v7361, 1.442695
      %v7446 = vpow.pop %v7445
      %v7447 = vmul.f32 %v7362, 1.442695
      %v7448 = vpow.pop %v7447
      %v7449 = vmul.f32 %v7363, 1.442695
      %v7450 = vpow.pop %v7449
      %v7451 = vmul.f32 %v7364, 1.442695
      %v7452 = vpow.pop %v7451
      %v7453 = vmul.f32 %v7365, 1.442695
      %v7454 = vpow.pop %v7453
      %v7455 = vmul.f32 %v7366, 1.442695
      %v7456 = vpow.pop %v7455
      %v7457 = vmul.f32 %v7367, 1.442695
      %v7458 = vpow.pop %v7457
      %v7459 = vmul.f32 %v7368, 1.442695
      %v7460 = vpow.pop %v7459
      %v7461 = vmul.f32 %v7369, 1.442695
      %v7462 = vpow.pop %v7461
      %v7463 = vmul.f32 %v7370, 1.442695
      %v7464 = vpow.pop %v7463
      %v7465 = vmul.f32 %v7371, 1.442695
      %v7466 = vpow.pop %v7465
      %v7467 = vmul.f32 %v7372, 1.442695
      %v7468 = vpow.pop %v7467
      %v7469 = vmul.f32 %v7373, 1.442695
      %v7470 = vpow.pop %v7469
      %v7471 = vmul.f32 %v7374, 1.442695
      %v7472 = vpow.pop %v7471
      %v7473 = vmul.f32 %v7375, 1.442695
      %v7474 = vpow.pop %v7473
      %v7475 = vmul.f32 %v7376, 1.442695
      %v7476 = vpow.pop %v7475
      %v7477 = vmul.f32 %v7377, 1.442695
      %v7478 = vpow.pop %v7477
      %v7479 = vmul.f32 %v7378, 1.442695
      %v7480 = vpow.pop %v7479
      %v7481 = vmul.f32 %v7379, 1.442695
      %v7482 = vpow.pop %v7481
      %v7483 = vmul.f32 %v7380, 1.442695
      %v7484 = vpow.pop %v7483
      %v7485 = vmul.f32 %v7381, 1.442695
      %v7486 = vpow.pop %v7485
      %v7487 = vmul.f32 %v7382, 1.442695
      %v7488 = vpow.pop %v7487
      %v7489 = vmul.f32 %v7383, 1.442695
      %v7490 = vpow.pop %v7489
      %v7491 = vmul.f32 %v7384, 1.442695
      %v7492 = vpow.pop %v7491
      %v7493 = vmul.f32 %v7385, 1.442695
      %v7494 = vpow.pop %v7493
      %v7495 = vmul.f32 %v7386, 1.442695
      %v7496 = vpow.pop %v7495
      %v7497 = vmul.f32 %v7387, 1.442695
      %v7498 = vpow.pop %v7497
      %v7499 = vmul.f32 %v7388, 1.442695
      %v7500 = vpow.pop %v7499
      %v7501 = vmul.f32 %v7389, 1.442695
      %v7502 = vpow.pop %v7501
      %v7503 = vmul.f32 %v7390, 1.442695
      %v7504 = vpow.pop %v7503
      %v7505 = vmul.f32 %v7391, 1.442695
      %v7506 = vpow.pop %v7505
      %v7507 = vmul.f32 %v7392, 1.442695
      %v7508 = vpow.pop %v7507
      %v7509 = vmul.f32 %v7393, 1.442695
      %v7510 = vpow.pop %v7509
      %v7511 = vmul.f32 %v7394, 1.442695
      %v7512 = vpow.pop %v7511
      %v7513 = vmul.f32 %v7395, 1.442695
      %v7514 = vpow.pop %v7513
      %v7515 = vmul.f32 %v7396, 1.442695
      %v7516 = vpow.pop %v7515
      %v7517 = vmul.f32 %v7397, 1.442695
      %v7518 = vpow.pop %v7517
      %v7519 = vmul.f32 %v7398, 1.442695
      %v7520 = vpow.pop %v7519
      %v7521 = vmul.f32 %v7399, 1.442695
      %v7522 = vpow.pop %v7521
      %v7523 = vmul.f32 %v7400, 1.442695
      %v7524 = vpow.pop %v7523
      %v7525 = vmul.f32 %v7401, 1.442695
      %v7526 = vpow.pop %v7525
      %v7527 = vmul.f32 %v7402, 1.442695
      %v7528 = vpow.pop %v7527
      %v7529 = vmul.f32 %v7403, 1.442695
      %v7530 = vpow.pop %v7529
      %v7531 = vmul.f32 %v7404, 1.442695
      %v7532 = vpow.pop %v7531
      %v7533 = vadd.f32 %v7406, %v7408
      %7534 = vadd.xlane.f32.xlu0 %v7533
      %v7535 = vpop.xlane.xlu0 %7534
      %v7536 = vadd.f32 %v7410, %v7412
      %7537 = vadd.xlane.f32.xlu0 %v7536
      %v7538 = vpop.xlane.xlu0 %7537
      %v7539 = vadd.f32 %v7414, %v7416
      %7540 = vadd.xlane.f32.xlu0 %v7539
      %v7541 = vpop.xlane.xlu0 %7540
      %v7542 = vadd.f32 %v7418, %v7420
      %7543 = vadd.xlane.f32.xlu0 %v7542
      %v7544 = vpop.xlane.xlu0 %7543
      %v7545 = vadd.f32 %v7422, %v7424
      %7546 = vadd.xlane.f32.xlu0 %v7545
      %v7547 = vpop.xlane.xlu0 %7546
      %v7548 = vadd.f32 %v7426, %v7428
      %7549 = vadd.xlane.f32.xlu0 %v7548
      %v7550 = vpop.xlane.xlu0 %7549
      %v7551 = vadd.f32 %v7430, %v7432
      %7552 = vadd.xlane.f32.xlu0 %v7551
      %v7553 = vpop.xlane.xlu0 %7552
      %v7554 = vadd.f32 %v7434, %v7436
      %7555 = vadd.xlane.f32.xlu0 %v7554
      %v7556 = vpop.xlane.xlu0 %7555
      %v7557 = vadd.f32 %v7438, %v7440
      %7558 = vadd.xlane.f32.xlu0 %v7557
      %v7559 = vpop.xlane.xlu0 %7558
      %v7560 = vadd.f32 %v7442, %v7444
      %7561 = vadd.xlane.f32.xlu0 %v7560
      %v7562 = vpop.xlane.xlu0 %7561
      %v7563 = vadd.f32 %v7446, %v7448
      %7564 = vadd.xlane.f32.xlu0 %v7563
      %v7565 = vpop.xlane.xlu0 %7564
      %v7566 = vadd.f32 %v7450, %v7452
      %7567 = vadd.xlane.f32.xlu0 %v7566
      %v7568 = vpop.xlane.xlu0 %7567
      %v7569 = vadd.f32 %v7454, %v7456
      %7570 = vadd.xlane.f32.xlu0 %v7569
      %v7571 = vpop.xlane.xlu0 %7570
      %v7572 = vadd.f32 %v7458, %v7460
      %7573 = vadd.xlane.f32.xlu0 %v7572
      %v7574 = vpop.xlane.xlu0 %7573
      %v7575 = vadd.f32 %v7462, %v7464
      %7576 = vadd.xlane.f32.xlu0 %v7575
      %v7577 = vpop.xlane.xlu0 %7576
      %v7578 = vadd.f32 %v7466, %v7468
      %7579 = vadd.xlane.f32.xlu0 %v7578
      %v7580 = vpop.xlane.xlu0 %7579
      %v7581 = vadd.f32 %v7470, %v7472
      %7582 = vadd.xlane.f32.xlu0 %v7581
      %v7583 = vpop.xlane.xlu0 %7582
      %v7584 = vadd.f32 %v7474, %v7476
      %7585 = vadd.xlane.f32.xlu0 %v7584
      %v7586 = vpop.xlane.xlu0 %7585
      %v7587 = vadd.f32 %v7478, %v7480
      %7588 = vadd.xlane.f32.xlu0 %v7587
      %v7589 = vpop.xlane.xlu0 %7588
      %v7590 = vadd.f32 %v7482, %v7484
      %7591 = vadd.xlane.f32.xlu0 %v7590
      %v7592 = vpop.xlane.xlu0 %7591
      %v7593 = vadd.f32 %v7486, %v7488
      %7594 = vadd.xlane.f32.xlu0 %v7593
      %v7595 = vpop.xlane.xlu0 %7594
      %v7596 = vadd.f32 %v7490, %v7492
      %7597 = vadd.xlane.f32.xlu0 %v7596
      %v7598 = vpop.xlane.xlu0 %7597
      %v7599 = vadd.f32 %v7494, %v7496
      %7600 = vadd.xlane.f32.xlu0 %v7599
      %v7601 = vpop.xlane.xlu0 %7600
      %v7602 = vadd.f32 %v7498, %v7500
      %7603 = vadd.xlane.f32.xlu0 %v7602
      %v7604 = vpop.xlane.xlu0 %7603
      %v7605 = vadd.f32 %v7502, %v7504
      %7606 = vadd.xlane.f32.xlu0 %v7605
      %v7607 = vpop.xlane.xlu0 %7606
      %v7608 = vadd.f32 %v7506, %v7508
      %7609 = vadd.xlane.f32.xlu0 %v7608
      %v7610 = vpop.xlane.xlu0 %7609
      %v7611 = vadd.f32 %v7510, %v7512
      %7612 = vadd.xlane.f32.xlu0 %v7611
      %v7613 = vpop.xlane.xlu0 %7612
      %v7614 = vadd.f32 %v7514, %v7516
      %7615 = vadd.xlane.f32.xlu0 %v7614
      %v7616 = vpop.xlane.xlu0 %7615
      %v7617 = vadd.f32 %v7518, %v7520
      %7618 = vadd.xlane.f32.xlu0 %v7617
      %v7619 = vpop.xlane.xlu0 %7618
      %v7620 = vadd.f32 %v7522, %v7524
      %7621 = vadd.xlane.f32.xlu0 %v7620
      %v7622 = vpop.xlane.xlu0 %7621
      %v7623 = vadd.f32 %v7526, %v7528
      %7624 = vadd.xlane.f32.xlu0 %v7623
      %v7625 = vpop.xlane.xlu0 %7624
      %v7626 = vadd.f32 %v7530, %v7532
      %7627 = vadd.xlane.f32.xlu0 %v7626
      %v7628 = vpop.xlane.xlu0 %7627
      %7629 = vrot.lane.b32.xlu0 %v1755, 48
      %v7630 = vpop.permute.xlu0 %7629
      %7631 = vrot.lane.b32.xlu0 %v1760, 48
      %v7632 = vpop.permute.xlu0 %7631
      %7633 = vrot.lane.b32.xlu0 %v1765, 48
      %v7634 = vpop.permute.xlu0 %7633
      %7635 = vrot.lane.b32.xlu0 %v1770, 48
      %v7636 = vpop.permute.xlu0 %7635
      %7637 = vrot.lane.b32.xlu0 %v1775, 48
      %v7638 = vpop.permute.xlu0 %7637
      %7639 = vrot.lane.b32.xlu0 %v1780, 48
      %v7640 = vpop.permute.xlu0 %7639
      %7641 = vrot.lane.b32.xlu0 %v1785, 48
      %v7642 = vpop.permute.xlu0 %7641
      %7643 = vrot.lane.b32.xlu0 %v1790, 48
      %v7644 = vpop.permute.xlu0 %7643
      %7645 = vrot.lane.b32.xlu0 %v1795, 48
      %v7646 = vpop.permute.xlu0 %7645
      %7647 = vrot.lane.b32.xlu0 %v1800, 48
      %v7648 = vpop.permute.xlu0 %7647
      %7649 = vrot.lane.b32.xlu0 %v1805, 48
      %v7650 = vpop.permute.xlu0 %7649
      %7651 = vrot.lane.b32.xlu0 %v1810, 48
      %v7652 = vpop.permute.xlu0 %7651
      %7653 = vrot.lane.b32.xlu0 %v1815, 48
      %v7654 = vpop.permute.xlu0 %7653
      %7655 = vrot.lane.b32.xlu0 %v1820, 48
      %v7656 = vpop.permute.xlu0 %7655
      %7657 = vrot.lane.b32.xlu0 %v1825, 48
      %v7658 = vpop.permute.xlu0 %7657
      %7659 = vrot.lane.b32.xlu0 %v1830, 48
      %v7660 = vpop.permute.xlu0 %7659
      %7661 = vrot.lane.b32.xlu0 %v1835, 48
      %v7662 = vpop.permute.xlu0 %7661
      %7663 = vrot.lane.b32.xlu0 %v1840, 48
      %v7664 = vpop.permute.xlu0 %7663
      %7665 = vrot.lane.b32.xlu0 %v1845, 48
      %v7666 = vpop.permute.xlu0 %7665
      %7667 = vrot.lane.b32.xlu0 %v1850, 48
      %v7668 = vpop.permute.xlu0 %7667
      %7669 = vrot.lane.b32.xlu0 %v1855, 48
      %v7670 = vpop.permute.xlu0 %7669
      %7671 = vrot.lane.b32.xlu0 %v1860, 48
      %v7672 = vpop.permute.xlu0 %7671
      %7673 = vrot.lane.b32.xlu0 %v1865, 48
      %v7674 = vpop.permute.xlu0 %7673
      %7675 = vrot.lane.b32.xlu0 %v1870, 48
      %v7676 = vpop.permute.xlu0 %7675
      %7677 = vrot.lane.b32.xlu0 %v1875, 48
      %v7678 = vpop.permute.xlu0 %7677
      %7679 = vrot.lane.b32.xlu0 %v1880, 48
      %v7680 = vpop.permute.xlu0 %7679
      %7681 = vrot.lane.b32.xlu0 %v1885, 48
      %v7682 = vpop.permute.xlu0 %7681
      %7683 = vrot.lane.b32.xlu0 %v1890, 48
      %v7684 = vpop.permute.xlu0 %7683
      %7685 = vrot.lane.b32.xlu0 %v1895, 48
      %v7686 = vpop.permute.xlu0 %7685
      %7687 = vrot.lane.b32.xlu0 %v1900, 48
      %v7688 = vpop.permute.xlu0 %7687
      %7689 = vrot.lane.b32.xlu0 %v1905, 48
      %v7690 = vpop.permute.xlu0 %7689
      %7691 = vrot.lane.b32.xlu0 %v1910, 48
      %v7692 = vpop.permute.xlu0 %7691
      %7725 = vmatprep.subr.mxu0 0.0
      %7726 = vmatpush1.msra.mxu0 %v7630
      %7727 = vmatprep.subr.mxu0 0.0
      %7728 = vmatpush1.msra.mxu0 %v7632
      %7729 = vmatprep.subr.mxu0 0.0
      %7730 = vmatpush1.msra.mxu0 %v7634
      %7731 = vmatprep.subr.mxu0 0.0
      %7732 = vmatpush1.msra.mxu0 %v7636
      %7733 = vmatprep.subr.mxu0 0.0
      %7734 = vmatpush1.msra.mxu0 %v7638
      %7735 = vmatprep.subr.mxu0 0.0
      %7736 = vmatpush1.msra.mxu0 %v7640
      %7737 = vmatprep.subr.mxu0 0.0
      %7738 = vmatpush1.msra.mxu0 %v7642
      %7739 = vmatprep.subr.mxu0 0.0
      %7740 = vmatpush1.msra.mxu0 %v7644
      %7741 = vmatprep.subr.mxu0 0.0
      %7742 = vmatpush1.msra.mxu0 %v7646
      %7743 = vmatprep.subr.mxu0 0.0
      %7744 = vmatpush1.msra.mxu0 %v7648
      %7745 = vmatprep.subr.mxu0 0.0
      %7746 = vmatpush1.msra.mxu0 %v7650
      %7747 = vmatprep.subr.mxu0 0.0
      %7748 = vmatpush1.msra.mxu0 %v7652
      %7749 = vmatprep.subr.mxu0 0.0
      %7750 = vmatpush1.msra.mxu0 %v7654
      %7751 = vmatprep.subr.mxu0 0.0
      %7752 = vmatpush1.msra.mxu0 %v7656
      %7753 = vmatprep.subr.mxu0 0.0
      %7754 = vmatpush1.msra.mxu0 %v7658
      %7755 = vmatprep.subr.mxu0 0.0
      %7756 = vmatpush1.msra.mxu0 %v7660
      %7757 = vmatprep.subr.mxu0 0.0
      %7758 = vmatpush1.msra.mxu0 %v7662
      %7759 = vmatprep.subr.mxu0 0.0
      %7760 = vmatpush1.msra.mxu0 %v7664
      %7761 = vmatprep.subr.mxu0 0.0
      %7762 = vmatpush1.msra.mxu0 %v7666
      %7763 = vmatprep.subr.mxu0 0.0
      %7764 = vmatpush1.msra.mxu0 %v7668
      %7765 = vmatprep.subr.mxu0 0.0
      %7766 = vmatpush1.msra.mxu0 %v7670
      %7767 = vmatprep.subr.mxu0 0.0
      %7768 = vmatpush1.msra.mxu0 %v7672
      %7769 = vmatprep.subr.mxu0 0.0
      %7770 = vmatpush1.msra.mxu0 %v7674
      %7771 = vmatprep.subr.mxu0 0.0
      %7772 = vmatpush1.msra.mxu0 %v7676
      %7773 = vmatprep.subr.mxu0 0.0
      %7774 = vmatpush1.msra.mxu0 %v7678
      %7775 = vmatprep.subr.mxu0 0.0
      %7776 = vmatpush1.msra.mxu0 %v7680
      %7777 = vmatprep.subr.mxu0 0.0
      %7778 = vmatpush1.msra.mxu0 %v7682
      %7779 = vmatprep.subr.mxu0 0.0
      %7780 = vmatpush1.msra.mxu0 %v7684
      %7781 = vmatprep.subr.mxu0 0.0
      %7782 = vmatpush1.msra.mxu0 %v7686
      %7783 = vmatprep.subr.mxu0 0.0
      %7784 = vmatpush1.msra.mxu0 %v7688
      %7785 = vmatprep.subr.mxu0 0.0
      %7786 = vmatpush1.msra.mxu0 %v7690
      %7787 = vmatprep.subr.mxu0 0.0
      %7788 = vmatpush1.msra.mxu0 %v7692
      %7789 = vmatprep.mubr.f32.mxu0 %v7408
      %7790 = vmatmul.mubr.f32.gmra.mrb[0].mxu0 %v7406
      %v7791 = vpop.f32.mrb[0].mxu0
      %v7792 = vadd.f32 0.0, %v7791
      %v7793 = vpop.f32.mrb[0].mxu0
      %7794 = vmatprep.mubr.f32.mxu0 %v7412
      %7795 = vmatmul.mubr.f32.gmra.mrb[0].mxu0 %v7410
      %v7796 = vpop.f32.mrb[0].mxu0
      %v7797 = vadd.f32 0.0, %v7796
      %v7798 = vpop.f32.mrb[0].mxu0
      %7799 = vmatprep.mubr.f32.mxu0 %v7416
      %7800 = vmatmul.mubr.f32.gmra.mrb[0].mxu0 %v7414
      %v7801 = vpop.f32.mrb[0].mxu0
      %v7802 = vadd.f32 0.0, %v7801
      %v7803 = vpop.f32.mrb[0].mxu0
      %7804 = vmatprep.mubr.f32.mxu0 %v7420
      %7805 = vmatmul.mubr.f32.gmra.mrb[0].mxu0 %v7418
      %v7806 = vpop.f32.mrb[0].mxu0
      %v7807 = vadd.f32 0.0, %v7806
      %v7808 = vpop.f32.mrb[0].mxu0
      %7809 = vmatprep.mubr.f32.mxu0 %v7424
      %7810 = vmatmul.mubr.f32.gmra.mrb[0].mxu0 %v7422
      %v7811 = vpop.f32.mrb[0].mxu0
      %v7812 = vadd.f32 0.0, %v7811
      %v7813 = vpop.f32.mrb[0].mxu0
      %7814 = vmatprep.mubr.f32.mxu0 %v7428
      %7815 = vmatmul.mubr.f32.gmra.mrb[0].mxu0 %v7426
      %v7816 = vpop.f32.mrb[0].mxu0
      %v7817 = vadd.f32 0.0, %v7816
      %v7818 = vpop.f32.mrb[0].mxu0
      %7819 = vmatprep.mubr.f32.mxu0 %v7432
      %7820 = vmatmul.mubr.f32.gmra.mrb[0].mxu0 %v7430
      %v7821 = vpop.f32.mrb[0].mxu0
      %v7822 = vadd.f32 0.0, %v7821
      %v7823 = vpop.f32.mrb[0].mxu0
      %7824 = vmatprep.mubr.f32.mxu0 %v7436
      %7825 = vmatmul.mubr.f32.gmra.mrb[0].mxu0 %v7434
      %v7826 = vpop.f32.mrb[0].mxu0
      %v7827 = vadd.f32 0.0, %v7826
      %v7828 = vpop.f32.mrb[0].mxu0
      %7829 = vmatprep.mubr.f32.mxu0 %v7440
      %7830 = vmatmul.mubr.f32.gmra.mrb[0].mxu0 %v7438
      %v7831 = vpop.f32.mrb[0].mxu0
      %v7832 = vadd.f32 0.0, %v7831
      %v7833 = vpop.f32.mrb[0].mxu0
      %7834 = vmatprep.mubr.f32.mxu0 %v7444
      %7835 = vmatmul.mubr.f32.gmra.mrb[0].mxu0 %v7442
      %v7836 = vpop.f32.mrb[0].mxu0
      %v7837 = vadd.f32 0.0, %v7836
      %v7838 = vpop.f32.mrb[0].mxu0
      %7839 = vmatprep.mubr.f32.mxu0 %v7448
      %7840 = vmatmul.mubr.f32.gmra.mrb[0].mxu0 %v7446
      %v7841 = vpop.f32.mrb[0].mxu0
      %v7842 = vadd.f32 0.0, %v7841
      %v7843 = vpop.f32.mrb[0].mxu0
      %7844 = vmatprep.mubr.f32.mxu0 %v7452
      %7845 = vmatmul.mubr.f32.gmra.mrb[0].mxu0 %v7450
      %v7846 = vpop.f32.mrb[0].mxu0
      %v7847 = vadd.f32 0.0, %v7846
      %v7848 = vpop.f32.mrb[0].mxu0
      %7849 = vmatprep.mubr.f32.mxu0 %v7456
      %7850 = vmatmul.mubr.f32.gmra.mrb[0].mxu0 %v7454
      %v7851 = vpop.f32.mrb[0].mxu0
      %v7852 = vadd.f32 0.0, %v7851
      %v7853 = vpop.f32.mrb[0].mxu0
      %7854 = vmatprep.mubr.f32.mxu0 %v7460
      %7855 = vmatmul.mubr.f32.gmra.mrb[0].mxu0 %v7458
      %v7856 = vpop.f32.mrb[0].mxu0
      %v7857 = vadd.f32 0.0, %v7856
      %v7858 = vpop.f32.mrb[0].mxu0
      %7859 = vmatprep.mubr.f32.mxu0 %v7464
      %7860 = vmatmul.mubr.f32.gmra.mrb[0].mxu0 %v7462
      %v7861 = vpop.f32.mrb[0].mxu0
      %v7862 = vadd.f32 0.0, %v7861
      %v7863 = vpop.f32.mrb[0].mxu0
      %7864 = vmatprep.mubr.f32.mxu0 %v7468
      %7865 = vmatmul.mubr.f32.gmra.mrb[0].mxu0 %v7466
      %v7866 = vpop.f32.mrb[0].mxu0
      %v7867 = vadd.f32 0.0, %v7866
      %v7868 = vpop.f32.mrb[0].mxu0
      %7869 = vmatprep.mubr.f32.mxu0 %v7472
      %7870 = vmatmul.mubr.f32.gmra.mrb[0].mxu0 %v7470
      %v7871 = vpop.f32.mrb[0].mxu0
      %v7872 = vadd.f32 0.0, %v7871
      %v7873 = vpop.f32.mrb[0].mxu0
      %7874 = vmatprep.mubr.f32.mxu0 %v7476
      %7875 = vmatmul.mubr.f32.gmra.mrb[0].mxu0 %v7474
      %v7876 = vpop.f32.mrb[0].mxu0
      %v7877 = vadd.f32 0.0, %v7876
      %v7878 = vpop.f32.mrb[0].mxu0
      %7879 = vmatprep.mubr.f32.mxu0 %v7480
      %7880 = vmatmul.mubr.f32.gmra.mrb[0].mxu0 %v7478
      %v7881 = vpop.f32.mrb[0].mxu0
      %v7882 = vadd.f32 0.0, %v7881
      %v7883 = vpop.f32.mrb[0].mxu0
      %7884 = vmatprep.mubr.f32.mxu0 %v7484
      %7885 = vmatmul.mubr.f32.gmra.mrb[0].mxu0 %v7482
      %v7886 = vpop.f32.mrb[0].mxu0
      %v7887 = vadd.f32 0.0, %v7886
      %v7888 = vpop.f32.mrb[0].mxu0
      %7889 = vmatprep.mubr.f32.mxu0 %v7488
      %7890 = vmatmul.mubr.f32.gmra.mrb[0].mxu0 %v7486
      %v7891 = vpop.f32.mrb[0].mxu0
      %v7892 = vadd.f32 0.0, %v7891
      %v7893 = vpop.f32.mrb[0].mxu0
      %7894 = vmatprep.mubr.f32.mxu0 %v7492
      %7895 = vmatmul.mubr.f32.gmra.mrb[0].mxu0 %v7490
      %v7896 = vpop.f32.mrb[0].mxu0
      %v7897 = vadd.f32 0.0, %v7896
      %v7898 = vpop.f32.mrb[0].mxu0
      %7899 = vmatprep.mubr.f32.mxu0 %v7496
      %7900 = vmatmul.mubr.f32.gmra.mrb[0].mxu0 %v7494
      %v7901 = vpop.f32.mrb[0].mxu0
      %v7902 = vadd.f32 0.0, %v7901
      %v7903 = vpop.f32.mrb[0].mxu0
      %7904 = vmatprep.mubr.f32.mxu0 %v7500
      %7905 = vmatmul.mubr.f32.gmra.mrb[0].mxu0 %v7498
      %v7906 = vpop.f32.mrb[0].mxu0
      %v7907 = vadd.f32 0.0, %v7906
      %v7908 = vpop.f32.mrb[0].mxu0
      %7909 = vmatprep.mubr.f32.mxu0 %v7504
      %7910 = vmatmul.mubr.f32.gmra.mrb[0].mxu0 %v7502
      %v7911 = vpop.f32.mrb[0].mxu0
      %v7912 = vadd.f32 0.0, %v7911
      %v7913 = vpop.f32.mrb[0].mxu0
      %7914 = vmatprep.mubr.f32.mxu0 %v7508
      %7915 = vmatmul.mubr.f32.gmra.mrb[0].mxu0 %v7506
      %v7916 = vpop.f32.mrb[0].mxu0
      %v7917 = vadd.f32 0.0, %v7916
      %v7918 = vpop.f32.mrb[0].mxu0
      %7919 = vmatprep.mubr.f32.mxu0 %v7512
      %7920 = vmatmul.mubr.f32.gmra.mrb[0].mxu0 %v7510
      %v7921 = vpop.f32.mrb[0].mxu0
      %v7922 = vadd.f32 0.0, %v7921
      %v7923 = vpop.f32.mrb[0].mxu0
      %7924 = vmatprep.mubr.f32.mxu0 %v7516
      %7925 = vmatmul.mubr.f32.gmra.mrb[0].mxu0 %v7514
      %v7926 = vpop.f32.mrb[0].mxu0
      %v7927 = vadd.f32 0.0, %v7926
      %v7928 = vpop.f32.mrb[0].mxu0
      %7929 = vmatprep.mubr.f32.mxu0 %v7520
      %7930 = vmatmul.mubr.f32.gmra.mrb[0].mxu0 %v7518
      %v7931 = vpop.f32.mrb[0].mxu0
      %v7932 = vadd.f32 0.0, %v7931
      %v7933 = vpop.f32.mrb[0].mxu0
      %7934 = vmatprep.mubr.f32.mxu0 %v7524
      %7935 = vmatmul.mubr.f32.gmra.mrb[0].mxu0 %v7522
      %v7936 = vpop.f32.mrb[0].mxu0
      %v7937 = vadd.f32 0.0, %v7936
      %v7938 = vpop.f32.mrb[0].mxu0
      %7939 = vmatprep.mubr.f32.mxu0 %v7528
      %7940 = vmatmul.mubr.f32.gmra.mrb[0].mxu0 %v7526
      %v7941 = vpop.f32.mrb[0].mxu0
      %v7942 = vadd.f32 0.0, %v7941
      %v7943 = vpop.f32.mrb[0].mxu0
      %7944 = vmatprep.mubr.f32.mxu0 %v7532
      %7945 = vmatmul.mubr.f32.gmra.mrb[0].mxu0 %v7530
      %v7946 = vpop.f32.mrb[0].mxu0
      %v7947 = vadd.f32 0.0, %v7946
      %v7948 = vpop.f32.mrb[0].mxu0
      %7949 = vdwg.mxu0
      %v7950 = vrcp.pop %v7535
      %v7951 = vrcp.pop %v7538
      %v7952 = vrcp.pop %v7541
      %v7953 = vrcp.pop %v7544
      %v7954 = vrcp.pop %v7547
      %v7955 = vrcp.pop %v7550
      %v7956 = vrcp.pop %v7553
      %v7957 = vrcp.pop %v7556
      %v7958 = vrcp.pop %v7559
      %v7959 = vrcp.pop %v7562
      %v7960 = vrcp.pop %v7565
      %v7961 = vrcp.pop %v7568
      %v7962 = vrcp.pop %v7571
      %v7963 = vrcp.pop %v7574
      %v7964 = vrcp.pop %v7577
      %v7965 = vrcp.pop %v7580
      %v7966 = vrcp.pop %v7583
      %v7967 = vrcp.pop %v7586
      %v7968 = vrcp.pop %v7589
      %v7969 = vrcp.pop %v7592
      %v7970 = vrcp.pop %v7595
      %v7971 = vrcp.pop %v7598
      %v7972 = vrcp.pop %v7601
      %v7973 = vrcp.pop %v7604
      %v7974 = vrcp.pop %v7607
      %v7975 = vrcp.pop %v7610
      %v7976 = vrcp.pop %v7613
      %v7977 = vrcp.pop %v7616
      %v7978 = vrcp.pop %v7619
      %v7979 = vrcp.pop %v7622
      %v7980 = vrcp.pop %v7625
      %v7981 = vrcp.pop %v7628
      %v7982 = vmul.f32 %v7792, %v7950
      %v7983 = vmul.f32 %v7797, %v7951
      %v7984 = vmul.f32 %v7802, %v7952
      %v7985 = vmul.f32 %v7807, %v7953
      %v7986 = vmul.f32 %v7812, %v7954
      %v7987 = vmul.f32 %v7817, %v7955
      %v7988 = vmul.f32 %v7822, %v7956
      %v7989 = vmul.f32 %v7827, %v7957
      %v7990 = vmul.f32 %v7832, %v7958
      %v7991 = vmul.f32 %v7837, %v7959
      %v7992 = vmul.f32 %v7842, %v7960
      %v7993 = vmul.f32 %v7847, %v7961
      %v7994 = vmul.f32 %v7852, %v7962
      %v7995 = vmul.f32 %v7857, %v7963
      %v7996 = vmul.f32 %v7862, %v7964
      %v7997 = vmul.f32 %v7867, %v7965
      %v7998 = vmul.f32 %v7872, %v7966
      %v7999 = vmul.f32 %v7877, %v7967
      %v8000 = vmul.f32 %v7882, %v7968
      %v8001 = vmul.f32 %v7887, %v7969
      %v8002 = vmul.f32 %v7892, %v7970
      %v8003 = vmul.f32 %v7897, %v7971
      %v8004 = vmul.f32 %v7902, %v7972
      %v8005 = vmul.f32 %v7907, %v7973
      %v8006 = vmul.f32 %v7912, %v7974
      %v8007 = vmul.f32 %v7917, %v7975
      %v8008 = vmul.f32 %v7922, %v7976
      %v8009 = vmul.f32 %v7927, %v7977
      %v8010 = vmul.f32 %v7932, %v7978
      %v8011 = vmul.f32 %v7937, %v7979
      %v8012 = vmul.f32 %v7942, %v7980
      %v8013 = vmul.f32 %v7947, %v7981
      %v8014 = vsel %vm4557, %v1755, 0.0
      %v8015 = vsel %vm4557, %v1760, 0.0
      %v8016 = vadd.f32 %v8014, %v8015
      %v8017 = vsel %vm4557, %v1765, 0.0
      %v8018 = vadd.f32 %v8016, %v8017
      %v8019 = vsel %vm4557, %v1770, 0.0
      %v8020 = vadd.f32 %v8018, %v8019
      %v8021 = vsel %vm4557, %v1775, 0.0
      %v8022 = vadd.f32 %v8020, %v8021
      %v8023 = vsel %vm4557, %v1780, 0.0
      %v8024 = vadd.f32 %v8022, %v8023
      %v8025 = vsel %vm4557, %v1785, 0.0
      %v8026 = vadd.f32 %v8024, %v8025
      %v8027 = vsel %vm4557, %v1790, 0.0
      %v8028 = vadd.f32 %v8026, %v8027
      %v8029 = vsel %vm4557, %v1795, 0.0
      %v8030 = vadd.f32 %v8028, %v8029
      %v8031 = vsel %vm4557, %v1800, 0.0
      %v8032 = vadd.f32 %v8030, %v8031
      %v8033 = vsel %vm4557, %v1805, 0.0
      %v8034 = vadd.f32 %v8032, %v8033
      %v8035 = vsel %vm4557, %v1810, 0.0
      %v8036 = vadd.f32 %v8034, %v8035
      %v8037 = vsel %vm4557, %v1815, 0.0
      %v8038 = vadd.f32 %v8036, %v8037
      %v8039 = vsel %vm4557, %v1820, 0.0
      %v8040 = vadd.f32 %v8038, %v8039
      %v8041 = vsel %vm4557, %v1825, 0.0
      %v8042 = vadd.f32 %v8040, %v8041
      %v8043 = vsel %vm4557, %v1830, 0.0
      %v8044 = vadd.f32 %v8042, %v8043
      %v8045 = vsel %vm4557, %v1835, 0.0
      %v8046 = vadd.f32 %v8044, %v8045
      %v8047 = vsel %vm4557, %v1840, 0.0
      %v8048 = vadd.f32 %v8046, %v8047
      %v8049 = vsel %vm4557, %v1845, 0.0
      %v8050 = vadd.f32 %v8048, %v8049
      %v8051 = vsel %vm4557, %v1850, 0.0
      %v8052 = vadd.f32 %v8050, %v8051
      %v8053 = vsel %vm4557, %v1855, 0.0
      %v8054 = vadd.f32 %v8052, %v8053
      %v8055 = vsel %vm4557, %v1860, 0.0
      %v8056 = vadd.f32 %v8054, %v8055
      %v8057 = vsel %vm4557, %v1865, 0.0
      %v8058 = vadd.f32 %v8056, %v8057
      %v8059 = vsel %vm4557, %v1870, 0.0
      %v8060 = vadd.f32 %v8058, %v8059
      %v8061 = vsel %vm4557, %v1875, 0.0
      %v8062 = vadd.f32 %v8060, %v8061
      %v8063 = vsel %vm4557, %v1880, 0.0
      %v8064 = vadd.f32 %v8062, %v8063
      %v8065 = vsel %vm4557, %v1885, 0.0
      %v8066 = vadd.f32 %v8064, %v8065
      %v8067 = vsel %vm4557, %v1890, 0.0
      %v8068 = vadd.f32 %v8066, %v8067
      %v8069 = vsel %vm4557, %v1895, 0.0
      %v8070 = vadd.f32 %v8068, %v8069
      %v8071 = vsel %vm4557, %v1900, 0.0
      %v8072 = vadd.f32 %v8070, %v8071
      %v8073 = vsel %vm4557, %v1905, 0.0
      %v8074 = vadd.f32 %v8072, %v8073
      %v8075 = vsel %vm4557, %v1910, 0.0
      %v8076 = vadd.f32 %v8074, %v8075
      %v8077 = vrot.slane %v8076, 4
      %v8078 = vadd.f32 %v8076, %v8077
      %v8079 = vrot.slane %v8078, 2
      %v8080 = vadd.f32 %v8078, %v8079
      %v8081 = vrot.slane %v8080, 1
      %v8082 = vadd.f32 %v8080, %v8081
      %v8083 = vmul.f32 %v8082, 1e-09
      %8085 = vrot.lane.b32.xlu0 %v8083, 48
      %v8086 = vpop.permute.xlu0 %8085
      %v8088 = vadd.f32 %v7982, %v8086
      %v8089 = vadd.f32 %v7983, %v8086
      %v8090 = vadd.f32 %v7984, %v8086
      %v8091 = vadd.f32 %v7985, %v8086
      %v8092 = vadd.f32 %v7986, %v8086
      %v8093 = vadd.f32 %v7987, %v8086
      %v8094 = vadd.f32 %v7988, %v8086
      %v8095 = vadd.f32 %v7989, %v8086
      %v8096 = vadd.f32 %v7990, %v8086
      %v8097 = vadd.f32 %v7991, %v8086
      %v8098 = vadd.f32 %v7992, %v8086
      %v8099 = vadd.f32 %v7993, %v8086
      %v8100 = vadd.f32 %v7994, %v8086
      %v8101 = vadd.f32 %v7995, %v8086
      %v8102 = vadd.f32 %v7996, %v8086
      %v8103 = vadd.f32 %v7997, %v8086
      %v8104 = vadd.f32 %v7998, %v8086
      %v8105 = vadd.f32 %v7999, %v8086
      %v8106 = vadd.f32 %v8000, %v8086
      %v8107 = vadd.f32 %v8001, %v8086
      %v8108 = vadd.f32 %v8002, %v8086
      %v8109 = vadd.f32 %v8003, %v8086
      %v8110 = vadd.f32 %v8004, %v8086
      %v8111 = vadd.f32 %v8005, %v8086
      %v8112 = vadd.f32 %v8006, %v8086
      %v8113 = vadd.f32 %v8007, %v8086
      %v8114 = vadd.f32 %v8008, %v8086
      %v8115 = vadd.f32 %v8009, %v8086
      %v8116 = vadd.f32 %v8010, %v8086
      %v8117 = vadd.f32 %v8011, %v8086
      %v8118 = vadd.f32 %v8012, %v8086
      %v8119 = vadd.f32 %v8013, %v8086
      %v8121 = vsel %vm351, %v8088, 0
      %v8124 = vsel %vm351, %v8089, 0
      %v8127 = vsel %vm351, %v8090, 0
      %v8130 = vsel %vm351, %v8091, 0
      %v8133 = vsel %vm351, %v8092, 0
      %v8136 = vsel %vm351, %v8093, 0
      %v8139 = vsel %vm351, %v8094, 0
      %v8142 = vsel %vm351, %v8095, 0
      %v8145 = vsel %vm351, %v8096, 0
      %v8148 = vsel %vm351, %v8097, 0
      %v8151 = vsel %vm351, %v8098, 0
      %v8154 = vsel %vm351, %v8099, 0
      %v8157 = vsel %vm351, %v8100, 0
      %v8160 = vsel %vm351, %v8101, 0
      %v8163 = vsel %vm351, %v8102, 0
      %v8166 = vsel %vm351, %v8103, 0
      %v8169 = vsel %vm351, %v8104, 0
      %v8172 = vsel %vm351, %v8105, 0
      %v8175 = vsel %vm351, %v8106, 0
      %v8178 = vsel %vm351, %v8107, 0
      %v8181 = vsel %vm351, %v8108, 0
      %v8184 = vsel %vm351, %v8109, 0
      %v8187 = vsel %vm351, %v8110, 0
      %v8190 = vsel %vm351, %v8111, 0
      %v8193 = vsel %vm351, %v8112, 0
      %v8196 = vsel %vm351, %v8113, 0
      %v8199 = vsel %vm351, %v8114, 0
      %v8202 = vsel %vm351, %v8115, 0
      %v8205 = vsel %vm351, %v8116, 0
      %v8208 = vsel %vm351, %v8117, 0
      %v8211 = vsel %vm351, %v8118, 0
      %v8214 = vsel %vm351, %v8119, 0
      %8216 = vmatprep.subr.mxu0 0.0
      %8217 = vmatpush1.msra.mxu0 %v1915
      %8218 = vmatprep.subr.mxu0 0.0
      %8219 = vmatpush1.msra.mxu0 %v1916
      %8220 = vmatprep.subr.mxu0 0.0
      %8221 = vmatpush1.msra.mxu0 0.0
      %8222 = vmatprep.subr.mxu0 0.0
      %8223 = vmatpush1.msra.mxu0 0.0
      %8224 = vmatprep.subr.mxu0 0.0
      %8225 = vmatpush1.msra.mxu0 0.0
      %8226 = vmatprep.subr.mxu0 0.0
      %8227 = vmatpush1.msra.mxu0 0.0
      %8228 = vmatprep.subr.mxu0 0.0
      %8229 = vmatpush1.msra.mxu0 0.0
      %8230 = vmatprep.subr.mxu0 0.0
      %8231 = vmatpush1.msra.mxu0 0.0
      %8232 = vmatprep.subr.mxu0 0.0
      %8233 = vmatpush1.msra.mxu0 0.0
      %8234 = vmatprep.subr.mxu0 0.0
      %8235 = vmatpush1.msra.mxu0 0.0
      %8236 = vmatprep.subr.mxu0 0.0
      %8237 = vmatpush1.msra.mxu0 0.0
      %8238 = vmatprep.subr.mxu0 0.0
      %8239 = vmatpush1.msra.mxu0 0.0
      %8240 = vmatprep.subr.mxu0 0.0
      %8241 = vmatpush1.msra.mxu0 0.0
      %8242 = vmatprep.subr.mxu0 0.0
      %8243 = vmatpush1.msra.mxu0 0.0
      %8244 = vmatprep.subr.mxu0 0.0
      %8245 = vmatpush1.msra.mxu0 0.0
      %8246 = vmatprep.subr.mxu0 0.0
      %8247 = vmatpush1.msra.mxu0 0.0
      %8248 = vmatprep.subr.mxu0 0.0
      %8249 = vmatpush1.msra.mxu0 0.0
      %8250 = vmatprep.subr.mxu0 0.0
      %8251 = vmatpush1.msra.mxu0 0.0
      %8252 = vmatprep.subr.mxu0 0.0
      %8253 = vmatpush1.msra.mxu0 0.0
      %8254 = vmatprep.subr.mxu0 0.0
      %8255 = vmatpush1.msra.mxu0 0.0
      %8256 = vmatprep.subr.mxu0 0.0
      %8257 = vmatpush1.msra.mxu0 0.0
      %8258 = vmatprep.subr.mxu0 0.0
      %8259 = vmatpush1.msra.mxu0 0.0
      %8260 = vmatprep.subr.mxu0 0.0
      %8261 = vmatpush1.msra.mxu0 0.0
      %8262 = vmatprep.subr.mxu0 0.0
      %8263 = vmatpush1.msra.mxu0 0.0
      %8264 = vmatprep.subr.mxu0 0.0
      %8265 = vmatpush1.msra.mxu0 0.0
      %8266 = vmatprep.subr.mxu0 0.0
      %8267 = vmatpush1.msra.mxu0 0.0
      %8268 = vmatprep.subr.mxu0 0.0
      %8269 = vmatpush1.msra.mxu0 0.0
      %8270 = vmatprep.subr.mxu0 0.0
      %8271 = vmatpush1.msra.mxu0 0.0
      %8272 = vmatprep.subr.mxu0 0.0
      %8273 = vmatpush1.msra.mxu0 0.0
      %8274 = vmatprep.subr.mxu0 0.0
      %8275 = vmatpush1.msra.mxu0 0.0
      %8276 = vmatprep.subr.mxu0 0.0
      %8277 = vmatpush1.msra.mxu0 0.0
      %8278 = vmatprep.subr.mxu0 0.0
      %8279 = vmatpush1.msra.mxu0 0.0
      %8280 = vmatprep.mubr.f32.mxu0 0.0
      %8281 = vmatmul.mubr.f32.gmra.mrb[0].mxu0 %v8121
      %v8282 = vpop.f32.mrb[0].mxu0
      %v8283 = vadd.f32 0.0, %v8282
      %v8284 = vpop.f32.mrb[0].mxu0
      %8285 = vmatprep.mubr.f32.mxu0 0.0
      %8286 = vmatmul.mubr.f32.gmra.mrb[0].mxu0 %v8124
      %v8287 = vpop.f32.mrb[0].mxu0
      %v8288 = vadd.f32 0.0, %v8287
      %v8289 = vpop.f32.mrb[0].mxu0
      %8290 = vmatprep.mubr.f32.mxu0 0.0
      %8291 = vmatmul.mubr.f32.gmra.mrb[0].mxu0 %v8127
      %v8292 = vpop.f32.mrb[0].mxu0
      %v8293 = vadd.f32 0.0, %v8292
      %v8294 = vpop.f32.mrb[0].mxu0
      %8295 = vmatprep.mubr.f32.mxu0 0.0
      %8296 = vmatmul.mubr.f32.gmra.mrb[0].mxu0 %v8130
      %v8297 = vpop.f32.mrb[0].mxu0
      %v8298 = vadd.f32 0.0, %v8297
      %v8299 = vpop.f32.mrb[0].mxu0
      %8300 = vmatprep.mubr.f32.mxu0 0.0
      %8301 = vmatmul.mubr.f32.gmra.mrb[0].mxu0 %v8133
      %v8302 = vpop.f32.mrb[0].mxu0
      %v8303 = vadd.f32 0.0, %v8302
      %v8304 = vpop.f32.mrb[0].mxu0
      %8305 = vmatprep.mubr.f32.mxu0 0.0
      %8306 = vmatmul.mubr.f32.gmra.mrb[0].mxu0 %v8136
      %v8307 = vpop.f32.mrb[0].mxu0
      %v8308 = vadd.f32 0.0, %v8307
      %v8309 = vpop.f32.mrb[0].mxu0
      %8310 = vmatprep.mubr.f32.mxu0 0.0
      %8311 = vmatmul.mubr.f32.gmra.mrb[0].mxu0 %v8139
      %v8312 = vpop.f32.mrb[0].mxu0
      %v8313 = vadd.f32 0.0, %v8312
      %v8314 = vpop.f32.mrb[0].mxu0
      %8315 = vmatprep.mubr.f32.mxu0 0.0
      %8316 = vmatmul.mubr.f32.gmra.mrb[0].mxu0 %v8142
      %v8317 = vpop.f32.mrb[0].mxu0
      %v8318 = vadd.f32 0.0, %v8317
      %v8319 = vpop.f32.mrb[0].mxu0
      %8320 = vmatprep.mubr.f32.mxu0 0.0
      %8321 = vmatmul.mubr.f32.gmra.mrb[0].mxu0 %v8145
      %v8322 = vpop.f32.mrb[0].mxu0
      %v8323 = vadd.f32 0.0, %v8322
      %v8324 = vpop.f32.mrb[0].mxu0
      %8325 = vmatprep.mubr.f32.mxu0 0.0
      %8326 = vmatmul.mubr.f32.gmra.mrb[0].mxu0 %v8148
      %v8327 = vpop.f32.mrb[0].mxu0
      %v8328 = vadd.f32 0.0, %v8327
      %v8329 = vpop.f32.mrb[0].mxu0
      %8330 = vmatprep.mubr.f32.mxu0 0.0
      %8331 = vmatmul.mubr.f32.gmra.mrb[0].mxu0 %v8151
      %v8332 = vpop.f32.mrb[0].mxu0
      %v8333 = vadd.f32 0.0, %v8332
      %v8334 = vpop.f32.mrb[0].mxu0
      %8335 = vmatprep.mubr.f32.mxu0 0.0
      %8336 = vmatmul.mubr.f32.gmra.mrb[0].mxu0 %v8154
      %v8337 = vpop.f32.mrb[0].mxu0
      %v8338 = vadd.f32 0.0, %v8337
      %v8339 = vpop.f32.mrb[0].mxu0
      %8340 = vmatprep.mubr.f32.mxu0 0.0
      %8341 = vmatmul.mubr.f32.gmra.mrb[0].mxu0 %v8157
      %v8342 = vpop.f32.mrb[0].mxu0
      %v8343 = vadd.f32 0.0, %v8342
      %v8344 = vpop.f32.mrb[0].mxu0
      %8345 = vmatprep.mubr.f32.mxu0 0.0
      %8346 = vmatmul.mubr.f32.gmra.mrb[0].mxu0 %v8160
      %v8347 = vpop.f32.mrb[0].mxu0
      %v8348 = vadd.f32 0.0, %v8347
      %v8349 = vpop.f32.mrb[0].mxu0
      %8350 = vmatprep.mubr.f32.mxu0 0.0
      %8351 = vmatmul.mubr.f32.gmra.mrb[0].mxu0 %v8163
      %v8352 = vpop.f32.mrb[0].mxu0
      %v8353 = vadd.f32 0.0, %v8352
      %v8354 = vpop.f32.mrb[0].mxu0
      %8355 = vmatprep.mubr.f32.mxu0 0.0
      %8356 = vmatmul.mubr.f32.gmra.mrb[0].mxu0 %v8166
      %v8357 = vpop.f32.mrb[0].mxu0
      %v8358 = vadd.f32 0.0, %v8357
      %v8359 = vpop.f32.mrb[0].mxu0
      %8360 = vmatprep.mubr.f32.mxu0 0.0
      %8361 = vmatmul.mubr.f32.gmra.mrb[0].mxu0 %v8169
      %v8362 = vpop.f32.mrb[0].mxu0
      %v8363 = vadd.f32 0.0, %v8362
      %v8364 = vpop.f32.mrb[0].mxu0
      %8365 = vmatprep.mubr.f32.mxu0 0.0
      %8366 = vmatmul.mubr.f32.gmra.mrb[0].mxu0 %v8172
      %v8367 = vpop.f32.mrb[0].mxu0
      %v8368 = vadd.f32 0.0, %v8367
      %v8369 = vpop.f32.mrb[0].mxu0
      %8370 = vmatprep.mubr.f32.mxu0 0.0
      %8371 = vmatmul.mubr.f32.gmra.mrb[0].mxu0 %v8175
      %v8372 = vpop.f32.mrb[0].mxu0
      %v8373 = vadd.f32 0.0, %v8372
      %v8374 = vpop.f32.mrb[0].mxu0
      %8375 = vmatprep.mubr.f32.mxu0 0.0
      %8376 = vmatmul.mubr.f32.gmra.mrb[0].mxu0 %v8178
      %v8377 = vpop.f32.mrb[0].mxu0
      %v8378 = vadd.f32 0.0, %v8377
      %v8379 = vpop.f32.mrb[0].mxu0
      %8380 = vmatprep.mubr.f32.mxu0 0.0
      %8381 = vmatmul.mubr.f32.gmra.mrb[0].mxu0 %v8181
      %v8382 = vpop.f32.mrb[0].mxu0
      %v8383 = vadd.f32 0.0, %v8382
      %v8384 = vpop.f32.mrb[0].mxu0
      %8385 = vmatprep.mubr.f32.mxu0 0.0
      %8386 = vmatmul.mubr.f32.gmra.mrb[0].mxu0 %v8184
      %v8387 = vpop.f32.mrb[0].mxu0
      %v8388 = vadd.f32 0.0, %v8387
      %v8389 = vpop.f32.mrb[0].mxu0
      %8390 = vmatprep.mubr.f32.mxu0 0.0
      %8391 = vmatmul.mubr.f32.gmra.mrb[0].mxu0 %v8187
      %v8392 = vpop.f32.mrb[0].mxu0
      %v8393 = vadd.f32 0.0, %v8392
      %v8394 = vpop.f32.mrb[0].mxu0
      %8395 = vmatprep.mubr.f32.mxu0 0.0
      %8396 = vmatmul.mubr.f32.gmra.mrb[0].mxu0 %v8190
      %v8397 = vpop.f32.mrb[0].mxu0
      %v8398 = vadd.f32 0.0, %v8397
      %v8399 = vpop.f32.mrb[0].mxu0
      %8400 = vmatprep.mubr.f32.mxu0 0.0
      %8401 = vmatmul.mubr.f32.gmra.mrb[0].mxu0 %v8193
      %v8402 = vpop.f32.mrb[0].mxu0
      %v8403 = vadd.f32 0.0, %v8402
      %v8404 = vpop.f32.mrb[0].mxu0
      %8405 = vmatprep.mubr.f32.mxu0 0.0
      %8406 = vmatmul.mubr.f32.gmra.mrb[0].mxu0 %v8196
      %v8407 = vpop.f32.mrb[0].mxu0
      %v8408 = vadd.f32 0.0, %v8407
      %v8409 = vpop.f32.mrb[0].mxu0
      %8410 = vmatprep.mubr.f32.mxu0 0.0
      %8411 = vmatmul.mubr.f32.gmra.mrb[0].mxu0 %v8199
      %v8412 = vpop.f32.mrb[0].mxu0
      %v8413 = vadd.f32 0.0, %v8412
      %v8414 = vpop.f32.mrb[0].mxu0
      %8415 = vmatprep.mubr.f32.mxu0 0.0
      %8416 = vmatmul.mubr.f32.gmra.mrb[0].mxu0 %v8202
      %v8417 = vpop.f32.mrb[0].mxu0
      %v8418 = vadd.f32 0.0, %v8417
      %v8419 = vpop.f32.mrb[0].mxu0
      %8420 = vmatprep.mubr.f32.mxu0 0.0
      %8421 = vmatmul.mubr.f32.gmra.mrb[0].mxu0 %v8205
      %v8422 = vpop.f32.mrb[0].mxu0
      %v8423 = vadd.f32 0.0, %v8422
      %v8424 = vpop.f32.mrb[0].mxu0
      %8425 = vmatprep.mubr.f32.mxu0 0.0
      %8426 = vmatmul.mubr.f32.gmra.mrb[0].mxu0 %v8208
      %v8427 = vpop.f32.mrb[0].mxu0
      %v8428 = vadd.f32 0.0, %v8427
      %v8429 = vpop.f32.mrb[0].mxu0
      %8430 = vmatprep.mubr.f32.mxu0 0.0
      %8431 = vmatmul.mubr.f32.gmra.mrb[0].mxu0 %v8211
      %v8432 = vpop.f32.mrb[0].mxu0
      %v8433 = vadd.f32 0.0, %v8432
      %v8434 = vpop.f32.mrb[0].mxu0
      %8435 = vmatprep.mubr.f32.mxu0 0.0
      %8436 = vmatmul.mubr.f32.gmra.mrb[0].mxu0 %v8214
      %v8437 = vpop.f32.mrb[0].mxu0
      %v8438 = vadd.f32 0.0, %v8437
      %v8439 = vpop.f32.mrb[0].mxu0
      %8440 = vdwg.mxu0
      %v8442 = vsel %vm351, %v6700, 0
      %v8445 = vsel %vm351, %v6701, 0
      %v8448 = vsel %vm351, %v6702, 0
      %v8451 = vsel %vm351, %v6703, 0
      %v8454 = vsel %vm351, %v6704, 0
      %v8457 = vsel %vm351, %v6705, 0
      %v8460 = vsel %vm351, %v6706, 0
      %v8463 = vsel %vm351, %v6707, 0
      %v8466 = vsel %vm351, %v6708, 0
      %v8469 = vsel %vm351, %v6709, 0
      %v8472 = vsel %vm351, %v6710, 0
      %v8475 = vsel %vm351, %v6711, 0
      %v8478 = vsel %vm351, %v6712, 0
      %v8481 = vsel %vm351, %v6713, 0
      %v8484 = vsel %vm351, %v6714, 0
      %v8487 = vsel %vm351, %v6715, 0
      %v8490 = vsel %vm351, %v6716, 0
      %v8493 = vsel %vm351, %v6717, 0
      %v8496 = vsel %vm351, %v6718, 0
      %v8499 = vsel %vm351, %v6719, 0
      %v8502 = vsel %vm351, %v6720, 0
      %v8505 = vsel %vm351, %v6721, 0
      %v8508 = vsel %vm351, %v6722, 0
      %v8511 = vsel %vm351, %v6723, 0
      %v8514 = vsel %vm351, %v6724, 0
      %v8517 = vsel %vm351, %v6725, 0
      %v8520 = vsel %vm351, %v6726, 0
      %v8523 = vsel %vm351, %v6727, 0
      %v8526 = vsel %vm351, %v6728, 0
      %v8529 = vsel %vm351, %v6729, 0
      %v8532 = vsel %vm351, %v6730, 0
      %v8535 = vsel %vm351, %v6731, 0
      %8537 = vmatprep.subr.mxu0 0.0
      %8538 = vmatpush1.msra.mxu0 %v1913
      %8539 = vmatprep.subr.mxu0 0.0
      %8540 = vmatpush1.msra.mxu0 %v1914
      %8541 = vmatprep.subr.mxu0 0.0
      %8542 = vmatpush1.msra.mxu0 0.0
      %8543 = vmatprep.subr.mxu0 0.0
      %8544 = vmatpush1.msra.mxu0 0.0
      %8545 = vmatprep.subr.mxu0 0.0
      %8546 = vmatpush1.msra.mxu0 0.0
      %8547 = vmatprep.subr.mxu0 0.0
      %8548 = vmatpush1.msra.mxu0 0.0
      %8549 = vmatprep.subr.mxu0 0.0
      %8550 = vmatpush1.msra.mxu0 0.0
      %8551 = vmatprep.subr.mxu0 0.0
      %8552 = vmatpush1.msra.mxu0 0.0
      %8553 = vmatprep.subr.mxu0 0.0
      %8554 = vmatpush1.msra.mxu0 0.0
      %8555 = vmatprep.subr.mxu0 0.0
      %8556 = vmatpush1.msra.mxu0 0.0
      %8557 = vmatprep.subr.mxu0 0.0
      %8558 = vmatpush1.msra.mxu0 0.0
      %8559 = vmatprep.subr.mxu0 0.0
      %8560 = vmatpush1.msra.mxu0 0.0
      %8561 = vmatprep.subr.mxu0 0.0
      %8562 = vmatpush1.msra.mxu0 0.0
      %8563 = vmatprep.subr.mxu0 0.0
      %8564 = vmatpush1.msra.mxu0 0.0
      %8565 = vmatprep.subr.mxu0 0.0
      %8566 = vmatpush1.msra.mxu0 0.0
      %8567 = vmatprep.subr.mxu0 0.0
      %8568 = vmatpush1.msra.mxu0 0.0
      %8569 = vmatprep.subr.mxu0 0.0
      %8570 = vmatpush1.msra.mxu0 0.0
      %8571 = vmatprep.subr.mxu0 0.0
      %8572 = vmatpush1.msra.mxu0 0.0
      %8573 = vmatprep.subr.mxu0 0.0
      %8574 = vmatpush1.msra.mxu0 0.0
      %8575 = vmatprep.subr.mxu0 0.0
      %8576 = vmatpush1.msra.mxu0 0.0
      %8577 = vmatprep.subr.mxu0 0.0
      %8578 = vmatpush1.msra.mxu0 0.0
      %8579 = vmatprep.subr.mxu0 0.0
      %8580 = vmatpush1.msra.mxu0 0.0
      %8581 = vmatprep.subr.mxu0 0.0
      %8582 = vmatpush1.msra.mxu0 0.0
      %8583 = vmatprep.subr.mxu0 0.0
      %8584 = vmatpush1.msra.mxu0 0.0
      %8585 = vmatprep.subr.mxu0 0.0
      %8586 = vmatpush1.msra.mxu0 0.0
      %8587 = vmatprep.subr.mxu0 0.0
      %8588 = vmatpush1.msra.mxu0 0.0
      %8589 = vmatprep.subr.mxu0 0.0
      %8590 = vmatpush1.msra.mxu0 0.0
      %8591 = vmatprep.subr.mxu0 0.0
      %8592 = vmatpush1.msra.mxu0 0.0
      %8593 = vmatprep.subr.mxu0 0.0
      %8594 = vmatpush1.msra.mxu0 0.0
      %8595 = vmatprep.subr.mxu0 0.0
      %8596 = vmatpush1.msra.mxu0 0.0
      %8597 = vmatprep.subr.mxu0 0.0
      %8598 = vmatpush1.msra.mxu0 0.0
      %8599 = vmatprep.subr.mxu0 0.0
      %8600 = vmatpush1.msra.mxu0 0.0
      %8601 = vmatprep.mubr.f32.mxu0 0.0
      %8602 = vmatmul.mubr.f32.gmra.mrb[0].mxu0 %v8442
      %v8603 = vpop.f32.mrb[0].mxu0
      %v8604 = vadd.f32 %v8283, %v8603
      %v8605 = vpop.f32.mrb[0].mxu0
      %8606 = vmatprep.mubr.f32.mxu0 0.0
      %8607 = vmatmul.mubr.f32.gmra.mrb[0].mxu0 %v8445
      %v8608 = vpop.f32.mrb[0].mxu0
      %v8609 = vadd.f32 %v8288, %v8608
      %v8610 = vpop.f32.mrb[0].mxu0
      %8611 = vmatprep.mubr.f32.mxu0 0.0
      %8612 = vmatmul.mubr.f32.gmra.mrb[0].mxu0 %v8448
      %v8613 = vpop.f32.mrb[0].mxu0
      %v8614 = vadd.f32 %v8293, %v8613
      %v8615 = vpop.f32.mrb[0].mxu0
      %8616 = vmatprep.mubr.f32.mxu0 0.0
      %8617 = vmatmul.mubr.f32.gmra.mrb[0].mxu0 %v8451
      %v8618 = vpop.f32.mrb[0].mxu0
      %v8619 = vadd.f32 %v8298, %v8618
      %v8620 = vpop.f32.mrb[0].mxu0
      %8621 = vmatprep.mubr.f32.mxu0 0.0
      %8622 = vmatmul.mubr.f32.gmra.mrb[0].mxu0 %v8454
      %v8623 = vpop.f32.mrb[0].mxu0
      %v8624 = vadd.f32 %v8303, %v8623
      %v8625 = vpop.f32.mrb[0].mxu0
      %8626 = vmatprep.mubr.f32.mxu0 0.0
      %8627 = vmatmul.mubr.f32.gmra.mrb[0].mxu0 %v8457
      %v8628 = vpop.f32.mrb[0].mxu0
      %v8629 = vadd.f32 %v8308, %v8628
      %v8630 = vpop.f32.mrb[0].mxu0
      %8631 = vmatprep.mubr.f32.mxu0 0.0
      %8632 = vmatmul.mubr.f32.gmra.mrb[0].mxu0 %v8460
      %v8633 = vpop.f32.mrb[0].mxu0
      %v8634 = vadd.f32 %v8313, %v8633
      %v8635 = vpop.f32.mrb[0].mxu0
      %8636 = vmatprep.mubr.f32.mxu0 0.0
      %8637 = vmatmul.mubr.f32.gmra.mrb[0].mxu0 %v8463
      %v8638 = vpop.f32.mrb[0].mxu0
      %v8639 = vadd.f32 %v8318, %v8638
      %v8640 = vpop.f32.mrb[0].mxu0
      %8641 = vmatprep.mubr.f32.mxu0 0.0
      %8642 = vmatmul.mubr.f32.gmra.mrb[0].mxu0 %v8466
      %v8643 = vpop.f32.mrb[0].mxu0
      %v8644 = vadd.f32 %v8323, %v8643
      %v8645 = vpop.f32.mrb[0].mxu0
      %8646 = vmatprep.mubr.f32.mxu0 0.0
      %8647 = vmatmul.mubr.f32.gmra.mrb[0].mxu0 %v8469
      %v8648 = vpop.f32.mrb[0].mxu0
      %v8649 = vadd.f32 %v8328, %v8648
      %v8650 = vpop.f32.mrb[0].mxu0
      %8651 = vmatprep.mubr.f32.mxu0 0.0
      %8652 = vmatmul.mubr.f32.gmra.mrb[0].mxu0 %v8472
      %v8653 = vpop.f32.mrb[0].mxu0
      %v8654 = vadd.f32 %v8333, %v8653
      %v8655 = vpop.f32.mrb[0].mxu0
      %8656 = vmatprep.mubr.f32.mxu0 0.0
      %8657 = vmatmul.mubr.f32.gmra.mrb[0].mxu0 %v8475
      %v8658 = vpop.f32.mrb[0].mxu0
      %v8659 = vadd.f32 %v8338, %v8658
      %v8660 = vpop.f32.mrb[0].mxu0
      %8661 = vmatprep.mubr.f32.mxu0 0.0
      %8662 = vmatmul.mubr.f32.gmra.mrb[0].mxu0 %v8478
      %v8663 = vpop.f32.mrb[0].mxu0
      %v8664 = vadd.f32 %v8343, %v8663
      %v8665 = vpop.f32.mrb[0].mxu0
      %8666 = vmatprep.mubr.f32.mxu0 0.0
      %8667 = vmatmul.mubr.f32.gmra.mrb[0].mxu0 %v8481
      %v8668 = vpop.f32.mrb[0].mxu0
      %v8669 = vadd.f32 %v8348, %v8668
      %v8670 = vpop.f32.mrb[0].mxu0
      %8671 = vmatprep.mubr.f32.mxu0 0.0
      %8672 = vmatmul.mubr.f32.gmra.mrb[0].mxu0 %v8484
      %v8673 = vpop.f32.mrb[0].mxu0
      %v8674 = vadd.f32 %v8353, %v8673
      %v8675 = vpop.f32.mrb[0].mxu0
      %8676 = vmatprep.mubr.f32.mxu0 0.0
      %8677 = vmatmul.mubr.f32.gmra.mrb[0].mxu0 %v8487
      %v8678 = vpop.f32.mrb[0].mxu0
      %v8679 = vadd.f32 %v8358, %v8678
      %v8680 = vpop.f32.mrb[0].mxu0
      %8681 = vmatprep.mubr.f32.mxu0 0.0
      %8682 = vmatmul.mubr.f32.gmra.mrb[0].mxu0 %v8490
      %v8683 = vpop.f32.mrb[0].mxu0
      %v8684 = vadd.f32 %v8363, %v8683
      %v8685 = vpop.f32.mrb[0].mxu0
      %8686 = vmatprep.mubr.f32.mxu0 0.0
      %8687 = vmatmul.mubr.f32.gmra.mrb[0].mxu0 %v8493
      %v8688 = vpop.f32.mrb[0].mxu0
      %v8689 = vadd.f32 %v8368, %v8688
      %v8690 = vpop.f32.mrb[0].mxu0
      %8691 = vmatprep.mubr.f32.mxu0 0.0
      %8692 = vmatmul.mubr.f32.gmra.mrb[0].mxu0 %v8496
      %v8693 = vpop.f32.mrb[0].mxu0
      %v8694 = vadd.f32 %v8373, %v8693
      %v8695 = vpop.f32.mrb[0].mxu0
      %8696 = vmatprep.mubr.f32.mxu0 0.0
      %8697 = vmatmul.mubr.f32.gmra.mrb[0].mxu0 %v8499
      %v8698 = vpop.f32.mrb[0].mxu0
      %v8699 = vadd.f32 %v8378, %v8698
      %v8700 = vpop.f32.mrb[0].mxu0
      %8701 = vmatprep.mubr.f32.mxu0 0.0
      %8702 = vmatmul.mubr.f32.gmra.mrb[0].mxu0 %v8502
      %v8703 = vpop.f32.mrb[0].mxu0
      %v8704 = vadd.f32 %v8383, %v8703
      %v8705 = vpop.f32.mrb[0].mxu0
      %8706 = vmatprep.mubr.f32.mxu0 0.0
      %8707 = vmatmul.mubr.f32.gmra.mrb[0].mxu0 %v8505
      %v8708 = vpop.f32.mrb[0].mxu0
      %v8709 = vadd.f32 %v8388, %v8708
      %v8710 = vpop.f32.mrb[0].mxu0
      %8711 = vmatprep.mubr.f32.mxu0 0.0
      %8712 = vmatmul.mubr.f32.gmra.mrb[0].mxu0 %v8508
      %v8713 = vpop.f32.mrb[0].mxu0
      %v8714 = vadd.f32 %v8393, %v8713
      %v8715 = vpop.f32.mrb[0].mxu0
      %8716 = vmatprep.mubr.f32.mxu0 0.0
      %8717 = vmatmul.mubr.f32.gmra.mrb[0].mxu0 %v8511
      %v8718 = vpop.f32.mrb[0].mxu0
      %v8719 = vadd.f32 %v8398, %v8718
      %v8720 = vpop.f32.mrb[0].mxu0
      %8721 = vmatprep.mubr.f32.mxu0 0.0
      %8722 = vmatmul.mubr.f32.gmra.mrb[0].mxu0 %v8514
      %v8723 = vpop.f32.mrb[0].mxu0
      %v8724 = vadd.f32 %v8403, %v8723
      %v8725 = vpop.f32.mrb[0].mxu0
      %8726 = vmatprep.mubr.f32.mxu0 0.0
      %8727 = vmatmul.mubr.f32.gmra.mrb[0].mxu0 %v8517
      %v8728 = vpop.f32.mrb[0].mxu0
      %v8729 = vadd.f32 %v8408, %v8728
      %v8730 = vpop.f32.mrb[0].mxu0
      %8731 = vmatprep.mubr.f32.mxu0 0.0
      %8732 = vmatmul.mubr.f32.gmra.mrb[0].mxu0 %v8520
      %v8733 = vpop.f32.mrb[0].mxu0
      %v8734 = vadd.f32 %v8413, %v8733
      %v8735 = vpop.f32.mrb[0].mxu0
      %8736 = vmatprep.mubr.f32.mxu0 0.0
      %8737 = vmatmul.mubr.f32.gmra.mrb[0].mxu0 %v8523
      %v8738 = vpop.f32.mrb[0].mxu0
      %v8739 = vadd.f32 %v8418, %v8738
      %v8740 = vpop.f32.mrb[0].mxu0
      %8741 = vmatprep.mubr.f32.mxu0 0.0
      %8742 = vmatmul.mubr.f32.gmra.mrb[0].mxu0 %v8526
      %v8743 = vpop.f32.mrb[0].mxu0
      %v8744 = vadd.f32 %v8423, %v8743
      %v8745 = vpop.f32.mrb[0].mxu0
      %8746 = vmatprep.mubr.f32.mxu0 0.0
      %8747 = vmatmul.mubr.f32.gmra.mrb[0].mxu0 %v8529
      %v8748 = vpop.f32.mrb[0].mxu0
      %v8749 = vadd.f32 %v8428, %v8748
      %v8750 = vpop.f32.mrb[0].mxu0
      %8751 = vmatprep.mubr.f32.mxu0 0.0
      %8752 = vmatmul.mubr.f32.gmra.mrb[0].mxu0 %v8532
      %v8753 = vpop.f32.mrb[0].mxu0
      %v8754 = vadd.f32 %v8433, %v8753
      %v8755 = vpop.f32.mrb[0].mxu0
      %8756 = vmatprep.mubr.f32.mxu0 0.0
      %8757 = vmatmul.mubr.f32.gmra.mrb[0].mxu0 %v8535
      %v8758 = vpop.f32.mrb[0].mxu0
      %v8759 = vadd.f32 %v8438, %v8758
      %v8760 = vpop.f32.mrb[0].mxu0
      %8761 = vdwg.mxu0
      %v8762 = vadd.f32 %v8604, %v5310
      %v8763 = vadd.f32 %v8609, %v5310
      %v8764 = vadd.f32 %v8614, %v5310
      %v8765 = vadd.f32 %v8619, %v5310
      %v8766 = vadd.f32 %v8624, %v5310
      %v8767 = vadd.f32 %v8629, %v5310
      %v8768 = vadd.f32 %v8634, %v5310
      %v8769 = vadd.f32 %v8639, %v5310
      %v8770 = vadd.f32 %v8644, %v5310
      %v8771 = vadd.f32 %v8649, %v5310
      %v8772 = vadd.f32 %v8654, %v5310
      %v8773 = vadd.f32 %v8659, %v5310
      %v8774 = vadd.f32 %v8664, %v5310
      %v8775 = vadd.f32 %v8669, %v5310
      %v8776 = vadd.f32 %v8674, %v5310
      %v8777 = vadd.f32 %v8679, %v5310
      %v8778 = vadd.f32 %v8684, %v5310
      %v8779 = vadd.f32 %v8689, %v5310
      %v8780 = vadd.f32 %v8694, %v5310
      %v8781 = vadd.f32 %v8699, %v5310
      %v8782 = vadd.f32 %v8704, %v5310
      %v8783 = vadd.f32 %v8709, %v5310
      %v8784 = vadd.f32 %v8714, %v5310
      %v8785 = vadd.f32 %v8719, %v5310
      %v8786 = vadd.f32 %v8724, %v5310
      %v8787 = vadd.f32 %v8729, %v5310
      %v8788 = vadd.f32 %v8734, %v5310
      %v8789 = vadd.f32 %v8739, %v5310
      %v8790 = vadd.f32 %v8744, %v5310
      %v8791 = vadd.f32 %v8749, %v5310
      %v8792 = vadd.f32 %v8754, %v5310
      %v8793 = vadd.f32 %v8759, %v5310
      %s8794 = scalar_lea.vmem %s285, 256
      %8795 = vst.msk [vmem:[%s8794] sm:$0xff] %vm351, %v8762
      %8796 = vst.msk [vmem:[%s8794 + $0x8] sm:$0xff] %vm351, %v8763
      %8797 = vst.msk [vmem:[%s8794 + $0x10] sm:$0xff] %vm351, %v8764
      %8798 = vst.msk [vmem:[%s8794 + $0x18] sm:$0xff] %vm351, %v8765
      %8799 = vst.msk [vmem:[%s8794 + $0x20] sm:$0xff] %vm351, %v8766
      %8800 = vst.msk [vmem:[%s8794 + $0x28] sm:$0xff] %vm351, %v8767
      %8801 = vst.msk [vmem:[%s8794 + $0x30] sm:$0xff] %vm351, %v8768
      %8802 = vst.msk [vmem:[%s8794 + $0x38] sm:$0xff] %vm351, %v8769
      %8803 = vst.msk [vmem:[%s8794 + $0x40] sm:$0xff] %vm351, %v8770
      %8804 = vst.msk [vmem:[%s8794 + $0x48] sm:$0xff] %vm351, %v8771
      %8805 = vst.msk [vmem:[%s8794 + $0x50] sm:$0xff] %vm351, %v8772
      %8806 = vst.msk [vmem:[%s8794 + $0x58] sm:$0xff] %vm351, %v8773
      %8807 = vst.msk [vmem:[%s8794 + $0x60] sm:$0xff] %vm351, %v8774
      %8808 = vst.msk [vmem:[%s8794 + $0x68] sm:$0xff] %vm351, %v8775
      %8809 = vst.msk [vmem:[%s8794 + $0x70] sm:$0xff] %vm351, %v8776
      %8810 = vst.msk [vmem:[%s8794 + $0x78] sm:$0xff] %vm351, %v8777
      %8811 = vst.msk [vmem:[%s8794 + $0x80] sm:$0xff] %vm351, %v8778
      %8812 = vst.msk [vmem:[%s8794 + $0x88] sm:$0xff] %vm351, %v8779
      %8813 = vst.msk [vmem:[%s8794 + $0x90] sm:$0xff] %vm351, %v8780
      %8814 = vst.msk [vmem:[%s8794 + $0x98] sm:$0xff] %vm351, %v8781
      %8815 = vst.msk [vmem:[%s8794 + $0xa0] sm:$0xff] %vm351, %v8782
      %8816 = vst.msk [vmem:[%s8794 + $0xa8] sm:$0xff] %vm351, %v8783
      %8817 = vst.msk [vmem:[%s8794 + $0xb0] sm:$0xff] %vm351, %v8784
      %8818 = vst.msk [vmem:[%s8794 + $0xb8] sm:$0xff] %vm351, %v8785
      %8819 = vst.msk [vmem:[%s8794 + $0xc0] sm:$0xff] %vm351, %v8786
      %8820 = vst.msk [vmem:[%s8794 + $0xc8] sm:$0xff] %vm351, %v8787
      %8821 = vst.msk [vmem:[%s8794 + $0xd0] sm:$0xff] %vm351, %v8788
      %8822 = vst.msk [vmem:[%s8794 + $0xd8] sm:$0xff] %vm351, %v8789
      %8823 = vst.msk [vmem:[%s8794 + $0xe0] sm:$0xff] %vm351, %v8790
      %8824 = vst.msk [vmem:[%s8794 + $0xe8] sm:$0xff] %vm351, %v8791
      %8825 = vst.msk [vmem:[%s8794 + $0xf0] sm:$0xff] %vm351, %v8792
      %8826 = vst.msk [vmem:[%s8794 + $0xf8] sm:$0xff] %vm351, %v8793
      %s8827 = smul.u32 2, %s18
      %p8828 = scmp.lt.s32.totalorder %s8827, 3
      %s8829 = scalar_select %p8828, %s8827, 3
      %s8830 = smul.addr %s8829, 32
      %s8831 = smul.addr %s8830, 8
      %s8832 = scalar_lea.vmem %s7, %s8831
      // Predicated region
      $region49: #{tpu_custom_call.1} parent=47 // pred_check
        %p8833 = pneg %p188
      $region50: #{tpu_custom_call.1} parent=47 // pred_check_branch
        %8835 = sbr.rel (%p8833) target = $region52
      $region51: #{tpu_custom_call.1} parent=47 // pred_region
        %s8836 = smul.u32 2, %s18
      $region52: #{tpu_custom_call.1} parent=47 // pred_fallthru
        _
    $region48: #{tpu_custom_call.1} parent=5 // pred_fallthru
      _
    %p8837 = scmp.le.s32.totalorder 2, %s13
    // Predicated region
    $region53: #{tpu_custom_call.1} parent=5 // pred_check
      %p8838 = pneg %p8837
    $region54: #{tpu_custom_call.1} parent=5 // pred_check_branch
      %8840 = sbr.rel (%p8838) target = $region56
    $region55: #{tpu_custom_call.1} parent=5 // pred_region
      %s8841 = ssub.s32 %s13, 2
      // Predicated region
      $region57: #{tpu_custom_call.1} parent=55 // pred_check
        %p8842 = pneg %p194
      $region58: #{tpu_custom_call.1} parent=55 // pred_check_branch
        %8844 = sbr.rel (%p8842) target = $region60
      $region59: #{tpu_custom_call.1} parent=55 // pred_region
        %s8845 = smul.u32 2, %s19
        %p8846 = scmp.lt.s32.totalorder %s8845, 3
        %s8847 = scalar_select %p8846, %s8845, 3
        %s8848 = smul.addr %s8847, 32
        %s8849 = smul.addr %s8848, 8
        %s8850 = scalar_lea.vmem %s7, %s8849
      $region60: #{tpu_custom_call.1} parent=55 // pred_fallthru
        _
    $region56: #{tpu_custom_call.1} parent=5 // pred_fallthru
      _
  $region6: #{tpu_custom_call.1} parent=0 // loop_footer
    %s17 = sadd.s32 1, %s13
  $region7: #{tpu_custom_call.1} parent=0 // loop_footer_branch
    %12 = sbr.rel target = $region3
  $region8: #{tpu_custom_call.1} parent=0 // loop_exit
    _

</llo_original>
